<compile_context>
chip_gen: v7x
topology: tpu7x:2x2x1
jax: 0.10.0
libtpu: 0.0.40
codegen_flags: <defaults>
</compile_context>

<pallas_src>
import functools
import math

import jax
import jax.numpy as jnp
from jax import lax
from jax.experimental import pallas as pl
from jax.experimental.pallas import tpu as pltpu  # noqa: F401

N_GROUPS = 8           # GroupNorm groups inside Conv1dBlock (diffuser default)
W_DTYPE = jnp.bfloat16 # matmul operand dtype (accumulation is always f32)


# ----------------------------------------------------------------------- in-kernel math

def _mish(x):
    # numerically stable softplus, matches nn.Mish (computed in f32)
    sp = jnp.log1p(jnp.exp(-jnp.abs(x))) + jnp.maximum(x, 0.0)
    return x * jnp.tanh(sp)


def _im2col(x2d, K, pad):
    """x2d: (H, C) f32 -> (H, K*C) same-padding im2col tile, built in VMEM."""
    H, C = x2d.shape
    if pad:
        z = jnp.zeros((pad, C), x2d.dtype)
        xp = jnp.concatenate([z, x2d, z], axis=0)
    else:
        xp = x2d
    if K == 1:
        return xp
    return jnp.concatenate([xp[k:k + H, :] for k in range(K)], axis=1)


def _gn_mish(h, B, H, gamma, beta, gmat):
    """GroupNorm(8)+Mish on a batch-folded (B*H, C) f32 slab.

    Group statistics are computed with ONE (2B, C) @ (C, C) matmul against a
    block-diagonal averaging matrix (gmat includes the 1/(Cg*H) factor).
    Returns a list of B (H, C) f32 blocks.
    """
    blocks = [h[b * H:(b + 1) * H] for b in range(B)]
    stats = []
    for hb in blocks:
        stats.append(jnp.sum(hb, axis=0, keepdims=True))        # sum x
        stats.append(jnp.sum(hb * hb, axis=0, keepdims=True))   # sum x^2
    st = jnp.dot(jnp.concatenate(stats, axis=0), gmat,
                 preferred_element_type=jnp.float32)             # (2B, C)
    outs = []
    for b, hb in enumerate(blocks):
        mean = st[2 * b:2 * b + 1]
        var = jnp.maximum(st[2 * b + 1:2 * b + 2] - mean * mean, 0.0)
        y = (hb - mean) * lax.rsqrt(var + 1e-5)
        outs.append(_mish(y * gamma + beta))
    return outs


# ----------------------------------------------------------------------------- kernels

def _resblock_body(x_ref, t_ref, w1_ref, b1_ref, g1_ref, be1_ref,
                   wt_ref, bt_ref, w2_ref, b2_ref, g2_ref, be2_ref,
                   gmat_ref, wr_ref, br_ref, out_ref, *, K, B, H):
    """Fused ResidualTemporalBlock: conv+GN+Mish, +time bias, conv+GN+Mish, residual."""
    pad = K // 2
    cdt = w1_ref.dtype

    # time projection: Mish -> Linear       (B, Cout)
    t = t_ref[...].astype(jnp.float32)
    tb = jnp.dot(_mish(t).astype(wt_ref.dtype), wt_ref[...],
                 preferred_element_type=jnp.float32) + bt_ref[...]

    # conv1: batch folded into M, one deep (B*H, K*Cin) @ (K*Cin, Cout) matmul
    xs = [x_ref[b].astype(jnp.float32) for b in range(B)]
    c1 = jnp.concatenate([_im2col(xb, K, pad) for xb in xs], axis=0)
    h1 = jnp.dot(c1.astype(cdt), w1_ref[...],
                 preferred_element_type=jnp.float32) + b1_ref[...]
    y1 = _gn_mish(h1, B, H, g1_ref[...], be1_ref[...], gmat_ref[...])
    y1 = [y1[b] + tb[b:b + 1, :] for b in range(B)]

    # conv2
    c2 = jnp.concatenate([_im2col(yb, K, pad) for yb in y1], axis=0)
    h2 = jnp.dot(c2.astype(cdt), w2_ref[...],
                 preferred_element_type=jnp.float32) + b2_ref[...]
    y2 = _gn_mish(h2, B, H, g2_ref[...], be2_ref[...], gmat_ref[...])

    # residual (1x1 conv or identity) + add
    for b in range(B):
        if wr_ref is not None:
            res = jnp.dot(xs[b].astype(cdt), wr_ref[...],
                          preferred_element_type=jnp.float32) + br_ref[...]
        else:
            res = xs[b]
        out_ref[b] = (y2[b] + res).astype(out_ref.dtype)


def _resblock_kernel_res(x_ref, t_ref, w1, b1, g1, be1, wt, bt, w2, b2, g2, be2,
                         gmat, wr, br, out_ref, *, K, B, H):
    _resblock_body(x_ref, t_ref, w1, b1, g1, be1, wt, bt, w2, b2, g2, be2,
                   gmat, wr, br, out_ref, K=K, B=B, H=H)


def _resblock_kernel_nores(x_ref, t_ref, w1, b1, g1, be1, wt, bt, w2, b2, g2, be2,
                           gmat, out_ref, *, K, B, H):
    _resblock_body(x_ref, t_ref, w1, b1, g1, be1, wt, bt, w2, b2, g2, be2,
                   gmat, None, None, out_ref, K=K, B=B, H=H)


def _time_mlp_kernel(e_ref, w1_ref, b1_ref, w2_ref, b2_ref, o_ref):
    # SinusoidalPosEmb (in wrapper) -> Linear -> Mish -> Linear, fused
    e = e_ref[...].astype(w1_ref.dtype)
    h = jnp.dot(e, w1_ref[...], preferred_element_type=jnp.float32) + b1_ref[...]
    h = _mish(h)
    o = jnp.dot(h.astype(w2_ref.dtype), w2_ref[...],
                preferred_element_type=jnp.float32) + b2_ref[...]
    o_ref[...] = o.astype(o_ref.dtype)


def _matmul_bias_kernel(x_ref, w_ref, b_ref, o_ref):
    # used for the stride-2 downsample conv (wrapper builds the strided im2col once)
    y = jnp.dot(x_ref[...].astype(w_ref.dtype), w_ref[...],
                preferred_element_type=jnp.float32) + b_ref[...]
    o_ref[...] = y.astype(o_ref.dtype)


def _upsample_kernel(xe_ref, xo_ref, we_ref, wo_ref, b_ref, o_ref):
    # ConvTranspose1d(C, C, 4, stride=2, padding=1) split into even/odd output phases:
    #   out[2i]   = wf0 @ x[i-1] + wf2 @ x[i]
    #   out[2i+1] = wf1 @ x[i]   + wf3 @ x[i+1]
    # (wf = direct-conv / pre-flipped kernel layout; no multiplies against injected zeros)
    even = jnp.dot(xe_ref[...].astype(we_ref.dtype), we_ref[...],
                   preferred_element_type=jnp.float32) + b_ref[...]
    odd = jnp.dot(xo_ref[...].astype(wo_ref.dtype), wo_ref[...],
                  preferred_element_type=jnp.float32) + b_ref[...]
    o_ref[...] = jnp.concatenate([even, odd], axis=1).astype(o_ref.dtype)


def _final_kernel(x_ref, w1_ref, b1_ref, g1_ref, be1_ref, gmat_ref,
                  w2_ref, b2_ref, o_ref, *, K, B, H):
    # final Conv1dBlock(dim, dim, K) -> Conv1d(dim, transition, 1), fused
    pad = K // 2
    xs = [x_ref[b].astype(jnp.float32) for b in range(B)]
    c1 = jnp.concatenate([_im2col(xb, K, pad) for xb in xs], axis=0)
    h1 = jnp.dot(c1.astype(w1_ref.dtype), w1_ref[...],
                 preferred_element_type=jnp.float32) + b1_ref[...]
    y1 = _gn_mish(h1, B, H, g1_ref[...], be1_ref[...], gmat_ref[...])
    y = jnp.dot(jnp.concatenate(y1, axis=0).astype(w2_ref.dtype), w2_ref[...],
                preferred_element_type=jnp.float32) + b2_ref[...]
    for b in range(B):
        o_ref[b] = y[b * H:(b + 1) * H].astype(o_ref.dtype)


# ----------------------------------------------------------------------------- wrappers

def _make_gmat(c, groups, h):
    cg = c // groups
    gid = jnp.arange(c) // cg
    return (gid[:, None] == gid[None, :]).astype(jnp.float32) / float(cg * h)


def sinusoidal_pos_emb(t, dim):
    half = dim // 2
    freq = jnp.exp(-math.log(10000.0) * jnp.arange(half, dtype=jnp.float32) / (half - 1))
    emb = t.astype(jnp.float32)[:, None] * freq[None, :]
    return jnp.concatenate([jnp.sin(emb), jnp.cos(emb)], axis=-1)


def time_mlp_fwd(time, p, dim):
    e = sinusoidal_pos_emb(time, dim)
    return pl.pallas_call(
        _time_mlp_kernel,
        out_shape=jax.ShapeDtypeStruct((e.shape[0], dim), jnp.float32),
    )(e, p["l1"]["w"], p["l1"]["b"], p["l2"]["w"], p["l2"]["b"])


def resblock_fwd(x, t, p, K):
    """Fused ResidualTemporalBlock forward. x: [B, H, Cin] -> [B, H, Cout]."""
    B, H, _ = x.shape
    Cout = p["conv1"]["b"].shape[1]
    gmat = _make_gmat(Cout, N_GROUPS, H)
    args = [x, t,
            p["conv1"]["w"], p["conv1"]["b"], p["conv1"]["gamma"], p["conv1"]["beta"],
            p["time"]["w"], p["time"]["b"],
            p["conv2"]["w"], p["conv2"]["b"], p["conv2"]["gamma"], p["conv2"]["beta"],
            gmat]
    if "res" in p:
        kernel = functools.partial(_resblock_kernel_res, K=K, B=B, H=H)
        args += [p["res"]["w"], p["res"]["b"]]
    else:
        kernel = functools.partial(_resblock_kernel_nores, K=K, B=B, H=H)
    return pl.pallas_call(
        kernel,
        out_shape=jax.ShapeDtypeStruct((B, H, Cout), jnp.float32),
    )(*args)


def downsample_fwd(x, p):
    # nn.Conv1d(dim, dim, 3, stride=2, padding=1): wrapper builds the strided im2col
    # once (tiny), kernel is a single batch-folded matmul.
    B, H, C = x.shape
    K, stride, pad = 3, 2, 1
    H_out = (H + 2 * pad - K) // stride + 1
    xp = jnp.pad(x, ((0, 0), (pad, pad), (0, 0)))
    cols = jnp.concatenate(
        [xp[:, k:k + stride * H_out:stride, :] for k in range(K)], axis=-1)
    cols = cols.reshape(B * H_out, K * C)
    out = pl.pallas_call(
        _matmul_bias_kernel,
        out_shape=jax.ShapeDtypeStruct((B * H_out, C), jnp.float32),
    )(cols, p["w"], p["b"])
    return out.reshape(B, H_out, C)


def upsample_fwd(x, p):
    # nn.ConvTranspose1d(dim, dim, 4, stride=2, padding=1) via even/odd phase split.
    B, H, C = x.shape
    x_prev = jnp.pad(x, ((0, 0), (1, 0), (0, 0)))[:, :H, :]   # x[i-1] (0 at i=0)
    x_next = jnp.pad(x, ((0, 0), (0, 1), (0, 0)))[:, 1:, :]   # x[i+1] (0 at i=H-1)
    xe = jnp.concatenate([x_prev, x], axis=-1).reshape(B * H, 2 * C)
    xo = jnp.concatenate([x, x_next], axis=-1).reshape(B * H, 2 * C)
    out = pl.pallas_call(
        _upsample_kernel,
        out_shape=jax.ShapeDtypeStruct((B * H, 2 * C), jnp.float32),
    )(xe, xo, p["w_even"], p["w_odd"], p["b"])
    # interleave even/odd phases along the horizon axis
    return out.reshape(B, H, 2, C).reshape(B, 2 * H, C)


def final_fwd(x, p_block, p_conv, K):
    B, H, _ = x.shape
    Cmid = p_block["b"].shape[1]
    F = p_conv["b"].shape[1]
    gmat = _make_gmat(Cmid, N_GROUPS, H)
    return pl.pallas_call(
        functools.partial(_final_kernel, K=K, B=B, H=H),
        out_shape=jax.ShapeDtypeStruct((B, H, F), jnp.float32),
    )(x, p_block["w"], p_block["b"], p_block["gamma"], p_block["beta"], gmat,
      p_conv["w"], p_conv["b"])


# ----------------------------------------------------------------------------- network

def temporal_unet_fwd(x_bhc, time, params, *, dim, K):
    # input already [B, H, C]; the PyTorch 'b h t -> b t h' rearrange is absorbed
    # by the channels-last layout.
    t = time_mlp_fwd(time, params["time_mlp"], dim)
    x = x_bhc
    skips = []
    for pdown in params["downs"]:
        x = resblock_fwd(x, t, pdown["res1"], K)
        x = resblock_fwd(x, t, pdown["res2"], K)
        skips.append(x)
        if "down" in pdown:
            x = downsample_fwd(x, pdown["down"])
    x = resblock_fwd(x, t, params["mid1"], K)
    x = resblock_fwd(x, t, params["mid2"], K)
    for pup in params["ups"]:
        x = jnp.concatenate([x, skips.pop()], axis=-1)   # torch.cat((x, h.pop()), dim=1)
        x = resblock_fwd(x, t, pup["res1"], K)
        x = resblock_fwd(x, t, pup["res2"], K)
        if "up" in pup:
            x = upsample_fwd(x, pup["up"])
    # TODO(synk): whole-UNet single-kernel fusion (all params VMEM-resident) is the next
    # step if launch overhead of the remaining 12 calls still dominates.
    return final_fwd(x, params["final_block"], params["final_conv"], K)   # [B, H, trans]


def concatenated_temporal_unet_fwd(x, time, params, *, n_agents, dim, K, returns=None):
    """x: [batch, horizon, agent, transition]  (returns=None path; no conditioning)."""
    B, H, A, F = x.shape
    assert A == n_agents, f"{x.shape}, {n_agents}"
    concat_x = x.reshape(B, H, A * F)                     # 'b h a f -> b h (a f)'
    # TODO(synk): returns_condition / env_ts_condition / condition_dropout branches are
    # disabled (module defaults False); only the returns=None forward path is implemented.
    out = temporal_unet_fwd(concat_x, time, params, dim=dim, K=K)
    return out.reshape(B, H, A, F)                        # 'b h (a f) -> b h a f'


# ----------------------------------------------------------------------------- params

def init_temporal_unet_params(key, transition_dim, dim, dim_mults, K):
    # Weights are stored in kernel-ready layouts:
    #   conv:  (K*Cin, Cout) bf16 im2col layout; linear: (Din, Dout) bf16;
    #   conv-transpose: even/odd phase matrices (2C, C) bf16 in direct-conv
    #   ("pre-flipped") tap order; biases / gamma / beta as (1, C) f32.
    # TODO(synk): when porting real PyTorch weights, nn.Conv1d (Cout,Cin,K) must be
    # permuted to (K,Cin,Cout) then flattened, and ConvTranspose1d (Cin,Cout,K) must be
    # flipped along K before the phase split.
    dims = [transition_dim] + [dim * m for m in dim_mults]
    in_out = list(zip(dims[:-1], dims[1:]))
    time_dim = dim
    keys = iter(jax.random.split(key, 256))

    def normal(shape, scale=0.02):
        return scale * jax.random.normal(next(keys), shape, jnp.float32)

    def conv_p(cin, cout, k):
        return {"w": normal((k * cin, cout)).astype(W_DTYPE),
                "b": jnp.zeros((1, cout), jnp.float32)}

    def convgn_p(cin, cout, k):
        p = conv_p(cin, cout, k)
        p["gamma"] = jnp.ones((1, cout), jnp.float32)
        p["beta"] = jnp.zeros((1, cout), jnp.float32)
        return p

    def lin_p(din, dout):
        return {"w": normal((din, dout)).astype(W_DTYPE),
                "b": jnp.zeros((1, dout), jnp.float32)}

    def up_p(c):
        w = normal((4, c, c))
        return {"w_even": jnp.concatenate([w[0], w[2]], axis=0).astype(W_DTYPE),
                "w_odd": jnp.concatenate([w[1], w[3]], axis=0).astype(W_DTYPE),
                "b": jnp.zeros((1, c), jnp.float32)}

    def res_p(cin, cout):
        p = {"conv1": convgn_p(cin, cout, K),
             "conv2": convgn_p(cout, cout, K),
             "time": lin_p(time_dim, cout)}
        if cin != cout:
            p["res"] = conv_p(cin, cout, 1)
        return p

    params = {"time_mlp": {"l1": lin_p(dim, dim * 4), "l2": lin_p(dim * 4, dim)}}
    n_res = len(in_out)

    downs = []
    for i, (cin, cout) in enumerate(in_out):
        d = {"res1": res_p(cin, cout), "res2": res_p(cout, cout)}
        if i < n_res - 1:
            d["down"] = conv_p(cout, cout, 3)
        downs.append(d)
    params["downs"] = downs

    mid = dims[-1]
    params["mid1"] = res_p(mid, mid)
    params["mid2"] = res_p(mid, mid)

    ups = []
    for i, (cin, cout) in enumerate(reversed(in_out[1:])):
        u = {"res1": res_p(cout * 2, cin), "res2": res_p(cin, cin)}
        if i < n_res - 1:
            u["up"] = up_p(cin)
        ups.append(u)
    params["ups"] = ups

    params["final_block"] = convgn_p(dim, dim, K)
    params["final_conv"] = conv_p(dim, transition_dim, 1)
    return params


# ----------------------------------------------------------------------------- main

if __name__ == "__main__":
    n_agents = 2
    transition_dim = 4
    horizon = 16            # divisible by 2**(len(dim_mults)-1)
    dim = 32
    dim_mults = (1, 2)
    kernel_size = 5
    batch = 2

    key = jax.random.PRNGKey(0)
    kx, kt, kp = jax.random.split(key, 3)

    x = jax.random.normal(kx, (batch, horizon, n_agents, transition_dim), jnp.float32)
    time = jax.random.randint(kt, (batch,), 0, 100).astype(jnp.float32)
    params = init_temporal_unet_params(kp, transition_dim * n_agents, dim, dim_mults,
                                       kernel_size)

    fwd = jax.jit(functools.partial(concatenated_temporal_unet_fwd,
                                    n_agents=n_agents, dim=dim, K=kernel_size))
    out = jax.block_until_ready(fwd(x, time, params))
    assert out.shape == x.shape, (out.shape, x.shape)
    assert bool(jnp.all(jnp.isfinite(out)))
    print("KERNEL_OK")
</pallas_src>

<mosaic_0001>
module attributes {stable_mosaic.version = 11 : i64} {
  func.func @_time_mlp_kernel(%arg0: memref<2x32xf32, #tpu.memory_space<vmem>>, %arg1: memref<32x128xbf16, #tpu.memory_space<vmem>>, %arg2: memref<1x128xf32, #tpu.memory_space<vmem>>, %arg3: memref<128x32xbf16, #tpu.memory_space<vmem>>, %arg4: memref<1x32xf32, #tpu.memory_space<vmem>>, %arg5: memref<2x32xf32, #tpu.memory_space<vmem>>) attributes {dimension_semantics = [], scalar_prefetch = 0 : i64, scratch_operands = 0 : i64, tpu.core_type = #tpu.core_type<tc>} {
    %c0 = arith.constant 0 : index
    %c0_0 = arith.constant 0 : index
    %0 = vector.load %arg0[%c0, %c0_0] : memref<2x32xf32, #tpu.memory_space<vmem>>, vector<2x32xf32>
    %1 = arith.truncf %0 : vector<2x32xf32> to vector<2x32xbf16>
    %c0_1 = arith.constant 0 : index
    %c0_2 = arith.constant 0 : index
    %2 = vector.load %arg1[%c0_1, %c0_2] : memref<32x128xbf16, #tpu.memory_space<vmem>>, vector<32x128xbf16>
    %cst = arith.constant dense<0.000000e+00> : vector<2x128xf32>
    %3 = tpu.matmul %1, %2, %cst {dimension_numbers = #tpu.dot_dimension_numbers<[1], [0], [0], [1], [0, 0, 1, 1], [], []>} : vector<2x32xbf16>, vector<32x128xbf16>, vector<2x128xf32> -> vector<2x128xf32>
    %c0_3 = arith.constant 0 : index
    %c0_4 = arith.constant 0 : index
    %4 = vector.load %arg2[%c0_3, %c0_4] : memref<1x128xf32, #tpu.memory_space<vmem>>, vector<1x128xf32>
    %5 = vector.broadcast %4 : vector<1x128xf32> to vector<2x128xf32>
    %6 = arith.addf %3, %5 : vector<2x128xf32>
    %7 = math.absf %6 : vector<2x128xf32>
    %cst_5 = arith.constant 0.000000e+00 : f32
    %8 = vector.broadcast %cst_5 : f32 to vector<2x128xf32>
    %9 = arith.subf %8, %7 : vector<2x128xf32>
    %10 = math.exp %9 : vector<2x128xf32>
    %11 = math.log1p %10 : vector<2x128xf32>
    %cst_6 = arith.constant 0.000000e+00 : f32
    %12 = vector.broadcast %cst_6 : f32 to vector<2x128xf32>
    %13 = arith.maximumf %6, %12 : vector<2x128xf32>
    %14 = arith.addf %11, %13 : vector<2x128xf32>
    %15 = math.tanh %14 : vector<2x128xf32>
    %16 = arith.mulf %6, %15 : vector<2x128xf32>
    %17 = arith.truncf %16 : vector<2x128xf32> to vector<2x128xbf16>
    %c0_7 = arith.constant 0 : index
    %c0_8 = arith.constant 0 : index
    %18 = vector.load %arg3[%c0_7, %c0_8] : memref<128x32xbf16, #tpu.memory_space<vmem>>, vector<128x32xbf16>
    %cst_9 = arith.constant dense<0.000000e+00> : vector<2x32xf32>
    %19 = tpu.matmul %17, %18, %cst_9 {dimension_numbers = #tpu.dot_dimension_numbers<[1], [0], [0], [1], [0, 0, 1, 1], [], []>} : vector<2x128xbf16>, vector<128x32xbf16>, vector<2x32xf32> -> vector<2x32xf32>
    %c0_10 = arith.constant 0 : index
    %c0_11 = arith.constant 0 : index
    %20 = vector.load %arg4[%c0_10, %c0_11] : memref<1x32xf32, #tpu.memory_space<vmem>>, vector<1x32xf32>
    %21 = vector.broadcast %20 : vector<1x32xf32> to vector<2x32xf32>
    %22 = arith.addf %19, %21 : vector<2x32xf32>
    %c0_12 = arith.constant 0 : index
    %c0_13 = arith.constant 0 : index
    %23 = vector.load %arg5[%c0_12, %c0_13] : memref<2x32xf32, #tpu.memory_space<vmem>>, vector<2x32xf32>
    tpu.vector_store %arg5[%c0_12, %c0_13], %22 {strides = array<i32>} : memref<2x32xf32, #tpu.memory_space<vmem>>, vector<2x32xf32>,
    return
  }
}

module attributes {stable_mosaic.version = 11 : i64} {
  func.func @_resblock_kernel_res(%arg0: memref<2x16x8xf32, #tpu.memory_space<vmem>>, %arg1: memref<2x32xf32, #tpu.memory_space<vmem>>, %arg2: memref<40x32xbf16, #tpu.memory_space<vmem>>, %arg3: memref<1x32xf32, #tpu.memory_space<vmem>>, %arg4: memref<1x32xf32, #tpu.memory_space<vmem>>, %arg5: memref<1x32xf32, #tpu.memory_space<vmem>>, %arg6: memref<32x32xbf16, #tpu.memory_space<vmem>>, %arg7: memref<1x32xf32, #tpu.memory_space<vmem>>, %arg8: memref<160x32xbf16, #tpu.memory_space<vmem>>, %arg9: memref<1x32xf32, #tpu.memory_space<vmem>>, %arg10: memref<1x32xf32, #tpu.memory_space<vmem>>, %arg11: memref<1x32xf32, #tpu.memory_space<vmem>>, %arg12: memref<32x32xf32, #tpu.memory_space<vmem>>, %arg13: memref<8x32xbf16, #tpu.memory_space<vmem>>, %arg14: memref<1x32xf32, #tpu.memory_space<vmem>>, %arg15: memref<2x16x32xf32, #tpu.memory_space<vmem>>) attributes {dimension_semantics = [], scalar_prefetch = 0 : i64, scratch_operands = 0 : i64, tpu.core_type = #tpu.core_type<tc>} {
    %c0 = arith.constant 0 : index
    %c0_0 = arith.constant 0 : index
    %0 = vector.load %arg1[%c0, %c0_0] : memref<2x32xf32, #tpu.memory_space<vmem>>, vector<2x32xf32>
    %1 = math.absf %0 : vector<2x32xf32>
    %cst = arith.constant 0.000000e+00 : f32
    %2 = vector.broadcast %cst : f32 to vector<2x32xf32>
    %3 = arith.subf %2, %1 : vector<2x32xf32>
    %4 = math.exp %3 : vector<2x32xf32>
    %5 = math.log1p %4 : vector<2x32xf32>
    %cst_1 = arith.constant 0.000000e+00 : f32
    %6 = vector.broadcast %cst_1 : f32 to vector<2x32xf32>
    %7 = arith.maximumf %0, %6 : vector<2x32xf32>
    %8 = arith.addf %5, %7 : vector<2x32xf32>
    %9 = math.tanh %8 : vector<2x32xf32>
    %10 = arith.mulf %0, %9 : vector<2x32xf32>
    %11 = arith.truncf %10 : vector<2x32xf32> to vector<2x32xbf16>
    %c0_2 = arith.constant 0 : index
    %c0_3 = arith.constant 0 : index
    %12 = vector.load %arg6[%c0_2, %c0_3] : memref<32x32xbf16, #tpu.memory_space<vmem>>, vector<32x32xbf16>
    %cst_4 = arith.constant dense<0.000000e+00> : vector<2x32xf32>
    %13 = tpu.matmul %11, %12, %cst_4 {dimension_numbers = #tpu.dot_dimension_numbers<[1], [0], [0], [1], [0, 0, 1, 1], [], []>} : vector<2x32xbf16>, vector<32x32xbf16>, vector<2x32xf32> -> vector<2x32xf32>
    %c0_5 = arith.constant 0 : index
    %c0_6 = arith.constant 0 : index
    %14 = vector.load %arg7[%c0_5, %c0_6] : memref<1x32xf32, #tpu.memory_space<vmem>>, vector<1x32xf32>
    %15 = vector.broadcast %14 : vector<1x32xf32> to vector<2x32xf32>
    %16 = arith.addf %13, %15 : vector<2x32xf32>
    %c0_7 = arith.constant 0 : index
    %c0_8 = arith.constant 0 : index
    %c0_9 = arith.constant 0 : index
    %17 = vector.load %arg0[%c0_7, %c0_8, %c0_9] : memref<2x16x8xf32, #tpu.memory_space<vmem>>, vector<1x16x8xf32>
    %18 = vector.shape_cast %17 : vector<1x16x8xf32> to vector<16x8xf32>
    %c1 = arith.constant 1 : index
    %c0_10 = arith.constant 0 : index
    %c0_11 = arith.constant 0 : index
    %19 = vector.load %arg0[%c1, %c0_10, %c0_11] : memref<2x16x8xf32, #tpu.memory_space<vmem>>, vector<1x16x8xf32>
    %20 = vector.shape_cast %19 : vector<1x16x8xf32> to vector<16x8xf32>
    %cst_12 = arith.constant 0.000000e+00 : f32
    %21 = vector.broadcast %cst_12 : f32 to vector<2x8xf32>
    %22 = tpu.concatenate %21, %18, %21 in 0 : vector<2x8xf32>, vector<16x8xf32>, vector<2x8xf32> -> vector<20x8xf32>
    %23 = vector.extract_strided_slice %22 {offsets = [0, 0], sizes = [16, 8], strides = [1, 1]} : vector<20x8xf32> to vector<16x8xf32>
    %24 = vector.extract_strided_slice %22 {offsets = [1, 0], sizes = [16, 8], strides = [1, 1]} : vector<20x8xf32> to vector<16x8xf32>
    %25 = vector.extract_strided_slice %22 {offsets = [2, 0], sizes = [16, 8], strides = [1, 1]} : vector<20x8xf32> to vector<16x8xf32>
    %26 = vector.extract_strided_slice %22 {offsets = [3, 0], sizes = [16, 8], strides = [1, 1]} : vector<20x8xf32> to vector<16x8xf32>
    %27 = vector.extract_strided_slice %22 {offsets = [4, 0], sizes = [16, 8], strides = [1, 1]} : vector<20x8xf32> to vector<16x8xf32>
    %28 = tpu.concatenate %23, %24, %25, %26, %27 in 1 : vector<16x8xf32>, vector<16x8xf32>, vector<16x8xf32>, vector<16x8xf32>, vector<16x8xf32> -> vector<16x40xf32>
    %cst_13 = arith.constant 0.000000e+00 : f32
    %29 = vector.broadcast %cst_13 : f32 to vector<2x8xf32>
    %30 = tpu.concatenate %29, %20, %29 in 0 : vector<2x8xf32>, vector<16x8xf32>, vector<2x8xf32> -> vector<20x8xf32>
    %31 = vector.extract_strided_slice %30 {offsets = [0, 0], sizes = [16, 8], strides = [1, 1]} : vector<20x8xf32> to vector<16x8xf32>
    %32 = vector.extract_strided_slice %30 {offsets = [1, 0], sizes = [16, 8], strides = [1, 1]} : vector<20x8xf32> to vector<16x8xf32>
    %33 = vector.extract_strided_slice %30 {offsets = [2, 0], sizes = [16, 8], strides = [1, 1]} : vector<20x8xf32> to vector<16x8xf32>
    %34 = vector.extract_strided_slice %30 {offsets = [3, 0], sizes = [16, 8], strides = [1, 1]} : vector<20x8xf32> to vector<16x8xf32>
    %35 = vector.extract_strided_slice %30 {offsets = [4, 0], sizes = [16, 8], strides = [1, 1]} : vector<20x8xf32> to vector<16x8xf32>
    %36 = tpu.concatenate %31, %32, %33, %34, %35 in 1 : vector<16x8xf32>, vector<16x8xf32>, vector<16x8xf32>, vector<16x8xf32>, vector<16x8xf32> -> vector<16x40xf32>
    %37 = tpu.concatenate %28, %36 in 0 : vector<16x40xf32>, vector<16x40xf32> -> vector<32x40xf32>
    %38 = arith.truncf %37 : vector<32x40xf32> to vector<32x40xbf16>
    %c0_14 = arith.constant 0 : index
    %c0_15 = arith.constant 0 : index
    %39 = vector.load %arg2[%c0_14, %c0_15] : memref<40x32xbf16, #tpu.memory_space<vmem>>, vector<40x32xbf16>
    %cst_16 = arith.constant dense<0.000000e+00> : vector<32x32xf32>
    %40 = tpu.matmul %38, %39, %cst_16 {dimension_numbers = #tpu.dot_dimension_numbers<[1], [0], [0], [1], [0, 0, 1, 1], [], []>} : vector<32x40xbf16>, vector<40x32xbf16>, vector<32x32xf32> -> vector<32x32xf32>
    %c0_17 = arith.constant 0 : index
    %c0_18 = arith.constant 0 : index
    %41 = vector.load %arg3[%c0_17, %c0_18] : memref<1x32xf32, #tpu.memory_space<vmem>>, vector<1x32xf32>
    %42 = vector.broadcast %41 : vector<1x32xf32> to vector<32x32xf32>
    %43 = arith.addf %40, %42 : vector<32x32xf32>
    %c0_19 = arith.constant 0 : index
    %c0_20 = arith.constant 0 : index
    %44 = vector.load %arg4[%c0_19, %c0_20] : memref<1x32xf32, #tpu.memory_space<vmem>>, vector<1x32xf32>
    %c0_21 = arith.constant 0 : index
    %c0_22 = arith.constant 0 : index
    %45 = vector.load %arg5[%c0_21, %c0_22] : memref<1x32xf32, #tpu.memory_space<vmem>>, vector<1x32xf32>
    %c0_23 = arith.constant 0 : index
    %c0_24 = arith.constant 0 : index
    %46 = vector.load %arg12[%c0_23, %c0_24] : memref<32x32xf32, #tpu.memory_space<vmem>>, vector<32x32xf32>
    %47 = vector.extract_strided_slice %43 {offsets = [0, 0], sizes = [16, 32], strides = [1, 1]} : vector<32x32xf32> to vector<16x32xf32>
    %48 = vector.extract_strided_slice %43 {offsets = [16, 0], sizes = [16, 32], strides = [1, 1]} : vector<32x32xf32> to vector<16x32xf32>
    %cst_25 = arith.constant dense<0.000000e+00> : vector<32xf32>
    %49 = vector.multi_reduction <add>, %47, %cst_25 [0] : vector<16x32xf32> to vector<32xf32>
    %50 = vector.shape_cast %49 : vector<32xf32> to vector<1x32xf32>
    %51 = arith.mulf %47, %47 : vector<16x32xf32>
    %cst_26 = arith.constant dense<0.000000e+00> : vector<32xf32>
    %52 = vector.multi_reduction <add>, %51, %cst_26 [0] : vector<16x32xf32> to vector<32xf32>
    %53 = vector.shape_cast %52 : vector<32xf32> to vector<1x32xf32>
    %cst_27 = arith.constant dense<0.000000e+00> : vector<32xf32>
    %54 = vector.multi_reduction <add>, %48, %cst_27 [0] : vector<16x32xf32> to vector<32xf32>
    %55 = vector.shape_cast %54 : vector<32xf32> to vector<1x32xf32>
    %56 = arith.mulf %48, %48 : vector<16x32xf32>
    %cst_28 = arith.constant dense<0.000000e+00> : vector<32xf32>
    %57 = vector.multi_reduction <add>, %56, %cst_28 [0] : vector<16x32xf32> to vector<32xf32>
    %58 = vector.shape_cast %57 : vector<32xf32> to vector<1x32xf32>
    %59 = tpu.concatenate %50, %53, %55, %58 in 0 : vector<1x32xf32>, vector<1x32xf32>, vector<1x32xf32>, vector<1x32xf32> -> vector<4x32xf32>
    %cst_29 = arith.constant dense<0.000000e+00> : vector<4x32xf32>
    %60 = tpu.matmul %59, %46, %cst_29 {dimension_numbers = #tpu.dot_dimension_numbers<[1], [0], [0], [1], [0, 0, 1, 1], [], []>} : vector<4x32xf32>, vector<32x32xf32>, vector<4x32xf32> -> vector<4x32xf32>
    %61 = vector.extract_strided_slice %60 {offsets = [0, 0], sizes = [1, 32], strides = [1, 1]} : vector<4x32xf32> to vector<1x32xf32>
    %62 = vector.extract_strided_slice %60 {offsets = [1, 0], sizes = [1, 32], strides = [1, 1]} : vector<4x32xf32> to vector<1x32xf32>
    %63 = arith.mulf %61, %61 : vector<1x32xf32>
    %64 = arith.subf %62, %63 : vector<1x32xf32>
    %cst_30 = arith.constant 0.000000e+00 : f32
    %65 = vector.broadcast %cst_30 : f32 to vector<1x32xf32>
    %66 = arith.maximumf %64, %65 : vector<1x32xf32>
    %67 = vector.broadcast %61 : vector<1x32xf32> to vector<16x32xf32>
    %68 = arith.subf %47, %67 : vector<16x32xf32>
    %cst_31 = arith.constant 9.99999974E-6 : f32
    %69 = vector.broadcast %cst_31 : f32 to vector<1x32xf32>
    %70 = arith.addf %66, %69 : vector<1x32xf32>
    %71 = math.rsqrt %70 : vector<1x32xf32>
    %72 = vector.broadcast %71 : vector<1x32xf32> to vector<16x32xf32>
    %73 = arith.mulf %68, %72 : vector<16x32xf32>
    %74 = vector.broadcast %44 : vector<1x32xf32> to vector<16x32xf32>
    %75 = arith.mulf %73, %74 : vector<16x32xf32>
    %76 = vector.broadcast %45 : vector<1x32xf32> to vector<16x32xf32>
    %77 = arith.addf %75, %76 : vector<16x32xf32>
    %78 = math.absf %77 : vector<16x32xf32>
    %cst_32 = arith.constant 0.000000e+00 : f32
    %79 = vector.broadcast %cst_32 : f32 to vector<16x32xf32>
    %80 = arith.subf %79, %78 : vector<16x32xf32>
    %81 = math.exp %80 : vector<16x32xf32>
    %82 = math.log1p %81 : vector<16x32xf32>
    %cst_33 = arith.constant 0.000000e+00 : f32
    %83 = vector.broadcast %cst_33 : f32 to vector<16x32xf32>
    %84 = arith.maximumf %77, %83 : vector<16x32xf32>
    %85 = arith.addf %82, %84 : vector<16x32xf32>
    %86 = math.tanh %85 : vector<16x32xf32>
    %87 = arith.mulf %77, %86 : vector<16x32xf32>
    %88 = vector.extract_strided_slice %60 {offsets = [2, 0], sizes = [1, 32], strides = [1, 1]} : vector<4x32xf32> to vector<1x32xf32>
    %89 = vector.extract_strided_slice %60 {offsets = [3, 0], sizes = [1, 32], strides = [1, 1]} : vector<4x32xf32> to vector<1x32xf32>
    %90 = arith.mulf %88, %88 : vector<1x32xf32>
    %91 = arith.subf %89, %90 : vector<1x32xf32>
    %cst_34 = arith.constant 0.000000e+00 : f32
    %92 = vector.broadcast %cst_34 : f32 to vector<1x32xf32>
    %93 = arith.maximumf %91, %92 : vector<1x32xf32>
    %94 = vector.broadcast %88 : vector<1x32xf32> to vector<16x32xf32>
    %95 = arith.subf %48, %94 : vector<16x32xf32>
    %cst_35 = arith.constant 9.99999974E-6 : f32
    %96 = vector.broadcast %cst_35 : f32 to vector<1x32xf32>
    %97 = arith.addf %93, %96 : vector<1x32xf32>
    %98 = math.rsqrt %97 : vector<1x32xf32>
    %99 = vector.broadcast %98 : vector<1x32xf32> to vector<16x32xf32>
    %100 = arith.mulf %95, %99 : vector<16x32xf32>
    %101 = vector.broadcast %44 : vector<1x32xf32> to vector<16x32xf32>
    %102 = arith.mulf %100, %101 : vector<16x32xf32>
    %103 = vector.broadcast %45 : vector<1x32xf32> to vector<16x32xf32>
    %104 = arith.addf %102, %103 : vector<16x32xf32>
    %105 = math.absf %104 : vector<16x32xf32>
    %cst_36 = arith.constant 0.000000e+00 : f32
    %106 = vector.broadcast %cst_36 : f32 to vector<16x32xf32>
    %107 = arith.subf %106, %105 : vector<16x32xf32>
    %108 = math.exp %107 : vector<16x32xf32>
    %109 = math.log1p %108 : vector<16x32xf32>
    %cst_37 = arith.constant 0.000000e+00 : f32
    %110 = vector.broadcast %cst_37 : f32 to vector<16x32xf32>
    %111 = arith.maximumf %104, %110 : vector<16x32xf32>
    %112 = arith.addf %109, %111 : vector<16x32xf32>
    %113 = math.tanh %112 : vector<16x32xf32>
    %114 = arith.mulf %104, %113 : vector<16x32xf32>
    %115 = vector.extract_strided_slice %16 {offsets = [0, 0], sizes = [1, 32], strides = [1, 1]} : vector<2x32xf32> to vector<1x32xf32>
    %116 = vector.broadcast %115 : vector<1x32xf32> to vector<16x32xf32>
    %117 = arith.addf %87, %116 : vector<16x32xf32>
    %118 = vector.extract_strided_slice %16 {offsets = [1, 0], sizes = [1, 32], strides = [1, 1]} : vector<2x32xf32> to vector<1x32xf32>
    %119 = vector.broadcast %118 : vector<1x32xf32> to vector<16x32xf32>
    %120 = arith.addf %114, %119 : vector<16x32xf32>
    %cst_38 = arith.constant 0.000000e+00 : f32
    %121 = vector.broadcast %cst_38 : f32 to vector<2x32xf32>
    %122 = tpu.concatenate %121, %117, %121 in 0 : vector<2x32xf32>, vector<16x32xf32>, vector<2x32xf32> -> vector<20x32xf32>
    %123 = vector.extract_strided_slice %122 {offsets = [0, 0], sizes = [16, 32], strides = [1, 1]} : vector<20x32xf32> to vector<16x32xf32>
    %124 = vector.extract_strided_slice %122 {offsets = [1, 0], sizes = [16, 32], strides = [1, 1]} : vector<20x32xf32> to vector<16x32xf32>
    %125 = vector.extract_strided_slice %122 {offsets = [2, 0], sizes = [16, 32], strides = [1, 1]} : vector<20x32xf32> to vector<16x32xf32>
    %126 = vector.extract_strided_slice %122 {offsets = [3, 0], sizes = [16, 32], strides = [1, 1]} : vector<20x32xf32> to vector<16x32xf32>
    %127 = vector.extract_strided_slice %122 {offsets = [4, 0], sizes = [16, 32], strides = [1, 1]} : vector<20x32xf32> to vector<16x32xf32>
    %128 = tpu.concatenate %123, %124, %125, %126, %127 in 1 : vector<16x32xf32>, vector<16x32xf32>, vector<16x32xf32>, vector<16x32xf32>, vector<16x32xf32> -> vector<16x160xf32>
    %cst_39 = arith.constant 0.000000e+00 : f32
    %129 = vector.broadcast %cst_39 : f32 to vector<2x32xf32>
    %130 = tpu.concatenate %129, %120, %129 in 0 : vector<2x32xf32>, vector<16x32xf32>, vector<2x32xf32> -> vector<20x32xf32>
    %131 = vector.extract_strided_slice %130 {offsets = [0, 0], sizes = [16, 32], strides = [1, 1]} : vector<20x32xf32> to vector<16x32xf32>
    %132 = vector.extract_strided_slice %130 {offsets = [1, 0], sizes = [16, 32], strides = [1, 1]} : vector<20x32xf32> to vector<16x32xf32>
    %133 = vector.extract_strided_slice %130 {offsets = [2, 0], sizes = [16, 32], strides = [1, 1]} : vector<20x32xf32> to vector<16x32xf32>
    %134 = vector.extract_strided_slice %130 {offsets = [3, 0], sizes = [16, 32], strides = [1, 1]} : vector<20x32xf32> to vector<16x32xf32>
    %135 = vector.extract_strided_slice %130 {offsets = [4, 0], sizes = [16, 32], strides = [1, 1]} : vector<20x32xf32> to vector<16x32xf32>
    %136 = tpu.concatenate %131, %132, %133, %134, %135 in 1 : vector<16x32xf32>, vector<16x32xf32>, vector<16x32xf32>, vector<16x32xf32>, vector<16x32xf32> -> vector<16x160xf32>
    %137 = tpu.concatenate %128, %136 in 0 : vector<16x160xf32>, vector<16x160xf32> -> vector<32x160xf32>
    %138 = arith.truncf %137 : vector<32x160xf32> to vector<32x160xbf16>
    %c0_40 = arith.constant 0 : index
    %c0_41 = arith.constant 0 : index
    %139 = vector.load %arg8[%c0_40, %c0_41] : memref<160x32xbf16, #tpu.memory_space<vmem>>, vector<160x32xbf16>
    %cst_42 = arith.constant dense<0.000000e+00> : vector<32x32xf32>
    %140 = tpu.matmul %138, %139, %cst_42 {dimension_numbers = #tpu.dot_dimension_numbers<[1], [0], [0], [1], [0, 0, 1, 1], [], []>} : vector<32x160xbf16>, vector<160x32xbf16>, vector<32x32xf32> -> vector<32x32xf32>
    %c0_43 = arith.constant 0 : index
    %c0_44 = arith.constant 0 : index
    %141 = vector.load %arg9[%c0_43, %c0_44] : memref<1x32xf32, #tpu.memory_space<vmem>>, vector<1x32xf32>
    %142 = vector.broadcast %141 : vector<1x32xf32> to vector<32x32xf32>
    %143 = arith.addf %140, %142 : vector<32x32xf32>
    %c0_45 = arith.constant 0 : index
    %c0_46 = arith.constant 0 : index
    %144 = vector.load %arg10[%c0_45, %c0_46] : memref<1x32xf32, #tpu.memory_space<vmem>>, vector<1x32xf32>
    %c0_47 = arith.constant 0 : index
    %c0_48 = arith.constant 0 : index
    %145 = vector.load %arg11[%c0_47, %c0_48] : memref<1x32xf32, #tpu.memory_space<vmem>>, vector<1x32xf32>
    %c0_49 = arith.constant 0 : index
    %c0_50 = arith.constant 0 : index
    %146 = vector.load %arg12[%c0_49, %c0_50] : memref<32x32xf32, #tpu.memory_space<vmem>>, vector<32x32xf32>
    %147 = vector.extract_strided_slice %143 {offsets = [0, 0], sizes = [16, 32], strides = [1, 1]} : vector<32x32xf32> to vector<16x32xf32>
    %148 = vector.extract_strided_slice %143 {offsets = [16, 0], sizes = [16, 32], strides = [1, 1]} : vector<32x32xf32> to vector<16x32xf32>
    %cst_51 = arith.constant dense<0.000000e+00> : vector<32xf32>
    %149 = vector.multi_reduction <add>, %147, %cst_51 [0] : vector<16x32xf32> to vector<32xf32>
    %150 = vector.shape_cast %149 : vector<32xf32> to vector<1x32xf32>
    %151 = arith.mulf %147, %147 : vector<16x32xf32>
    %cst_52 = arith.constant dense<0.000000e+00> : vector<32xf32>
    %152 = vector.multi_reduction <add>, %151, %cst_52 [0] : vector<16x32xf32> to vector<32xf32>
    %153 = vector.shape_cast %152 : vector<32xf32> to vector<1x32xf32>
    %cst_53 = arith.constant dense<0.000000e+00> : vector<32xf32>
    %154 = vector.multi_reduction <add>, %148, %cst_53 [0] : vector<16x32xf32> to vector<32xf32>
    %155 = vector.shape_cast %154 : vector<32xf32> to vector<1x32xf32>
    %156 = arith.mulf %148, %148 : vector<16x32xf32>
    %cst_54 = arith.constant dense<0.000000e+00> : vector<32xf32>
    %157 = vector.multi_reduction <add>, %156, %cst_54 [0] : vector<16x32xf32> to vector<32xf32>
    %158 = vector.shape_cast %157 : vector<32xf32> to vector<1x32xf32>
    %159 = tpu.concatenate %150, %153, %155, %158 in 0 : vector<1x32xf32>, vector<1x32xf32>, vector<1x32xf32>, vector<1x32xf32> -> vector<4x32xf32>
    %cst_55 = arith.constant dense<0.000000e+00> : vector<4x32xf32>
    %160 = tpu.matmul %159, %146, %cst_55 {dimension_numbers = #tpu.dot_dimension_numbers<[1], [0], [0], [1], [0, 0, 1, 1], [], []>} : vector<4x32xf32>, vector<32x32xf32>, vector<4x32xf32> -> vector<4x32xf32>
    %161 = vector.extract_strided_slice %160 {offsets = [0, 0], sizes = [1, 32], strides = [1, 1]} : vector<4x32xf32> to vector<1x32xf32>
    %162 = vector.extract_strided_slice %160 {offsets = [1, 0], sizes = [1, 32], strides = [1, 1]} : vector<4x32xf32> to vector<1x32xf32>
    %163 = arith.mulf %161, %161 : vector<1x32xf32>
    %164 = arith.subf %162, %163 : vector<1x32xf32>
    %cst_56 = arith.constant 0.000000e+00 : f32
    %165 = vector.broadcast %cst_56 : f32 to vector<1x32xf32>
    %166 = arith.maximumf %164, %165 : vector<1x32xf32>
    %167 = vector.broadcast %161 : vector<1x32xf32> to vector<16x32xf32>
    %168 = arith.subf %147, %167 : vector<16x32xf32>
    %cst_57 = arith.constant 9.99999974E-6 : f32
    %169 = vector.broadcast %cst_57 : f32 to vector<1x32xf32>
    %170 = arith.addf %166, %169 : vector<1x32xf32>
    %171 = math.rsqrt %170 : vector<1x32xf32>
    %172 = vector.broadcast %171 : vector<1x32xf32> to vector<16x32xf32>
    %173 = arith.mulf %168, %172 : vector<16x32xf32>
    %174 = vector.broadcast %144 : vector<1x32xf32> to vector<16x32xf32>
    %175 = arith.mulf %173, %174 : vector<16x32xf32>
    %176 = vector.broadcast %145 : vector<1x32xf32> to vector<16x32xf32>
    %177 = arith.addf %175, %176 : vector<16x32xf32>
    %178 = math.absf %177 : vector<16x32xf32>
    %cst_58 = arith.constant 0.000000e+00 : f32
    %179 = vector.broadcast %cst_58 : f32 to vector<16x32xf32>
    %180 = arith.subf %179, %178 : vector<16x32xf32>
    %181 = math.exp %180 : vector<16x32xf32>
    %182 = math.log1p %181 : vector<16x32xf32>
    %cst_59 = arith.constant 0.000000e+00 : f32
    %183 = vector.broadcast %cst_59 : f32 to vector<16x32xf32>
    %184 = arith.maximumf %177, %183 : vector<16x32xf32>
    %185 = arith.addf %182, %184 : vector<16x32xf32>
    %186 = math.tanh %185 : vector<16x32xf32>
    %187 = arith.mulf %177, %186 : vector<16x32xf32>
    %188 = vector.extract_strided_slice %160 {offsets = [2, 0], sizes = [1, 32], strides = [1, 1]} : vector<4x32xf32> to vector<1x32xf32>
    %189 = vector.extract_strided_slice %160 {offsets = [3, 0], sizes = [1, 32], strides = [1, 1]} : vector<4x32xf32> to vector<1x32xf32>
    %190 = arith.mulf %188, %188 : vector<1x32xf32>
    %191 = arith.subf %189, %190 : vector<1x32xf32>
    %cst_60 = arith.constant 0.000000e+00 : f32
    %192 = vector.broadcast %cst_60 : f32 to vector<1x32xf32>
    %193 = arith.maximumf %191, %192 : vector<1x32xf32>
    %194 = vector.broadcast %188 : vector<1x32xf32> to vector<16x32xf32>
    %195 = arith.subf %148, %194 : vector<16x32xf32>
    %cst_61 = arith.constant 9.99999974E-6 : f32
    %196 = vector.broadcast %cst_61 : f32 to vector<1x32xf32>
    %197 = arith.addf %193, %196 : vector<1x32xf32>
    %198 = math.rsqrt %197 : vector<1x32xf32>
    %199 = vector.broadcast %198 : vector<1x32xf32> to vector<16x32xf32>
    %200 = arith.mulf %195, %199 : vector<16x32xf32>
    %201 = vector.broadcast %144 : vector<1x32xf32> to vector<16x32xf32>
    %202 = arith.mulf %200, %201 : vector<16x32xf32>
    %203 = vector.broadcast %145 : vector<1x32xf32> to vector<16x32xf32>
    %204 = arith.addf %202, %203 : vector<16x32xf32>
    %205 = math.absf %204 : vector<16x32xf32>
    %cst_62 = arith.constant 0.000000e+00 : f32
    %206 = vector.broadcast %cst_62 : f32 to vector<16x32xf32>
    %207 = arith.subf %206, %205 : vector<16x32xf32>
    %208 = math.exp %207 : vector<16x32xf32>
    %209 = math.log1p %208 : vector<16x32xf32>
    %cst_63 = arith.constant 0.000000e+00 : f32
    %210 = vector.broadcast %cst_63 : f32 to vector<16x32xf32>
    %211 = arith.maximumf %204, %210 : vector<16x32xf32>
    %212 = arith.addf %209, %211 : vector<16x32xf32>
    %213 = math.tanh %212 : vector<16x32xf32>
    %214 = arith.mulf %204, %213 : vector<16x32xf32>
    %215 = arith.truncf %18 : vector<16x8xf32> to vector<16x8xbf16>
    %c0_64 = arith.constant 0 : index
    %c0_65 = arith.constant 0 : index
    %216 = vector.load %arg13[%c0_64, %c0_65] : memref<8x32xbf16, #tpu.memory_space<vmem>>, vector<8x32xbf16>
    %cst_66 = arith.constant dense<0.000000e+00> : vector<16x32xf32>
    %217 = tpu.matmul %215, %216, %cst_66 {dimension_numbers = #tpu.dot_dimension_numbers<[1], [0], [0], [1], [0, 0, 1, 1], [], []>} : vector<16x8xbf16>, vector<8x32xbf16>, vector<16x32xf32> -> vector<16x32xf32>
    %c0_67 = arith.constant 0 : index
    %c0_68 = arith.constant 0 : index
    %218 = vector.load %arg14[%c0_67, %c0_68] : memref<1x32xf32, #tpu.memory_space<vmem>>, vector<1x32xf32>
    %219 = vector.broadcast %218 : vector<1x32xf32> to vector<16x32xf32>
    %220 = arith.addf %217, %219 : vector<16x32xf32>
    %221 = arith.addf %187, %220 : vector<16x32xf32>
    %c0_69 = arith.constant 0 : index
    %c0_70 = arith.constant 0 : index
    %c0_71 = arith.constant 0 : index
    %222 = vector.load %arg15[%c0_69, %c0_70, %c0_71] : memref<2x16x32xf32, #tpu.memory_space<vmem>>, vector<1x16x32xf32>
    %223 = vector.shape_cast %222 : vector<1x16x32xf32> to vector<16x32xf32>
    %224 = vector.shape_cast %221 : vector<16x32xf32> to vector<1x16x32xf32>
    tpu.vector_store %arg15[%c0_69, %c0_70, %c0_71], %224 {strides = array<i32>} : memref<2x16x32xf32, #tpu.memory_space<vmem>>, vector<1x16x32xf32>,
    %225 = arith.truncf %20 : vector<16x8xf32> to vector<16x8xbf16>
    %c0_72 = arith.constant 0 : index
    %c0_73 = arith.constant 0 : index
    %226 = vector.load %arg13[%c0_72, %c0_73] : memref<8x32xbf16, #tpu.memory_space<vmem>>, vector<8x32xbf16>
    %cst_74 = arith.constant dense<0.000000e+00> : vector<16x32xf32>
    %227 = tpu.matmul %225, %226, %cst_74 {dimension_numbers = #tpu.dot_dimension_numbers<[1], [0], [0], [1], [0, 0, 1, 1], [], []>} : vector<16x8xbf16>, vector<8x32xbf16>, vector<16x32xf32> -> vector<16x32xf32>
    %c0_75 = arith.constant 0 : index
    %c0_76 = arith.constant 0 : index
    %228 = vector.load %arg14[%c0_75, %c0_76] : memref<1x32xf32, #tpu.memory_space<vmem>>, vector<1x32xf32>
    %229 = vector.broadcast %228 : vector<1x32xf32> to vector<16x32xf32>
    %230 = arith.addf %227, %229 : vector<16x32xf32>
    %231 = arith.addf %214, %230 : vector<16x32xf32>
    %c1_77 = arith.constant 1 : index
    %c0_78 = arith.constant 0 : index
    %c0_79 = arith.constant 0 : index
    %232 = vector.load %arg15[%c1_77, %c0_78, %c0_79] : memref<2x16x32xf32, #tpu.memory_space<vmem>>, vector<1x16x32xf32>
    %233 = vector.shape_cast %232 : vector<1x16x32xf32> to vector<16x32xf32>
    %234 = vector.shape_cast %231 : vector<16x32xf32> to vector<1x16x32xf32>
    tpu.vector_store %arg15[%c1_77, %c0_78, %c0_79], %234 {strides = array<i32>} : memref<2x16x32xf32, #tpu.memory_space<vmem>>, vector<1x16x32xf32>,
    return
  }
}

module attributes {stable_mosaic.version = 11 : i64} {
  func.func @_resblock_kernel_nores(%arg0: memref<2x16x32xf32, #tpu.memory_space<vmem>>, %arg1: memref<2x32xf32, #tpu.memory_space<vmem>>, %arg2: memref<160x32xbf16, #tpu.memory_space<vmem>>, %arg3: memref<1x32xf32, #tpu.memory_space<vmem>>, %arg4: memref<1x32xf32, #tpu.memory_space<vmem>>, %arg5: memref<1x32xf32, #tpu.memory_space<vmem>>, %arg6: memref<32x32xbf16, #tpu.memory_space<vmem>>, %arg7: memref<1x32xf32, #tpu.memory_space<vmem>>, %arg8: memref<160x32xbf16, #tpu.memory_space<vmem>>, %arg9: memref<1x32xf32, #tpu.memory_space<vmem>>, %arg10: memref<1x32xf32, #tpu.memory_space<vmem>>, %arg11: memref<1x32xf32, #tpu.memory_space<vmem>>, %arg12: memref<32x32xf32, #tpu.memory_space<vmem>>, %arg13: memref<2x16x32xf32, #tpu.memory_space<vmem>>) attributes {dimension_semantics = [], scalar_prefetch = 0 : i64, scratch_operands = 0 : i64, tpu.core_type = #tpu.core_type<tc>} {
    %c0 = arith.constant 0 : index
    %c0_0 = arith.constant 0 : index
    %0 = vector.load %arg1[%c0, %c0_0] : memref<2x32xf32, #tpu.memory_space<vmem>>, vector<2x32xf32>
    %1 = math.absf %0 : vector<2x32xf32>
    %cst = arith.constant 0.000000e+00 : f32
    %2 = vector.broadcast %cst : f32 to vector<2x32xf32>
    %3 = arith.subf %2, %1 : vector<2x32xf32>
    %4 = math.exp %3 : vector<2x32xf32>
    %5 = math.log1p %4 : vector<2x32xf32>
    %cst_1 = arith.constant 0.000000e+00 : f32
    %6 = vector.broadcast %cst_1 : f32 to vector<2x32xf32>
    %7 = arith.maximumf %0, %6 : vector<2x32xf32>
    %8 = arith.addf %5, %7 : vector<2x32xf32>
    %9 = math.tanh %8 : vector<2x32xf32>
    %10 = arith.mulf %0, %9 : vector<2x32xf32>
    %11 = arith.truncf %10 : vector<2x32xf32> to vector<2x32xbf16>
    %c0_2 = arith.constant 0 : index
    %c0_3 = arith.constant 0 : index
    %12 = vector.load %arg6[%c0_2, %c0_3] : memref<32x32xbf16, #tpu.memory_space<vmem>>, vector<32x32xbf16>
    %cst_4 = arith.constant dense<0.000000e+00> : vector<2x32xf32>
    %13 = tpu.matmul %11, %12, %cst_4 {dimension_numbers = #tpu.dot_dimension_numbers<[1], [0], [0], [1], [0, 0, 1, 1], [], []>} : vector<2x32xbf16>, vector<32x32xbf16>, vector<2x32xf32> -> vector<2x32xf32>
    %c0_5 = arith.constant 0 : index
    %c0_6 = arith.constant 0 : index
    %14 = vector.load %arg7[%c0_5, %c0_6] : memref<1x32xf32, #tpu.memory_space<vmem>>, vector<1x32xf32>
    %15 = vector.broadcast %14 : vector<1x32xf32> to vector<2x32xf32>
    %16 = arith.addf %13, %15 : vector<2x32xf32>
    %c0_7 = arith.constant 0 : index
    %c0_8 = arith.constant 0 : index
    %c0_9 = arith.constant 0 : index
    %17 = vector.load %arg0[%c0_7, %c0_8, %c0_9] : memref<2x16x32xf32, #tpu.memory_space<vmem>>, vector<1x16x32xf32>
    %18 = vector.shape_cast %17 : vector<1x16x32xf32> to vector<16x32xf32>
    %c1 = arith.constant 1 : index
    %c0_10 = arith.constant 0 : index
    %c0_11 = arith.constant 0 : index
    %19 = vector.load %arg0[%c1, %c0_10, %c0_11] : memref<2x16x32xf32, #tpu.memory_space<vmem>>, vector<1x16x32xf32>
    %20 = vector.shape_cast %19 : vector<1x16x32xf32> to vector<16x32xf32>
    %cst_12 = arith.constant 0.000000e+00 : f32
    %21 = vector.broadcast %cst_12 : f32 to vector<2x32xf32>
    %22 = tpu.concatenate %21, %18, %21 in 0 : vector<2x32xf32>, vector<16x32xf32>, vector<2x32xf32> -> vector<20x32xf32>
    %23 = vector.extract_strided_slice %22 {offsets = [0, 0], sizes = [16, 32], strides = [1, 1]} : vector<20x32xf32> to vector<16x32xf32>
    %24 = vector.extract_strided_slice %22 {offsets = [1, 0], sizes = [16, 32], strides = [1, 1]} : vector<20x32xf32> to vector<16x32xf32>
    %25 = vector.extract_strided_slice %22 {offsets = [2, 0], sizes = [16, 32], strides = [1, 1]} : vector<20x32xf32> to vector<16x32xf32>
    %26 = vector.extract_strided_slice %22 {offsets = [3, 0], sizes = [16, 32], strides = [1, 1]} : vector<20x32xf32> to vector<16x32xf32>
    %27 = vector.extract_strided_slice %22 {offsets = [4, 0], sizes = [16, 32], strides = [1, 1]} : vector<20x32xf32> to vector<16x32xf32>
    %28 = tpu.concatenate %23, %24, %25, %26, %27 in 1 : vector<16x32xf32>, vector<16x32xf32>, vector<16x32xf32>, vector<16x32xf32>, vector<16x32xf32> -> vector<16x160xf32>
    %cst_13 = arith.constant 0.000000e+00 : f32
    %29 = vector.broadcast %cst_13 : f32 to vector<2x32xf32>
    %30 = tpu.concatenate %29, %20, %29 in 0 : vector<2x32xf32>, vector<16x32xf32>, vector<2x32xf32> -> vector<20x32xf32>
    %31 = vector.extract_strided_slice %30 {offsets = [0, 0], sizes = [16, 32], strides = [1, 1]} : vector<20x32xf32> to vector<16x32xf32>
    %32 = vector.extract_strided_slice %30 {offsets = [1, 0], sizes = [16, 32], strides = [1, 1]} : vector<20x32xf32> to vector<16x32xf32>
    %33 = vector.extract_strided_slice %30 {offsets = [2, 0], sizes = [16, 32], strides = [1, 1]} : vector<20x32xf32> to vector<16x32xf32>
    %34 = vector.extract_strided_slice %30 {offsets = [3, 0], sizes = [16, 32], strides = [1, 1]} : vector<20x32xf32> to vector<16x32xf32>
    %35 = vector.extract_strided_slice %30 {offsets = [4, 0], sizes = [16, 32], strides = [1, 1]} : vector<20x32xf32> to vector<16x32xf32>
    %36 = tpu.concatenate %31, %32, %33, %34, %35 in 1 : vector<16x32xf32>, vector<16x32xf32>, vector<16x32xf32>, vector<16x32xf32>, vector<16x32xf32> -> vector<16x160xf32>
    %37 = tpu.concatenate %28, %36 in 0 : vector<16x160xf32>, vector<16x160xf32> -> vector<32x160xf32>
    %38 = arith.truncf %37 : vector<32x160xf32> to vector<32x160xbf16>
    %c0_14 = arith.constant 0 : index
    %c0_15 = arith.constant 0 : index
    %39 = vector.load %arg2[%c0_14, %c0_15] : memref<160x32xbf16, #tpu.memory_space<vmem>>, vector<160x32xbf16>
    %cst_16 = arith.constant dense<0.000000e+00> : vector<32x32xf32>
    %40 = tpu.matmul %38, %39, %cst_16 {dimension_numbers = #tpu.dot_dimension_numbers<[1], [0], [0], [1], [0, 0, 1, 1], [], []>} : vector<32x160xbf16>, vector<160x32xbf16>, vector<32x32xf32> -> vector<32x32xf32>
    %c0_17 = arith.constant 0 : index
    %c0_18 = arith.constant 0 : index
    %41 = vector.load %arg3[%c0_17, %c0_18] : memref<1x32xf32, #tpu.memory_space<vmem>>, vector<1x32xf32>
    %42 = vector.broadcast %41 : vector<1x32xf32> to vector<32x32xf32>
    %43 = arith.addf %40, %42 : vector<32x32xf32>
    %c0_19 = arith.constant 0 : index
    %c0_20 = arith.constant 0 : index
    %44 = vector.load %arg4[%c0_19, %c0_20] : memref<1x32xf32, #tpu.memory_space<vmem>>, vector<1x32xf32>
    %c0_21 = arith.constant 0 : index
    %c0_22 = arith.constant 0 : index
    %45 = vector.load %arg5[%c0_21, %c0_22] : memref<1x32xf32, #tpu.memory_space<vmem>>, vector<1x32xf32>
    %c0_23 = arith.constant 0 : index
    %c0_24 = arith.constant 0 : index
    %46 = vector.load %arg12[%c0_23, %c0_24] : memref<32x32xf32, #tpu.memory_space<vmem>>, vector<32x32xf32>
    %47 = vector.extract_strided_slice %43 {offsets = [0, 0], sizes = [16, 32], strides = [1, 1]} : vector<32x32xf32> to vector<16x32xf32>
    %48 = vector.extract_strided_slice %43 {offsets = [16, 0], sizes = [16, 32], strides = [1, 1]} : vector<32x32xf32> to vector<16x32xf32>
    %cst_25 = arith.constant dense<0.000000e+00> : vector<32xf32>
    %49 = vector.multi_reduction <add>, %47, %cst_25 [0] : vector<16x32xf32> to vector<32xf32>
    %50 = vector.shape_cast %49 : vector<32xf32> to vector<1x32xf32>
    %51 = arith.mulf %47, %47 : vector<16x32xf32>
    %cst_26 = arith.constant dense<0.000000e+00> : vector<32xf32>
    %52 = vector.multi_reduction <add>, %51, %cst_26 [0] : vector<16x32xf32> to vector<32xf32>
    %53 = vector.shape_cast %52 : vector<32xf32> to vector<1x32xf32>
    %cst_27 = arith.constant dense<0.000000e+00> : vector<32xf32>
    %54 = vector.multi_reduction <add>, %48, %cst_27 [0] : vector<16x32xf32> to vector<32xf32>
    %55 = vector.shape_cast %54 : vector<32xf32> to vector<1x32xf32>
    %56 = arith.mulf %48, %48 : vector<16x32xf32>
    %cst_28 = arith.constant dense<0.000000e+00> : vector<32xf32>
    %57 = vector.multi_reduction <add>, %56, %cst_28 [0] : vector<16x32xf32> to vector<32xf32>
    %58 = vector.shape_cast %57 : vector<32xf32> to vector<1x32xf32>
    %59 = tpu.concatenate %50, %53, %55, %58 in 0 : vector<1x32xf32>, vector<1x32xf32>, vector<1x32xf32>, vector<1x32xf32> -> vector<4x32xf32>
    %cst_29 = arith.constant dense<0.000000e+00> : vector<4x32xf32>
    %60 = tpu.matmul %59, %46, %cst_29 {dimension_numbers = #tpu.dot_dimension_numbers<[1], [0], [0], [1], [0, 0, 1, 1], [], []>} : vector<4x32xf32>, vector<32x32xf32>, vector<4x32xf32> -> vector<4x32xf32>
    %61 = vector.extract_strided_slice %60 {offsets = [0, 0], sizes = [1, 32], strides = [1, 1]} : vector<4x32xf32> to vector<1x32xf32>
    %62 = vector.extract_strided_slice %60 {offsets = [1, 0], sizes = [1, 32], strides = [1, 1]} : vector<4x32xf32> to vector<1x32xf32>
    %63 = arith.mulf %61, %61 : vector<1x32xf32>
    %64 = arith.subf %62, %63 : vector<1x32xf32>
    %cst_30 = arith.constant 0.000000e+00 : f32
    %65 = vector.broadcast %cst_30 : f32 to vector<1x32xf32>
    %66 = arith.maximumf %64, %65 : vector<1x32xf32>
    %67 = vector.broadcast %61 : vector<1x32xf32> to vector<16x32xf32>
    %68 = arith.subf %47, %67 : vector<16x32xf32>
    %cst_31 = arith.constant 9.99999974E-6 : f32
    %69 = vector.broadcast %cst_31 : f32 to vector<1x32xf32>
    %70 = arith.addf %66, %69 : vector<1x32xf32>
    %71 = math.rsqrt %70 : vector<1x32xf32>
    %72 = vector.broadcast %71 : vector<1x32xf32> to vector<16x32xf32>
    %73 = arith.mulf %68, %72 : vector<16x32xf32>
    %74 = vector.broadcast %44 : vector<1x32xf32> to vector<16x32xf32>
    %75 = arith.mulf %73, %74 : vector<16x32xf32>
    %76 = vector.broadcast %45 : vector<1x32xf32> to vector<16x32xf32>
    %77 = arith.addf %75, %76 : vector<16x32xf32>
    %78 = math.absf %77 : vector<16x32xf32>
    %cst_32 = arith.constant 0.000000e+00 : f32
    %79 = vector.broadcast %cst_32 : f32 to vector<16x32xf32>
    %80 = arith.subf %79, %78 : vector<16x32xf32>
    %81 = math.exp %80 : vector<16x32xf32>
    %82 = math.log1p %81 : vector<16x32xf32>
    %cst_33 = arith.constant 0.000000e+00 : f32
    %83 = vector.broadcast %cst_33 : f32 to vector<16x32xf32>
    %84 = arith.maximumf %77, %83 : vector<16x32xf32>
    %85 = arith.addf %82, %84 : vector<16x32xf32>
    %86 = math.tanh %85 : vector<16x32xf32>
    %87 = arith.mulf %77, %86 : vector<16x32xf32>
    %88 = vector.extract_strided_slice %60 {offsets = [2, 0], sizes = [1, 32], strides = [1, 1]} : vector<4x32xf32> to vector<1x32xf32>
    %89 = vector.extract_strided_slice %60 {offsets = [3, 0], sizes = [1, 32], strides = [1, 1]} : vector<4x32xf32> to vector<1x32xf32>
    %90 = arith.mulf %88, %88 : vector<1x32xf32>
    %91 = arith.subf %89, %90 : vector<1x32xf32>
    %cst_34 = arith.constant 0.000000e+00 : f32
    %92 = vector.broadcast %cst_34 : f32 to vector<1x32xf32>
    %93 = arith.maximumf %91, %92 : vector<1x32xf32>
    %94 = vector.broadcast %88 : vector<1x32xf32> to vector<16x32xf32>
    %95 = arith.subf %48, %94 : vector<16x32xf32>
    %cst_35 = arith.constant 9.99999974E-6 : f32
    %96 = vector.broadcast %cst_35 : f32 to vector<1x32xf32>
    %97 = arith.addf %93, %96 : vector<1x32xf32>
    %98 = math.rsqrt %97 : vector<1x32xf32>
    %99 = vector.broadcast %98 : vector<1x32xf32> to vector<16x32xf32>
    %100 = arith.mulf %95, %99 : vector<16x32xf32>
    %101 = vector.broadcast %44 : vector<1x32xf32> to vector<16x32xf32>
    %102 = arith.mulf %100, %101 : vector<16x32xf32>
    %103 = vector.broadcast %45 : vector<1x32xf32> to vector<16x32xf32>
    %104 = arith.addf %102, %103 : vector<16x32xf32>
    %105 = math.absf %104 : vector<16x32xf32>
    %cst_36 = arith.constant 0.000000e+00 : f32
    %106 = vector.broadcast %cst_36 : f32 to vector<16x32xf32>
    %107 = arith.subf %106, %105 : vector<16x32xf32>
    %108 = math.exp %107 : vector<16x32xf32>
    %109 = math.log1p %108 : vector<16x32xf32>
    %cst_37 = arith.constant 0.000000e+00 : f32
    %110 = vector.broadcast %cst_37 : f32 to vector<16x32xf32>
    %111 = arith.maximumf %104, %110 : vector<16x32xf32>
    %112 = arith.addf %109, %111 : vector<16x32xf32>
    %113 = math.tanh %112 : vector<16x32xf32>
    %114 = arith.mulf %104, %113 : vector<16x32xf32>
    %115 = vector.extract_strided_slice %16 {offsets = [0, 0], sizes = [1, 32], strides = [1, 1]} : vector<2x32xf32> to vector<1x32xf32>
    %116 = vector.broadcast %115 : vector<1x32xf32> to vector<16x32xf32>
    %117 = arith.addf %87, %116 : vector<16x32xf32>
    %118 = vector.extract_strided_slice %16 {offsets = [1, 0], sizes = [1, 32], strides = [1, 1]} : vector<2x32xf32> to vector<1x32xf32>
    %119 = vector.broadcast %118 : vector<1x32xf32> to vector<16x32xf32>
    %120 = arith.addf %114, %119 : vector<16x32xf32>
    %cst_38 = arith.constant 0.000000e+00 : f32
    %121 = vector.broadcast %cst_38 : f32 to vector<2x32xf32>
    %122 = tpu.concatenate %121, %117, %121 in 0 : vector<2x32xf32>, vector<16x32xf32>, vector<2x32xf32> -> vector<20x32xf32>
    %123 = vector.extract_strided_slice %122 {offsets = [0, 0], sizes = [16, 32], strides = [1, 1]} : vector<20x32xf32> to vector<16x32xf32>
    %124 = vector.extract_strided_slice %122 {offsets = [1, 0], sizes = [16, 32], strides = [1, 1]} : vector<20x32xf32> to vector<16x32xf32>
    %125 = vector.extract_strided_slice %122 {offsets = [2, 0], sizes = [16, 32], strides = [1, 1]} : vector<20x32xf32> to vector<16x32xf32>
    %126 = vector.extract_strided_slice %122 {offsets = [3, 0], sizes = [16, 32], strides = [1, 1]} : vector<20x32xf32> to vector<16x32xf32>
    %127 = vector.extract_strided_slice %122 {offsets = [4, 0], sizes = [16, 32], strides = [1, 1]} : vector<20x32xf32> to vector<16x32xf32>
    %128 = tpu.concatenate %123, %124, %125, %126, %127 in 1 : vector<16x32xf32>, vector<16x32xf32>, vector<16x32xf32>, vector<16x32xf32>, vector<16x32xf32> -> vector<16x160xf32>
    %cst_39 = arith.constant 0.000000e+00 : f32
    %129 = vector.broadcast %cst_39 : f32 to vector<2x32xf32>
    %130 = tpu.concatenate %129, %120, %129 in 0 : vector<2x32xf32>, vector<16x32xf32>, vector<2x32xf32> -> vector<20x32xf32>
    %131 = vector.extract_strided_slice %130 {offsets = [0, 0], sizes = [16, 32], strides = [1, 1]} : vector<20x32xf32> to vector<16x32xf32>
    %132 = vector.extract_strided_slice %130 {offsets = [1, 0], sizes = [16, 32], strides = [1, 1]} : vector<20x32xf32> to vector<16x32xf32>
    %133 = vector.extract_strided_slice %130 {offsets = [2, 0], sizes = [16, 32], strides = [1, 1]} : vector<20x32xf32> to vector<16x32xf32>
    %134 = vector.extract_strided_slice %130 {offsets = [3, 0], sizes = [16, 32], strides = [1, 1]} : vector<20x32xf32> to vector<16x32xf32>
    %135 = vector.extract_strided_slice %130 {offsets = [4, 0], sizes = [16, 32], strides = [1, 1]} : vector<20x32xf32> to vector<16x32xf32>
    %136 = tpu.concatenate %131, %132, %133, %134, %135 in 1 : vector<16x32xf32>, vector<16x32xf32>, vector<16x32xf32>, vector<16x32xf32>, vector<16x32xf32> -> vector<16x160xf32>
    %137 = tpu.concatenate %128, %136 in 0 : vector<16x160xf32>, vector<16x160xf32> -> vector<32x160xf32>
    %138 = arith.truncf %137 : vector<32x160xf32> to vector<32x160xbf16>
    %c0_40 = arith.constant 0 : index
    %c0_41 = arith.constant 0 : index
    %139 = vector.load %arg8[%c0_40, %c0_41] : memref<160x32xbf16, #tpu.memory_space<vmem>>, vector<160x32xbf16>
    %cst_42 = arith.constant dense<0.000000e+00> : vector<32x32xf32>
    %140 = tpu.matmul %138, %139, %cst_42 {dimension_numbers = #tpu.dot_dimension_numbers<[1], [0], [0], [1], [0, 0, 1, 1], [], []>} : vector<32x160xbf16>, vector<160x32xbf16>, vector<32x32xf32> -> vector<32x32xf32>
    %c0_43 = arith.constant 0 : index
    %c0_44 = arith.constant 0 : index
    %141 = vector.load %arg9[%c0_43, %c0_44] : memref<1x32xf32, #tpu.memory_space<vmem>>, vector<1x32xf32>
    %142 = vector.broadcast %141 : vector<1x32xf32> to vector<32x32xf32>
    %143 = arith.addf %140, %142 : vector<32x32xf32>
    %c0_45 = arith.constant 0 : index
    %c0_46 = arith.constant 0 : index
    %144 = vector.load %arg10[%c0_45, %c0_46] : memref<1x32xf32, #tpu.memory_space<vmem>>, vector<1x32xf32>
    %c0_47 = arith.constant 0 : index
    %c0_48 = arith.constant 0 : index
    %145 = vector.load %arg11[%c0_47, %c0_48] : memref<1x32xf32, #tpu.memory_space<vmem>>, vector<1x32xf32>
    %c0_49 = arith.constant 0 : index
    %c0_50 = arith.constant 0 : index
    %146 = vector.load %arg12[%c0_49, %c0_50] : memref<32x32xf32, #tpu.memory_space<vmem>>, vector<32x32xf32>
    %147 = vector.extract_strided_slice %143 {offsets = [0, 0], sizes = [16, 32], strides = [1, 1]} : vector<32x32xf32> to vector<16x32xf32>
    %148 = vector.extract_strided_slice %143 {offsets = [16, 0], sizes = [16, 32], strides = [1, 1]} : vector<32x32xf32> to vector<16x32xf32>
    %cst_51 = arith.constant dense<0.000000e+00> : vector<32xf32>
    %149 = vector.multi_reduction <add>, %147, %cst_51 [0] : vector<16x32xf32> to vector<32xf32>
    %150 = vector.shape_cast %149 : vector<32xf32> to vector<1x32xf32>
    %151 = arith.mulf %147, %147 : vector<16x32xf32>
    %cst_52 = arith.constant dense<0.000000e+00> : vector<32xf32>
    %152 = vector.multi_reduction <add>, %151, %cst_52 [0] : vector<16x32xf32> to vector<32xf32>
    %153 = vector.shape_cast %152 : vector<32xf32> to vector<1x32xf32>
    %cst_53 = arith.constant dense<0.000000e+00> : vector<32xf32>
    %154 = vector.multi_reduction <add>, %148, %cst_53 [0] : vector<16x32xf32> to vector<32xf32>
    %155 = vector.shape_cast %154 : vector<32xf32> to vector<1x32xf32>
    %156 = arith.mulf %148, %148 : vector<16x32xf32>
    %cst_54 = arith.constant dense<0.000000e+00> : vector<32xf32>
    %157 = vector.multi_reduction <add>, %156, %cst_54 [0] : vector<16x32xf32> to vector<32xf32>
    %158 = vector.shape_cast %157 : vector<32xf32> to vector<1x32xf32>
    %159 = tpu.concatenate %150, %153, %155, %158 in 0 : vector<1x32xf32>, vector<1x32xf32>, vector<1x32xf32>, vector<1x32xf32> -> vector<4x32xf32>
    %cst_55 = arith.constant dense<0.000000e+00> : vector<4x32xf32>
    %160 = tpu.matmul %159, %146, %cst_55 {dimension_numbers = #tpu.dot_dimension_numbers<[1], [0], [0], [1], [0, 0, 1, 1], [], []>} : vector<4x32xf32>, vector<32x32xf32>, vector<4x32xf32> -> vector<4x32xf32>
    %161 = vector.extract_strided_slice %160 {offsets = [0, 0], sizes = [1, 32], strides = [1, 1]} : vector<4x32xf32> to vector<1x32xf32>
    %162 = vector.extract_strided_slice %160 {offsets = [1, 0], sizes = [1, 32], strides = [1, 1]} : vector<4x32xf32> to vector<1x32xf32>
    %163 = arith.mulf %161, %161 : vector<1x32xf32>
    %164 = arith.subf %162, %163 : vector<1x32xf32>
    %cst_56 = arith.constant 0.000000e+00 : f32
    %165 = vector.broadcast %cst_56 : f32 to vector<1x32xf32>
    %166 = arith.maximumf %164, %165 : vector<1x32xf32>
    %167 = vector.broadcast %161 : vector<1x32xf32> to vector<16x32xf32>
    %168 = arith.subf %147, %167 : vector<16x32xf32>
    %cst_57 = arith.constant 9.99999974E-6 : f32
    %169 = vector.broadcast %cst_57 : f32 to vector<1x32xf32>
    %170 = arith.addf %166, %169 : vector<1x32xf32>
    %171 = math.rsqrt %170 : vector<1x32xf32>
    %172 = vector.broadcast %171 : vector<1x32xf32> to vector<16x32xf32>
    %173 = arith.mulf %168, %172 : vector<16x32xf32>
    %174 = vector.broadcast %144 : vector<1x32xf32> to vector<16x32xf32>
    %175 = arith.mulf %173, %174 : vector<16x32xf32>
    %176 = vector.broadcast %145 : vector<1x32xf32> to vector<16x32xf32>
    %177 = arith.addf %175, %176 : vector<16x32xf32>
    %178 = math.absf %177 : vector<16x32xf32>
    %cst_58 = arith.constant 0.000000e+00 : f32
    %179 = vector.broadcast %cst_58 : f32 to vector<16x32xf32>
    %180 = arith.subf %179, %178 : vector<16x32xf32>
    %181 = math.exp %180 : vector<16x32xf32>
    %182 = math.log1p %181 : vector<16x32xf32>
    %cst_59 = arith.constant 0.000000e+00 : f32
    %183 = vector.broadcast %cst_59 : f32 to vector<16x32xf32>
    %184 = arith.maximumf %177, %183 : vector<16x32xf32>
    %185 = arith.addf %182, %184 : vector<16x32xf32>
    %186 = math.tanh %185 : vector<16x32xf32>
    %187 = arith.mulf %177, %186 : vector<16x32xf32>
    %188 = vector.extract_strided_slice %160 {offsets = [2, 0], sizes = [1, 32], strides = [1, 1]} : vector<4x32xf32> to vector<1x32xf32>
    %189 = vector.extract_strided_slice %160 {offsets = [3, 0], sizes = [1, 32], strides = [1, 1]} : vector<4x32xf32> to vector<1x32xf32>
    %190 = arith.mulf %188, %188 : vector<1x32xf32>
    %191 = arith.subf %189, %190 : vector<1x32xf32>
    %cst_60 = arith.constant 0.000000e+00 : f32
    %192 = vector.broadcast %cst_60 : f32 to vector<1x32xf32>
    %193 = arith.maximumf %191, %192 : vector<1x32xf32>
    %194 = vector.broadcast %188 : vector<1x32xf32> to vector<16x32xf32>
    %195 = arith.subf %148, %194 : vector<16x32xf32>
    %cst_61 = arith.constant 9.99999974E-6 : f32
    %196 = vector.broadcast %cst_61 : f32 to vector<1x32xf32>
    %197 = arith.addf %193, %196 : vector<1x32xf32>
    %198 = math.rsqrt %197 : vector<1x32xf32>
    %199 = vector.broadcast %198 : vector<1x32xf32> to vector<16x32xf32>
    %200 = arith.mulf %195, %199 : vector<16x32xf32>
    %201 = vector.broadcast %144 : vector<1x32xf32> to vector<16x32xf32>
    %202 = arith.mulf %200, %201 : vector<16x32xf32>
    %203 = vector.broadcast %145 : vector<1x32xf32> to vector<16x32xf32>
    %204 = arith.addf %202, %203 : vector<16x32xf32>
    %205 = math.absf %204 : vector<16x32xf32>
    %cst_62 = arith.constant 0.000000e+00 : f32
    %206 = vector.broadcast %cst_62 : f32 to vector<16x32xf32>
    %207 = arith.subf %206, %205 : vector<16x32xf32>
    %208 = math.exp %207 : vector<16x32xf32>
    %209 = math.log1p %208 : vector<16x32xf32>
    %cst_63 = arith.constant 0.000000e+00 : f32
    %210 = vector.broadcast %cst_63 : f32 to vector<16x32xf32>
    %211 = arith.maximumf %204, %210 : vector<16x32xf32>
    %212 = arith.addf %209, %211 : vector<16x32xf32>
    %213 = math.tanh %212 : vector<16x32xf32>
    %214 = arith.mulf %204, %213 : vector<16x32xf32>
    %215 = arith.addf %187, %18 : vector<16x32xf32>
    %c0_64 = arith.constant 0 : index
    %c0_65 = arith.constant 0 : index
    %c0_66 = arith.constant 0 : index
    %216 = vector.load %arg13[%c0_64, %c0_65, %c0_66] : memref<2x16x32xf32, #tpu.memory_space<vmem>>, vector<1x16x32xf32>
    %217 = vector.shape_cast %216 : vector<1x16x32xf32> to vector<16x32xf32>
    %218 = vector.shape_cast %215 : vector<16x32xf32> to vector<1x16x32xf32>
    tpu.vector_store %arg13[%c0_64, %c0_65, %c0_66], %218 {strides = array<i32>} : memref<2x16x32xf32, #tpu.memory_space<vmem>>, vector<1x16x32xf32>,
    %219 = arith.addf %214, %20 : vector<16x32xf32>
    %c1_67 = arith.constant 1 : index
    %c0_68 = arith.constant 0 : index
    %c0_69 = arith.constant 0 : index
    %220 = vector.load %arg13[%c1_67, %c0_68, %c0_69] : memref<2x16x32xf32, #tpu.memory_space<vmem>>, vector<1x16x32xf32>
    %221 = vector.shape_cast %220 : vector<1x16x32xf32> to vector<16x32xf32>
    %222 = vector.shape_cast %219 : vector<16x32xf32> to vector<1x16x32xf32>
    tpu.vector_store %arg13[%c1_67, %c0_68, %c0_69], %222 {strides = array<i32>} : memref<2x16x32xf32, #tpu.memory_space<vmem>>, vector<1x16x32xf32>,
    return
  }
}

module attributes {stable_mosaic.version = 11 : i64} {
  func.func @_matmul_bias_kernel(%arg0: memref<16x96xf32, #tpu.memory_space<vmem>>, %arg1: memref<96x32xbf16, #tpu.memory_space<vmem>>, %arg2: memref<1x32xf32, #tpu.memory_space<vmem>>, %arg3: memref<16x32xf32, #tpu.memory_space<vmem>>) attributes {dimension_semantics = [], scalar_prefetch = 0 : i64, scratch_operands = 0 : i64, tpu.core_type = #tpu.core_type<tc>} {
    %c0 = arith.constant 0 : index
    %c0_0 = arith.constant 0 : index
    %0 = vector.load %arg0[%c0, %c0_0] : memref<16x96xf32, #tpu.memory_space<vmem>>, vector<16x96xf32>
    %1 = arith.truncf %0 : vector<16x96xf32> to vector<16x96xbf16>
    %c0_1 = arith.constant 0 : index
    %c0_2 = arith.constant 0 : index
    %2 = vector.load %arg1[%c0_1, %c0_2] : memref<96x32xbf16, #tpu.memory_space<vmem>>, vector<96x32xbf16>
    %cst = arith.constant dense<0.000000e+00> : vector<16x32xf32>
    %3 = tpu.matmul %1, %2, %cst {dimension_numbers = #tpu.dot_dimension_numbers<[1], [0], [0], [1], [0, 0, 1, 1], [], []>} : vector<16x96xbf16>, vector<96x32xbf16>, vector<16x32xf32> -> vector<16x32xf32>
    %c0_3 = arith.constant 0 : index
    %c0_4 = arith.constant 0 : index
    %4 = vector.load %arg2[%c0_3, %c0_4] : memref<1x32xf32, #tpu.memory_space<vmem>>, vector<1x32xf32>
    %5 = vector.broadcast %4 : vector<1x32xf32> to vector<16x32xf32>
    %6 = arith.addf %3, %5 : vector<16x32xf32>
    %c0_5 = arith.constant 0 : index
    %c0_6 = arith.constant 0 : index
    %7 = vector.load %arg3[%c0_5, %c0_6] : memref<16x32xf32, #tpu.memory_space<vmem>>, vector<16x32xf32>
    tpu.vector_store %arg3[%c0_5, %c0_6], %6 {strides = array<i32>} : memref<16x32xf32, #tpu.memory_space<vmem>>, vector<16x32xf32>,
    return
  }
}

module attributes {stable_mosaic.version = 11 : i64} {
  func.func @_resblock_kernel_res(%arg0: memref<2x8x32xf32, #tpu.memory_space<vmem>>, %arg1: memref<2x32xf32, #tpu.memory_space<vmem>>, %arg2: memref<160x64xbf16, #tpu.memory_space<vmem>>, %arg3: memref<1x64xf32, #tpu.memory_space<vmem>>, %arg4: memref<1x64xf32, #tpu.memory_space<vmem>>, %arg5: memref<1x64xf32, #tpu.memory_space<vmem>>, %arg6: memref<32x64xbf16, #tpu.memory_space<vmem>>, %arg7: memref<1x64xf32, #tpu.memory_space<vmem>>, %arg8: memref<320x64xbf16, #tpu.memory_space<vmem>>, %arg9: memref<1x64xf32, #tpu.memory_space<vmem>>, %arg10: memref<1x64xf32, #tpu.memory_space<vmem>>, %arg11: memref<1x64xf32, #tpu.memory_space<vmem>>, %arg12: memref<64x64xf32, #tpu.memory_space<vmem>>, %arg13: memref<32x64xbf16, #tpu.memory_space<vmem>>, %arg14: memref<1x64xf32, #tpu.memory_space<vmem>>, %arg15: memref<2x8x64xf32, #tpu.memory_space<vmem>>) attributes {dimension_semantics = [], scalar_prefetch = 0 : i64, scratch_operands = 0 : i64, tpu.core_type = #tpu.core_type<tc>} {
    %c0 = arith.constant 0 : index
    %c0_0 = arith.constant 0 : index
    %0 = vector.load %arg1[%c0, %c0_0] : memref<2x32xf32, #tpu.memory_space<vmem>>, vector<2x32xf32>
    %1 = math.absf %0 : vector<2x32xf32>
    %cst = arith.constant 0.000000e+00 : f32
    %2 = vector.broadcast %cst : f32 to vector<2x32xf32>
    %3 = arith.subf %2, %1 : vector<2x32xf32>
    %4 = math.exp %3 : vector<2x32xf32>
    %5 = math.log1p %4 : vector<2x32xf32>
    %cst_1 = arith.constant 0.000000e+00 : f32
    %6 = vector.broadcast %cst_1 : f32 to vector<2x32xf32>
    %7 = arith.maximumf %0, %6 : vector<2x32xf32>
    %8 = arith.addf %5, %7 : vector<2x32xf32>
    %9 = math.tanh %8 : vector<2x32xf32>
    %10 = arith.mulf %0, %9 : vector<2x32xf32>
    %11 = arith.truncf %10 : vector<2x32xf32> to vector<2x32xbf16>
    %c0_2 = arith.constant 0 : index
    %c0_3 = arith.constant 0 : index
    %12 = vector.load %arg6[%c0_2, %c0_3] : memref<32x64xbf16, #tpu.memory_space<vmem>>, vector<32x64xbf16>
    %cst_4 = arith.constant dense<0.000000e+00> : vector<2x64xf32>
    %13 = tpu.matmul %11, %12, %cst_4 {dimension_numbers = #tpu.dot_dimension_numbers<[1], [0], [0], [1], [0, 0, 1, 1], [], []>} : vector<2x32xbf16>, vector<32x64xbf16>, vector<2x64xf32> -> vector<2x64xf32>
    %c0_5 = arith.constant 0 : index
    %c0_6 = arith.constant 0 : index
    %14 = vector.load %arg7[%c0_5, %c0_6] : memref<1x64xf32, #tpu.memory_space<vmem>>, vector<1x64xf32>
    %15 = vector.broadcast %14 : vector<1x64xf32> to vector<2x64xf32>
    %16 = arith.addf %13, %15 : vector<2x64xf32>
    %c0_7 = arith.constant 0 : index
    %c0_8 = arith.constant 0 : index
    %c0_9 = arith.constant 0 : index
    %17 = vector.load %arg0[%c0_7, %c0_8, %c0_9] : memref<2x8x32xf32, #tpu.memory_space<vmem>>, vector<1x8x32xf32>
    %18 = vector.shape_cast %17 : vector<1x8x32xf32> to vector<8x32xf32>
    %c1 = arith.constant 1 : index
    %c0_10 = arith.constant 0 : index
    %c0_11 = arith.constant 0 : index
    %19 = vector.load %arg0[%c1, %c0_10, %c0_11] : memref<2x8x32xf32, #tpu.memory_space<vmem>>, vector<1x8x32xf32>
    %20 = vector.shape_cast %19 : vector<1x8x32xf32> to vector<8x32xf32>
    %cst_12 = arith.constant 0.000000e+00 : f32
    %21 = vector.broadcast %cst_12 : f32 to vector<2x32xf32>
    %22 = tpu.concatenate %21, %18, %21 in 0 : vector<2x32xf32>, vector<8x32xf32>, vector<2x32xf32> -> vector<12x32xf32>
    %23 = vector.extract_strided_slice %22 {offsets = [0, 0], sizes = [8, 32], strides = [1, 1]} : vector<12x32xf32> to vector<8x32xf32>
    %24 = vector.extract_strided_slice %22 {offsets = [1, 0], sizes = [8, 32], strides = [1, 1]} : vector<12x32xf32> to vector<8x32xf32>
    %25 = vector.extract_strided_slice %22 {offsets = [2, 0], sizes = [8, 32], strides = [1, 1]} : vector<12x32xf32> to vector<8x32xf32>
    %26 = vector.extract_strided_slice %22 {offsets = [3, 0], sizes = [8, 32], strides = [1, 1]} : vector<12x32xf32> to vector<8x32xf32>
    %27 = vector.extract_strided_slice %22 {offsets = [4, 0], sizes = [8, 32], strides = [1, 1]} : vector<12x32xf32> to vector<8x32xf32>
    %28 = tpu.concatenate %23, %24, %25, %26, %27 in 1 : vector<8x32xf32>, vector<8x32xf32>, vector<8x32xf32>, vector<8x32xf32>, vector<8x32xf32> -> vector<8x160xf32>
    %cst_13 = arith.constant 0.000000e+00 : f32
    %29 = vector.broadcast %cst_13 : f32 to vector<2x32xf32>
    %30 = tpu.concatenate %29, %20, %29 in 0 : vector<2x32xf32>, vector<8x32xf32>, vector<2x32xf32> -> vector<12x32xf32>
    %31 = vector.extract_strided_slice %30 {offsets = [0, 0], sizes = [8, 32], strides = [1, 1]} : vector<12x32xf32> to vector<8x32xf32>
    %32 = vector.extract_strided_slice %30 {offsets = [1, 0], sizes = [8, 32], strides = [1, 1]} : vector<12x32xf32> to vector<8x32xf32>
    %33 = vector.extract_strided_slice %30 {offsets = [2, 0], sizes = [8, 32], strides = [1, 1]} : vector<12x32xf32> to vector<8x32xf32>
    %34 = vector.extract_strided_slice %30 {offsets = [3, 0], sizes = [8, 32], strides = [1, 1]} : vector<12x32xf32> to vector<8x32xf32>
    %35 = vector.extract_strided_slice %30 {offsets = [4, 0], sizes = [8, 32], strides = [1, 1]} : vector<12x32xf32> to vector<8x32xf32>
    %36 = tpu.concatenate %31, %32, %33, %34, %35 in 1 : vector<8x32xf32>, vector<8x32xf32>, vector<8x32xf32>, vector<8x32xf32>, vector<8x32xf32> -> vector<8x160xf32>
    %37 = tpu.concatenate %28, %36 in 0 : vector<8x160xf32>, vector<8x160xf32> -> vector<16x160xf32>
    %38 = arith.truncf %37 : vector<16x160xf32> to vector<16x160xbf16>
    %c0_14 = arith.constant 0 : index
    %c0_15 = arith.constant 0 : index
    %39 = vector.load %arg2[%c0_14, %c0_15] : memref<160x64xbf16, #tpu.memory_space<vmem>>, vector<160x64xbf16>
    %cst_16 = arith.constant dense<0.000000e+00> : vector<16x64xf32>
    %40 = tpu.matmul %38, %39, %cst_16 {dimension_numbers = #tpu.dot_dimension_numbers<[1], [0], [0], [1], [0, 0, 1, 1], [], []>} : vector<16x160xbf16>, vector<160x64xbf16>, vector<16x64xf32> -> vector<16x64xf32>
    %c0_17 = arith.constant 0 : index
    %c0_18 = arith.constant 0 : index
    %41 = vector.load %arg3[%c0_17, %c0_18] : memref<1x64xf32, #tpu.memory_space<vmem>>, vector<1x64xf32>
    %42 = vector.broadcast %41 : vector<1x64xf32> to vector<16x64xf32>
    %43 = arith.addf %40, %42 : vector<16x64xf32>
    %c0_19 = arith.constant 0 : index
    %c0_20 = arith.constant 0 : index
    %44 = vector.load %arg4[%c0_19, %c0_20] : memref<1x64xf32, #tpu.memory_space<vmem>>, vector<1x64xf32>
    %c0_21 = arith.constant 0 : index
    %c0_22 = arith.constant 0 : index
    %45 = vector.load %arg5[%c0_21, %c0_22] : memref<1x64xf32, #tpu.memory_space<vmem>>, vector<1x64xf32>
    %c0_23 = arith.constant 0 : index
    %c0_24 = arith.constant 0 : index
    %46 = vector.load %arg12[%c0_23, %c0_24] : memref<64x64xf32, #tpu.memory_space<vmem>>, vector<64x64xf32>
    %47 = vector.extract_strided_slice %43 {offsets = [0, 0], sizes = [8, 64], strides = [1, 1]} : vector<16x64xf32> to vector<8x64xf32>
    %48 = vector.extract_strided_slice %43 {offsets = [8, 0], sizes = [8, 64], strides = [1, 1]} : vector<16x64xf32> to vector<8x64xf32>
    %cst_25 = arith.constant dense<0.000000e+00> : vector<64xf32>
    %49 = vector.multi_reduction <add>, %47, %cst_25 [0] : vector<8x64xf32> to vector<64xf32>
    %50 = vector.shape_cast %49 : vector<64xf32> to vector<1x64xf32>
    %51 = arith.mulf %47, %47 : vector<8x64xf32>
    %cst_26 = arith.constant dense<0.000000e+00> : vector<64xf32>
    %52 = vector.multi_reduction <add>, %51, %cst_26 [0] : vector<8x64xf32> to vector<64xf32>
    %53 = vector.shape_cast %52 : vector<64xf32> to vector<1x64xf32>
    %cst_27 = arith.constant dense<0.000000e+00> : vector<64xf32>
    %54 = vector.multi_reduction <add>, %48, %cst_27 [0] : vector<8x64xf32> to vector<64xf32>
    %55 = vector.shape_cast %54 : vector<64xf32> to vector<1x64xf32>
    %56 = arith.mulf %48, %48 : vector<8x64xf32>
    %cst_28 = arith.constant dense<0.000000e+00> : vector<64xf32>
    %57 = vector.multi_reduction <add>, %56, %cst_28 [0] : vector<8x64xf32> to vector<64xf32>
    %58 = vector.shape_cast %57 : vector<64xf32> to vector<1x64xf32>
    %59 = tpu.concatenate %50, %53, %55, %58 in 0 : vector<1x64xf32>, vector<1x64xf32>, vector<1x64xf32>, vector<1x64xf32> -> vector<4x64xf32>
    %cst_29 = arith.constant dense<0.000000e+00> : vector<4x64xf32>
    %60 = tpu.matmul %59, %46, %cst_29 {dimension_numbers = #tpu.dot_dimension_numbers<[1], [0], [0], [1], [0, 0, 1, 1], [], []>} : vector<4x64xf32>, vector<64x64xf32>, vector<4x64xf32> -> vector<4x64xf32>
    %61 = vector.extract_strided_slice %60 {offsets = [0, 0], sizes = [1, 64], strides = [1, 1]} : vector<4x64xf32> to vector<1x64xf32>
    %62 = vector.extract_strided_slice %60 {offsets = [1, 0], sizes = [1, 64], strides = [1, 1]} : vector<4x64xf32> to vector<1x64xf32>
    %63 = arith.mulf %61, %61 : vector<1x64xf32>
    %64 = arith.subf %62, %63 : vector<1x64xf32>
    %cst_30 = arith.constant 0.000000e+00 : f32
    %65 = vector.broadcast %cst_30 : f32 to vector<1x64xf32>
    %66 = arith.maximumf %64, %65 : vector<1x64xf32>
    %67 = vector.broadcast %61 : vector<1x64xf32> to vector<8x64xf32>
    %68 = arith.subf %47, %67 : vector<8x64xf32>
    %cst_31 = arith.constant 9.99999974E-6 : f32
    %69 = vector.broadcast %cst_31 : f32 to vector<1x64xf32>
    %70 = arith.addf %66, %69 : vector<1x64xf32>
    %71 = math.rsqrt %70 : vector<1x64xf32>
    %72 = vector.broadcast %71 : vector<1x64xf32> to vector<8x64xf32>
    %73 = arith.mulf %68, %72 : vector<8x64xf32>
    %74 = vector.broadcast %44 : vector<1x64xf32> to vector<8x64xf32>
    %75 = arith.mulf %73, %74 : vector<8x64xf32>
    %76 = vector.broadcast %45 : vector<1x64xf32> to vector<8x64xf32>
    %77 = arith.addf %75, %76 : vector<8x64xf32>
    %78 = math.absf %77 : vector<8x64xf32>
    %cst_32 = arith.constant 0.000000e+00 : f32
    %79 = vector.broadcast %cst_32 : f32 to vector<8x64xf32>
    %80 = arith.subf %79, %78 : vector<8x64xf32>
    %81 = math.exp %80 : vector<8x64xf32>
    %82 = math.log1p %81 : vector<8x64xf32>
    %cst_33 = arith.constant 0.000000e+00 : f32
    %83 = vector.broadcast %cst_33 : f32 to vector<8x64xf32>
    %84 = arith.maximumf %77, %83 : vector<8x64xf32>
    %85 = arith.addf %82, %84 : vector<8x64xf32>
    %86 = math.tanh %85 : vector<8x64xf32>
    %87 = arith.mulf %77, %86 : vector<8x64xf32>
    %88 = vector.extract_strided_slice %60 {offsets = [2, 0], sizes = [1, 64], strides = [1, 1]} : vector<4x64xf32> to vector<1x64xf32>
    %89 = vector.extract_strided_slice %60 {offsets = [3, 0], sizes = [1, 64], strides = [1, 1]} : vector<4x64xf32> to vector<1x64xf32>
    %90 = arith.mulf %88, %88 : vector<1x64xf32>
    %91 = arith.subf %89, %90 : vector<1x64xf32>
    %cst_34 = arith.constant 0.000000e+00 : f32
    %92 = vector.broadcast %cst_34 : f32 to vector<1x64xf32>
    %93 = arith.maximumf %91, %92 : vector<1x64xf32>
    %94 = vector.broadcast %88 : vector<1x64xf32> to vector<8x64xf32>
    %95 = arith.subf %48, %94 : vector<8x64xf32>
    %cst_35 = arith.constant 9.99999974E-6 : f32
    %96 = vector.broadcast %cst_35 : f32 to vector<1x64xf32>
    %97 = arith.addf %93, %96 : vector<1x64xf32>
    %98 = math.rsqrt %97 : vector<1x64xf32>
    %99 = vector.broadcast %98 : vector<1x64xf32> to vector<8x64xf32>
    %100 = arith.mulf %95, %99 : vector<8x64xf32>
    %101 = vector.broadcast %44 : vector<1x64xf32> to vector<8x64xf32>
    %102 = arith.mulf %100, %101 : vector<8x64xf32>
    %103 = vector.broadcast %45 : vector<1x64xf32> to vector<8x64xf32>
    %104 = arith.addf %102, %103 : vector<8x64xf32>
    %105 = math.absf %104 : vector<8x64xf32>
    %cst_36 = arith.constant 0.000000e+00 : f32
    %106 = vector.broadcast %cst_36 : f32 to vector<8x64xf32>
    %107 = arith.subf %106, %105 : vector<8x64xf32>
    %108 = math.exp %107 : vector<8x64xf32>
    %109 = math.log1p %108 : vector<8x64xf32>
    %cst_37 = arith.constant 0.000000e+00 : f32
    %110 = vector.broadcast %cst_37 : f32 to vector<8x64xf32>
    %111 = arith.maximumf %104, %110 : vector<8x64xf32>
    %112 = arith.addf %109, %111 : vector<8x64xf32>
    %113 = math.tanh %112 : vector<8x64xf32>
    %114 = arith.mulf %104, %113 : vector<8x64xf32>
    %115 = vector.extract_strided_slice %16 {offsets = [0, 0], sizes = [1, 64], strides = [1, 1]} : vector<2x64xf32> to vector<1x64xf32>
    %116 = vector.broadcast %115 : vector<1x64xf32> to vector<8x64xf32>
    %117 = arith.addf %87, %116 : vector<8x64xf32>
    %118 = vector.extract_strided_slice %16 {offsets = [1, 0], sizes = [1, 64], strides = [1, 1]} : vector<2x64xf32> to vector<1x64xf32>
    %119 = vector.broadcast %118 : vector<1x64xf32> to vector<8x64xf32>
    %120 = arith.addf %114, %119 : vector<8x64xf32>
    %cst_38 = arith.constant 0.000000e+00 : f32
    %121 = vector.broadcast %cst_38 : f32 to vector<2x64xf32>
    %122 = tpu.concatenate %121, %117, %121 in 0 : vector<2x64xf32>, vector<8x64xf32>, vector<2x64xf32> -> vector<12x64xf32>
    %123 = vector.extract_strided_slice %122 {offsets = [0, 0], sizes = [8, 64], strides = [1, 1]} : vector<12x64xf32> to vector<8x64xf32>
    %124 = vector.extract_strided_slice %122 {offsets = [1, 0], sizes = [8, 64], strides = [1, 1]} : vector<12x64xf32> to vector<8x64xf32>
    %125 = vector.extract_strided_slice %122 {offsets = [2, 0], sizes = [8, 64], strides = [1, 1]} : vector<12x64xf32> to vector<8x64xf32>
    %126 = vector.extract_strided_slice %122 {offsets = [3, 0], sizes = [8, 64], strides = [1, 1]} : vector<12x64xf32> to vector<8x64xf32>
    %127 = vector.extract_strided_slice %122 {offsets = [4, 0], sizes = [8, 64], strides = [1, 1]} : vector<12x64xf32> to vector<8x64xf32>
    %128 = tpu.concatenate %123, %124, %125, %126, %127 in 1 : vector<8x64xf32>, vector<8x64xf32>, vector<8x64xf32>, vector<8x64xf32>, vector<8x64xf32> -> vector<8x320xf32>
    %cst_39 = arith.constant 0.000000e+00 : f32
    %129 = vector.broadcast %cst_39 : f32 to vector<2x64xf32>
    %130 = tpu.concatenate %129, %120, %129 in 0 : vector<2x64xf32>, vector<8x64xf32>, vector<2x64xf32> -> vector<12x64xf32>
    %131 = vector.extract_strided_slice %130 {offsets = [0, 0], sizes = [8, 64], strides = [1, 1]} : vector<12x64xf32> to vector<8x64xf32>
    %132 = vector.extract_strided_slice %130 {offsets = [1, 0], sizes = [8, 64], strides = [1, 1]} : vector<12x64xf32> to vector<8x64xf32>
    %133 = vector.extract_strided_slice %130 {offsets = [2, 0], sizes = [8, 64], strides = [1, 1]} : vector<12x64xf32> to vector<8x64xf32>
    %134 = vector.extract_strided_slice %130 {offsets = [3, 0], sizes = [8, 64], strides = [1, 1]} : vector<12x64xf32> to vector<8x64xf32>
    %135 = vector.extract_strided_slice %130 {offsets = [4, 0], sizes = [8, 64], strides = [1, 1]} : vector<12x64xf32> to vector<8x64xf32>
    %136 = tpu.concatenate %131, %132, %133, %134, %135 in 1 : vector<8x64xf32>, vector<8x64xf32>, vector<8x64xf32>, vector<8x64xf32>, vector<8x64xf32> -> vector<8x320xf32>
    %137 = tpu.concatenate %128, %136 in 0 : vector<8x320xf32>, vector<8x320xf32> -> vector<16x320xf32>
    %138 = arith.truncf %137 : vector<16x320xf32> to vector<16x320xbf16>
    %c0_40 = arith.constant 0 : index
    %c0_41 = arith.constant 0 : index
    %139 = vector.load %arg8[%c0_40, %c0_41] : memref<320x64xbf16, #tpu.memory_space<vmem>>, vector<320x64xbf16>
    %cst_42 = arith.constant dense<0.000000e+00> : vector<16x64xf32>
    %140 = tpu.matmul %138, %139, %cst_42 {dimension_numbers = #tpu.dot_dimension_numbers<[1], [0], [0], [1], [0, 0, 1, 1], [], []>} : vector<16x320xbf16>, vector<320x64xbf16>, vector<16x64xf32> -> vector<16x64xf32>
    %c0_43 = arith.constant 0 : index
    %c0_44 = arith.constant 0 : index
    %141 = vector.load %arg9[%c0_43, %c0_44] : memref<1x64xf32, #tpu.memory_space<vmem>>, vector<1x64xf32>
    %142 = vector.broadcast %141 : vector<1x64xf32> to vector<16x64xf32>
    %143 = arith.addf %140, %142 : vector<16x64xf32>
    %c0_45 = arith.constant 0 : index
    %c0_46 = arith.constant 0 : index
    %144 = vector.load %arg10[%c0_45, %c0_46] : memref<1x64xf32, #tpu.memory_space<vmem>>, vector<1x64xf32>
    %c0_47 = arith.constant 0 : index
    %c0_48 = arith.constant 0 : index
    %145 = vector.load %arg11[%c0_47, %c0_48] : memref<1x64xf32, #tpu.memory_space<vmem>>, vector<1x64xf32>
    %c0_49 = arith.constant 0 : index
    %c0_50 = arith.constant 0 : index
    %146 = vector.load %arg12[%c0_49, %c0_50] : memref<64x64xf32, #tpu.memory_space<vmem>>, vector<64x64xf32>
    %147 = vector.extract_strided_slice %143 {offsets = [0, 0], sizes = [8, 64], strides = [1, 1]} : vector<16x64xf32> to vector<8x64xf32>
    %148 = vector.extract_strided_slice %143 {offsets = [8, 0], sizes = [8, 64], strides = [1, 1]} : vector<16x64xf32> to vector<8x64xf32>
    %cst_51 = arith.constant dense<0.000000e+00> : vector<64xf32>
    %149 = vector.multi_reduction <add>, %147, %cst_51 [0] : vector<8x64xf32> to vector<64xf32>
    %150 = vector.shape_cast %149 : vector<64xf32> to vector<1x64xf32>
    %151 = arith.mulf %147, %147 : vector<8x64xf32>
    %cst_52 = arith.constant dense<0.000000e+00> : vector<64xf32>
    %152 = vector.multi_reduction <add>, %151, %cst_52 [0] : vector<8x64xf32> to vector<64xf32>
    %153 = vector.shape_cast %152 : vector<64xf32> to vector<1x64xf32>
    %cst_53 = arith.constant dense<0.000000e+00> : vector<64xf32>
    %154 = vector.multi_reduction <add>, %148, %cst_53 [0] : vector<8x64xf32> to vector<64xf32>
    %155 = vector.shape_cast %154 : vector<64xf32> to vector<1x64xf32>
    %156 = arith.mulf %148, %148 : vector<8x64xf32>
    %cst_54 = arith.constant dense<0.000000e+00> : vector<64xf32>
    %157 = vector.multi_reduction <add>, %156, %cst_54 [0] : vector<8x64xf32> to vector<64xf32>
    %158 = vector.shape_cast %157 : vector<64xf32> to vector<1x64xf32>
    %159 = tpu.concatenate %150, %153, %155, %158 in 0 : vector<1x64xf32>, vector<1x64xf32>, vector<1x64xf32>, vector<1x64xf32> -> vector<4x64xf32>
    %cst_55 = arith.constant dense<0.000000e+00> : vector<4x64xf32>
    %160 = tpu.matmul %159, %146, %cst_55 {dimension_numbers = #tpu.dot_dimension_numbers<[1], [0], [0], [1], [0, 0, 1, 1], [], []>} : vector<4x64xf32>, vector<64x64xf32>, vector<4x64xf32> -> vector<4x64xf32>
    %161 = vector.extract_strided_slice %160 {offsets = [0, 0], sizes = [1, 64], strides = [1, 1]} : vector<4x64xf32> to vector<1x64xf32>
    %162 = vector.extract_strided_slice %160 {offsets = [1, 0], sizes = [1, 64], strides = [1, 1]} : vector<4x64xf32> to vector<1x64xf32>
    %163 = arith.mulf %161, %161 : vector<1x64xf32>
    %164 = arith.subf %162, %163 : vector<1x64xf32>
    %cst_56 = arith.constant 0.000000e+00 : f32
    %165 = vector.broadcast %cst_56 : f32 to vector<1x64xf32>
    %166 = arith.maximumf %164, %165 : vector<1x64xf32>
    %167 = vector.broadcast %161 : vector<1x64xf32> to vector<8x64xf32>
    %168 = arith.subf %147, %167 : vector<8x64xf32>
    %cst_57 = arith.constant 9.99999974E-6 : f32
    %169 = vector.broadcast %cst_57 : f32 to vector<1x64xf32>
    %170 = arith.addf %166, %169 : vector<1x64xf32>
    %171 = math.rsqrt %170 : vector<1x64xf32>
    %172 = vector.broadcast %171 : vector<1x64xf32> to vector<8x64xf32>
    %173 = arith.mulf %168, %172 : vector<8x64xf32>
    %174 = vector.broadcast %144 : vector<1x64xf32> to vector<8x64xf32>
    %175 = arith.mulf %173, %174 : vector<8x64xf32>
    %176 = vector.broadcast %145 : vector<1x64xf32> to vector<8x64xf32>
    %177 = arith.addf %175, %176 : vector<8x64xf32>
    %178 = math.absf %177 : vector<8x64xf32>
    %cst_58 = arith.constant 0.000000e+00 : f32
    %179 = vector.broadcast %cst_58 : f32 to vector<8x64xf32>
    %180 = arith.subf %179, %178 : vector<8x64xf32>
    %181 = math.exp %180 : vector<8x64xf32>
    %182 = math.log1p %181 : vector<8x64xf32>
    %cst_59 = arith.constant 0.000000e+00 : f32
    %183 = vector.broadcast %cst_59 : f32 to vector<8x64xf32>
    %184 = arith.maximumf %177, %183 : vector<8x64xf32>
    %185 = arith.addf %182, %184 : vector<8x64xf32>
    %186 = math.tanh %185 : vector<8x64xf32>
    %187 = arith.mulf %177, %186 : vector<8x64xf32>
    %188 = vector.extract_strided_slice %160 {offsets = [2, 0], sizes = [1, 64], strides = [1, 1]} : vector<4x64xf32> to vector<1x64xf32>
    %189 = vector.extract_strided_slice %160 {offsets = [3, 0], sizes = [1, 64], strides = [1, 1]} : vector<4x64xf32> to vector<1x64xf32>
    %190 = arith.mulf %188, %188 : vector<1x64xf32>
    %191 = arith.subf %189, %190 : vector<1x64xf32>
    %cst_60 = arith.constant 0.000000e+00 : f32
    %192 = vector.broadcast %cst_60 : f32 to vector<1x64xf32>
    %193 = arith.maximumf %191, %192 : vector<1x64xf32>
    %194 = vector.broadcast %188 : vector<1x64xf32> to vector<8x64xf32>
    %195 = arith.subf %148, %194 : vector<8x64xf32>
    %cst_61 = arith.constant 9.99999974E-6 : f32
    %196 = vector.broadcast %cst_61 : f32 to vector<1x64xf32>
    %197 = arith.addf %193, %196 : vector<1x64xf32>
    %198 = math.rsqrt %197 : vector<1x64xf32>
    %199 = vector.broadcast %198 : vector<1x64xf32> to vector<8x64xf32>
    %200 = arith.mulf %195, %199 : vector<8x64xf32>
    %201 = vector.broadcast %144 : vector<1x64xf32> to vector<8x64xf32>
    %202 = arith.mulf %200, %201 : vector<8x64xf32>
    %203 = vector.broadcast %145 : vector<1x64xf32> to vector<8x64xf32>
    %204 = arith.addf %202, %203 : vector<8x64xf32>
    %205 = math.absf %204 : vector<8x64xf32>
    %cst_62 = arith.constant 0.000000e+00 : f32
    %206 = vector.broadcast %cst_62 : f32 to vector<8x64xf32>
    %207 = arith.subf %206, %205 : vector<8x64xf32>
    %208 = math.exp %207 : vector<8x64xf32>
    %209 = math.log1p %208 : vector<8x64xf32>
    %cst_63 = arith.constant 0.000000e+00 : f32
    %210 = vector.broadcast %cst_63 : f32 to vector<8x64xf32>
    %211 = arith.maximumf %204, %210 : vector<8x64xf32>
    %212 = arith.addf %209, %211 : vector<8x64xf32>
    %213 = math.tanh %212 : vector<8x64xf32>
    %214 = arith.mulf %204, %213 : vector<8x64xf32>
    %215 = arith.truncf %18 : vector<8x32xf32> to vector<8x32xbf16>
    %c0_64 = arith.constant 0 : index
    %c0_65 = arith.constant 0 : index
    %216 = vector.load %arg13[%c0_64, %c0_65] : memref<32x64xbf16, #tpu.memory_space<vmem>>, vector<32x64xbf16>
    %cst_66 = arith.constant dense<0.000000e+00> : vector<8x64xf32>
    %217 = tpu.matmul %215, %216, %cst_66 {dimension_numbers = #tpu.dot_dimension_numbers<[1], [0], [0], [1], [0, 0, 1, 1], [], []>} : vector<8x32xbf16>, vector<32x64xbf16>, vector<8x64xf32> -> vector<8x64xf32>
    %c0_67 = arith.constant 0 : index
    %c0_68 = arith.constant 0 : index
    %218 = vector.load %arg14[%c0_67, %c0_68] : memref<1x64xf32, #tpu.memory_space<vmem>>, vector<1x64xf32>
    %219 = vector.broadcast %218 : vector<1x64xf32> to vector<8x64xf32>
    %220 = arith.addf %217, %219 : vector<8x64xf32>
    %221 = arith.addf %187, %220 : vector<8x64xf32>
    %c0_69 = arith.constant 0 : index
    %c0_70 = arith.constant 0 : index
    %c0_71 = arith.constant 0 : index
    %222 = vector.load %arg15[%c0_69, %c0_70, %c0_71] : memref<2x8x64xf32, #tpu.memory_space<vmem>>, vector<1x8x64xf32>
    %223 = vector.shape_cast %222 : vector<1x8x64xf32> to vector<8x64xf32>
    %224 = vector.shape_cast %221 : vector<8x64xf32> to vector<1x8x64xf32>
    tpu.vector_store %arg15[%c0_69, %c0_70, %c0_71], %224 {strides = array<i32>} : memref<2x8x64xf32, #tpu.memory_space<vmem>>, vector<1x8x64xf32>,
    %225 = arith.truncf %20 : vector<8x32xf32> to vector<8x32xbf16>
    %c0_72 = arith.constant 0 : index
    %c0_73 = arith.constant 0 : index
    %226 = vector.load %arg13[%c0_72, %c0_73] : memref<32x64xbf16, #tpu.memory_space<vmem>>, vector<32x64xbf16>
    %cst_74 = arith.constant dense<0.000000e+00> : vector<8x64xf32>
    %227 = tpu.matmul %225, %226, %cst_74 {dimension_numbers = #tpu.dot_dimension_numbers<[1], [0], [0], [1], [0, 0, 1, 1], [], []>} : vector<8x32xbf16>, vector<32x64xbf16>, vector<8x64xf32> -> vector<8x64xf32>
    %c0_75 = arith.constant 0 : index
    %c0_76 = arith.constant 0 : index
    %228 = vector.load %arg14[%c0_75, %c0_76] : memref<1x64xf32, #tpu.memory_space<vmem>>, vector<1x64xf32>
    %229 = vector.broadcast %228 : vector<1x64xf32> to vector<8x64xf32>
    %230 = arith.addf %227, %229 : vector<8x64xf32>
    %231 = arith.addf %214, %230 : vector<8x64xf32>
    %c1_77 = arith.constant 1 : index
    %c0_78 = arith.constant 0 : index
    %c0_79 = arith.constant 0 : index
    %232 = vector.load %arg15[%c1_77, %c0_78, %c0_79] : memref<2x8x64xf32, #tpu.memory_space<vmem>>, vector<1x8x64xf32>
    %233 = vector.shape_cast %232 : vector<1x8x64xf32> to vector<8x64xf32>
    %234 = vector.shape_cast %231 : vector<8x64xf32> to vector<1x8x64xf32>
    tpu.vector_store %arg15[%c1_77, %c0_78, %c0_79], %234 {strides = array<i32>} : memref<2x8x64xf32, #tpu.memory_space<vmem>>, vector<1x8x64xf32>,
    return
  }
}

module attributes {stable_mosaic.version = 11 : i64} {
  func.func @_resblock_kernel_nores(%arg0: memref<2x8x64xf32, #tpu.memory_space<vmem>>, %arg1: memref<2x32xf32, #tpu.memory_space<vmem>>, %arg2: memref<320x64xbf16, #tpu.memory_space<vmem>>, %arg3: memref<1x64xf32, #tpu.memory_space<vmem>>, %arg4: memref<1x64xf32, #tpu.memory_space<vmem>>, %arg5: memref<1x64xf32, #tpu.memory_space<vmem>>, %arg6: memref<32x64xbf16, #tpu.memory_space<vmem>>, %arg7: memref<1x64xf32, #tpu.memory_space<vmem>>, %arg8: memref<320x64xbf16, #tpu.memory_space<vmem>>, %arg9: memref<1x64xf32, #tpu.memory_space<vmem>>, %arg10: memref<1x64xf32, #tpu.memory_space<vmem>>, %arg11: memref<1x64xf32, #tpu.memory_space<vmem>>, %arg12: memref<64x64xf32, #tpu.memory_space<vmem>>, %arg13: memref<2x8x64xf32, #tpu.memory_space<vmem>>) attributes {dimension_semantics = [], scalar_prefetch = 0 : i64, scratch_operands = 0 : i64, tpu.core_type = #tpu.core_type<tc>} {
    %c0 = arith.constant 0 : index
    %c0_0 = arith.constant 0 : index
    %0 = vector.load %arg1[%c0, %c0_0] : memref<2x32xf32, #tpu.memory_space<vmem>>, vector<2x32xf32>
    %1 = math.absf %0 : vector<2x32xf32>
    %cst = arith.constant 0.000000e+00 : f32
    %2 = vector.broadcast %cst : f32 to vector<2x32xf32>
    %3 = arith.subf %2, %1 : vector<2x32xf32>
    %4 = math.exp %3 : vector<2x32xf32>
    %5 = math.log1p %4 : vector<2x32xf32>
    %cst_1 = arith.constant 0.000000e+00 : f32
    %6 = vector.broadcast %cst_1 : f32 to vector<2x32xf32>
    %7 = arith.maximumf %0, %6 : vector<2x32xf32>
    %8 = arith.addf %5, %7 : vector<2x32xf32>
    %9 = math.tanh %8 : vector<2x32xf32>
    %10 = arith.mulf %0, %9 : vector<2x32xf32>
    %11 = arith.truncf %10 : vector<2x32xf32> to vector<2x32xbf16>
    %c0_2 = arith.constant 0 : index
    %c0_3 = arith.constant 0 : index
    %12 = vector.load %arg6[%c0_2, %c0_3] : memref<32x64xbf16, #tpu.memory_space<vmem>>, vector<32x64xbf16>
    %cst_4 = arith.constant dense<0.000000e+00> : vector<2x64xf32>
    %13 = tpu.matmul %11, %12, %cst_4 {dimension_numbers = #tpu.dot_dimension_numbers<[1], [0], [0], [1], [0, 0, 1, 1], [], []>} : vector<2x32xbf16>, vector<32x64xbf16>, vector<2x64xf32> -> vector<2x64xf32>
    %c0_5 = arith.constant 0 : index
    %c0_6 = arith.constant 0 : index
    %14 = vector.load %arg7[%c0_5, %c0_6] : memref<1x64xf32, #tpu.memory_space<vmem>>, vector<1x64xf32>
    %15 = vector.broadcast %14 : vector<1x64xf32> to vector<2x64xf32>
    %16 = arith.addf %13, %15 : vector<2x64xf32>
    %c0_7 = arith.constant 0 : index
    %c0_8 = arith.constant 0 : index
    %c0_9 = arith.constant 0 : index
    %17 = vector.load %arg0[%c0_7, %c0_8, %c0_9] : memref<2x8x64xf32, #tpu.memory_space<vmem>>, vector<1x8x64xf32>
    %18 = vector.shape_cast %17 : vector<1x8x64xf32> to vector<8x64xf32>
    %c1 = arith.constant 1 : index
    %c0_10 = arith.constant 0 : index
    %c0_11 = arith.constant 0 : index
    %19 = vector.load %arg0[%c1, %c0_10, %c0_11] : memref<2x8x64xf32, #tpu.memory_space<vmem>>, vector<1x8x64xf32>
    %20 = vector.shape_cast %19 : vector<1x8x64xf32> to vector<8x64xf32>
    %cst_12 = arith.constant 0.000000e+00 : f32
    %21 = vector.broadcast %cst_12 : f32 to vector<2x64xf32>
    %22 = tpu.concatenate %21, %18, %21 in 0 : vector<2x64xf32>, vector<8x64xf32>, vector<2x64xf32> -> vector<12x64xf32>
    %23 = vector.extract_strided_slice %22 {offsets = [0, 0], sizes = [8, 64], strides = [1, 1]} : vector<12x64xf32> to vector<8x64xf32>
    %24 = vector.extract_strided_slice %22 {offsets = [1, 0], sizes = [8, 64], strides = [1, 1]} : vector<12x64xf32> to vector<8x64xf32>
    %25 = vector.extract_strided_slice %22 {offsets = [2, 0], sizes = [8, 64], strides = [1, 1]} : vector<12x64xf32> to vector<8x64xf32>
    %26 = vector.extract_strided_slice %22 {offsets = [3, 0], sizes = [8, 64], strides = [1, 1]} : vector<12x64xf32> to vector<8x64xf32>
    %27 = vector.extract_strided_slice %22 {offsets = [4, 0], sizes = [8, 64], strides = [1, 1]} : vector<12x64xf32> to vector<8x64xf32>
    %28 = tpu.concatenate %23, %24, %25, %26, %27 in 1 : vector<8x64xf32>, vector<8x64xf32>, vector<8x64xf32>, vector<8x64xf32>, vector<8x64xf32> -> vector<8x320xf32>
    %cst_13 = arith.constant 0.000000e+00 : f32
    %29 = vector.broadcast %cst_13 : f32 to vector<2x64xf32>
    %30 = tpu.concatenate %29, %20, %29 in 0 : vector<2x64xf32>, vector<8x64xf32>, vector<2x64xf32> -> vector<12x64xf32>
    %31 = vector.extract_strided_slice %30 {offsets = [0, 0], sizes = [8, 64], strides = [1, 1]} : vector<12x64xf32> to vector<8x64xf32>
    %32 = vector.extract_strided_slice %30 {offsets = [1, 0], sizes = [8, 64], strides = [1, 1]} : vector<12x64xf32> to vector<8x64xf32>
    %33 = vector.extract_strided_slice %30 {offsets = [2, 0], sizes = [8, 64], strides = [1, 1]} : vector<12x64xf32> to vector<8x64xf32>
    %34 = vector.extract_strided_slice %30 {offsets = [3, 0], sizes = [8, 64], strides = [1, 1]} : vector<12x64xf32> to vector<8x64xf32>
    %35 = vector.extract_strided_slice %30 {offsets = [4, 0], sizes = [8, 64], strides = [1, 1]} : vector<12x64xf32> to vector<8x64xf32>
    %36 = tpu.concatenate %31, %32, %33, %34, %35 in 1 : vector<8x64xf32>, vector<8x64xf32>, vector<8x64xf32>, vector<8x64xf32>, vector<8x64xf32> -> vector<8x320xf32>
    %37 = tpu.concatenate %28, %36 in 0 : vector<8x320xf32>, vector<8x320xf32> -> vector<16x320xf32>
    %38 = arith.truncf %37 : vector<16x320xf32> to vector<16x320xbf16>
    %c0_14 = arith.constant 0 : index
    %c0_15 = arith.constant 0 : index
    %39 = vector.load %arg2[%c0_14, %c0_15] : memref<320x64xbf16, #tpu.memory_space<vmem>>, vector<320x64xbf16>
    %cst_16 = arith.constant dense<0.000000e+00> : vector<16x64xf32>
    %40 = tpu.matmul %38, %39, %cst_16 {dimension_numbers = #tpu.dot_dimension_numbers<[1], [0], [0], [1], [0, 0, 1, 1], [], []>} : vector<16x320xbf16>, vector<320x64xbf16>, vector<16x64xf32> -> vector<16x64xf32>
    %c0_17 = arith.constant 0 : index
    %c0_18 = arith.constant 0 : index
    %41 = vector.load %arg3[%c0_17, %c0_18] : memref<1x64xf32, #tpu.memory_space<vmem>>, vector<1x64xf32>
    %42 = vector.broadcast %41 : vector<1x64xf32> to vector<16x64xf32>
    %43 = arith.addf %40, %42 : vector<16x64xf32>
    %c0_19 = arith.constant 0 : index
    %c0_20 = arith.constant 0 : index
    %44 = vector.load %arg4[%c0_19, %c0_20] : memref<1x64xf32, #tpu.memory_space<vmem>>, vector<1x64xf32>
    %c0_21 = arith.constant 0 : index
    %c0_22 = arith.constant 0 : index
    %45 = vector.load %arg5[%c0_21, %c0_22] : memref<1x64xf32, #tpu.memory_space<vmem>>, vector<1x64xf32>
    %c0_23 = arith.constant 0 : index
    %c0_24 = arith.constant 0 : index
    %46 = vector.load %arg12[%c0_23, %c0_24] : memref<64x64xf32, #tpu.memory_space<vmem>>, vector<64x64xf32>
    %47 = vector.extract_strided_slice %43 {offsets = [0, 0], sizes = [8, 64], strides = [1, 1]} : vector<16x64xf32> to vector<8x64xf32>
    %48 = vector.extract_strided_slice %43 {offsets = [8, 0], sizes = [8, 64], strides = [1, 1]} : vector<16x64xf32> to vector<8x64xf32>
    %cst_25 = arith.constant dense<0.000000e+00> : vector<64xf32>
    %49 = vector.multi_reduction <add>, %47, %cst_25 [0] : vector<8x64xf32> to vector<64xf32>
    %50 = vector.shape_cast %49 : vector<64xf32> to vector<1x64xf32>
    %51 = arith.mulf %47, %47 : vector<8x64xf32>
    %cst_26 = arith.constant dense<0.000000e+00> : vector<64xf32>
    %52 = vector.multi_reduction <add>, %51, %cst_26 [0] : vector<8x64xf32> to vector<64xf32>
    %53 = vector.shape_cast %52 : vector<64xf32> to vector<1x64xf32>
    %cst_27 = arith.constant dense<0.000000e+00> : vector<64xf32>
    %54 = vector.multi_reduction <add>, %48, %cst_27 [0] : vector<8x64xf32> to vector<64xf32>
    %55 = vector.shape_cast %54 : vector<64xf32> to vector<1x64xf32>
    %56 = arith.mulf %48, %48 : vector<8x64xf32>
    %cst_28 = arith.constant dense<0.000000e+00> : vector<64xf32>
    %57 = vector.multi_reduction <add>, %56, %cst_28 [0] : vector<8x64xf32> to vector<64xf32>
    %58 = vector.shape_cast %57 : vector<64xf32> to vector<1x64xf32>
    %59 = tpu.concatenate %50, %53, %55, %58 in 0 : vector<1x64xf32>, vector<1x64xf32>, vector<1x64xf32>, vector<1x64xf32> -> vector<4x64xf32>
    %cst_29 = arith.constant dense<0.000000e+00> : vector<4x64xf32>
    %60 = tpu.matmul %59, %46, %cst_29 {dimension_numbers = #tpu.dot_dimension_numbers<[1], [0], [0], [1], [0, 0, 1, 1], [], []>} : vector<4x64xf32>, vector<64x64xf32>, vector<4x64xf32> -> vector<4x64xf32>
    %61 = vector.extract_strided_slice %60 {offsets = [0, 0], sizes = [1, 64], strides = [1, 1]} : vector<4x64xf32> to vector<1x64xf32>
    %62 = vector.extract_strided_slice %60 {offsets = [1, 0], sizes = [1, 64], strides = [1, 1]} : vector<4x64xf32> to vector<1x64xf32>
    %63 = arith.mulf %61, %61 : vector<1x64xf32>
    %64 = arith.subf %62, %63 : vector<1x64xf32>
    %cst_30 = arith.constant 0.000000e+00 : f32
    %65 = vector.broadcast %cst_30 : f32 to vector<1x64xf32>
    %66 = arith.maximumf %64, %65 : vector<1x64xf32>
    %67 = vector.broadcast %61 : vector<1x64xf32> to vector<8x64xf32>
    %68 = arith.subf %47, %67 : vector<8x64xf32>
    %cst_31 = arith.constant 9.99999974E-6 : f32
    %69 = vector.broadcast %cst_31 : f32 to vector<1x64xf32>
    %70 = arith.addf %66, %69 : vector<1x64xf32>
    %71 = math.rsqrt %70 : vector<1x64xf32>
    %72 = vector.broadcast %71 : vector<1x64xf32> to vector<8x64xf32>
    %73 = arith.mulf %68, %72 : vector<8x64xf32>
    %74 = vector.broadcast %44 : vector<1x64xf32> to vector<8x64xf32>
    %75 = arith.mulf %73, %74 : vector<8x64xf32>
    %76 = vector.broadcast %45 : vector<1x64xf32> to vector<8x64xf32>
    %77 = arith.addf %75, %76 : vector<8x64xf32>
    %78 = math.absf %77 : vector<8x64xf32>
    %cst_32 = arith.constant 0.000000e+00 : f32
    %79 = vector.broadcast %cst_32 : f32 to vector<8x64xf32>
    %80 = arith.subf %79, %78 : vector<8x64xf32>
    %81 = math.exp %80 : vector<8x64xf32>
    %82 = math.log1p %81 : vector<8x64xf32>
    %cst_33 = arith.constant 0.000000e+00 : f32
    %83 = vector.broadcast %cst_33 : f32 to vector<8x64xf32>
    %84 = arith.maximumf %77, %83 : vector<8x64xf32>
    %85 = arith.addf %82, %84 : vector<8x64xf32>
    %86 = math.tanh %85 : vector<8x64xf32>
    %87 = arith.mulf %77, %86 : vector<8x64xf32>
    %88 = vector.extract_strided_slice %60 {offsets = [2, 0], sizes = [1, 64], strides = [1, 1]} : vector<4x64xf32> to vector<1x64xf32>
    %89 = vector.extract_strided_slice %60 {offsets = [3, 0], sizes = [1, 64], strides = [1, 1]} : vector<4x64xf32> to vector<1x64xf32>
    %90 = arith.mulf %88, %88 : vector<1x64xf32>
    %91 = arith.subf %89, %90 : vector<1x64xf32>
    %cst_34 = arith.constant 0.000000e+00 : f32
    %92 = vector.broadcast %cst_34 : f32 to vector<1x64xf32>
    %93 = arith.maximumf %91, %92 : vector<1x64xf32>
    %94 = vector.broadcast %88 : vector<1x64xf32> to vector<8x64xf32>
    %95 = arith.subf %48, %94 : vector<8x64xf32>
    %cst_35 = arith.constant 9.99999974E-6 : f32
    %96 = vector.broadcast %cst_35 : f32 to vector<1x64xf32>
    %97 = arith.addf %93, %96 : vector<1x64xf32>
    %98 = math.rsqrt %97 : vector<1x64xf32>
    %99 = vector.broadcast %98 : vector<1x64xf32> to vector<8x64xf32>
    %100 = arith.mulf %95, %99 : vector<8x64xf32>
    %101 = vector.broadcast %44 : vector<1x64xf32> to vector<8x64xf32>
    %102 = arith.mulf %100, %101 : vector<8x64xf32>
    %103 = vector.broadcast %45 : vector<1x64xf32> to vector<8x64xf32>
    %104 = arith.addf %102, %103 : vector<8x64xf32>
    %105 = math.absf %104 : vector<8x64xf32>
    %cst_36 = arith.constant 0.000000e+00 : f32
    %106 = vector.broadcast %cst_36 : f32 to vector<8x64xf32>
    %107 = arith.subf %106, %105 : vector<8x64xf32>
    %108 = math.exp %107 : vector<8x64xf32>
    %109 = math.log1p %108 : vector<8x64xf32>
    %cst_37 = arith.constant 0.000000e+00 : f32
    %110 = vector.broadcast %cst_37 : f32 to vector<8x64xf32>
    %111 = arith.maximumf %104, %110 : vector<8x64xf32>
    %112 = arith.addf %109, %111 : vector<8x64xf32>
    %113 = math.tanh %112 : vector<8x64xf32>
    %114 = arith.mulf %104, %113 : vector<8x64xf32>
    %115 = vector.extract_strided_slice %16 {offsets = [0, 0], sizes = [1, 64], strides = [1, 1]} : vector<2x64xf32> to vector<1x64xf32>
    %116 = vector.broadcast %115 : vector<1x64xf32> to vector<8x64xf32>
    %117 = arith.addf %87, %116 : vector<8x64xf32>
    %118 = vector.extract_strided_slice %16 {offsets = [1, 0], sizes = [1, 64], strides = [1, 1]} : vector<2x64xf32> to vector<1x64xf32>
    %119 = vector.broadcast %118 : vector<1x64xf32> to vector<8x64xf32>
    %120 = arith.addf %114, %119 : vector<8x64xf32>
    %cst_38 = arith.constant 0.000000e+00 : f32
    %121 = vector.broadcast %cst_38 : f32 to vector<2x64xf32>
    %122 = tpu.concatenate %121, %117, %121 in 0 : vector<2x64xf32>, vector<8x64xf32>, vector<2x64xf32> -> vector<12x64xf32>
    %123 = vector.extract_strided_slice %122 {offsets = [0, 0], sizes = [8, 64], strides = [1, 1]} : vector<12x64xf32> to vector<8x64xf32>
    %124 = vector.extract_strided_slice %122 {offsets = [1, 0], sizes = [8, 64], strides = [1, 1]} : vector<12x64xf32> to vector<8x64xf32>
    %125 = vector.extract_strided_slice %122 {offsets = [2, 0], sizes = [8, 64], strides = [1, 1]} : vector<12x64xf32> to vector<8x64xf32>
    %126 = vector.extract_strided_slice %122 {offsets = [3, 0], sizes = [8, 64], strides = [1, 1]} : vector<12x64xf32> to vector<8x64xf32>
    %127 = vector.extract_strided_slice %122 {offsets = [4, 0], sizes = [8, 64], strides = [1, 1]} : vector<12x64xf32> to vector<8x64xf32>
    %128 = tpu.concatenate %123, %124, %125, %126, %127 in 1 : vector<8x64xf32>, vector<8x64xf32>, vector<8x64xf32>, vector<8x64xf32>, vector<8x64xf32> -> vector<8x320xf32>
    %cst_39 = arith.constant 0.000000e+00 : f32
    %129 = vector.broadcast %cst_39 : f32 to vector<2x64xf32>
    %130 = tpu.concatenate %129, %120, %129 in 0 : vector<2x64xf32>, vector<8x64xf32>, vector<2x64xf32> -> vector<12x64xf32>
    %131 = vector.extract_strided_slice %130 {offsets = [0, 0], sizes = [8, 64], strides = [1, 1]} : vector<12x64xf32> to vector<8x64xf32>
    %132 = vector.extract_strided_slice %130 {offsets = [1, 0], sizes = [8, 64], strides = [1, 1]} : vector<12x64xf32> to vector<8x64xf32>
    %133 = vector.extract_strided_slice %130 {offsets = [2, 0], sizes = [8, 64], strides = [1, 1]} : vector<12x64xf32> to vector<8x64xf32>
    %134 = vector.extract_strided_slice %130 {offsets = [3, 0], sizes = [8, 64], strides = [1, 1]} : vector<12x64xf32> to vector<8x64xf32>
    %135 = vector.extract_strided_slice %130 {offsets = [4, 0], sizes = [8, 64], strides = [1, 1]} : vector<12x64xf32> to vector<8x64xf32>
    %136 = tpu.concatenate %131, %132, %133, %134, %135 in 1 : vector<8x64xf32>, vector<8x64xf32>, vector<8x64xf32>, vector<8x64xf32>, vector<8x64xf32> -> vector<8x320xf32>
    %137 = tpu.concatenate %128, %136 in 0 : vector<8x320xf32>, vector<8x320xf32> -> vector<16x320xf32>
    %138 = arith.truncf %137 : vector<16x320xf32> to vector<16x320xbf16>
    %c0_40 = arith.constant 0 : index
    %c0_41 = arith.constant 0 : index
    %139 = vector.load %arg8[%c0_40, %c0_41] : memref<320x64xbf16, #tpu.memory_space<vmem>>, vector<320x64xbf16>
    %cst_42 = arith.constant dense<0.000000e+00> : vector<16x64xf32>
    %140 = tpu.matmul %138, %139, %cst_42 {dimension_numbers = #tpu.dot_dimension_numbers<[1], [0], [0], [1], [0, 0, 1, 1], [], []>} : vector<16x320xbf16>, vector<320x64xbf16>, vector<16x64xf32> -> vector<16x64xf32>
    %c0_43 = arith.constant 0 : index
    %c0_44 = arith.constant 0 : index
    %141 = vector.load %arg9[%c0_43, %c0_44] : memref<1x64xf32, #tpu.memory_space<vmem>>, vector<1x64xf32>
    %142 = vector.broadcast %141 : vector<1x64xf32> to vector<16x64xf32>
    %143 = arith.addf %140, %142 : vector<16x64xf32>
    %c0_45 = arith.constant 0 : index
    %c0_46 = arith.constant 0 : index
    %144 = vector.load %arg10[%c0_45, %c0_46] : memref<1x64xf32, #tpu.memory_space<vmem>>, vector<1x64xf32>
    %c0_47 = arith.constant 0 : index
    %c0_48 = arith.constant 0 : index
    %145 = vector.load %arg11[%c0_47, %c0_48] : memref<1x64xf32, #tpu.memory_space<vmem>>, vector<1x64xf32>
    %c0_49 = arith.constant 0 : index
    %c0_50 = arith.constant 0 : index
    %146 = vector.load %arg12[%c0_49, %c0_50] : memref<64x64xf32, #tpu.memory_space<vmem>>, vector<64x64xf32>
    %147 = vector.extract_strided_slice %143 {offsets = [0, 0], sizes = [8, 64], strides = [1, 1]} : vector<16x64xf32> to vector<8x64xf32>
    %148 = vector.extract_strided_slice %143 {offsets = [8, 0], sizes = [8, 64], strides = [1, 1]} : vector<16x64xf32> to vector<8x64xf32>
    %cst_51 = arith.constant dense<0.000000e+00> : vector<64xf32>
    %149 = vector.multi_reduction <add>, %147, %cst_51 [0] : vector<8x64xf32> to vector<64xf32>
    %150 = vector.shape_cast %149 : vector<64xf32> to vector<1x64xf32>
    %151 = arith.mulf %147, %147 : vector<8x64xf32>
    %cst_52 = arith.constant dense<0.000000e+00> : vector<64xf32>
    %152 = vector.multi_reduction <add>, %151, %cst_52 [0] : vector<8x64xf32> to vector<64xf32>
    %153 = vector.shape_cast %152 : vector<64xf32> to vector<1x64xf32>
    %cst_53 = arith.constant dense<0.000000e+00> : vector<64xf32>
    %154 = vector.multi_reduction <add>, %148, %cst_53 [0] : vector<8x64xf32> to vector<64xf32>
    %155 = vector.shape_cast %154 : vector<64xf32> to vector<1x64xf32>
    %156 = arith.mulf %148, %148 : vector<8x64xf32>
    %cst_54 = arith.constant dense<0.000000e+00> : vector<64xf32>
    %157 = vector.multi_reduction <add>, %156, %cst_54 [0] : vector<8x64xf32> to vector<64xf32>
    %158 = vector.shape_cast %157 : vector<64xf32> to vector<1x64xf32>
    %159 = tpu.concatenate %150, %153, %155, %158 in 0 : vector<1x64xf32>, vector<1x64xf32>, vector<1x64xf32>, vector<1x64xf32> -> vector<4x64xf32>
    %cst_55 = arith.constant dense<0.000000e+00> : vector<4x64xf32>
    %160 = tpu.matmul %159, %146, %cst_55 {dimension_numbers = #tpu.dot_dimension_numbers<[1], [0], [0], [1], [0, 0, 1, 1], [], []>} : vector<4x64xf32>, vector<64x64xf32>, vector<4x64xf32> -> vector<4x64xf32>
    %161 = vector.extract_strided_slice %160 {offsets = [0, 0], sizes = [1, 64], strides = [1, 1]} : vector<4x64xf32> to vector<1x64xf32>
    %162 = vector.extract_strided_slice %160 {offsets = [1, 0], sizes = [1, 64], strides = [1, 1]} : vector<4x64xf32> to vector<1x64xf32>
    %163 = arith.mulf %161, %161 : vector<1x64xf32>
    %164 = arith.subf %162, %163 : vector<1x64xf32>
    %cst_56 = arith.constant 0.000000e+00 : f32
    %165 = vector.broadcast %cst_56 : f32 to vector<1x64xf32>
    %166 = arith.maximumf %164, %165 : vector<1x64xf32>
    %167 = vector.broadcast %161 : vector<1x64xf32> to vector<8x64xf32>
    %168 = arith.subf %147, %167 : vector<8x64xf32>
    %cst_57 = arith.constant 9.99999974E-6 : f32
    %169 = vector.broadcast %cst_57 : f32 to vector<1x64xf32>
    %170 = arith.addf %166, %169 : vector<1x64xf32>
    %171 = math.rsqrt %170 : vector<1x64xf32>
    %172 = vector.broadcast %171 : vector<1x64xf32> to vector<8x64xf32>
    %173 = arith.mulf %168, %172 : vector<8x64xf32>
    %174 = vector.broadcast %144 : vector<1x64xf32> to vector<8x64xf32>
    %175 = arith.mulf %173, %174 : vector<8x64xf32>
    %176 = vector.broadcast %145 : vector<1x64xf32> to vector<8x64xf32>
    %177 = arith.addf %175, %176 : vector<8x64xf32>
    %178 = math.absf %177 : vector<8x64xf32>
    %cst_58 = arith.constant 0.000000e+00 : f32
    %179 = vector.broadcast %cst_58 : f32 to vector<8x64xf32>
    %180 = arith.subf %179, %178 : vector<8x64xf32>
    %181 = math.exp %180 : vector<8x64xf32>
    %182 = math.log1p %181 : vector<8x64xf32>
    %cst_59 = arith.constant 0.000000e+00 : f32
    %183 = vector.broadcast %cst_59 : f32 to vector<8x64xf32>
    %184 = arith.maximumf %177, %183 : vector<8x64xf32>
    %185 = arith.addf %182, %184 : vector<8x64xf32>
    %186 = math.tanh %185 : vector<8x64xf32>
    %187 = arith.mulf %177, %186 : vector<8x64xf32>
    %188 = vector.extract_strided_slice %160 {offsets = [2, 0], sizes = [1, 64], strides = [1, 1]} : vector<4x64xf32> to vector<1x64xf32>
    %189 = vector.extract_strided_slice %160 {offsets = [3, 0], sizes = [1, 64], strides = [1, 1]} : vector<4x64xf32> to vector<1x64xf32>
    %190 = arith.mulf %188, %188 : vector<1x64xf32>
    %191 = arith.subf %189, %190 : vector<1x64xf32>
    %cst_60 = arith.constant 0.000000e+00 : f32
    %192 = vector.broadcast %cst_60 : f32 to vector<1x64xf32>
    %193 = arith.maximumf %191, %192 : vector<1x64xf32>
    %194 = vector.broadcast %188 : vector<1x64xf32> to vector<8x64xf32>
    %195 = arith.subf %148, %194 : vector<8x64xf32>
    %cst_61 = arith.constant 9.99999974E-6 : f32
    %196 = vector.broadcast %cst_61 : f32 to vector<1x64xf32>
    %197 = arith.addf %193, %196 : vector<1x64xf32>
    %198 = math.rsqrt %197 : vector<1x64xf32>
    %199 = vector.broadcast %198 : vector<1x64xf32> to vector<8x64xf32>
    %200 = arith.mulf %195, %199 : vector<8x64xf32>
    %201 = vector.broadcast %144 : vector<1x64xf32> to vector<8x64xf32>
    %202 = arith.mulf %200, %201 : vector<8x64xf32>
    %203 = vector.broadcast %145 : vector<1x64xf32> to vector<8x64xf32>
    %204 = arith.addf %202, %203 : vector<8x64xf32>
    %205 = math.absf %204 : vector<8x64xf32>
    %cst_62 = arith.constant 0.000000e+00 : f32
    %206 = vector.broadcast %cst_62 : f32 to vector<8x64xf32>
    %207 = arith.subf %206, %205 : vector<8x64xf32>
    %208 = math.exp %207 : vector<8x64xf32>
    %209 = math.log1p %208 : vector<8x64xf32>
    %cst_63 = arith.constant 0.000000e+00 : f32
    %210 = vector.broadcast %cst_63 : f32 to vector<8x64xf32>
    %211 = arith.maximumf %204, %210 : vector<8x64xf32>
    %212 = arith.addf %209, %211 : vector<8x64xf32>
    %213 = math.tanh %212 : vector<8x64xf32>
    %214 = arith.mulf %204, %213 : vector<8x64xf32>
    %215 = arith.addf %187, %18 : vector<8x64xf32>
    %c0_64 = arith.constant 0 : index
    %c0_65 = arith.constant 0 : index
    %c0_66 = arith.constant 0 : index
    %216 = vector.load %arg13[%c0_64, %c0_65, %c0_66] : memref<2x8x64xf32, #tpu.memory_space<vmem>>, vector<1x8x64xf32>
    %217 = vector.shape_cast %216 : vector<1x8x64xf32> to vector<8x64xf32>
    %218 = vector.shape_cast %215 : vector<8x64xf32> to vector<1x8x64xf32>
    tpu.vector_store %arg13[%c0_64, %c0_65, %c0_66], %218 {strides = array<i32>} : memref<2x8x64xf32, #tpu.memory_space<vmem>>, vector<1x8x64xf32>,
    %219 = arith.addf %214, %20 : vector<8x64xf32>
    %c1_67 = arith.constant 1 : index
    %c0_68 = arith.constant 0 : index
    %c0_69 = arith.constant 0 : index
    %220 = vector.load %arg13[%c1_67, %c0_68, %c0_69] : memref<2x8x64xf32, #tpu.memory_space<vmem>>, vector<1x8x64xf32>
    %221 = vector.shape_cast %220 : vector<1x8x64xf32> to vector<8x64xf32>
    %222 = vector.shape_cast %219 : vector<8x64xf32> to vector<1x8x64xf32>
    tpu.vector_store %arg13[%c1_67, %c0_68, %c0_69], %222 {strides = array<i32>} : memref<2x8x64xf32, #tpu.memory_space<vmem>>, vector<1x8x64xf32>,
    return
  }
}

module attributes {stable_mosaic.version = 11 : i64} {
  func.func @_resblock_kernel_res(%arg0: memref<2x8x128xf32, #tpu.memory_space<vmem>>, %arg1: memref<2x32xf32, #tpu.memory_space<vmem>>, %arg2: memref<640x32xbf16, #tpu.memory_space<vmem>>, %arg3: memref<1x32xf32, #tpu.memory_space<vmem>>, %arg4: memref<1x32xf32, #tpu.memory_space<vmem>>, %arg5: memref<1x32xf32, #tpu.memory_space<vmem>>, %arg6: memref<32x32xbf16, #tpu.memory_space<vmem>>, %arg7: memref<1x32xf32, #tpu.memory_space<vmem>>, %arg8: memref<160x32xbf16, #tpu.memory_space<vmem>>, %arg9: memref<1x32xf32, #tpu.memory_space<vmem>>, %arg10: memref<1x32xf32, #tpu.memory_space<vmem>>, %arg11: memref<1x32xf32, #tpu.memory_space<vmem>>, %arg12: memref<32x32xf32, #tpu.memory_space<vmem>>, %arg13: memref<128x32xbf16, #tpu.memory_space<vmem>>, %arg14: memref<1x32xf32, #tpu.memory_space<vmem>>, %arg15: memref<2x8x32xf32, #tpu.memory_space<vmem>>) attributes {dimension_semantics = [], scalar_prefetch = 0 : i64, scratch_operands = 0 : i64, tpu.core_type = #tpu.core_type<tc>} {
    %c0 = arith.constant 0 : index
    %c0_0 = arith.constant 0 : index
    %0 = vector.load %arg1[%c0, %c0_0] : memref<2x32xf32, #tpu.memory_space<vmem>>, vector<2x32xf32>
    %1 = math.absf %0 : vector<2x32xf32>
    %cst = arith.constant 0.000000e+00 : f32
    %2 = vector.broadcast %cst : f32 to vector<2x32xf32>
    %3 = arith.subf %2, %1 : vector<2x32xf32>
    %4 = math.exp %3 : vector<2x32xf32>
    %5 = math.log1p %4 : vector<2x32xf32>
    %cst_1 = arith.constant 0.000000e+00 : f32
    %6 = vector.broadcast %cst_1 : f32 to vector<2x32xf32>
    %7 = arith.maximumf %0, %6 : vector<2x32xf32>
    %8 = arith.addf %5, %7 : vector<2x32xf32>
    %9 = math.tanh %8 : vector<2x32xf32>
    %10 = arith.mulf %0, %9 : vector<2x32xf32>
    %11 = arith.truncf %10 : vector<2x32xf32> to vector<2x32xbf16>
    %c0_2 = arith.constant 0 : index
    %c0_3 = arith.constant 0 : index
    %12 = vector.load %arg6[%c0_2, %c0_3] : memref<32x32xbf16, #tpu.memory_space<vmem>>, vector<32x32xbf16>
    %cst_4 = arith.constant dense<0.000000e+00> : vector<2x32xf32>
    %13 = tpu.matmul %11, %12, %cst_4 {dimension_numbers = #tpu.dot_dimension_numbers<[1], [0], [0], [1], [0, 0, 1, 1], [], []>} : vector<2x32xbf16>, vector<32x32xbf16>, vector<2x32xf32> -> vector<2x32xf32>
    %c0_5 = arith.constant 0 : index
    %c0_6 = arith.constant 0 : index
    %14 = vector.load %arg7[%c0_5, %c0_6] : memref<1x32xf32, #tpu.memory_space<vmem>>, vector<1x32xf32>
    %15 = vector.broadcast %14 : vector<1x32xf32> to vector<2x32xf32>
    %16 = arith.addf %13, %15 : vector<2x32xf32>
    %c0_7 = arith.constant 0 : index
    %c0_8 = arith.constant 0 : index
    %c0_9 = arith.constant 0 : index
    %17 = vector.load %arg0[%c0_7, %c0_8, %c0_9] : memref<2x8x128xf32, #tpu.memory_space<vmem>>, vector<1x8x128xf32>
    %18 = vector.shape_cast %17 : vector<1x8x128xf32> to vector<8x128xf32>
    %c1 = arith.constant 1 : index
    %c0_10 = arith.constant 0 : index
    %c0_11 = arith.constant 0 : index
    %19 = vector.load %arg0[%c1, %c0_10, %c0_11] : memref<2x8x128xf32, #tpu.memory_space<vmem>>, vector<1x8x128xf32>
    %20 = vector.shape_cast %19 : vector<1x8x128xf32> to vector<8x128xf32>
    %cst_12 = arith.constant 0.000000e+00 : f32
    %21 = vector.broadcast %cst_12 : f32 to vector<2x128xf32>
    %22 = tpu.concatenate %21, %18, %21 in 0 : vector<2x128xf32>, vector<8x128xf32>, vector<2x128xf32> -> vector<12x128xf32>
    %23 = vector.extract_strided_slice %22 {offsets = [0, 0], sizes = [8, 128], strides = [1, 1]} : vector<12x128xf32> to vector<8x128xf32>
    %24 = vector.extract_strided_slice %22 {offsets = [1, 0], sizes = [8, 128], strides = [1, 1]} : vector<12x128xf32> to vector<8x128xf32>
    %25 = vector.extract_strided_slice %22 {offsets = [2, 0], sizes = [8, 128], strides = [1, 1]} : vector<12x128xf32> to vector<8x128xf32>
    %26 = vector.extract_strided_slice %22 {offsets = [3, 0], sizes = [8, 128], strides = [1, 1]} : vector<12x128xf32> to vector<8x128xf32>
    %27 = vector.extract_strided_slice %22 {offsets = [4, 0], sizes = [8, 128], strides = [1, 1]} : vector<12x128xf32> to vector<8x128xf32>
    %28 = tpu.concatenate %23, %24, %25, %26, %27 in 1 : vector<8x128xf32>, vector<8x128xf32>, vector<8x128xf32>, vector<8x128xf32>, vector<8x128xf32> -> vector<8x640xf32>
    %cst_13 = arith.constant 0.000000e+00 : f32
    %29 = vector.broadcast %cst_13 : f32 to vector<2x128xf32>
    %30 = tpu.concatenate %29, %20, %29 in 0 : vector<2x128xf32>, vector<8x128xf32>, vector<2x128xf32> -> vector<12x128xf32>
    %31 = vector.extract_strided_slice %30 {offsets = [0, 0], sizes = [8, 128], strides = [1, 1]} : vector<12x128xf32> to vector<8x128xf32>
    %32 = vector.extract_strided_slice %30 {offsets = [1, 0], sizes = [8, 128], strides = [1, 1]} : vector<12x128xf32> to vector<8x128xf32>
    %33 = vector.extract_strided_slice %30 {offsets = [2, 0], sizes = [8, 128], strides = [1, 1]} : vector<12x128xf32> to vector<8x128xf32>
    %34 = vector.extract_strided_slice %30 {offsets = [3, 0], sizes = [8, 128], strides = [1, 1]} : vector<12x128xf32> to vector<8x128xf32>
    %35 = vector.extract_strided_slice %30 {offsets = [4, 0], sizes = [8, 128], strides = [1, 1]} : vector<12x128xf32> to vector<8x128xf32>
    %36 = tpu.concatenate %31, %32, %33, %34, %35 in 1 : vector<8x128xf32>, vector<8x128xf32>, vector<8x128xf32>, vector<8x128xf32>, vector<8x128xf32> -> vector<8x640xf32>
    %37 = tpu.concatenate %28, %36 in 0 : vector<8x640xf32>, vector<8x640xf32> -> vector<16x640xf32>
    %38 = arith.truncf %37 : vector<16x640xf32> to vector<16x640xbf16>
    %c0_14 = arith.constant 0 : index
    %c0_15 = arith.constant 0 : index
    %39 = vector.load %arg2[%c0_14, %c0_15] : memref<640x32xbf16, #tpu.memory_space<vmem>>, vector<640x32xbf16>
    %cst_16 = arith.constant dense<0.000000e+00> : vector<16x32xf32>
    %40 = tpu.matmul %38, %39, %cst_16 {dimension_numbers = #tpu.dot_dimension_numbers<[1], [0], [0], [1], [0, 0, 1, 1], [], []>} : vector<16x640xbf16>, vector<640x32xbf16>, vector<16x32xf32> -> vector<16x32xf32>
    %c0_17 = arith.constant 0 : index
    %c0_18 = arith.constant 0 : index
    %41 = vector.load %arg3[%c0_17, %c0_18] : memref<1x32xf32, #tpu.memory_space<vmem>>, vector<1x32xf32>
    %42 = vector.broadcast %41 : vector<1x32xf32> to vector<16x32xf32>
    %43 = arith.addf %40, %42 : vector<16x32xf32>
    %c0_19 = arith.constant 0 : index
    %c0_20 = arith.constant 0 : index
    %44 = vector.load %arg4[%c0_19, %c0_20] : memref<1x32xf32, #tpu.memory_space<vmem>>, vector<1x32xf32>
    %c0_21 = arith.constant 0 : index
    %c0_22 = arith.constant 0 : index
    %45 = vector.load %arg5[%c0_21, %c0_22] : memref<1x32xf32, #tpu.memory_space<vmem>>, vector<1x32xf32>
    %c0_23 = arith.constant 0 : index
    %c0_24 = arith.constant 0 : index
    %46 = vector.load %arg12[%c0_23, %c0_24] : memref<32x32xf32, #tpu.memory_space<vmem>>, vector<32x32xf32>
    %47 = vector.extract_strided_slice %43 {offsets = [0, 0], sizes = [8, 32], strides = [1, 1]} : vector<16x32xf32> to vector<8x32xf32>
    %48 = vector.extract_strided_slice %43 {offsets = [8, 0], sizes = [8, 32], strides = [1, 1]} : vector<16x32xf32> to vector<8x32xf32>
    %cst_25 = arith.constant dense<0.000000e+00> : vector<32xf32>
    %49 = vector.multi_reduction <add>, %47, %cst_25 [0] : vector<8x32xf32> to vector<32xf32>
    %50 = vector.shape_cast %49 : vector<32xf32> to vector<1x32xf32>
    %51 = arith.mulf %47, %47 : vector<8x32xf32>
    %cst_26 = arith.constant dense<0.000000e+00> : vector<32xf32>
    %52 = vector.multi_reduction <add>, %51, %cst_26 [0] : vector<8x32xf32> to vector<32xf32>
    %53 = vector.shape_cast %52 : vector<32xf32> to vector<1x32xf32>
    %cst_27 = arith.constant dense<0.000000e+00> : vector<32xf32>
    %54 = vector.multi_reduction <add>, %48, %cst_27 [0] : vector<8x32xf32> to vector<32xf32>
    %55 = vector.shape_cast %54 : vector<32xf32> to vector<1x32xf32>
    %56 = arith.mulf %48, %48 : vector<8x32xf32>
    %cst_28 = arith.constant dense<0.000000e+00> : vector<32xf32>
    %57 = vector.multi_reduction <add>, %56, %cst_28 [0] : vector<8x32xf32> to vector<32xf32>
    %58 = vector.shape_cast %57 : vector<32xf32> to vector<1x32xf32>
    %59 = tpu.concatenate %50, %53, %55, %58 in 0 : vector<1x32xf32>, vector<1x32xf32>, vector<1x32xf32>, vector<1x32xf32> -> vector<4x32xf32>
    %cst_29 = arith.constant dense<0.000000e+00> : vector<4x32xf32>
    %60 = tpu.matmul %59, %46, %cst_29 {dimension_numbers = #tpu.dot_dimension_numbers<[1], [0], [0], [1], [0, 0, 1, 1], [], []>} : vector<4x32xf32>, vector<32x32xf32>, vector<4x32xf32> -> vector<4x32xf32>
    %61 = vector.extract_strided_slice %60 {offsets = [0, 0], sizes = [1, 32], strides = [1, 1]} : vector<4x32xf32> to vector<1x32xf32>
    %62 = vector.extract_strided_slice %60 {offsets = [1, 0], sizes = [1, 32], strides = [1, 1]} : vector<4x32xf32> to vector<1x32xf32>
    %63 = arith.mulf %61, %61 : vector<1x32xf32>
    %64 = arith.subf %62, %63 : vector<1x32xf32>
    %cst_30 = arith.constant 0.000000e+00 : f32
    %65 = vector.broadcast %cst_30 : f32 to vector<1x32xf32>
    %66 = arith.maximumf %64, %65 : vector<1x32xf32>
    %67 = vector.broadcast %61 : vector<1x32xf32> to vector<8x32xf32>
    %68 = arith.subf %47, %67 : vector<8x32xf32>
    %cst_31 = arith.constant 9.99999974E-6 : f32
    %69 = vector.broadcast %cst_31 : f32 to vector<1x32xf32>
    %70 = arith.addf %66, %69 : vector<1x32xf32>
    %71 = math.rsqrt %70 : vector<1x32xf32>
    %72 = vector.broadcast %71 : vector<1x32xf32> to vector<8x32xf32>
    %73 = arith.mulf %68, %72 : vector<8x32xf32>
    %74 = vector.broadcast %44 : vector<1x32xf32> to vector<8x32xf32>
    %75 = arith.mulf %73, %74 : vector<8x32xf32>
    %76 = vector.broadcast %45 : vector<1x32xf32> to vector<8x32xf32>
    %77 = arith.addf %75, %76 : vector<8x32xf32>
    %78 = math.absf %77 : vector<8x32xf32>
    %cst_32 = arith.constant 0.000000e+00 : f32
    %79 = vector.broadcast %cst_32 : f32 to vector<8x32xf32>
    %80 = arith.subf %79, %78 : vector<8x32xf32>
    %81 = math.exp %80 : vector<8x32xf32>
    %82 = math.log1p %81 : vector<8x32xf32>
    %cst_33 = arith.constant 0.000000e+00 : f32
    %83 = vector.broadcast %cst_33 : f32 to vector<8x32xf32>
    %84 = arith.maximumf %77, %83 : vector<8x32xf32>
    %85 = arith.addf %82, %84 : vector<8x32xf32>
    %86 = math.tanh %85 : vector<8x32xf32>
    %87 = arith.mulf %77, %86 : vector<8x32xf32>
    %88 = vector.extract_strided_slice %60 {offsets = [2, 0], sizes = [1, 32], strides = [1, 1]} : vector<4x32xf32> to vector<1x32xf32>
    %89 = vector.extract_strided_slice %60 {offsets = [3, 0], sizes = [1, 32], strides = [1, 1]} : vector<4x32xf32> to vector<1x32xf32>
    %90 = arith.mulf %88, %88 : vector<1x32xf32>
    %91 = arith.subf %89, %90 : vector<1x32xf32>
    %cst_34 = arith.constant 0.000000e+00 : f32
    %92 = vector.broadcast %cst_34 : f32 to vector<1x32xf32>
    %93 = arith.maximumf %91, %92 : vector<1x32xf32>
    %94 = vector.broadcast %88 : vector<1x32xf32> to vector<8x32xf32>
    %95 = arith.subf %48, %94 : vector<8x32xf32>
    %cst_35 = arith.constant 9.99999974E-6 : f32
    %96 = vector.broadcast %cst_35 : f32 to vector<1x32xf32>
    %97 = arith.addf %93, %96 : vector<1x32xf32>
    %98 = math.rsqrt %97 : vector<1x32xf32>
    %99 = vector.broadcast %98 : vector<1x32xf32> to vector<8x32xf32>
    %100 = arith.mulf %95, %99 : vector<8x32xf32>
    %101 = vector.broadcast %44 : vector<1x32xf32> to vector<8x32xf32>
    %102 = arith.mulf %100, %101 : vector<8x32xf32>
    %103 = vector.broadcast %45 : vector<1x32xf32> to vector<8x32xf32>
    %104 = arith.addf %102, %103 : vector<8x32xf32>
    %105 = math.absf %104 : vector<8x32xf32>
    %cst_36 = arith.constant 0.000000e+00 : f32
    %106 = vector.broadcast %cst_36 : f32 to vector<8x32xf32>
    %107 = arith.subf %106, %105 : vector<8x32xf32>
    %108 = math.exp %107 : vector<8x32xf32>
    %109 = math.log1p %108 : vector<8x32xf32>
    %cst_37 = arith.constant 0.000000e+00 : f32
    %110 = vector.broadcast %cst_37 : f32 to vector<8x32xf32>
    %111 = arith.maximumf %104, %110 : vector<8x32xf32>
    %112 = arith.addf %109, %111 : vector<8x32xf32>
    %113 = math.tanh %112 : vector<8x32xf32>
    %114 = arith.mulf %104, %113 : vector<8x32xf32>
    %115 = vector.extract_strided_slice %16 {offsets = [0, 0], sizes = [1, 32], strides = [1, 1]} : vector<2x32xf32> to vector<1x32xf32>
    %116 = vector.broadcast %115 : vector<1x32xf32> to vector<8x32xf32>
    %117 = arith.addf %87, %116 : vector<8x32xf32>
    %118 = vector.extract_strided_slice %16 {offsets = [1, 0], sizes = [1, 32], strides = [1, 1]} : vector<2x32xf32> to vector<1x32xf32>
    %119 = vector.broadcast %118 : vector<1x32xf32> to vector<8x32xf32>
    %120 = arith.addf %114, %119 : vector<8x32xf32>
    %cst_38 = arith.constant 0.000000e+00 : f32
    %121 = vector.broadcast %cst_38 : f32 to vector<2x32xf32>
    %122 = tpu.concatenate %121, %117, %121 in 0 : vector<2x32xf32>, vector<8x32xf32>, vector<2x32xf32> -> vector<12x32xf32>
    %123 = vector.extract_strided_slice %122 {offsets = [0, 0], sizes = [8, 32], strides = [1, 1]} : vector<12x32xf32> to vector<8x32xf32>
    %124 = vector.extract_strided_slice %122 {offsets = [1, 0], sizes = [8, 32], strides = [1, 1]} : vector<12x32xf32> to vector<8x32xf32>
    %125 = vector.extract_strided_slice %122 {offsets = [2, 0], sizes = [8, 32], strides = [1, 1]} : vector<12x32xf32> to vector<8x32xf32>
    %126 = vector.extract_strided_slice %122 {offsets = [3, 0], sizes = [8, 32], strides = [1, 1]} : vector<12x32xf32> to vector<8x32xf32>
    %127 = vector.extract_strided_slice %122 {offsets = [4, 0], sizes = [8, 32], strides = [1, 1]} : vector<12x32xf32> to vector<8x32xf32>
    %128 = tpu.concatenate %123, %124, %125, %126, %127 in 1 : vector<8x32xf32>, vector<8x32xf32>, vector<8x32xf32>, vector<8x32xf32>, vector<8x32xf32> -> vector<8x160xf32>
    %cst_39 = arith.constant 0.000000e+00 : f32
    %129 = vector.broadcast %cst_39 : f32 to vector<2x32xf32>
    %130 = tpu.concatenate %129, %120, %129 in 0 : vector<2x32xf32>, vector<8x32xf32>, vector<2x32xf32> -> vector<12x32xf32>
    %131 = vector.extract_strided_slice %130 {offsets = [0, 0], sizes = [8, 32], strides = [1, 1]} : vector<12x32xf32> to vector<8x32xf32>
    %132 = vector.extract_strided_slice %130 {offsets = [1, 0], sizes = [8, 32], strides = [1, 1]} : vector<12x32xf32> to vector<8x32xf32>
    %133 = vector.extract_strided_slice %130 {offsets = [2, 0], sizes = [8, 32], strides = [1, 1]} : vector<12x32xf32> to vector<8x32xf32>
    %134 = vector.extract_strided_slice %130 {offsets = [3, 0], sizes = [8, 32], strides = [1, 1]} : vector<12x32xf32> to vector<8x32xf32>
    %135 = vector.extract_strided_slice %130 {offsets = [4, 0], sizes = [8, 32], strides = [1, 1]} : vector<12x32xf32> to vector<8x32xf32>
    %136 = tpu.concatenate %131, %132, %133, %134, %135 in 1 : vector<8x32xf32>, vector<8x32xf32>, vector<8x32xf32>, vector<8x32xf32>, vector<8x32xf32> -> vector<8x160xf32>
    %137 = tpu.concatenate %128, %136 in 0 : vector<8x160xf32>, vector<8x160xf32> -> vector<16x160xf32>
    %138 = arith.truncf %137 : vector<16x160xf32> to vector<16x160xbf16>
    %c0_40 = arith.constant 0 : index
    %c0_41 = arith.constant 0 : index
    %139 = vector.load %arg8[%c0_40, %c0_41] : memref<160x32xbf16, #tpu.memory_space<vmem>>, vector<160x32xbf16>
    %cst_42 = arith.constant dense<0.000000e+00> : vector<16x32xf32>
    %140 = tpu.matmul %138, %139, %cst_42 {dimension_numbers = #tpu.dot_dimension_numbers<[1], [0], [0], [1], [0, 0, 1, 1], [], []>} : vector<16x160xbf16>, vector<160x32xbf16>, vector<16x32xf32> -> vector<16x32xf32>
    %c0_43 = arith.constant 0 : index
    %c0_44 = arith.constant 0 : index
    %141 = vector.load %arg9[%c0_43, %c0_44] : memref<1x32xf32, #tpu.memory_space<vmem>>, vector<1x32xf32>
    %142 = vector.broadcast %141 : vector<1x32xf32> to vector<16x32xf32>
    %143 = arith.addf %140, %142 : vector<16x32xf32>
    %c0_45 = arith.constant 0 : index
    %c0_46 = arith.constant 0 : index
    %144 = vector.load %arg10[%c0_45, %c0_46] : memref<1x32xf32, #tpu.memory_space<vmem>>, vector<1x32xf32>
    %c0_47 = arith.constant 0 : index
    %c0_48 = arith.constant 0 : index
    %145 = vector.load %arg11[%c0_47, %c0_48] : memref<1x32xf32, #tpu.memory_space<vmem>>, vector<1x32xf32>
    %c0_49 = arith.constant 0 : index
    %c0_50 = arith.constant 0 : index
    %146 = vector.load %arg12[%c0_49, %c0_50] : memref<32x32xf32, #tpu.memory_space<vmem>>, vector<32x32xf32>
    %147 = vector.extract_strided_slice %143 {offsets = [0, 0], sizes = [8, 32], strides = [1, 1]} : vector<16x32xf32> to vector<8x32xf32>
    %148 = vector.extract_strided_slice %143 {offsets = [8, 0], sizes = [8, 32], strides = [1, 1]} : vector<16x32xf32> to vector<8x32xf32>
    %cst_51 = arith.constant dense<0.000000e+00> : vector<32xf32>
    %149 = vector.multi_reduction <add>, %147, %cst_51 [0] : vector<8x32xf32> to vector<32xf32>
    %150 = vector.shape_cast %149 : vector<32xf32> to vector<1x32xf32>
    %151 = arith.mulf %147, %147 : vector<8x32xf32>
    %cst_52 = arith.constant dense<0.000000e+00> : vector<32xf32>
    %152 = vector.multi_reduction <add>, %151, %cst_52 [0] : vector<8x32xf32> to vector<32xf32>
    %153 = vector.shape_cast %152 : vector<32xf32> to vector<1x32xf32>
    %cst_53 = arith.constant dense<0.000000e+00> : vector<32xf32>
    %154 = vector.multi_reduction <add>, %148, %cst_53 [0] : vector<8x32xf32> to vector<32xf32>
    %155 = vector.shape_cast %154 : vector<32xf32> to vector<1x32xf32>
    %156 = arith.mulf %148, %148 : vector<8x32xf32>
    %cst_54 = arith.constant dense<0.000000e+00> : vector<32xf32>
    %157 = vector.multi_reduction <add>, %156, %cst_54 [0] : vector<8x32xf32> to vector<32xf32>
    %158 = vector.shape_cast %157 : vector<32xf32> to vector<1x32xf32>
    %159 = tpu.concatenate %150, %153, %155, %158 in 0 : vector<1x32xf32>, vector<1x32xf32>, vector<1x32xf32>, vector<1x32xf32> -> vector<4x32xf32>
    %cst_55 = arith.constant dense<0.000000e+00> : vector<4x32xf32>
    %160 = tpu.matmul %159, %146, %cst_55 {dimension_numbers = #tpu.dot_dimension_numbers<[1], [0], [0], [1], [0, 0, 1, 1], [], []>} : vector<4x32xf32>, vector<32x32xf32>, vector<4x32xf32> -> vector<4x32xf32>
    %161 = vector.extract_strided_slice %160 {offsets = [0, 0], sizes = [1, 32], strides = [1, 1]} : vector<4x32xf32> to vector<1x32xf32>
    %162 = vector.extract_strided_slice %160 {offsets = [1, 0], sizes = [1, 32], strides = [1, 1]} : vector<4x32xf32> to vector<1x32xf32>
    %163 = arith.mulf %161, %161 : vector<1x32xf32>
    %164 = arith.subf %162, %163 : vector<1x32xf32>
    %cst_56 = arith.constant 0.000000e+00 : f32
    %165 = vector.broadcast %cst_56 : f32 to vector<1x32xf32>
    %166 = arith.maximumf %164, %165 : vector<1x32xf32>
    %167 = vector.broadcast %161 : vector<1x32xf32> to vector<8x32xf32>
    %168 = arith.subf %147, %167 : vector<8x32xf32>
    %cst_57 = arith.constant 9.99999974E-6 : f32
    %169 = vector.broadcast %cst_57 : f32 to vector<1x32xf32>
    %170 = arith.addf %166, %169 : vector<1x32xf32>
    %171 = math.rsqrt %170 : vector<1x32xf32>
    %172 = vector.broadcast %171 : vector<1x32xf32> to vector<8x32xf32>
    %173 = arith.mulf %168, %172 : vector<8x32xf32>
    %174 = vector.broadcast %144 : vector<1x32xf32> to vector<8x32xf32>
    %175 = arith.mulf %173, %174 : vector<8x32xf32>
    %176 = vector.broadcast %145 : vector<1x32xf32> to vector<8x32xf32>
    %177 = arith.addf %175, %176 : vector<8x32xf32>
    %178 = math.absf %177 : vector<8x32xf32>
    %cst_58 = arith.constant 0.000000e+00 : f32
    %179 = vector.broadcast %cst_58 : f32 to vector<8x32xf32>
    %180 = arith.subf %179, %178 : vector<8x32xf32>
    %181 = math.exp %180 : vector<8x32xf32>
    %182 = math.log1p %181 : vector<8x32xf32>
    %cst_59 = arith.constant 0.000000e+00 : f32
    %183 = vector.broadcast %cst_59 : f32 to vector<8x32xf32>
    %184 = arith.maximumf %177, %183 : vector<8x32xf32>
    %185 = arith.addf %182, %184 : vector<8x32xf32>
    %186 = math.tanh %185 : vector<8x32xf32>
    %187 = arith.mulf %177, %186 : vector<8x32xf32>
    %188 = vector.extract_strided_slice %160 {offsets = [2, 0], sizes = [1, 32], strides = [1, 1]} : vector<4x32xf32> to vector<1x32xf32>
    %189 = vector.extract_strided_slice %160 {offsets = [3, 0], sizes = [1, 32], strides = [1, 1]} : vector<4x32xf32> to vector<1x32xf32>
    %190 = arith.mulf %188, %188 : vector<1x32xf32>
    %191 = arith.subf %189, %190 : vector<1x32xf32>
    %cst_60 = arith.constant 0.000000e+00 : f32
    %192 = vector.broadcast %cst_60 : f32 to vector<1x32xf32>
    %193 = arith.maximumf %191, %192 : vector<1x32xf32>
    %194 = vector.broadcast %188 : vector<1x32xf32> to vector<8x32xf32>
    %195 = arith.subf %148, %194 : vector<8x32xf32>
    %cst_61 = arith.constant 9.99999974E-6 : f32
    %196 = vector.broadcast %cst_61 : f32 to vector<1x32xf32>
    %197 = arith.addf %193, %196 : vector<1x32xf32>
    %198 = math.rsqrt %197 : vector<1x32xf32>
    %199 = vector.broadcast %198 : vector<1x32xf32> to vector<8x32xf32>
    %200 = arith.mulf %195, %199 : vector<8x32xf32>
    %201 = vector.broadcast %144 : vector<1x32xf32> to vector<8x32xf32>
    %202 = arith.mulf %200, %201 : vector<8x32xf32>
    %203 = vector.broadcast %145 : vector<1x32xf32> to vector<8x32xf32>
    %204 = arith.addf %202, %203 : vector<8x32xf32>
    %205 = math.absf %204 : vector<8x32xf32>
    %cst_62 = arith.constant 0.000000e+00 : f32
    %206 = vector.broadcast %cst_62 : f32 to vector<8x32xf32>
    %207 = arith.subf %206, %205 : vector<8x32xf32>
    %208 = math.exp %207 : vector<8x32xf32>
    %209 = math.log1p %208 : vector<8x32xf32>
    %cst_63 = arith.constant 0.000000e+00 : f32
    %210 = vector.broadcast %cst_63 : f32 to vector<8x32xf32>
    %211 = arith.maximumf %204, %210 : vector<8x32xf32>
    %212 = arith.addf %209, %211 : vector<8x32xf32>
    %213 = math.tanh %212 : vector<8x32xf32>
    %214 = arith.mulf %204, %213 : vector<8x32xf32>
    %215 = arith.truncf %18 : vector<8x128xf32> to vector<8x128xbf16>
    %c0_64 = arith.constant 0 : index
    %c0_65 = arith.constant 0 : index
    %216 = vector.load %arg13[%c0_64, %c0_65] : memref<128x32xbf16, #tpu.memory_space<vmem>>, vector<128x32xbf16>
    %cst_66 = arith.constant dense<0.000000e+00> : vector<8x32xf32>
    %217 = tpu.matmul %215, %216, %cst_66 {dimension_numbers = #tpu.dot_dimension_numbers<[1], [0], [0], [1], [0, 0, 1, 1], [], []>} : vector<8x128xbf16>, vector<128x32xbf16>, vector<8x32xf32> -> vector<8x32xf32>
    %c0_67 = arith.constant 0 : index
    %c0_68 = arith.constant 0 : index
    %218 = vector.load %arg14[%c0_67, %c0_68] : memref<1x32xf32, #tpu.memory_space<vmem>>, vector<1x32xf32>
    %219 = vector.broadcast %218 : vector<1x32xf32> to vector<8x32xf32>
    %220 = arith.addf %217, %219 : vector<8x32xf32>
    %221 = arith.addf %187, %220 : vector<8x32xf32>
    %c0_69 = arith.constant 0 : index
    %c0_70 = arith.constant 0 : index
    %c0_71 = arith.constant 0 : index
    %222 = vector.load %arg15[%c0_69, %c0_70, %c0_71] : memref<2x8x32xf32, #tpu.memory_space<vmem>>, vector<1x8x32xf32>
    %223 = vector.shape_cast %222 : vector<1x8x32xf32> to vector<8x32xf32>
    %224 = vector.shape_cast %221 : vector<8x32xf32> to vector<1x8x32xf32>
    tpu.vector_store %arg15[%c0_69, %c0_70, %c0_71], %224 {strides = array<i32>} : memref<2x8x32xf32, #tpu.memory_space<vmem>>, vector<1x8x32xf32>,
    %225 = arith.truncf %20 : vector<8x128xf32> to vector<8x128xbf16>
    %c0_72 = arith.constant 0 : index
    %c0_73 = arith.constant 0 : index
    %226 = vector.load %arg13[%c0_72, %c0_73] : memref<128x32xbf16, #tpu.memory_space<vmem>>, vector<128x32xbf16>
    %cst_74 = arith.constant dense<0.000000e+00> : vector<8x32xf32>
    %227 = tpu.matmul %225, %226, %cst_74 {dimension_numbers = #tpu.dot_dimension_numbers<[1], [0], [0], [1], [0, 0, 1, 1], [], []>} : vector<8x128xbf16>, vector<128x32xbf16>, vector<8x32xf32> -> vector<8x32xf32>
    %c0_75 = arith.constant 0 : index
    %c0_76 = arith.constant 0 : index
    %228 = vector.load %arg14[%c0_75, %c0_76] : memref<1x32xf32, #tpu.memory_space<vmem>>, vector<1x32xf32>
    %229 = vector.broadcast %228 : vector<1x32xf32> to vector<8x32xf32>
    %230 = arith.addf %227, %229 : vector<8x32xf32>
    %231 = arith.addf %214, %230 : vector<8x32xf32>
    %c1_77 = arith.constant 1 : index
    %c0_78 = arith.constant 0 : index
    %c0_79 = arith.constant 0 : index
    %232 = vector.load %arg15[%c1_77, %c0_78, %c0_79] : memref<2x8x32xf32, #tpu.memory_space<vmem>>, vector<1x8x32xf32>
    %233 = vector.shape_cast %232 : vector<1x8x32xf32> to vector<8x32xf32>
    %234 = vector.shape_cast %231 : vector<8x32xf32> to vector<1x8x32xf32>
    tpu.vector_store %arg15[%c1_77, %c0_78, %c0_79], %234 {strides = array<i32>} : memref<2x8x32xf32, #tpu.memory_space<vmem>>, vector<1x8x32xf32>,
    return
  }
}

module attributes {stable_mosaic.version = 11 : i64} {
  func.func @_resblock_kernel_nores(%arg0: memref<2x8x32xf32, #tpu.memory_space<vmem>>, %arg1: memref<2x32xf32, #tpu.memory_space<vmem>>, %arg2: memref<160x32xbf16, #tpu.memory_space<vmem>>, %arg3: memref<1x32xf32, #tpu.memory_space<vmem>>, %arg4: memref<1x32xf32, #tpu.memory_space<vmem>>, %arg5: memref<1x32xf32, #tpu.memory_space<vmem>>, %arg6: memref<32x32xbf16, #tpu.memory_space<vmem>>, %arg7: memref<1x32xf32, #tpu.memory_space<vmem>>, %arg8: memref<160x32xbf16, #tpu.memory_space<vmem>>, %arg9: memref<1x32xf32, #tpu.memory_space<vmem>>, %arg10: memref<1x32xf32, #tpu.memory_space<vmem>>, %arg11: memref<1x32xf32, #tpu.memory_space<vmem>>, %arg12: memref<32x32xf32, #tpu.memory_space<vmem>>, %arg13: memref<2x8x32xf32, #tpu.memory_space<vmem>>) attributes {dimension_semantics = [], scalar_prefetch = 0 : i64, scratch_operands = 0 : i64, tpu.core_type = #tpu.core_type<tc>} {
    %c0 = arith.constant 0 : index
    %c0_0 = arith.constant 0 : index
    %0 = vector.load %arg1[%c0, %c0_0] : memref<2x32xf32, #tpu.memory_space<vmem>>, vector<2x32xf32>
    %1 = math.absf %0 : vector<2x32xf32>
    %cst = arith.constant 0.000000e+00 : f32
    %2 = vector.broadcast %cst : f32 to vector<2x32xf32>
    %3 = arith.subf %2, %1 : vector<2x32xf32>
    %4 = math.exp %3 : vector<2x32xf32>
    %5 = math.log1p %4 : vector<2x32xf32>
    %cst_1 = arith.constant 0.000000e+00 : f32
    %6 = vector.broadcast %cst_1 : f32 to vector<2x32xf32>
    %7 = arith.maximumf %0, %6 : vector<2x32xf32>
    %8 = arith.addf %5, %7 : vector<2x32xf32>
    %9 = math.tanh %8 : vector<2x32xf32>
    %10 = arith.mulf %0, %9 : vector<2x32xf32>
    %11 = arith.truncf %10 : vector<2x32xf32> to vector<2x32xbf16>
    %c0_2 = arith.constant 0 : index
    %c0_3 = arith.constant 0 : index
    %12 = vector.load %arg6[%c0_2, %c0_3] : memref<32x32xbf16, #tpu.memory_space<vmem>>, vector<32x32xbf16>
    %cst_4 = arith.constant dense<0.000000e+00> : vector<2x32xf32>
    %13 = tpu.matmul %11, %12, %cst_4 {dimension_numbers = #tpu.dot_dimension_numbers<[1], [0], [0], [1], [0, 0, 1, 1], [], []>} : vector<2x32xbf16>, vector<32x32xbf16>, vector<2x32xf32> -> vector<2x32xf32>
    %c0_5 = arith.constant 0 : index
    %c0_6 = arith.constant 0 : index
    %14 = vector.load %arg7[%c0_5, %c0_6] : memref<1x32xf32, #tpu.memory_space<vmem>>, vector<1x32xf32>
    %15 = vector.broadcast %14 : vector<1x32xf32> to vector<2x32xf32>
    %16 = arith.addf %13, %15 : vector<2x32xf32>
    %c0_7 = arith.constant 0 : index
    %c0_8 = arith.constant 0 : index
    %c0_9 = arith.constant 0 : index
    %17 = vector.load %arg0[%c0_7, %c0_8, %c0_9] : memref<2x8x32xf32, #tpu.memory_space<vmem>>, vector<1x8x32xf32>
    %18 = vector.shape_cast %17 : vector<1x8x32xf32> to vector<8x32xf32>
    %c1 = arith.constant 1 : index
    %c0_10 = arith.constant 0 : index
    %c0_11 = arith.constant 0 : index
    %19 = vector.load %arg0[%c1, %c0_10, %c0_11] : memref<2x8x32xf32, #tpu.memory_space<vmem>>, vector<1x8x32xf32>
    %20 = vector.shape_cast %19 : vector<1x8x32xf32> to vector<8x32xf32>
    %cst_12 = arith.constant 0.000000e+00 : f32
    %21 = vector.broadcast %cst_12 : f32 to vector<2x32xf32>
    %22 = tpu.concatenate %21, %18, %21 in 0 : vector<2x32xf32>, vector<8x32xf32>, vector<2x32xf32> -> vector<12x32xf32>
    %23 = vector.extract_strided_slice %22 {offsets = [0, 0], sizes = [8, 32], strides = [1, 1]} : vector<12x32xf32> to vector<8x32xf32>
    %24 = vector.extract_strided_slice %22 {offsets = [1, 0], sizes = [8, 32], strides = [1, 1]} : vector<12x32xf32> to vector<8x32xf32>
    %25 = vector.extract_strided_slice %22 {offsets = [2, 0], sizes = [8, 32], strides = [1, 1]} : vector<12x32xf32> to vector<8x32xf32>
    %26 = vector.extract_strided_slice %22 {offsets = [3, 0], sizes = [8, 32], strides = [1, 1]} : vector<12x32xf32> to vector<8x32xf32>
    %27 = vector.extract_strided_slice %22 {offsets = [4, 0], sizes = [8, 32], strides = [1, 1]} : vector<12x32xf32> to vector<8x32xf32>
    %28 = tpu.concatenate %23, %24, %25, %26, %27 in 1 : vector<8x32xf32>, vector<8x32xf32>, vector<8x32xf32>, vector<8x32xf32>, vector<8x32xf32> -> vector<8x160xf32>
    %cst_13 = arith.constant 0.000000e+00 : f32
    %29 = vector.broadcast %cst_13 : f32 to vector<2x32xf32>
    %30 = tpu.concatenate %29, %20, %29 in 0 : vector<2x32xf32>, vector<8x32xf32>, vector<2x32xf32> -> vector<12x32xf32>
    %31 = vector.extract_strided_slice %30 {offsets = [0, 0], sizes = [8, 32], strides = [1, 1]} : vector<12x32xf32> to vector<8x32xf32>
    %32 = vector.extract_strided_slice %30 {offsets = [1, 0], sizes = [8, 32], strides = [1, 1]} : vector<12x32xf32> to vector<8x32xf32>
    %33 = vector.extract_strided_slice %30 {offsets = [2, 0], sizes = [8, 32], strides = [1, 1]} : vector<12x32xf32> to vector<8x32xf32>
    %34 = vector.extract_strided_slice %30 {offsets = [3, 0], sizes = [8, 32], strides = [1, 1]} : vector<12x32xf32> to vector<8x32xf32>
    %35 = vector.extract_strided_slice %30 {offsets = [4, 0], sizes = [8, 32], strides = [1, 1]} : vector<12x32xf32> to vector<8x32xf32>
    %36 = tpu.concatenate %31, %32, %33, %34, %35 in 1 : vector<8x32xf32>, vector<8x32xf32>, vector<8x32xf32>, vector<8x32xf32>, vector<8x32xf32> -> vector<8x160xf32>
    %37 = tpu.concatenate %28, %36 in 0 : vector<8x160xf32>, vector<8x160xf32> -> vector<16x160xf32>
    %38 = arith.truncf %37 : vector<16x160xf32> to vector<16x160xbf16>
    %c0_14 = arith.constant 0 : index
    %c0_15 = arith.constant 0 : index
    %39 = vector.load %arg2[%c0_14, %c0_15] : memref<160x32xbf16, #tpu.memory_space<vmem>>, vector<160x32xbf16>
    %cst_16 = arith.constant dense<0.000000e+00> : vector<16x32xf32>
    %40 = tpu.matmul %38, %39, %cst_16 {dimension_numbers = #tpu.dot_dimension_numbers<[1], [0], [0], [1], [0, 0, 1, 1], [], []>} : vector<16x160xbf16>, vector<160x32xbf16>, vector<16x32xf32> -> vector<16x32xf32>
    %c0_17 = arith.constant 0 : index
    %c0_18 = arith.constant 0 : index
    %41 = vector.load %arg3[%c0_17, %c0_18] : memref<1x32xf32, #tpu.memory_space<vmem>>, vector<1x32xf32>
    %42 = vector.broadcast %41 : vector<1x32xf32> to vector<16x32xf32>
    %43 = arith.addf %40, %42 : vector<16x32xf32>
    %c0_19 = arith.constant 0 : index
    %c0_20 = arith.constant 0 : index
    %44 = vector.load %arg4[%c0_19, %c0_20] : memref<1x32xf32, #tpu.memory_space<vmem>>, vector<1x32xf32>
    %c0_21 = arith.constant 0 : index
    %c0_22 = arith.constant 0 : index
    %45 = vector.load %arg5[%c0_21, %c0_22] : memref<1x32xf32, #tpu.memory_space<vmem>>, vector<1x32xf32>
    %c0_23 = arith.constant 0 : index
    %c0_24 = arith.constant 0 : index
    %46 = vector.load %arg12[%c0_23, %c0_24] : memref<32x32xf32, #tpu.memory_space<vmem>>, vector<32x32xf32>
    %47 = vector.extract_strided_slice %43 {offsets = [0, 0], sizes = [8, 32], strides = [1, 1]} : vector<16x32xf32> to vector<8x32xf32>
    %48 = vector.extract_strided_slice %43 {offsets = [8, 0], sizes = [8, 32], strides = [1, 1]} : vector<16x32xf32> to vector<8x32xf32>
    %cst_25 = arith.constant dense<0.000000e+00> : vector<32xf32>
    %49 = vector.multi_reduction <add>, %47, %cst_25 [0] : vector<8x32xf32> to vector<32xf32>
    %50 = vector.shape_cast %49 : vector<32xf32> to vector<1x32xf32>
    %51 = arith.mulf %47, %47 : vector<8x32xf32>
    %cst_26 = arith.constant dense<0.000000e+00> : vector<32xf32>
    %52 = vector.multi_reduction <add>, %51, %cst_26 [0] : vector<8x32xf32> to vector<32xf32>
    %53 = vector.shape_cast %52 : vector<32xf32> to vector<1x32xf32>
    %cst_27 = arith.constant dense<0.000000e+00> : vector<32xf32>
    %54 = vector.multi_reduction <add>, %48, %cst_27 [0] : vector<8x32xf32> to vector<32xf32>
    %55 = vector.shape_cast %54 : vector<32xf32> to vector<1x32xf32>
    %56 = arith.mulf %48, %48 : vector<8x32xf32>
    %cst_28 = arith.constant dense<0.000000e+00> : vector<32xf32>
    %57 = vector.multi_reduction <add>, %56, %cst_28 [0] : vector<8x32xf32> to vector<32xf32>
    %58 = vector.shape_cast %57 : vector<32xf32> to vector<1x32xf32>
    %59 = tpu.concatenate %50, %53, %55, %58 in 0 : vector<1x32xf32>, vector<1x32xf32>, vector<1x32xf32>, vector<1x32xf32> -> vector<4x32xf32>
    %cst_29 = arith.constant dense<0.000000e+00> : vector<4x32xf32>
    %60 = tpu.matmul %59, %46, %cst_29 {dimension_numbers = #tpu.dot_dimension_numbers<[1], [0], [0], [1], [0, 0, 1, 1], [], []>} : vector<4x32xf32>, vector<32x32xf32>, vector<4x32xf32> -> vector<4x32xf32>
    %61 = vector.extract_strided_slice %60 {offsets = [0, 0], sizes = [1, 32], strides = [1, 1]} : vector<4x32xf32> to vector<1x32xf32>
    %62 = vector.extract_strided_slice %60 {offsets = [1, 0], sizes = [1, 32], strides = [1, 1]} : vector<4x32xf32> to vector<1x32xf32>
    %63 = arith.mulf %61, %61 : vector<1x32xf32>
    %64 = arith.subf %62, %63 : vector<1x32xf32>
    %cst_30 = arith.constant 0.000000e+00 : f32
    %65 = vector.broadcast %cst_30 : f32 to vector<1x32xf32>
    %66 = arith.maximumf %64, %65 : vector<1x32xf32>
    %67 = vector.broadcast %61 : vector<1x32xf32> to vector<8x32xf32>
    %68 = arith.subf %47, %67 : vector<8x32xf32>
    %cst_31 = arith.constant 9.99999974E-6 : f32
    %69 = vector.broadcast %cst_31 : f32 to vector<1x32xf32>
    %70 = arith.addf %66, %69 : vector<1x32xf32>
    %71 = math.rsqrt %70 : vector<1x32xf32>
    %72 = vector.broadcast %71 : vector<1x32xf32> to vector<8x32xf32>
    %73 = arith.mulf %68, %72 : vector<8x32xf32>
    %74 = vector.broadcast %44 : vector<1x32xf32> to vector<8x32xf32>
    %75 = arith.mulf %73, %74 : vector<8x32xf32>
    %76 = vector.broadcast %45 : vector<1x32xf32> to vector<8x32xf32>
    %77 = arith.addf %75, %76 : vector<8x32xf32>
    %78 = math.absf %77 : vector<8x32xf32>
    %cst_32 = arith.constant 0.000000e+00 : f32
    %79 = vector.broadcast %cst_32 : f32 to vector<8x32xf32>
    %80 = arith.subf %79, %78 : vector<8x32xf32>
    %81 = math.exp %80 : vector<8x32xf32>
    %82 = math.log1p %81 : vector<8x32xf32>
    %cst_33 = arith.constant 0.000000e+00 : f32
    %83 = vector.broadcast %cst_33 : f32 to vector<8x32xf32>
    %84 = arith.maximumf %77, %83 : vector<8x32xf32>
    %85 = arith.addf %82, %84 : vector<8x32xf32>
    %86 = math.tanh %85 : vector<8x32xf32>
    %87 = arith.mulf %77, %86 : vector<8x32xf32>
    %88 = vector.extract_strided_slice %60 {offsets = [2, 0], sizes = [1, 32], strides = [1, 1]} : vector<4x32xf32> to vector<1x32xf32>
    %89 = vector.extract_strided_slice %60 {offsets = [3, 0], sizes = [1, 32], strides = [1, 1]} : vector<4x32xf32> to vector<1x32xf32>
    %90 = arith.mulf %88, %88 : vector<1x32xf32>
    %91 = arith.subf %89, %90 : vector<1x32xf32>
    %cst_34 = arith.constant 0.000000e+00 : f32
    %92 = vector.broadcast %cst_34 : f32 to vector<1x32xf32>
    %93 = arith.maximumf %91, %92 : vector<1x32xf32>
    %94 = vector.broadcast %88 : vector<1x32xf32> to vector<8x32xf32>
    %95 = arith.subf %48, %94 : vector<8x32xf32>
    %cst_35 = arith.constant 9.99999974E-6 : f32
    %96 = vector.broadcast %cst_35 : f32 to vector<1x32xf32>
    %97 = arith.addf %93, %96 : vector<1x32xf32>
    %98 = math.rsqrt %97 : vector<1x32xf32>
    %99 = vector.broadcast %98 : vector<1x32xf32> to vector<8x32xf32>
    %100 = arith.mulf %95, %99 : vector<8x32xf32>
    %101 = vector.broadcast %44 : vector<1x32xf32> to vector<8x32xf32>
    %102 = arith.mulf %100, %101 : vector<8x32xf32>
    %103 = vector.broadcast %45 : vector<1x32xf32> to vector<8x32xf32>
    %104 = arith.addf %102, %103 : vector<8x32xf32>
    %105 = math.absf %104 : vector<8x32xf32>
    %cst_36 = arith.constant 0.000000e+00 : f32
    %106 = vector.broadcast %cst_36 : f32 to vector<8x32xf32>
    %107 = arith.subf %106, %105 : vector<8x32xf32>
    %108 = math.exp %107 : vector<8x32xf32>
    %109 = math.log1p %108 : vector<8x32xf32>
    %cst_37 = arith.constant 0.000000e+00 : f32
    %110 = vector.broadcast %cst_37 : f32 to vector<8x32xf32>
    %111 = arith.maximumf %104, %110 : vector<8x32xf32>
    %112 = arith.addf %109, %111 : vector<8x32xf32>
    %113 = math.tanh %112 : vector<8x32xf32>
    %114 = arith.mulf %104, %113 : vector<8x32xf32>
    %115 = vector.extract_strided_slice %16 {offsets = [0, 0], sizes = [1, 32], strides = [1, 1]} : vector<2x32xf32> to vector<1x32xf32>
    %116 = vector.broadcast %115 : vector<1x32xf32> to vector<8x32xf32>
    %117 = arith.addf %87, %116 : vector<8x32xf32>
    %118 = vector.extract_strided_slice %16 {offsets = [1, 0], sizes = [1, 32], strides = [1, 1]} : vector<2x32xf32> to vector<1x32xf32>
    %119 = vector.broadcast %118 : vector<1x32xf32> to vector<8x32xf32>
    %120 = arith.addf %114, %119 : vector<8x32xf32>
    %cst_38 = arith.constant 0.000000e+00 : f32
    %121 = vector.broadcast %cst_38 : f32 to vector<2x32xf32>
    %122 = tpu.concatenate %121, %117, %121 in 0 : vector<2x32xf32>, vector<8x32xf32>, vector<2x32xf32> -> vector<12x32xf32>
    %123 = vector.extract_strided_slice %122 {offsets = [0, 0], sizes = [8, 32], strides = [1, 1]} : vector<12x32xf32> to vector<8x32xf32>
    %124 = vector.extract_strided_slice %122 {offsets = [1, 0], sizes = [8, 32], strides = [1, 1]} : vector<12x32xf32> to vector<8x32xf32>
    %125 = vector.extract_strided_slice %122 {offsets = [2, 0], sizes = [8, 32], strides = [1, 1]} : vector<12x32xf32> to vector<8x32xf32>
    %126 = vector.extract_strided_slice %122 {offsets = [3, 0], sizes = [8, 32], strides = [1, 1]} : vector<12x32xf32> to vector<8x32xf32>
    %127 = vector.extract_strided_slice %122 {offsets = [4, 0], sizes = [8, 32], strides = [1, 1]} : vector<12x32xf32> to vector<8x32xf32>
    %128 = tpu.concatenate %123, %124, %125, %126, %127 in 1 : vector<8x32xf32>, vector<8x32xf32>, vector<8x32xf32>, vector<8x32xf32>, vector<8x32xf32> -> vector<8x160xf32>
    %cst_39 = arith.constant 0.000000e+00 : f32
    %129 = vector.broadcast %cst_39 : f32 to vector<2x32xf32>
    %130 = tpu.concatenate %129, %120, %129 in 0 : vector<2x32xf32>, vector<8x32xf32>, vector<2x32xf32> -> vector<12x32xf32>
    %131 = vector.extract_strided_slice %130 {offsets = [0, 0], sizes = [8, 32], strides = [1, 1]} : vector<12x32xf32> to vector<8x32xf32>
    %132 = vector.extract_strided_slice %130 {offsets = [1, 0], sizes = [8, 32], strides = [1, 1]} : vector<12x32xf32> to vector<8x32xf32>
    %133 = vector.extract_strided_slice %130 {offsets = [2, 0], sizes = [8, 32], strides = [1, 1]} : vector<12x32xf32> to vector<8x32xf32>
    %134 = vector.extract_strided_slice %130 {offsets = [3, 0], sizes = [8, 32], strides = [1, 1]} : vector<12x32xf32> to vector<8x32xf32>
    %135 = vector.extract_strided_slice %130 {offsets = [4, 0], sizes = [8, 32], strides = [1, 1]} : vector<12x32xf32> to vector<8x32xf32>
    %136 = tpu.concatenate %131, %132, %133, %134, %135 in 1 : vector<8x32xf32>, vector<8x32xf32>, vector<8x32xf32>, vector<8x32xf32>, vector<8x32xf32> -> vector<8x160xf32>
    %137 = tpu.concatenate %128, %136 in 0 : vector<8x160xf32>, vector<8x160xf32> -> vector<16x160xf32>
    %138 = arith.truncf %137 : vector<16x160xf32> to vector<16x160xbf16>
    %c0_40 = arith.constant 0 : index
    %c0_41 = arith.constant 0 : index
    %139 = vector.load %arg8[%c0_40, %c0_41] : memref<160x32xbf16, #tpu.memory_space<vmem>>, vector<160x32xbf16>
    %cst_42 = arith.constant dense<0.000000e+00> : vector<16x32xf32>
    %140 = tpu.matmul %138, %139, %cst_42 {dimension_numbers = #tpu.dot_dimension_numbers<[1], [0], [0], [1], [0, 0, 1, 1], [], []>} : vector<16x160xbf16>, vector<160x32xbf16>, vector<16x32xf32> -> vector<16x32xf32>
    %c0_43 = arith.constant 0 : index
    %c0_44 = arith.constant 0 : index
    %141 = vector.load %arg9[%c0_43, %c0_44] : memref<1x32xf32, #tpu.memory_space<vmem>>, vector<1x32xf32>
    %142 = vector.broadcast %141 : vector<1x32xf32> to vector<16x32xf32>
    %143 = arith.addf %140, %142 : vector<16x32xf32>
    %c0_45 = arith.constant 0 : index
    %c0_46 = arith.constant 0 : index
    %144 = vector.load %arg10[%c0_45, %c0_46] : memref<1x32xf32, #tpu.memory_space<vmem>>, vector<1x32xf32>
    %c0_47 = arith.constant 0 : index
    %c0_48 = arith.constant 0 : index
    %145 = vector.load %arg11[%c0_47, %c0_48] : memref<1x32xf32, #tpu.memory_space<vmem>>, vector<1x32xf32>
    %c0_49 = arith.constant 0 : index
    %c0_50 = arith.constant 0 : index
    %146 = vector.load %arg12[%c0_49, %c0_50] : memref<32x32xf32, #tpu.memory_space<vmem>>, vector<32x32xf32>
    %147 = vector.extract_strided_slice %143 {offsets = [0, 0], sizes = [8, 32], strides = [1, 1]} : vector<16x32xf32> to vector<8x32xf32>
    %148 = vector.extract_strided_slice %143 {offsets = [8, 0], sizes = [8, 32], strides = [1, 1]} : vector<16x32xf32> to vector<8x32xf32>
    %cst_51 = arith.constant dense<0.000000e+00> : vector<32xf32>
    %149 = vector.multi_reduction <add>, %147, %cst_51 [0] : vector<8x32xf32> to vector<32xf32>
    %150 = vector.shape_cast %149 : vector<32xf32> to vector<1x32xf32>
    %151 = arith.mulf %147, %147 : vector<8x32xf32>
    %cst_52 = arith.constant dense<0.000000e+00> : vector<32xf32>
    %152 = vector.multi_reduction <add>, %151, %cst_52 [0] : vector<8x32xf32> to vector<32xf32>
    %153 = vector.shape_cast %152 : vector<32xf32> to vector<1x32xf32>
    %cst_53 = arith.constant dense<0.000000e+00> : vector<32xf32>
    %154 = vector.multi_reduction <add>, %148, %cst_53 [0] : vector<8x32xf32> to vector<32xf32>
    %155 = vector.shape_cast %154 : vector<32xf32> to vector<1x32xf32>
    %156 = arith.mulf %148, %148 : vector<8x32xf32>
    %cst_54 = arith.constant dense<0.000000e+00> : vector<32xf32>
    %157 = vector.multi_reduction <add>, %156, %cst_54 [0] : vector<8x32xf32> to vector<32xf32>
    %158 = vector.shape_cast %157 : vector<32xf32> to vector<1x32xf32>
    %159 = tpu.concatenate %150, %153, %155, %158 in 0 : vector<1x32xf32>, vector<1x32xf32>, vector<1x32xf32>, vector<1x32xf32> -> vector<4x32xf32>
    %cst_55 = arith.constant dense<0.000000e+00> : vector<4x32xf32>
    %160 = tpu.matmul %159, %146, %cst_55 {dimension_numbers = #tpu.dot_dimension_numbers<[1], [0], [0], [1], [0, 0, 1, 1], [], []>} : vector<4x32xf32>, vector<32x32xf32>, vector<4x32xf32> -> vector<4x32xf32>
    %161 = vector.extract_strided_slice %160 {offsets = [0, 0], sizes = [1, 32], strides = [1, 1]} : vector<4x32xf32> to vector<1x32xf32>
    %162 = vector.extract_strided_slice %160 {offsets = [1, 0], sizes = [1, 32], strides = [1, 1]} : vector<4x32xf32> to vector<1x32xf32>
    %163 = arith.mulf %161, %161 : vector<1x32xf32>
    %164 = arith.subf %162, %163 : vector<1x32xf32>
    %cst_56 = arith.constant 0.000000e+00 : f32
    %165 = vector.broadcast %cst_56 : f32 to vector<1x32xf32>
    %166 = arith.maximumf %164, %165 : vector<1x32xf32>
    %167 = vector.broadcast %161 : vector<1x32xf32> to vector<8x32xf32>
    %168 = arith.subf %147, %167 : vector<8x32xf32>
    %cst_57 = arith.constant 9.99999974E-6 : f32
    %169 = vector.broadcast %cst_57 : f32 to vector<1x32xf32>
    %170 = arith.addf %166, %169 : vector<1x32xf32>
    %171 = math.rsqrt %170 : vector<1x32xf32>
    %172 = vector.broadcast %171 : vector<1x32xf32> to vector<8x32xf32>
    %173 = arith.mulf %168, %172 : vector<8x32xf32>
    %174 = vector.broadcast %144 : vector<1x32xf32> to vector<8x32xf32>
    %175 = arith.mulf %173, %174 : vector<8x32xf32>
    %176 = vector.broadcast %145 : vector<1x32xf32> to vector<8x32xf32>
    %177 = arith.addf %175, %176 : vector<8x32xf32>
    %178 = math.absf %177 : vector<8x32xf32>
    %cst_58 = arith.constant 0.000000e+00 : f32
    %179 = vector.broadcast %cst_58 : f32 to vector<8x32xf32>
    %180 = arith.subf %179, %178 : vector<8x32xf32>
    %181 = math.exp %180 : vector<8x32xf32>
    %182 = math.log1p %181 : vector<8x32xf32>
    %cst_59 = arith.constant 0.000000e+00 : f32
    %183 = vector.broadcast %cst_59 : f32 to vector<8x32xf32>
    %184 = arith.maximumf %177, %183 : vector<8x32xf32>
    %185 = arith.addf %182, %184 : vector<8x32xf32>
    %186 = math.tanh %185 : vector<8x32xf32>
    %187 = arith.mulf %177, %186 : vector<8x32xf32>
    %188 = vector.extract_strided_slice %160 {offsets = [2, 0], sizes = [1, 32], strides = [1, 1]} : vector<4x32xf32> to vector<1x32xf32>
    %189 = vector.extract_strided_slice %160 {offsets = [3, 0], sizes = [1, 32], strides = [1, 1]} : vector<4x32xf32> to vector<1x32xf32>
    %190 = arith.mulf %188, %188 : vector<1x32xf32>
    %191 = arith.subf %189, %190 : vector<1x32xf32>
    %cst_60 = arith.constant 0.000000e+00 : f32
    %192 = vector.broadcast %cst_60 : f32 to vector<1x32xf32>
    %193 = arith.maximumf %191, %192 : vector<1x32xf32>
    %194 = vector.broadcast %188 : vector<1x32xf32> to vector<8x32xf32>
    %195 = arith.subf %148, %194 : vector<8x32xf32>
    %cst_61 = arith.constant 9.99999974E-6 : f32
    %196 = vector.broadcast %cst_61 : f32 to vector<1x32xf32>
    %197 = arith.addf %193, %196 : vector<1x32xf32>
    %198 = math.rsqrt %197 : vector<1x32xf32>
    %199 = vector.broadcast %198 : vector<1x32xf32> to vector<8x32xf32>
    %200 = arith.mulf %195, %199 : vector<8x32xf32>
    %201 = vector.broadcast %144 : vector<1x32xf32> to vector<8x32xf32>
    %202 = arith.mulf %200, %201 : vector<8x32xf32>
    %203 = vector.broadcast %145 : vector<1x32xf32> to vector<8x32xf32>
    %204 = arith.addf %202, %203 : vector<8x32xf32>
    %205 = math.absf %204 : vector<8x32xf32>
    %cst_62 = arith.constant 0.000000e+00 : f32
    %206 = vector.broadcast %cst_62 : f32 to vector<8x32xf32>
    %207 = arith.subf %206, %205 : vector<8x32xf32>
    %208 = math.exp %207 : vector<8x32xf32>
    %209 = math.log1p %208 : vector<8x32xf32>
    %cst_63 = arith.constant 0.000000e+00 : f32
    %210 = vector.broadcast %cst_63 : f32 to vector<8x32xf32>
    %211 = arith.maximumf %204, %210 : vector<8x32xf32>
    %212 = arith.addf %209, %211 : vector<8x32xf32>
    %213 = math.tanh %212 : vector<8x32xf32>
    %214 = arith.mulf %204, %213 : vector<8x32xf32>
    %215 = arith.addf %187, %18 : vector<8x32xf32>
    %c0_64 = arith.constant 0 : index
    %c0_65 = arith.constant 0 : index
    %c0_66 = arith.constant 0 : index
    %216 = vector.load %arg13[%c0_64, %c0_65, %c0_66] : memref<2x8x32xf32, #tpu.memory_space<vmem>>, vector<1x8x32xf32>
    %217 = vector.shape_cast %216 : vector<1x8x32xf32> to vector<8x32xf32>
    %218 = vector.shape_cast %215 : vector<8x32xf32> to vector<1x8x32xf32>
    tpu.vector_store %arg13[%c0_64, %c0_65, %c0_66], %218 {strides = array<i32>} : memref<2x8x32xf32, #tpu.memory_space<vmem>>, vector<1x8x32xf32>,
    %219 = arith.addf %214, %20 : vector<8x32xf32>
    %c1_67 = arith.constant 1 : index
    %c0_68 = arith.constant 0 : index
    %c0_69 = arith.constant 0 : index
    %220 = vector.load %arg13[%c1_67, %c0_68, %c0_69] : memref<2x8x32xf32, #tpu.memory_space<vmem>>, vector<1x8x32xf32>
    %221 = vector.shape_cast %220 : vector<1x8x32xf32> to vector<8x32xf32>
    %222 = vector.shape_cast %219 : vector<8x32xf32> to vector<1x8x32xf32>
    tpu.vector_store %arg13[%c1_67, %c0_68, %c0_69], %222 {strides = array<i32>} : memref<2x8x32xf32, #tpu.memory_space<vmem>>, vector<1x8x32xf32>,
    return
  }
}

module attributes {stable_mosaic.version = 11 : i64} {
  func.func @_upsample_kernel(%arg0: memref<16x64xf32, #tpu.memory_space<vmem>>, %arg1: memref<16x64xf32, #tpu.memory_space<vmem>>, %arg2: memref<64x32xbf16, #tpu.memory_space<vmem>>, %arg3: memref<64x32xbf16, #tpu.memory_space<vmem>>, %arg4: memref<1x32xf32, #tpu.memory_space<vmem>>, %arg5: memref<16x64xf32, #tpu.memory_space<vmem>>) attributes {dimension_semantics = [], scalar_prefetch = 0 : i64, scratch_operands = 0 : i64, tpu.core_type = #tpu.core_type<tc>} {
    %c0 = arith.constant 0 : index
    %c0_0 = arith.constant 0 : index
    %0 = vector.load %arg0[%c0, %c0_0] : memref<16x64xf32, #tpu.memory_space<vmem>>, vector<16x64xf32>
    %1 = arith.truncf %0 : vector<16x64xf32> to vector<16x64xbf16>
    %c0_1 = arith.constant 0 : index
    %c0_2 = arith.constant 0 : index
    %2 = vector.load %arg2[%c0_1, %c0_2] : memref<64x32xbf16, #tpu.memory_space<vmem>>, vector<64x32xbf16>
    %cst = arith.constant dense<0.000000e+00> : vector<16x32xf32>
    %3 = tpu.matmul %1, %2, %cst {dimension_numbers = #tpu.dot_dimension_numbers<[1], [0], [0], [1], [0, 0, 1, 1], [], []>} : vector<16x64xbf16>, vector<64x32xbf16>, vector<16x32xf32> -> vector<16x32xf32>
    %c0_3 = arith.constant 0 : index
    %c0_4 = arith.constant 0 : index
    %4 = vector.load %arg4[%c0_3, %c0_4] : memref<1x32xf32, #tpu.memory_space<vmem>>, vector<1x32xf32>
    %5 = vector.broadcast %4 : vector<1x32xf32> to vector<16x32xf32>
    %6 = arith.addf %3, %5 : vector<16x32xf32>
    %c0_5 = arith.constant 0 : index
    %c0_6 = arith.constant 0 : index
    %7 = vector.load %arg1[%c0_5, %c0_6] : memref<16x64xf32, #tpu.memory_space<vmem>>, vector<16x64xf32>
    %8 = arith.truncf %7 : vector<16x64xf32> to vector<16x64xbf16>
    %c0_7 = arith.constant 0 : index
    %c0_8 = arith.constant 0 : index
    %9 = vector.load %arg3[%c0_7, %c0_8] : memref<64x32xbf16, #tpu.memory_space<vmem>>, vector<64x32xbf16>
    %cst_9 = arith.constant dense<0.000000e+00> : vector<16x32xf32>
    %10 = tpu.matmul %8, %9, %cst_9 {dimension_numbers = #tpu.dot_dimension_numbers<[1], [0], [0], [1], [0, 0, 1, 1], [], []>} : vector<16x64xbf16>, vector<64x32xbf16>, vector<16x32xf32> -> vector<16x32xf32>
    %c0_10 = arith.constant 0 : index
    %c0_11 = arith.constant 0 : index
    %11 = vector.load %arg4[%c0_10, %c0_11] : memref<1x32xf32, #tpu.memory_space<vmem>>, vector<1x32xf32>
    %12 = vector.broadcast %11 : vector<1x32xf32> to vector<16x32xf32>
    %13 = arith.addf %10, %12 : vector<16x32xf32>
    %14 = tpu.concatenate %6, %13 in 1 : vector<16x32xf32>, vector<16x32xf32> -> vector<16x64xf32>
    %c0_12 = arith.constant 0 : index
    %c0_13 = arith.constant 0 : index
    %15 = vector.load %arg5[%c0_12, %c0_13] : memref<16x64xf32, #tpu.memory_space<vmem>>, vector<16x64xf32>
    tpu.vector_store %arg5[%c0_12, %c0_13], %14 {strides = array<i32>} : memref<16x64xf32, #tpu.memory_space<vmem>>, vector<16x64xf32>,
    return
  }
}

module attributes {stable_mosaic.version = 11 : i64} {
  func.func @_final_kernel(%arg0: memref<2x16x32xf32, #tpu.memory_space<vmem>>, %arg1: memref<160x32xbf16, #tpu.memory_space<vmem>>, %arg2: memref<1x32xf32, #tpu.memory_space<vmem>>, %arg3: memref<1x32xf32, #tpu.memory_space<vmem>>, %arg4: memref<1x32xf32, #tpu.memory_space<vmem>>, %arg5: memref<32x32xf32, #tpu.memory_space<vmem>>, %arg6: memref<32x8xbf16, #tpu.memory_space<vmem>>, %arg7: memref<1x8xf32, #tpu.memory_space<vmem>>, %arg8: memref<2x16x8xf32, #tpu.memory_space<vmem>>) attributes {dimension_semantics = [], scalar_prefetch = 0 : i64, scratch_operands = 0 : i64, tpu.core_type = #tpu.core_type<tc>} {
    %c0 = arith.constant 0 : index
    %c0_0 = arith.constant 0 : index
    %c0_1 = arith.constant 0 : index
    %0 = vector.load %arg0[%c0, %c0_0, %c0_1] : memref<2x16x32xf32, #tpu.memory_space<vmem>>, vector<1x16x32xf32>
    %1 = vector.shape_cast %0 : vector<1x16x32xf32> to vector<16x32xf32>
    %c1 = arith.constant 1 : index
    %c0_2 = arith.constant 0 : index
    %c0_3 = arith.constant 0 : index
    %2 = vector.load %arg0[%c1, %c0_2, %c0_3] : memref<2x16x32xf32, #tpu.memory_space<vmem>>, vector<1x16x32xf32>
    %3 = vector.shape_cast %2 : vector<1x16x32xf32> to vector<16x32xf32>
    %cst = arith.constant 0.000000e+00 : f32
    %4 = vector.broadcast %cst : f32 to vector<2x32xf32>
    %5 = tpu.concatenate %4, %1, %4 in 0 : vector<2x32xf32>, vector<16x32xf32>, vector<2x32xf32> -> vector<20x32xf32>
    %6 = vector.extract_strided_slice %5 {offsets = [0, 0], sizes = [16, 32], strides = [1, 1]} : vector<20x32xf32> to vector<16x32xf32>
    %7 = vector.extract_strided_slice %5 {offsets = [1, 0], sizes = [16, 32], strides = [1, 1]} : vector<20x32xf32> to vector<16x32xf32>
    %8 = vector.extract_strided_slice %5 {offsets = [2, 0], sizes = [16, 32], strides = [1, 1]} : vector<20x32xf32> to vector<16x32xf32>
    %9 = vector.extract_strided_slice %5 {offsets = [3, 0], sizes = [16, 32], strides = [1, 1]} : vector<20x32xf32> to vector<16x32xf32>
    %10 = vector.extract_strided_slice %5 {offsets = [4, 0], sizes = [16, 32], strides = [1, 1]} : vector<20x32xf32> to vector<16x32xf32>
    %11 = tpu.concatenate %6, %7, %8, %9, %10 in 1 : vector<16x32xf32>, vector<16x32xf32>, vector<16x32xf32>, vector<16x32xf32>, vector<16x32xf32> -> vector<16x160xf32>
    %cst_4 = arith.constant 0.000000e+00 : f32
    %12 = vector.broadcast %cst_4 : f32 to vector<2x32xf32>
    %13 = tpu.concatenate %12, %3, %12 in 0 : vector<2x32xf32>, vector<16x32xf32>, vector<2x32xf32> -> vector<20x32xf32>
    %14 = vector.extract_strided_slice %13 {offsets = [0, 0], sizes = [16, 32], strides = [1, 1]} : vector<20x32xf32> to vector<16x32xf32>
    %15 = vector.extract_strided_slice %13 {offsets = [1, 0], sizes = [16, 32], strides = [1, 1]} : vector<20x32xf32> to vector<16x32xf32>
    %16 = vector.extract_strided_slice %13 {offsets = [2, 0], sizes = [16, 32], strides = [1, 1]} : vector<20x32xf32> to vector<16x32xf32>
    %17 = vector.extract_strided_slice %13 {offsets = [3, 0], sizes = [16, 32], strides = [1, 1]} : vector<20x32xf32> to vector<16x32xf32>
    %18 = vector.extract_strided_slice %13 {offsets = [4, 0], sizes = [16, 32], strides = [1, 1]} : vector<20x32xf32> to vector<16x32xf32>
    %19 = tpu.concatenate %14, %15, %16, %17, %18 in 1 : vector<16x32xf32>, vector<16x32xf32>, vector<16x32xf32>, vector<16x32xf32>, vector<16x32xf32> -> vector<16x160xf32>
    %20 = tpu.concatenate %11, %19 in 0 : vector<16x160xf32>, vector<16x160xf32> -> vector<32x160xf32>
    %21 = arith.truncf %20 : vector<32x160xf32> to vector<32x160xbf16>
    %c0_5 = arith.constant 0 : index
    %c0_6 = arith.constant 0 : index
    %22 = vector.load %arg1[%c0_5, %c0_6] : memref<160x32xbf16, #tpu.memory_space<vmem>>, vector<160x32xbf16>
    %cst_7 = arith.constant dense<0.000000e+00> : vector<32x32xf32>
    %23 = tpu.matmul %21, %22, %cst_7 {dimension_numbers = #tpu.dot_dimension_numbers<[1], [0], [0], [1], [0, 0, 1, 1], [], []>} : vector<32x160xbf16>, vector<160x32xbf16>, vector<32x32xf32> -> vector<32x32xf32>
    %c0_8 = arith.constant 0 : index
    %c0_9 = arith.constant 0 : index
    %24 = vector.load %arg2[%c0_8, %c0_9] : memref<1x32xf32, #tpu.memory_space<vmem>>, vector<1x32xf32>
    %25 = vector.broadcast %24 : vector<1x32xf32> to vector<32x32xf32>
    %26 = arith.addf %23, %25 : vector<32x32xf32>
    %c0_10 = arith.constant 0 : index
    %c0_11 = arith.constant 0 : index
    %27 = vector.load %arg3[%c0_10, %c0_11] : memref<1x32xf32, #tpu.memory_space<vmem>>, vector<1x32xf32>
    %c0_12 = arith.constant 0 : index
    %c0_13 = arith.constant 0 : index
    %28 = vector.load %arg4[%c0_12, %c0_13] : memref<1x32xf32, #tpu.memory_space<vmem>>, vector<1x32xf32>
    %c0_14 = arith.constant 0 : index
    %c0_15 = arith.constant 0 : index
    %29 = vector.load %arg5[%c0_14, %c0_15] : memref<32x32xf32, #tpu.memory_space<vmem>>, vector<32x32xf32>
    %30 = vector.extract_strided_slice %26 {offsets = [0, 0], sizes = [16, 32], strides = [1, 1]} : vector<32x32xf32> to vector<16x32xf32>
    %31 = vector.extract_strided_slice %26 {offsets = [16, 0], sizes = [16, 32], strides = [1, 1]} : vector<32x32xf32> to vector<16x32xf32>
    %cst_16 = arith.constant dense<0.000000e+00> : vector<32xf32>
    %32 = vector.multi_reduction <add>, %30, %cst_16 [0] : vector<16x32xf32> to vector<32xf32>
    %33 = vector.shape_cast %32 : vector<32xf32> to vector<1x32xf32>
    %34 = arith.mulf %30, %30 : vector<16x32xf32>
    %cst_17 = arith.constant dense<0.000000e+00> : vector<32xf32>
    %35 = vector.multi_reduction <add>, %34, %cst_17 [0] : vector<16x32xf32> to vector<32xf32>
    %36 = vector.shape_cast %35 : vector<32xf32> to vector<1x32xf32>
    %cst_18 = arith.constant dense<0.000000e+00> : vector<32xf32>
    %37 = vector.multi_reduction <add>, %31, %cst_18 [0] : vector<16x32xf32> to vector<32xf32>
    %38 = vector.shape_cast %37 : vector<32xf32> to vector<1x32xf32>
    %39 = arith.mulf %31, %31 : vector<16x32xf32>
    %cst_19 = arith.constant dense<0.000000e+00> : vector<32xf32>
    %40 = vector.multi_reduction <add>, %39, %cst_19 [0] : vector<16x32xf32> to vector<32xf32>
    %41 = vector.shape_cast %40 : vector<32xf32> to vector<1x32xf32>
    %42 = tpu.concatenate %33, %36, %38, %41 in 0 : vector<1x32xf32>, vector<1x32xf32>, vector<1x32xf32>, vector<1x32xf32> -> vector<4x32xf32>
    %cst_20 = arith.constant dense<0.000000e+00> : vector<4x32xf32>
    %43 = tpu.matmul %42, %29, %cst_20 {dimension_numbers = #tpu.dot_dimension_numbers<[1], [0], [0], [1], [0, 0, 1, 1], [], []>} : vector<4x32xf32>, vector<32x32xf32>, vector<4x32xf32> -> vector<4x32xf32>
    %44 = vector.extract_strided_slice %43 {offsets = [0, 0], sizes = [1, 32], strides = [1, 1]} : vector<4x32xf32> to vector<1x32xf32>
    %45 = vector.extract_strided_slice %43 {offsets = [1, 0], sizes = [1, 32], strides = [1, 1]} : vector<4x32xf32> to vector<1x32xf32>
    %46 = arith.mulf %44, %44 : vector<1x32xf32>
    %47 = arith.subf %45, %46 : vector<1x32xf32>
    %cst_21 = arith.constant 0.000000e+00 : f32
    %48 = vector.broadcast %cst_21 : f32 to vector<1x32xf32>
    %49 = arith.maximumf %47, %48 : vector<1x32xf32>
    %50 = vector.broadcast %44 : vector<1x32xf32> to vector<16x32xf32>
    %51 = arith.subf %30, %50 : vector<16x32xf32>
    %cst_22 = arith.constant 9.99999974E-6 : f32
    %52 = vector.broadcast %cst_22 : f32 to vector<1x32xf32>
    %53 = arith.addf %49, %52 : vector<1x32xf32>
    %54 = math.rsqrt %53 : vector<1x32xf32>
    %55 = vector.broadcast %54 : vector<1x32xf32> to vector<16x32xf32>
    %56 = arith.mulf %51, %55 : vector<16x32xf32>
    %57 = vector.broadcast %27 : vector<1x32xf32> to vector<16x32xf32>
    %58 = arith.mulf %56, %57 : vector<16x32xf32>
    %59 = vector.broadcast %28 : vector<1x32xf32> to vector<16x32xf32>
    %60 = arith.addf %58, %59 : vector<16x32xf32>
    %61 = math.absf %60 : vector<16x32xf32>
    %cst_23 = arith.constant 0.000000e+00 : f32
    %62 = vector.broadcast %cst_23 : f32 to vector<16x32xf32>
    %63 = arith.subf %62, %61 : vector<16x32xf32>
    %64 = math.exp %63 : vector<16x32xf32>
    %65 = math.log1p %64 : vector<16x32xf32>
    %cst_24 = arith.constant 0.000000e+00 : f32
    %66 = vector.broadcast %cst_24 : f32 to vector<16x32xf32>
    %67 = arith.maximumf %60, %66 : vector<16x32xf32>
    %68 = arith.addf %65, %67 : vector<16x32xf32>
    %69 = math.tanh %68 : vector<16x32xf32>
    %70 = arith.mulf %60, %69 : vector<16x32xf32>
    %71 = vector.extract_strided_slice %43 {offsets = [2, 0], sizes = [1, 32], strides = [1, 1]} : vector<4x32xf32> to vector<1x32xf32>
    %72 = vector.extract_strided_slice %43 {offsets = [3, 0], sizes = [1, 32], strides = [1, 1]} : vector<4x32xf32> to vector<1x32xf32>
    %73 = arith.mulf %71, %71 : vector<1x32xf32>
    %74 = arith.subf %72, %73 : vector<1x32xf32>
    %cst_25 = arith.constant 0.000000e+00 : f32
    %75 = vector.broadcast %cst_25 : f32 to vector<1x32xf32>
    %76 = arith.maximumf %74, %75 : vector<1x32xf32>
    %77 = vector.broadcast %71 : vector<1x32xf32> to vector<16x32xf32>
    %78 = arith.subf %31, %77 : vector<16x32xf32>
    %cst_26 = arith.constant 9.99999974E-6 : f32
    %79 = vector.broadcast %cst_26 : f32 to vector<1x32xf32>
    %80 = arith.addf %76, %79 : vector<1x32xf32>
    %81 = math.rsqrt %80 : vector<1x32xf32>
    %82 = vector.broadcast %81 : vector<1x32xf32> to vector<16x32xf32>
    %83 = arith.mulf %78, %82 : vector<16x32xf32>
    %84 = vector.broadcast %27 : vector<1x32xf32> to vector<16x32xf32>
    %85 = arith.mulf %83, %84 : vector<16x32xf32>
    %86 = vector.broadcast %28 : vector<1x32xf32> to vector<16x32xf32>
    %87 = arith.addf %85, %86 : vector<16x32xf32>
    %88 = math.absf %87 : vector<16x32xf32>
    %cst_27 = arith.constant 0.000000e+00 : f32
    %89 = vector.broadcast %cst_27 : f32 to vector<16x32xf32>
    %90 = arith.subf %89, %88 : vector<16x32xf32>
    %91 = math.exp %90 : vector<16x32xf32>
    %92 = math.log1p %91 : vector<16x32xf32>
    %cst_28 = arith.constant 0.000000e+00 : f32
    %93 = vector.broadcast %cst_28 : f32 to vector<16x32xf32>
    %94 = arith.maximumf %87, %93 : vector<16x32xf32>
    %95 = arith.addf %92, %94 : vector<16x32xf32>
    %96 = math.tanh %95 : vector<16x32xf32>
    %97 = arith.mulf %87, %96 : vector<16x32xf32>
    %98 = tpu.concatenate %70, %97 in 0 : vector<16x32xf32>, vector<16x32xf32> -> vector<32x32xf32>
    %99 = arith.truncf %98 : vector<32x32xf32> to vector<32x32xbf16>
    %c0_29 = arith.constant 0 : index
    %c0_30 = arith.constant 0 : index
    %100 = vector.load %arg6[%c0_29, %c0_30] : memref<32x8xbf16, #tpu.memory_space<vmem>>, vector<32x8xbf16>
    %cst_31 = arith.constant dense<0.000000e+00> : vector<32x8xf32>
    %101 = tpu.matmul %99, %100, %cst_31 {dimension_numbers = #tpu.dot_dimension_numbers<[1], [0], [0], [1], [0, 0, 1, 1], [], []>} : vector<32x32xbf16>, vector<32x8xbf16>, vector<32x8xf32> -> vector<32x8xf32>
    %c0_32 = arith.constant 0 : index
    %c0_33 = arith.constant 0 : index
    %102 = vector.load %arg7[%c0_32, %c0_33] : memref<1x8xf32, #tpu.memory_space<vmem>>, vector<1x8xf32>
    %103 = vector.broadcast %102 : vector<1x8xf32> to vector<32x8xf32>
    %104 = arith.addf %101, %103 : vector<32x8xf32>
    %105 = vector.extract_strided_slice %104 {offsets = [0, 0], sizes = [16, 8], strides = [1, 1]} : vector<32x8xf32> to vector<16x8xf32>
    %c0_34 = arith.constant 0 : index
    %c0_35 = arith.constant 0 : index
    %c0_36 = arith.constant 0 : index
    %106 = vector.load %arg8[%c0_34, %c0_35, %c0_36] : memref<2x16x8xf32, #tpu.memory_space<vmem>>, vector<1x16x8xf32>
    %107 = vector.shape_cast %106 : vector<1x16x8xf32> to vector<16x8xf32>
    %108 = vector.shape_cast %105 : vector<16x8xf32> to vector<1x16x8xf32>
    tpu.vector_store %arg8[%c0_34, %c0_35, %c0_36], %108 {strides = array<i32>} : memref<2x16x8xf32, #tpu.memory_space<vmem>>, vector<1x16x8xf32>,
    %109 = vector.extract_strided_slice %104 {offsets = [16, 0], sizes = [16, 8], strides = [1, 1]} : vector<32x8xf32> to vector<16x8xf32>
    %c1_37 = arith.constant 1 : index
    %c0_38 = arith.constant 0 : index
    %c0_39 = arith.constant 0 : index
    %110 = vector.load %arg8[%c1_37, %c0_38, %c0_39] : memref<2x16x8xf32, #tpu.memory_space<vmem>>, vector<1x16x8xf32>
    %111 = vector.shape_cast %110 : vector<1x16x8xf32> to vector<16x8xf32>
    %112 = vector.shape_cast %109 : vector<16x8xf32> to vector<1x16x8xf32>
    tpu.vector_store %arg8[%c1_37, %c0_38, %c0_39], %112 {strides = array<i32>} : memref<2x16x8xf32, #tpu.memory_space<vmem>>, vector<1x16x8xf32>,
    return
  }
}

</mosaic_0001>

<llo_original>
// kernel: concatenated_temporal_unet_fwd.12
$region0: #{concatenated_temporal_unet_fwd.12}
  #allocation0 [shape = 'u32[]', space=smem, size = 0x4, offset = 0x4, fixed_abs, tag = 'smem constant byte address 0x4 - core index']
  #allocation1 [shape = 'u32[144,128]{1,0:T(1,128)}', space=vmem, size = 0x12000, scoped, tag = 'internal scratch']
  %s0 = inlined_call_operand.vmem [shape: f32[2,32], index: 0, kind: input, shape index: {}]
  %s1 = inlined_call_operand.vmem [shape: bf16[32,128], index: 1, kind: input, shape index: {}]
  %s2 = inlined_call_operand.vmem [shape: f32[1,128], index: 2, kind: input, shape index: {}]
  %s3 = inlined_call_operand.vmem [shape: bf16[128,32], index: 3, kind: input, shape index: {}]
  %s4 = inlined_call_operand.vmem [shape: f32[1,32], index: 4, kind: input, shape index: {}]
  %s5 = inlined_call_operand.vmem [shape: f32[2,32], index: 5, kind: output, shape index: {}]
  %s6 = sld [smem:[#allocation0]]
  $region30: #{concatenated_temporal_unet_fwd.12} parent=0
    _
  %s8 = ssub.s32 1, %s6
  %s9 = scalar_select 0, %s8, %s6
  // Predicated region
  $region2: #{concatenated_temporal_unet_fwd.12} parent=0 // pred_check
    _
  $region3: #{concatenated_temporal_unet_fwd.12} parent=0 // pred_check_branch
    %11 = sbr.rel (0) target = $region5
  $region4: #{concatenated_temporal_unet_fwd.12} parent=0 // pred_region
    _
  $region5: #{concatenated_temporal_unet_fwd.12} parent=0 // pred_fallthru
    _
  // Predicated region
  $region6: #{concatenated_temporal_unet_fwd.12} parent=0 // pred_check
    _
  $region7: #{concatenated_temporal_unet_fwd.12} parent=0 // pred_check_branch
    %13 = sbr.rel (0) target = $region9
  $region8: #{concatenated_temporal_unet_fwd.12} parent=0 // pred_region
    _
  $region9: #{concatenated_temporal_unet_fwd.12} parent=0 // pred_fallthru
    _
  // Predicated region
  $region10: #{concatenated_temporal_unet_fwd.12} parent=0 // pred_check
    _
  $region11: #{concatenated_temporal_unet_fwd.12} parent=0 // pred_check_branch
    %15 = sbr.rel (0) target = $region13
  $region12: #{concatenated_temporal_unet_fwd.12} parent=0 // pred_region
    _
  $region13: #{concatenated_temporal_unet_fwd.12} parent=0 // pred_fallthru
    _
  // Predicated region
  $region14: #{concatenated_temporal_unet_fwd.12} parent=0 // pred_check
    _
  $region15: #{concatenated_temporal_unet_fwd.12} parent=0 // pred_check_branch
    %17 = sbr.rel (0) target = $region17
  $region16: #{concatenated_temporal_unet_fwd.12} parent=0 // pred_region
    _
  $region17: #{concatenated_temporal_unet_fwd.12} parent=0 // pred_fallthru
    _
  // Predicated region
  $region18: #{concatenated_temporal_unet_fwd.12} parent=0 // pred_check
    _
  $region19: #{concatenated_temporal_unet_fwd.12} parent=0 // pred_check_branch
    %19 = sbr.rel (0) target = $region21
  $region20: #{concatenated_temporal_unet_fwd.12} parent=0 // pred_region
    _
  $region21: #{concatenated_temporal_unet_fwd.12} parent=0 // pred_fallthru
    _
  %v21 = vld [vmem:[%s0] sm:$0x3]
  %v22 = vpack.c.bf16 %v21, %v21
  %v23 = vld [vmem:[%s1] sm:$0xf]
  %v24 = vld [vmem:[%s1 + $0x4] sm:$0xf]
  %v25 = vld [vmem:[%s1 + $0x8] sm:$0xf]
  %v26 = vld [vmem:[%s1 + $0xc] sm:$0xf]
  %v27 = vld [vmem:[%s2] sm:$0x1]
  %v29 = vlaneseq
  %v30 = vshrl.u32 %v29, 7
  %v31 = vsub.s32 0, %v30
  %v32 = vrot.slane %v27, %v31
  %v38 = vunpack.c.l.b16 %v23
  %v39 = vunpack.c.l.b16 %v24
  %v40 = vunpack.c.l.b16 %v25
  %v41 = vunpack.c.l.b16 %v26
  %v42 = vpack.c.b16 %v39, %v38
  %v43 = vpack.c.b16 %v41, %v40
  %vm46 = vcmask 261120
  %v48 = vsel %vm46, %v22, 0
  %50 = vmatprep.subr.bf16.mxu0 0
  %51 = vmatpush1.bf16.msra.mxu0 %v42
  %52 = vmatprep.subr.bf16.mxu0 0
  %53 = vmatpush1.bf16.msra.mxu0 %v43
  %54 = vmatprep.subr.bf16.mxu0 0
  %55 = vmatpush1.bf16.msra.mxu0 0
  %56 = vmatprep.subr.bf16.mxu0 0
  %57 = vmatpush1.bf16.msra.mxu0 0
  %58 = vmatprep.subr.bf16.mxu0 0
  %59 = vmatpush1.bf16.msra.mxu0 0
  %60 = vmatprep.subr.bf16.mxu0 0
  %61 = vmatpush1.bf16.msra.mxu0 0
  %62 = vmatprep.subr.bf16.mxu0 0
  %63 = vmatpush1.bf16.msra.mxu0 0
  %64 = vmatprep.subr.bf16.mxu0 0
  %65 = vmatpush1.bf16.msra.mxu0 0
  %66 = vmatprep.subr.bf16.mxu0 0
  %67 = vmatpush1.bf16.msra.mxu0 0
  %68 = vmatprep.subr.bf16.mxu0 0
  %69 = vmatpush1.bf16.msra.mxu0 0
  %70 = vmatprep.subr.bf16.mxu0 0
  %71 = vmatpush1.bf16.msra.mxu0 0
  %72 = vmatprep.subr.bf16.mxu0 0
  %73 = vmatpush1.bf16.msra.mxu0 0
  %74 = vmatprep.subr.bf16.mxu0 0
  %75 = vmatpush1.bf16.msra.mxu0 0
  %76 = vmatprep.subr.bf16.mxu0 0
  %77 = vmatpush1.bf16.msra.mxu0 0
  %78 = vmatprep.subr.bf16.mxu0 0
  %79 = vmatpush1.bf16.msra.mxu0 0
  %80 = vmatprep.subr.bf16.mxu0 0
  %81 = vmatpush1.bf16.msra.mxu0 0
  %82 = vmatprep.mubr.bf16.mxu0 0
  %83 = vmatmul.mubr.bf16.gmra.mrb[0].mxu0 %v48
  %v84 = vpop.f32.mrb[0].mxu0
  %v85 = vadd.f32 %v32, %v84
  %v86 = vpop.f32.mrb[0].mxu0
  %v87 = vpop.f32.mrb[0].mxu0
  %v88 = vpop.f32.mrb[0].mxu0
  %89 = vdwg.mxu0
  %v90 = vand.u32 2147483647, %v85
  %v91 = vsub.f32 0.0, %v90
  %v92 = vmul.f32 %v91, 1.442695
  %v93 = vpow.pop %v92
  %v94 = vadd.f32 %v93, 1.0
  %v95 = vlog2.pop %v94
  %v96 = vmul.f32 %v95, 0.6931472
  %v97 = vmul.f32 -0.5, %v93
  %v98 = vadd.f32 %v97, 1.0
  %v99 = vmul.f32 %v98, %v93
  %v100 = vand.u32 2147483647, %v93
  %vm101 = vcmp.lt.f32.partialorder %v100, 0.0004427343
  %v102 = vsel %vm101, %v99, %v96
  %v103 = vmax.f32 %v85, 0.0
  %v104 = vadd.f32 %v102, %v103
  %v105 = vtanh.pop %v104
  %v106 = vmul.f32 %v85, %v105
  %v107 = vpack.c.bf16 %v106, %v106
  %v108 = vld [vmem:[%s3] sm:$0xf]
  %v109 = vld [vmem:[%s3 + $0x4] sm:$0xf]
  %v110 = vld [vmem:[%s3 + $0x8] sm:$0xf]
  %v111 = vld [vmem:[%s3 + $0xc] sm:$0xf]
  %v112 = vld [vmem:[%s3 + $0x10] sm:$0xf]
  %v113 = vld [vmem:[%s3 + $0x14] sm:$0xf]
  %v114 = vld [vmem:[%s3 + $0x18] sm:$0xf]
  %v115 = vld [vmem:[%s3 + $0x1c] sm:$0xf]
  %v116 = vld [vmem:[%s3 + $0x20] sm:$0xf]
  %v117 = vld [vmem:[%s3 + $0x24] sm:$0xf]
  %v118 = vld [vmem:[%s3 + $0x28] sm:$0xf]
  %v119 = vld [vmem:[%s3 + $0x2c] sm:$0xf]
  %v120 = vld [vmem:[%s3 + $0x30] sm:$0xf]
  %v121 = vld [vmem:[%s3 + $0x34] sm:$0xf]
  %v122 = vld [vmem:[%s3 + $0x38] sm:$0xf]
  %v123 = vld [vmem:[%s3 + $0x3c] sm:$0xf]
  %v124 = vld [vmem:[%s4] sm:$0x1]
  %v126 = vlaneseq
  %v127 = vshrl.u32 %v126, 7
  %v128 = vsub.s32 0, %v127
  %v129 = vrot.slane %v124, %v128
  %v147 = vunpack.c.l.b16 %v108
  %v148 = vunpack.c.l.b16 %v109
  %v149 = vunpack.c.l.b16 %v110
  %v150 = vunpack.c.l.b16 %v111
  %v151 = vunpack.c.l.b16 %v112
  %v152 = vunpack.c.l.b16 %v113
  %v153 = vunpack.c.l.b16 %v114
  %v154 = vunpack.c.l.b16 %v115
  %v155 = vunpack.c.l.b16 %v116
  %v156 = vunpack.c.l.b16 %v117
  %v157 = vunpack.c.l.b16 %v118
  %v158 = vunpack.c.l.b16 %v119
  %v159 = vunpack.c.l.b16 %v120
  %v160 = vunpack.c.l.b16 %v121
  %v161 = vunpack.c.l.b16 %v122
  %v162 = vunpack.c.l.b16 %v123
  %v163 = vpack.c.b16 %v148, %v147
  %v164 = vpack.c.b16 %v150, %v149
  %v165 = vpack.c.b16 %v152, %v151
  %v166 = vpack.c.b16 %v154, %v153
  %v167 = vpack.c.b16 %v156, %v155
  %v168 = vpack.c.b16 %v158, %v157
  %v169 = vpack.c.b16 %v160, %v159
  %v170 = vpack.c.b16 %v162, %v161
  %179 = vmatprep.subr.bf16.mxu0 0
  %180 = vmatpush1.bf16.msra.mxu0 %v163
  %181 = vmatprep.subr.bf16.mxu0 0
  %182 = vmatpush1.bf16.msra.mxu0 %v164
  %183 = vmatprep.subr.bf16.mxu0 0
  %184 = vmatpush1.bf16.msra.mxu0 %v165
  %185 = vmatprep.subr.bf16.mxu0 0
  %186 = vmatpush1.bf16.msra.mxu0 %v166
  %187 = vmatprep.subr.bf16.mxu0 0
  %188 = vmatpush1.bf16.msra.mxu0 %v167
  %189 = vmatprep.subr.bf16.mxu0 0
  %190 = vmatpush1.bf16.msra.mxu0 %v168
  %191 = vmatprep.subr.bf16.mxu0 0
  %192 = vmatpush1.bf16.msra.mxu0 %v169
  %193 = vmatprep.subr.bf16.mxu0 0
  %194 = vmatpush1.bf16.msra.mxu0 %v170
  %195 = vmatprep.subr.bf16.mxu0 0
  %196 = vmatpush1.bf16.msra.mxu0 0
  %197 = vmatprep.subr.bf16.mxu0 0
  %198 = vmatpush1.bf16.msra.mxu0 0
  %199 = vmatprep.subr.bf16.mxu0 0
  %200 = vmatpush1.bf16.msra.mxu0 0
  %201 = vmatprep.subr.bf16.mxu0 0
  %202 = vmatpush1.bf16.msra.mxu0 0
  %203 = vmatprep.subr.bf16.mxu0 0
  %204 = vmatpush1.bf16.msra.mxu0 0
  %205 = vmatprep.subr.bf16.mxu0 0
  %206 = vmatpush1.bf16.msra.mxu0 0
  %207 = vmatprep.subr.bf16.mxu0 0
  %208 = vmatpush1.bf16.msra.mxu0 0
  %209 = vmatprep.subr.bf16.mxu0 0
  %210 = vmatpush1.bf16.msra.mxu0 0
  %211 = vmatprep.mubr.bf16.mxu0 0
  %212 = vmatmul.mubr.bf16.gmra.mrb[0].mxu0 %v107
  %v213 = vpop.f32.mrb[0].mxu0
  %v214 = vadd.f32 %v129, %v213
  %v215 = vpop.f32.mrb[0].mxu0
  %v216 = vpop.f32.mrb[0].mxu0
  %v217 = vpop.f32.mrb[0].mxu0
  %218 = vdwg.mxu0
  %vm219 = vcmask 254976
  %220 = vst.msk [vmem:[%s5] sm:$0x3] %vm219, %v214
  // Predicated region
  $region22: #{concatenated_temporal_unet_fwd.12} parent=0 // pred_check
    _
  $region23: #{concatenated_temporal_unet_fwd.12} parent=0 // pred_check_branch
    %222 = sbr.rel (0) target = $region25
  $region24: #{concatenated_temporal_unet_fwd.12} parent=0 // pred_region
    _
  $region25: #{concatenated_temporal_unet_fwd.12} parent=0 // pred_fallthru
    _
  // Predicated region
  $region26: #{concatenated_temporal_unet_fwd.12} parent=0 // pred_check
    _
  $region27: #{concatenated_temporal_unet_fwd.12} parent=0 // pred_check_branch
    %224 = sbr.rel (0) target = $region29
  $region28: #{concatenated_temporal_unet_fwd.12} parent=0 // pred_region
    _
  $region29: #{concatenated_temporal_unet_fwd.12} parent=0 // pred_fallthru
    _

// kernel: concatenated_temporal_unet_fwd.15
$region0: #{concatenated_temporal_unet_fwd.15}
  #allocation0 [shape = 'u32[]', space=smem, size = 0x4, offset = 0x4, fixed_abs, tag = 'smem constant byte address 0x4 - core index']
  #allocation1 [shape = 'u32[144,128]{1,0:T(1,128)}', space=vmem, size = 0x12000, scoped, tag = 'internal scratch']
  %s0 = inlined_call_operand.vmem [shape: f32[16,96], index: 0, kind: input, shape index: {}]
  %s1 = inlined_call_operand.vmem [shape: bf16[96,32], index: 1, kind: input, shape index: {}]
  %s2 = inlined_call_operand.vmem [shape: f32[1,32], index: 2, kind: input, shape index: {}]
  %s3 = inlined_call_operand.vmem [shape: f32[16,32], index: 3, kind: output, shape index: {}]
  %s4 = sld [smem:[#allocation0]]
  $region22: #{concatenated_temporal_unet_fwd.15} parent=0
    _
  %s6 = ssub.s32 1, %s4
  %s7 = scalar_select 0, %s6, %s4
  // Predicated region
  $region2: #{concatenated_temporal_unet_fwd.15} parent=0 // pred_check
    _
  $region3: #{concatenated_temporal_unet_fwd.15} parent=0 // pred_check_branch
    %9 = sbr.rel (0) target = $region5
  $region4: #{concatenated_temporal_unet_fwd.15} parent=0 // pred_region
    _
  $region5: #{concatenated_temporal_unet_fwd.15} parent=0 // pred_fallthru
    _
  // Predicated region
  $region6: #{concatenated_temporal_unet_fwd.15} parent=0 // pred_check
    _
  $region7: #{concatenated_temporal_unet_fwd.15} parent=0 // pred_check_branch
    %11 = sbr.rel (0) target = $region9
  $region8: #{concatenated_temporal_unet_fwd.15} parent=0 // pred_region
    _
  $region9: #{concatenated_temporal_unet_fwd.15} parent=0 // pred_fallthru
    _
  // Predicated region
  $region10: #{concatenated_temporal_unet_fwd.15} parent=0 // pred_check
    _
  $region11: #{concatenated_temporal_unet_fwd.15} parent=0 // pred_check_branch
    %13 = sbr.rel (0) target = $region13
  $region12: #{concatenated_temporal_unet_fwd.15} parent=0 // pred_region
    _
  $region13: #{concatenated_temporal_unet_fwd.15} parent=0 // pred_fallthru
    _
  %v15 = vld [vmem:[%s0] sm:$0xff]
  %v16 = vld [vmem:[%s0 + $0x8] sm:$0xff]
  %v17 = vpack.c.bf16 %v16, %v15
  %v18 = vld [vmem:[%s1] sm:$0xf]
  %v19 = vld [vmem:[%s1 + $0x4] sm:$0xf]
  %v20 = vld [vmem:[%s1 + $0x8] sm:$0xf]
  %v21 = vld [vmem:[%s1 + $0xc] sm:$0xf]
  %v22 = vld [vmem:[%s1 + $0x10] sm:$0xf]
  %v23 = vld [vmem:[%s1 + $0x14] sm:$0xf]
  %v24 = vld [vmem:[%s1 + $0x18] sm:$0xf]
  %v25 = vld [vmem:[%s1 + $0x1c] sm:$0xf]
  %v26 = vld [vmem:[%s1 + $0x20] sm:$0xf]
  %v27 = vld [vmem:[%s1 + $0x24] sm:$0xf]
  %v28 = vld [vmem:[%s1 + $0x28] sm:$0xf]
  %v29 = vld [vmem:[%s1 + $0x2c] sm:$0xf]
  %v30 = vld [vmem:[%s2] sm:$0x1]
  %v32 = vlaneseq
  %v33 = vshrl.u32 %v32, 7
  %v34 = vsub.s32 0, %v33
  %v35 = vrot.slane %v30, %v34
  %v49 = vunpack.c.l.b16 %v18
  %v50 = vunpack.c.l.b16 %v19
  %v51 = vunpack.c.l.b16 %v20
  %v52 = vunpack.c.l.b16 %v21
  %v53 = vunpack.c.l.b16 %v22
  %v54 = vunpack.c.l.b16 %v23
  %v55 = vunpack.c.l.b16 %v24
  %v56 = vunpack.c.l.b16 %v25
  %v57 = vunpack.c.l.b16 %v26
  %v58 = vunpack.c.l.b16 %v27
  %v59 = vunpack.c.l.b16 %v28
  %v60 = vunpack.c.l.b16 %v29
  %v61 = vpack.c.b16 %v50, %v49
  %v62 = vpack.c.b16 %v52, %v51
  %v63 = vpack.c.b16 %v54, %v53
  %v64 = vpack.c.b16 %v56, %v55
  %v65 = vpack.c.b16 %v58, %v57
  %v66 = vpack.c.b16 %v60, %v59
  %vm73 = vcmask 785408
  %v75 = vsel %vm73, %v17, 0
  %77 = vmatprep.subr.bf16.mxu0 0
  %78 = vmatpush1.bf16.msra.mxu0 %v61
  %79 = vmatprep.subr.bf16.mxu0 0
  %80 = vmatpush1.bf16.msra.mxu0 %v62
  %81 = vmatprep.subr.bf16.mxu0 0
  %82 = vmatpush1.bf16.msra.mxu0 %v63
  %83 = vmatprep.subr.bf16.mxu0 0
  %84 = vmatpush1.bf16.msra.mxu0 %v64
  %85 = vmatprep.subr.bf16.mxu0 0
  %86 = vmatpush1.bf16.msra.mxu0 %v65
  %87 = vmatprep.subr.bf16.mxu0 0
  %88 = vmatpush1.bf16.msra.mxu0 %v66
  %89 = vmatprep.subr.bf16.mxu0 0
  %90 = vmatpush1.bf16.msra.mxu0 0
  %91 = vmatprep.subr.bf16.mxu0 0
  %92 = vmatpush1.bf16.msra.mxu0 0
  %93 = vmatprep.subr.bf16.mxu0 0
  %94 = vmatpush1.bf16.msra.mxu0 0
  %95 = vmatprep.subr.bf16.mxu0 0
  %96 = vmatpush1.bf16.msra.mxu0 0
  %97 = vmatprep.subr.bf16.mxu0 0
  %98 = vmatpush1.bf16.msra.mxu0 0
  %99 = vmatprep.subr.bf16.mxu0 0
  %100 = vmatpush1.bf16.msra.mxu0 0
  %101 = vmatprep.subr.bf16.mxu0 0
  %102 = vmatpush1.bf16.msra.mxu0 0
  %103 = vmatprep.subr.bf16.mxu0 0
  %104 = vmatpush1.bf16.msra.mxu0 0
  %105 = vmatprep.subr.bf16.mxu0 0
  %106 = vmatpush1.bf16.msra.mxu0 0
  %107 = vmatprep.subr.bf16.mxu0 0
  %108 = vmatpush1.bf16.msra.mxu0 0
  %109 = vmatprep.mubr.bf16.mxu0 0
  %110 = vmatmul.mubr.bf16.gmra.mrb[0].mxu0 %v75
  %v111 = vpop.f32.mrb[0].mxu0
  %v112 = vadd.f32 %v35, %v111
  %v113 = vpop.f32.mrb[0].mxu0
  %v114 = vpop.f32.mrb[0].mxu0
  %v115 = vadd.f32 %v35, %v114
  %v116 = vpop.f32.mrb[0].mxu0
  %117 = vdwg.mxu0
  %vm118 = vcmask 261120
  %119 = vst.msk [vmem:[%s3] sm:$0xff] %vm118, %v112
  %120 = vst.msk [vmem:[%s3 + $0x8] sm:$0xff] %vm118, %v115
  // Predicated region
  $region14: #{concatenated_temporal_unet_fwd.15} parent=0 // pred_check
    _
  $region15: #{concatenated_temporal_unet_fwd.15} parent=0 // pred_check_branch
    %122 = sbr.rel (0) target = $region17
  $region16: #{concatenated_temporal_unet_fwd.15} parent=0 // pred_region
    _
  $region17: #{concatenated_temporal_unet_fwd.15} parent=0 // pred_fallthru
    _
  // Predicated region
  $region18: #{concatenated_temporal_unet_fwd.15} parent=0 // pred_check
    _
  $region19: #{concatenated_temporal_unet_fwd.15} parent=0 // pred_check_branch
    %124 = sbr.rel (0) target = $region21
  $region20: #{concatenated_temporal_unet_fwd.15} parent=0 // pred_region
    _
  $region21: #{concatenated_temporal_unet_fwd.15} parent=0 // pred_fallthru
    _

// kernel: concatenated_temporal_unet_fwd.13
$region0: #{concatenated_temporal_unet_fwd.13}
  #allocation0 [shape = 'u32[]', space=smem, size = 0x4, offset = 0x4, fixed_abs, tag = 'smem constant byte address 0x4 - core index']
  #allocation1 [shape = 'u32[144,128]{1,0:T(1,128)}', space=vmem, size = 0x12000, scoped, tag = 'internal scratch']
  %s0 = inlined_call_operand.vmem [shape: f32[2,16,8], index: 0, kind: input, shape index: {}]
  %s1 = inlined_call_operand.vmem [shape: f32[2,32], index: 1, kind: input, shape index: {}]
  %s2 = inlined_call_operand.vmem [shape: bf16[40,32], index: 2, kind: input, shape index: {}]
  %s3 = inlined_call_operand.vmem [shape: f32[1,32], index: 3, kind: input, shape index: {}]
  %s4 = inlined_call_operand.vmem [shape: f32[1,32], index: 4, kind: input, shape index: {}]
  %s5 = inlined_call_operand.vmem [shape: f32[1,32], index: 5, kind: input, shape index: {}]
  %s6 = inlined_call_operand.vmem [shape: bf16[32,32], index: 6, kind: input, shape index: {}]
  %s7 = inlined_call_operand.vmem [shape: f32[1,32], index: 7, kind: input, shape index: {}]
  %s8 = inlined_call_operand.vmem [shape: bf16[160,32], index: 8, kind: input, shape index: {}]
  %s9 = inlined_call_operand.vmem [shape: f32[1,32], index: 9, kind: input, shape index: {}]
  %s10 = inlined_call_operand.vmem [shape: f32[1,32], index: 10, kind: input, shape index: {}]
  %s11 = inlined_call_operand.vmem [shape: f32[1,32], index: 11, kind: input, shape index: {}]
  %s12 = inlined_call_operand.vmem [shape: f32[32,32], index: 12, kind: input, shape index: {}]
  %s13 = inlined_call_operand.vmem [shape: bf16[8,32], index: 13, kind: input, shape index: {}]
  %s14 = inlined_call_operand.vmem [shape: f32[1,32], index: 14, kind: input, shape index: {}]
  %s15 = inlined_call_operand.vmem [shape: f32[2,16,32], index: 15, kind: output, shape index: {}]
  %s16 = sld [smem:[#allocation0]]
  $region70: #{concatenated_temporal_unet_fwd.13} parent=0
    _
  %s18 = ssub.s32 1, %s16
  %s19 = scalar_select 0, %s18, %s16
  // Predicated region
  $region2: #{concatenated_temporal_unet_fwd.13} parent=0 // pred_check
    _
  $region3: #{concatenated_temporal_unet_fwd.13} parent=0 // pred_check_branch
    %21 = sbr.rel (0) target = $region5
  $region4: #{concatenated_temporal_unet_fwd.13} parent=0 // pred_region
    _
  $region5: #{concatenated_temporal_unet_fwd.13} parent=0 // pred_fallthru
    _
  // Predicated region
  $region6: #{concatenated_temporal_unet_fwd.13} parent=0 // pred_check
    _
  $region7: #{concatenated_temporal_unet_fwd.13} parent=0 // pred_check_branch
    %23 = sbr.rel (0) target = $region9
  $region8: #{concatenated_temporal_unet_fwd.13} parent=0 // pred_region
    _
  $region9: #{concatenated_temporal_unet_fwd.13} parent=0 // pred_fallthru
    _
  // Predicated region
  $region10: #{concatenated_temporal_unet_fwd.13} parent=0 // pred_check
    _
  $region11: #{concatenated_temporal_unet_fwd.13} parent=0 // pred_check_branch
    %25 = sbr.rel (0) target = $region13
  $region12: #{concatenated_temporal_unet_fwd.13} parent=0 // pred_region
    _
  $region13: #{concatenated_temporal_unet_fwd.13} parent=0 // pred_fallthru
    _
  // Predicated region
  $region14: #{concatenated_temporal_unet_fwd.13} parent=0 // pred_check
    _
  $region15: #{concatenated_temporal_unet_fwd.13} parent=0 // pred_check_branch
    %27 = sbr.rel (0) target = $region17
  $region16: #{concatenated_temporal_unet_fwd.13} parent=0 // pred_region
    _
  $region17: #{concatenated_temporal_unet_fwd.13} parent=0 // pred_fallthru
    _
  // Predicated region
  $region18: #{concatenated_temporal_unet_fwd.13} parent=0 // pred_check
    _
  $region19: #{concatenated_temporal_unet_fwd.13} parent=0 // pred_check_branch
    %29 = sbr.rel (0) target = $region21
  $region20: #{concatenated_temporal_unet_fwd.13} parent=0 // pred_region
    _
  $region21: #{concatenated_temporal_unet_fwd.13} parent=0 // pred_fallthru
    _
  // Predicated region
  $region22: #{concatenated_temporal_unet_fwd.13} parent=0 // pred_check
    _
  $region23: #{concatenated_temporal_unet_fwd.13} parent=0 // pred_check_branch
    %31 = sbr.rel (0) target = $region25
  $region24: #{concatenated_temporal_unet_fwd.13} parent=0 // pred_region
    _
  $region25: #{concatenated_temporal_unet_fwd.13} parent=0 // pred_fallthru
    _
  // Predicated region
  $region26: #{concatenated_temporal_unet_fwd.13} parent=0 // pred_check
    _
  $region27: #{concatenated_temporal_unet_fwd.13} parent=0 // pred_check_branch
    %33 = sbr.rel (0) target = $region29
  $region28: #{concatenated_temporal_unet_fwd.13} parent=0 // pred_region
    _
  $region29: #{concatenated_temporal_unet_fwd.13} parent=0 // pred_fallthru
    _
  // Predicated region
  $region30: #{concatenated_temporal_unet_fwd.13} parent=0 // pred_check
    _
  $region31: #{concatenated_temporal_unet_fwd.13} parent=0 // pred_check_branch
    %35 = sbr.rel (0) target = $region33
  $region32: #{concatenated_temporal_unet_fwd.13} parent=0 // pred_region
    _
  $region33: #{concatenated_temporal_unet_fwd.13} parent=0 // pred_fallthru
    _
  // Predicated region
  $region34: #{concatenated_temporal_unet_fwd.13} parent=0 // pred_check
    _
  $region35: #{concatenated_temporal_unet_fwd.13} parent=0 // pred_check_branch
    %37 = sbr.rel (0) target = $region37
  $region36: #{concatenated_temporal_unet_fwd.13} parent=0 // pred_region
    _
  $region37: #{concatenated_temporal_unet_fwd.13} parent=0 // pred_fallthru
    _
  // Predicated region
  $region38: #{concatenated_temporal_unet_fwd.13} parent=0 // pred_check
    _
  $region39: #{concatenated_temporal_unet_fwd.13} parent=0 // pred_check_branch
    %39 = sbr.rel (0) target = $region41
  $region40: #{concatenated_temporal_unet_fwd.13} parent=0 // pred_region
    _
  $region41: #{concatenated_temporal_unet_fwd.13} parent=0 // pred_fallthru
    _
  // Predicated region
  $region42: #{concatenated_temporal_unet_fwd.13} parent=0 // pred_check
    _
  $region43: #{concatenated_temporal_unet_fwd.13} parent=0 // pred_check_branch
    %41 = sbr.rel (0) target = $region45
  $region44: #{concatenated_temporal_unet_fwd.13} parent=0 // pred_region
    _
  $region45: #{concatenated_temporal_unet_fwd.13} parent=0 // pred_fallthru
    _
  // Predicated region
  $region46: #{concatenated_temporal_unet_fwd.13} parent=0 // pred_check
    _
  $region47: #{concatenated_temporal_unet_fwd.13} parent=0 // pred_check_branch
    %43 = sbr.rel (0) target = $region49
  $region48: #{concatenated_temporal_unet_fwd.13} parent=0 // pred_region
    _
  $region49: #{concatenated_temporal_unet_fwd.13} parent=0 // pred_fallthru
    _
  // Predicated region
  $region50: #{concatenated_temporal_unet_fwd.13} parent=0 // pred_check
    _
  $region51: #{concatenated_temporal_unet_fwd.13} parent=0 // pred_check_branch
    %45 = sbr.rel (0) target = $region53
  $region52: #{concatenated_temporal_unet_fwd.13} parent=0 // pred_region
    _
  $region53: #{concatenated_temporal_unet_fwd.13} parent=0 // pred_fallthru
    _
  // Predicated region
  $region54: #{concatenated_temporal_unet_fwd.13} parent=0 // pred_check
    _
  $region55: #{concatenated_temporal_unet_fwd.13} parent=0 // pred_check_branch
    %47 = sbr.rel (0) target = $region57
  $region56: #{concatenated_temporal_unet_fwd.13} parent=0 // pred_region
    _
  $region57: #{concatenated_temporal_unet_fwd.13} parent=0 // pred_fallthru
    _
  // Predicated region
  $region58: #{concatenated_temporal_unet_fwd.13} parent=0 // pred_check
    _
  $region59: #{concatenated_temporal_unet_fwd.13} parent=0 // pred_check_branch
    %49 = sbr.rel (0) target = $region61
  $region60: #{concatenated_temporal_unet_fwd.13} parent=0 // pred_region
    _
  $region61: #{concatenated_temporal_unet_fwd.13} parent=0 // pred_fallthru
    _
  %v51 = vld [vmem:[%s1] sm:$0x3]
  %v52 = vand.u32 2147483647, %v51
  %v53 = vsub.f32 0.0, %v52
  %v54 = vmul.f32 %v53, 1.442695
  %v55 = vpow.pop %v54
  %v56 = vadd.f32 %v55, 1.0
  %v57 = vlog2.pop %v56
  %v58 = vmul.f32 %v57, 0.6931472
  %v59 = vmul.f32 -0.5, %v55
  %v60 = vadd.f32 %v59, 1.0
  %v61 = vmul.f32 %v60, %v55
  %v62 = vand.u32 2147483647, %v55
  %vm63 = vcmp.lt.f32.partialorder %v62, 0.0004427343
  %v64 = vsel %vm63, %v61, %v58
  %v65 = vmax.f32 %v51, 0.0
  %v66 = vadd.f32 %v64, %v65
  %v67 = vtanh.pop %v66
  %v68 = vmul.f32 %v51, %v67
  %v69 = vpack.c.bf16 %v68, %v68
  %v70 = vld [vmem:[%s6] sm:$0xf]
  %v71 = vld [vmem:[%s6 + $0x4] sm:$0xf]
  %v72 = vld [vmem:[%s6 + $0x8] sm:$0xf]
  %v73 = vld [vmem:[%s6 + $0xc] sm:$0xf]
  %v74 = vld [vmem:[%s7] sm:$0x1]
  %v76 = vlaneseq
  %v77 = vshrl.u32 %v76, 7
  %v78 = vsub.s32 0, %v77
  %v79 = vrot.slane %v74, %v78
  %v85 = vunpack.c.l.b16 %v70
  %v86 = vunpack.c.l.b16 %v71
  %v87 = vunpack.c.l.b16 %v72
  %v88 = vunpack.c.l.b16 %v73
  %v89 = vpack.c.b16 %v86, %v85
  %v90 = vpack.c.b16 %v88, %v87
  %vm93 = vcmask 261120
  %v95 = vsel %vm93, %v69, 0
  %97 = vmatprep.subr.bf16.mxu0 0
  %98 = vmatpush1.bf16.msra.mxu0 %v89
  %99 = vmatprep.subr.bf16.mxu0 0
  %100 = vmatpush1.bf16.msra.mxu0 %v90
  %101 = vmatprep.subr.bf16.mxu0 0
  %102 = vmatpush1.bf16.msra.mxu0 0
  %103 = vmatprep.subr.bf16.mxu0 0
  %104 = vmatpush1.bf16.msra.mxu0 0
  %105 = vmatprep.subr.bf16.mxu0 0
  %106 = vmatpush1.bf16.msra.mxu0 0
  %107 = vmatprep.subr.bf16.mxu0 0
  %108 = vmatpush1.bf16.msra.mxu0 0
  %109 = vmatprep.subr.bf16.mxu0 0
  %110 = vmatpush1.bf16.msra.mxu0 0
  %111 = vmatprep.subr.bf16.mxu0 0
  %112 = vmatpush1.bf16.msra.mxu0 0
  %113 = vmatprep.subr.bf16.mxu0 0
  %114 = vmatpush1.bf16.msra.mxu0 0
  %115 = vmatprep.subr.bf16.mxu0 0
  %116 = vmatpush1.bf16.msra.mxu0 0
  %117 = vmatprep.subr.bf16.mxu0 0
  %118 = vmatpush1.bf16.msra.mxu0 0
  %119 = vmatprep.subr.bf16.mxu0 0
  %120 = vmatpush1.bf16.msra.mxu0 0
  %121 = vmatprep.subr.bf16.mxu0 0
  %122 = vmatpush1.bf16.msra.mxu0 0
  %123 = vmatprep.subr.bf16.mxu0 0
  %124 = vmatpush1.bf16.msra.mxu0 0
  %125 = vmatprep.subr.bf16.mxu0 0
  %126 = vmatpush1.bf16.msra.mxu0 0
  %127 = vmatprep.subr.bf16.mxu0 0
  %128 = vmatpush1.bf16.msra.mxu0 0
  %129 = vmatprep.mubr.bf16.mxu0 0
  %130 = vmatmul.mubr.bf16.gmra.mrb[0].mxu0 %v95
  %v131 = vpop.f32.mrb[0].mxu0
  %v132 = vadd.f32 %v79, %v131
  %v133 = vpop.f32.mrb[0].mxu0
  %v134 = vpop.f32.mrb[0].mxu0
  %v135 = vpop.f32.mrb[0].mxu0
  %136 = vdwg.mxu0
  %v137 = vld [vmem:[%s0] sm:$0xff]
  %v138 = vld [vmem:[%s0 + $0x8] sm:$0xff]
  %s139 = scalar_lea.vmem %s0, 16
  %v140 = vld [vmem:[%s139] sm:$0xff]
  %v141 = vld [vmem:[%s139 + $0x8] sm:$0xff]
  %vm144 = vcmask 1041408
  %v145 = vrot.slane %v137, 6
  %v146 = vrot.slane %v138, 6
  %v147 = vsel %vm144, %v145, %v146
  %v151 = vsel %vm144, 0.0, %v145
  %v152 = vsel %vm144, %v146, 0.0
  %vm155 = vcmask 1046528
  %v156 = vrot.slane %v151, 1
  %v157 = vrot.slane %v147, 1
  %v158 = vsel %vm155, %v156, %v157
  %v159 = vrot.slane %v152, 1
  %v160 = vsel %vm155, %v157, %v159
  %161 = vrot.lane.b32.xlu0 %v158, 8
  %v162 = vpop.permute.xlu0 %161
  %163 = vrot.lane.b32.xlu0 %v160, 8
  %v164 = vpop.permute.xlu0 %163
  %vm167 = vcmask 1045504
  %v168 = vrot.slane %v151, 2
  %v169 = vrot.slane %v147, 2
  %v170 = vsel %vm167, %v168, %v169
  %v171 = vrot.slane %v152, 2
  %v172 = vsel %vm167, %v169, %v171
  %173 = vrot.lane.b32.xlu0 %v170, 16
  %v174 = vpop.permute.xlu0 %173
  %175 = vrot.lane.b32.xlu0 %v172, 16
  %v176 = vpop.permute.xlu0 %175
  %vm179 = vcmask 1044480
  %v180 = vrot.slane %v151, 3
  %v181 = vrot.slane %v147, 3
  %v182 = vsel %vm179, %v180, %v181
  %v183 = vrot.slane %v152, 3
  %v184 = vsel %vm179, %v181, %v183
  %185 = vrot.lane.b32.xlu0 %v182, 24
  %v186 = vpop.permute.xlu0 %185
  %187 = vrot.lane.b32.xlu0 %v184, 24
  %v188 = vpop.permute.xlu0 %187
  %vm191 = vcmask 1043456
  %v192 = vrot.slane %v151, 4
  %v193 = vrot.slane %v147, 4
  %v194 = vsel %vm191, %v192, %v193
  %v195 = vrot.slane %v152, 4
  %v196 = vsel %vm191, %v193, %v195
  %197 = vrot.lane.b32.xlu0 %v194, 32
  %v198 = vpop.permute.xlu0 %197
  %199 = vrot.lane.b32.xlu0 %v196, 32
  %v200 = vpop.permute.xlu0 %199
  %vm203 = vcmask 64512
  %v204 = vsel %vm203, %v151, %v162
  %v205 = vsel %vm203, %v147, %v164
  %vm206 = vcmask 130048
  %v207 = vsel %vm206, %v204, %v174
  %v208 = vsel %vm206, %v205, %v176
  %vm209 = vcmask 195584
  %v210 = vsel %vm209, %v207, %v186
  %v211 = vsel %vm209, %v208, %v188
  %v212 = vsel %vm93, %v210, %v198
  %v213 = vsel %vm93, %v211, %v200
  %v216 = vrot.slane %v140, 6
  %v217 = vrot.slane %v141, 6
  %v218 = vsel %vm144, %v216, %v217
  %v222 = vsel %vm144, 0.0, %v216
  %v223 = vsel %vm144, %v217, 0.0
  %v226 = vrot.slane %v222, 1
  %v227 = vrot.slane %v218, 1
  %v228 = vsel %vm155, %v226, %v227
  %v229 = vrot.slane %v223, 1
  %v230 = vsel %vm155, %v227, %v229
  %231 = vrot.lane.b32.xlu0 %v228, 8
  %v232 = vpop.permute.xlu0 %231
  %233 = vrot.lane.b32.xlu0 %v230, 8
  %v234 = vpop.permute.xlu0 %233
  %v237 = vrot.slane %v222, 2
  %v238 = vrot.slane %v218, 2
  %v239 = vsel %vm167, %v237, %v238
  %v240 = vrot.slane %v223, 2
  %v241 = vsel %vm167, %v238, %v240
  %242 = vrot.lane.b32.xlu0 %v239, 16
  %v243 = vpop.permute.xlu0 %242
  %244 = vrot.lane.b32.xlu0 %v241, 16
  %v245 = vpop.permute.xlu0 %244
  %v248 = vrot.slane %v222, 3
  %v249 = vrot.slane %v218, 3
  %v250 = vsel %vm179, %v248, %v249
  %v251 = vrot.slane %v223, 3
  %v252 = vsel %vm179, %v249, %v251
  %253 = vrot.lane.b32.xlu0 %v250, 24
  %v254 = vpop.permute.xlu0 %253
  %255 = vrot.lane.b32.xlu0 %v252, 24
  %v256 = vpop.permute.xlu0 %255
  %v259 = vrot.slane %v222, 4
  %v260 = vrot.slane %v218, 4
  %v261 = vsel %vm191, %v259, %v260
  %v262 = vrot.slane %v223, 4
  %v263 = vsel %vm191, %v260, %v262
  %264 = vrot.lane.b32.xlu0 %v261, 32
  %v265 = vpop.permute.xlu0 %264
  %266 = vrot.lane.b32.xlu0 %v263, 32
  %v267 = vpop.permute.xlu0 %266
  %v270 = vsel %vm203, %v222, %v232
  %v271 = vsel %vm203, %v218, %v234
  %v272 = vsel %vm206, %v270, %v243
  %v273 = vsel %vm206, %v271, %v245
  %v274 = vsel %vm209, %v272, %v254
  %v275 = vsel %vm209, %v273, %v256
  %v276 = vsel %vm93, %v274, %v265
  %v277 = vsel %vm93, %v275, %v267
  %v278 = vpack.c.bf16 %v213, %v212
  %v279 = vpack.c.bf16 %v277, %v276
  %v280 = vld [vmem:[%s2] sm:$0xf]
  %v281 = vld [vmem:[%s2 + $0x4] sm:$0xf]
  %v282 = vld [vmem:[%s2 + $0x8] sm:$0xf]
  %v283 = vld [vmem:[%s2 + $0xc] sm:$0xf]
  %v284 = vld [vmem:[%s2 + $0x10] sm:$0xf]
  %v285 = vld [vmem:[%s3] sm:$0x1]
  %v287 = vlaneseq
  %v288 = vshrl.u32 %v287, 7
  %v289 = vsub.s32 0, %v288
  %v290 = vrot.slane %v285, %v289
  %v297 = vunpack.c.l.b16 %v280
  %v298 = vunpack.c.l.b16 %v281
  %v299 = vunpack.c.l.b16 %v282
  %v300 = vunpack.c.l.b16 %v283
  %v301 = vunpack.c.l.b16 %v284
  %v302 = vpack.c.b16 %v298, %v297
  %v303 = vpack.c.b16 %v300, %v299
  %v304 = vpack.c.b16 %v301, %v301
  %vm307 = vcmask 326656
  %v309 = vsel %vm307, %v278, 0
  %v312 = vsel %vm307, %v279, 0
  %v315 = vsel %vm191, %v304, 0
  %317 = vmatprep.subr.bf16.mxu0 0
  %318 = vmatpush1.bf16.msra.mxu0 %v302
  %319 = vmatprep.subr.bf16.mxu0 0
  %320 = vmatpush1.bf16.msra.mxu0 %v303
  %321 = vmatprep.subr.bf16.mxu0 0
  %322 = vmatpush1.bf16.msra.mxu0 %v315
  %323 = vmatprep.subr.bf16.mxu0 0
  %324 = vmatpush1.bf16.msra.mxu0 0
  %325 = vmatprep.subr.bf16.mxu0 0
  %326 = vmatpush1.bf16.msra.mxu0 0
  %327 = vmatprep.subr.bf16.mxu0 0
  %328 = vmatpush1.bf16.msra.mxu0 0
  %329 = vmatprep.subr.bf16.mxu0 0
  %330 = vmatpush1.bf16.msra.mxu0 0
  %331 = vmatprep.subr.bf16.mxu0 0
  %332 = vmatpush1.bf16.msra.mxu0 0
  %333 = vmatprep.subr.bf16.mxu0 0
  %334 = vmatpush1.bf16.msra.mxu0 0
  %335 = vmatprep.subr.bf16.mxu0 0
  %336 = vmatpush1.bf16.msra.mxu0 0
  %337 = vmatprep.subr.bf16.mxu0 0
  %338 = vmatpush1.bf16.msra.mxu0 0
  %339 = vmatprep.subr.bf16.mxu0 0
  %340 = vmatpush1.bf16.msra.mxu0 0
  %341 = vmatprep.subr.bf16.mxu0 0
  %342 = vmatpush1.bf16.msra.mxu0 0
  %343 = vmatprep.subr.bf16.mxu0 0
  %344 = vmatpush1.bf16.msra.mxu0 0
  %345 = vmatprep.subr.bf16.mxu0 0
  %346 = vmatpush1.bf16.msra.mxu0 0
  %347 = vmatprep.subr.bf16.mxu0 0
  %348 = vmatpush1.bf16.msra.mxu0 0
  %349 = vmatprep.mubr.bf16.mxu0 0
  %350 = vmatmul.mubr.bf16.gmra.mrb[0].mxu0 %v309
  %v351 = vpop.f32.mrb[0].mxu0
  %v352 = vadd.f32 %v290, %v351
  %v353 = vpop.f32.mrb[0].mxu0
  %v354 = vpop.f32.mrb[0].mxu0
  %v355 = vadd.f32 %v290, %v354
  %v356 = vpop.f32.mrb[0].mxu0
  %357 = vmatprep.mubr.bf16.mxu0 0
  %358 = vmatmul.mubr.bf16.gmra.mrb[0].mxu0 %v312
  %v359 = vpop.f32.mrb[0].mxu0
  %v360 = vadd.f32 %v290, %v359
  %v361 = vpop.f32.mrb[0].mxu0
  %v362 = vpop.f32.mrb[0].mxu0
  %v363 = vadd.f32 %v290, %v362
  %v364 = vpop.f32.mrb[0].mxu0
  %365 = vdwg.mxu0
  %v366 = vld [vmem:[%s4] sm:$0x1]
  %v367 = vld [vmem:[%s5] sm:$0x1]
  %v368 = vld [vmem:[%s12] sm:$0xff]
  %v369 = vld [vmem:[%s12 + $0x8] sm:$0xff]
  %v370 = vld [vmem:[%s12 + $0x10] sm:$0xff]
  %v371 = vld [vmem:[%s12 + $0x18] sm:$0xff]
  %v372 = vsel %vm93, %v352, 0.0
  %v373 = vsel %vm93, %v355, 0.0
  %v374 = vadd.f32 %v372, %v373
  %v375 = vrot.slane %v374, 4
  %v376 = vadd.f32 %v374, %v375
  %v377 = vrot.slane %v376, 2
  %v378 = vadd.f32 %v376, %v377
  %v379 = vrot.slane %v378, 1
  %v380 = vadd.f32 %v378, %v379
  %v381 = vmul.f32 %v352, %v352
  %v382 = vmul.f32 %v355, %v355
  %v383 = vsel %vm93, %v381, 0.0
  %v384 = vsel %vm93, %v382, 0.0
  %v385 = vadd.f32 %v383, %v384
  %v386 = vrot.slane %v385, 4
  %v387 = vadd.f32 %v385, %v386
  %v388 = vrot.slane %v387, 2
  %v389 = vadd.f32 %v387, %v388
  %v390 = vrot.slane %v389, 1
  %v391 = vadd.f32 %v389, %v390
  %v392 = vsel %vm93, %v360, 0.0
  %v393 = vsel %vm93, %v363, 0.0
  %v394 = vadd.f32 %v392, %v393
  %v395 = vrot.slane %v394, 4
  %v396 = vadd.f32 %v394, %v395
  %v397 = vrot.slane %v396, 2
  %v398 = vadd.f32 %v396, %v397
  %v399 = vrot.slane %v398, 1
  %v400 = vadd.f32 %v398, %v399
  %v401 = vmul.f32 %v360, %v360
  %v402 = vmul.f32 %v363, %v363
  %v403 = vsel %vm93, %v401, 0.0
  %v404 = vsel %vm93, %v402, 0.0
  %v405 = vadd.f32 %v403, %v404
  %v406 = vrot.slane %v405, 4
  %v407 = vadd.f32 %v405, %v406
  %v408 = vrot.slane %v407, 2
  %v409 = vadd.f32 %v407, %v408
  %v410 = vrot.slane %v409, 1
  %v411 = vadd.f32 %v409, %v410
  %vm412 = vcmask 1040384
  %v413 = vsel %vm412, %v380, %v391
  %v414 = vsel %vm144, %v413, %v400
  %vm415 = vcmask 1042432
  %v416 = vsel %vm415, %v414, %v411
  %v418 = vsel %vm93, %v416, 0
  %420 = vmatprep.subr.mxu0 0.0
  %421 = vmatpush1.msra.mxu0 %v368
  %422 = vmatprep.subr.mxu0 0.0
  %423 = vmatpush1.msra.mxu0 %v369
  %424 = vmatprep.subr.mxu0 0.0
  %425 = vmatpush1.msra.mxu0 %v370
  %426 = vmatprep.subr.mxu0 0.0
  %427 = vmatpush1.msra.mxu0 %v371
  %428 = vmatprep.subr.mxu0 0.0
  %429 = vmatpush1.msra.mxu0 0.0
  %430 = vmatprep.subr.mxu0 0.0
  %431 = vmatpush1.msra.mxu0 0.0
  %432 = vmatprep.subr.mxu0 0.0
  %433 = vmatpush1.msra.mxu0 0.0
  %434 = vmatprep.subr.mxu0 0.0
  %435 = vmatpush1.msra.mxu0 0.0
  %436 = vmatprep.subr.mxu0 0.0
  %437 = vmatpush1.msra.mxu0 0.0
  %438 = vmatprep.subr.mxu0 0.0
  %439 = vmatpush1.msra.mxu0 0.0
  %440 = vmatprep.subr.mxu0 0.0
  %441 = vmatpush1.msra.mxu0 0.0
  %442 = vmatprep.subr.mxu0 0.0
  %443 = vmatpush1.msra.mxu0 0.0
  %444 = vmatprep.subr.mxu0 0.0
  %445 = vmatpush1.msra.mxu0 0.0
  %446 = vmatprep.subr.mxu0 0.0
  %447 = vmatpush1.msra.mxu0 0.0
  %448 = vmatprep.subr.mxu0 0.0
  %449 = vmatpush1.msra.mxu0 0.0
  %450 = vmatprep.subr.mxu0 0.0
  %451 = vmatpush1.msra.mxu0 0.0
  %452 = vmatprep.subr.mxu0 0.0
  %453 = vmatpush1.msra.mxu0 0.0
  %454 = vmatprep.subr.mxu0 0.0
  %455 = vmatpush1.msra.mxu0 0.0
  %456 = vmatprep.subr.mxu0 0.0
  %457 = vmatpush1.msra.mxu0 0.0
  %458 = vmatprep.subr.mxu0 0.0
  %459 = vmatpush1.msra.mxu0 0.0
  %460 = vmatprep.subr.mxu0 0.0
  %461 = vmatpush1.msra.mxu0 0.0
  %462 = vmatprep.subr.mxu0 0.0
  %463 = vmatpush1.msra.mxu0 0.0
  %464 = vmatprep.subr.mxu0 0.0
  %465 = vmatpush1.msra.mxu0 0.0
  %466 = vmatprep.subr.mxu0 0.0
  %467 = vmatpush1.msra.mxu0 0.0
  %468 = vmatprep.subr.mxu0 0.0
  %469 = vmatpush1.msra.mxu0 0.0
  %470 = vmatprep.subr.mxu0 0.0
  %471 = vmatpush1.msra.mxu0 0.0
  %472 = vmatprep.subr.mxu0 0.0
  %473 = vmatpush1.msra.mxu0 0.0
  %474 = vmatprep.subr.mxu0 0.0
  %475 = vmatpush1.msra.mxu0 0.0
  %476 = vmatprep.subr.mxu0 0.0
  %477 = vmatpush1.msra.mxu0 0.0
  %478 = vmatprep.subr.mxu0 0.0
  %479 = vmatpush1.msra.mxu0 0.0
  %480 = vmatprep.subr.mxu0 0.0
  %481 = vmatpush1.msra.mxu0 0.0
  %482 = vmatprep.subr.mxu0 0.0
  %483 = vmatpush1.msra.mxu0 0.0
  %484 = vmatprep.mubr.f32.mxu0 0.0
  %485 = vmatmul.mubr.f32.gmra.mrb[0].mxu0 %v418
  %v486 = vpop.f32.mrb[0].mxu0
  %v487 = vadd.f32 0.0, %v486
  %v488 = vpop.f32.mrb[0].mxu0
  %489 = vdwg.mxu0
  %v490 = vmul.f32 %v487, %v487
  %v492 = vrot.slane %v490, 7
  %v494 = vsub.f32 %v487, %v492
  %v495 = vmax.f32 %v494, 0.0
  %v496 = vlaneseq
  %v497 = vshrl.u32 %v496, 7
  %v498 = vsub.s32 0, %v497
  %v499 = vrot.slane %v487, %v498
  %v500 = vsub.f32 %v352, %v499
  %v501 = vsub.f32 %v355, %v499
  %v502 = vadd.f32 %v495, 1e-05
  %v503 = vrsqrt.pop %v502
  %v504 = vlaneseq
  %v505 = vshrl.u32 %v504, 7
  %v506 = vsub.s32 1, %v505
  %v507 = vrot.slane %v503, %v506
  %v508 = vmul.f32 %v500, %v507
  %v509 = vmul.f32 %v501, %v507
  %v511 = vlaneseq
  %v512 = vshrl.u32 %v511, 7
  %v513 = vsub.s32 0, %v512
  %v514 = vrot.slane %v366, %v513
  %v516 = vmul.f32 %v508, %v514
  %v517 = vmul.f32 %v509, %v514
  %v519 = vlaneseq
  %v520 = vshrl.u32 %v519, 7
  %v521 = vsub.s32 0, %v520
  %v522 = vrot.slane %v367, %v521
  %v524 = vadd.f32 %v516, %v522
  %v525 = vadd.f32 %v517, %v522
  %v526 = vand.u32 2147483647, %v524
  %v527 = vand.u32 2147483647, %v525
  %v528 = vsub.f32 0.0, %v526
  %v529 = vsub.f32 0.0, %v527
  %v530 = vmul.f32 %v528, 1.442695
  %v531 = vpow.pop %v530
  %v532 = vmul.f32 %v529, 1.442695
  %v533 = vpow.pop %v532
  %v534 = vadd.f32 %v531, 1.0
  %v535 = vlog2.pop %v534
  %v536 = vmul.f32 %v535, 0.6931472
  %v537 = vmul.f32 -0.5, %v531
  %v538 = vadd.f32 %v537, 1.0
  %v539 = vmul.f32 %v538, %v531
  %v540 = vand.u32 2147483647, %v531
  %vm541 = vcmp.lt.f32.partialorder %v540, 0.0004427343
  %v542 = vsel %vm541, %v539, %v536
  %v543 = vadd.f32 %v533, 1.0
  %v544 = vlog2.pop %v543
  %v545 = vmul.f32 %v544, 0.6931472
  %v546 = vmul.f32 -0.5, %v533
  %v547 = vadd.f32 %v546, 1.0
  %v548 = vmul.f32 %v547, %v533
  %v549 = vand.u32 2147483647, %v533
  %vm550 = vcmp.lt.f32.partialorder %v549, 0.0004427343
  %v551 = vsel %vm550, %v548, %v545
  %v552 = vmax.f32 %v524, 0.0
  %v553 = vmax.f32 %v525, 0.0
  %v554 = vadd.f32 %v542, %v552
  %v555 = vadd.f32 %v551, %v553
  %v556 = vtanh.pop %v554
  %v557 = vtanh.pop %v555
  %v558 = vmul.f32 %v524, %v556
  %v559 = vmul.f32 %v525, %v557
  %v560 = vlaneseq
  %v561 = vshrl.u32 %v560, 7
  %v562 = vsub.s32 2, %v561
  %v563 = vrot.slane %v487, %v562
  %v564 = vsub.f32 %v360, %v563
  %v565 = vsub.f32 %v363, %v563
  %v566 = vlaneseq
  %v567 = vshrl.u32 %v566, 7
  %v568 = vsub.s32 3, %v567
  %v569 = vrot.slane %v503, %v568
  %v570 = vmul.f32 %v564, %v569
  %v571 = vmul.f32 %v565, %v569
  %v572 = vmul.f32 %v570, %v514
  %v573 = vmul.f32 %v571, %v514
  %v574 = vadd.f32 %v572, %v522
  %v575 = vadd.f32 %v573, %v522
  %v576 = vand.u32 2147483647, %v574
  %v577 = vand.u32 2147483647, %v575
  %v578 = vsub.f32 0.0, %v576
  %v579 = vsub.f32 0.0, %v577
  %v580 = vmul.f32 %v578, 1.442695
  %v581 = vpow.pop %v580
  %v582 = vmul.f32 %v579, 1.442695
  %v583 = vpow.pop %v582
  %v584 = vadd.f32 %v581, 1.0
  %v585 = vlog2.pop %v584
  %v586 = vmul.f32 %v585, 0.6931472
  %v587 = vmul.f32 -0.5, %v581
  %v588 = vadd.f32 %v587, 1.0
  %v589 = vmul.f32 %v588, %v581
  %v590 = vand.u32 2147483647, %v581
  %vm591 = vcmp.lt.f32.partialorder %v590, 0.0004427343
  %v592 = vsel %vm591, %v589, %v586
  %v593 = vadd.f32 %v583, 1.0
  %v594 = vlog2.pop %v593
  %v595 = vmul.f32 %v594, 0.6931472
  %v596 = vmul.f32 -0.5, %v583
  %v597 = vadd.f32 %v596, 1.0
  %v598 = vmul.f32 %v597, %v583
  %v599 = vand.u32 2147483647, %v583
  %vm600 = vcmp.lt.f32.partialorder %v599, 0.0004427343
  %v601 = vsel %vm600, %v598, %v595
  %v602 = vmax.f32 %v574, 0.0
  %v603 = vmax.f32 %v575, 0.0
  %v604 = vadd.f32 %v592, %v602
  %v605 = vadd.f32 %v601, %v603
  %v606 = vtanh.pop %v604
  %v607 = vtanh.pop %v605
  %v608 = vmul.f32 %v574, %v606
  %v609 = vmul.f32 %v575, %v607
  %v610 = vlaneseq
  %v611 = vshrl.u32 %v610, 7
  %v612 = vsub.s32 0, %v611
  %v613 = vrot.slane %v132, %v612
  %v614 = vadd.f32 %v558, %v613
  %v615 = vadd.f32 %v559, %v613
  %v616 = vlaneseq
  %v617 = vshrl.u32 %v616, 7
  %v618 = vsub.s32 1, %v617
  %v619 = vrot.slane %v132, %v618
  %v620 = vadd.f32 %v608, %v619
  %v621 = vadd.f32 %v609, %v619
  %v624 = vrot.slane %v614, 6
  %v625 = vrot.slane %v615, 6
  %v626 = vsel %vm144, %v624, %v625
  %v630 = vsel %vm144, 0.0, %v624
  %v631 = vsel %vm144, %v625, 0.0
  %v634 = vrot.slane %v630, 1
  %v635 = vrot.slane %v626, 1
  %v636 = vsel %vm155, %v634, %v635
  %v637 = vrot.slane %v631, 1
  %v638 = vsel %vm155, %v635, %v637
  %639 = vrot.lane.b32.xlu0 %v636, 32
  %v640 = vpop.permute.xlu0 %639
  %641 = vrot.lane.b32.xlu0 %v638, 32
  %v642 = vpop.permute.xlu0 %641
  %v645 = vrot.slane %v630, 2
  %v646 = vrot.slane %v626, 2
  %v647 = vsel %vm167, %v645, %v646
  %v648 = vrot.slane %v631, 2
  %v649 = vsel %vm167, %v646, %v648
  %650 = vrot.lane.b32.xlu0 %v647, 64
  %v651 = vpop.permute.xlu0 %650
  %652 = vrot.lane.b32.xlu0 %v649, 64
  %v653 = vpop.permute.xlu0 %652
  %v656 = vrot.slane %v630, 3
  %v657 = vrot.slane %v626, 3
  %v658 = vsel %vm179, %v656, %v657
  %v659 = vrot.slane %v631, 3
  %v660 = vsel %vm179, %v657, %v659
  %661 = vrot.lane.b32.xlu0 %v658, 96
  %v662 = vpop.permute.xlu0 %661
  %663 = vrot.lane.b32.xlu0 %v660, 96
  %v664 = vpop.permute.xlu0 %663
  %v667 = vrot.slane %v630, 4
  %v668 = vrot.slane %v626, 4
  %v669 = vsel %vm191, %v667, %v668
  %v670 = vrot.slane %v631, 4
  %v671 = vsel %vm191, %v668, %v670
  %v674 = vsel %vm93, %v630, %v640
  %v675 = vsel %vm93, %v626, %v642
  %vm676 = vcmask 523264
  %v677 = vsel %vm676, %v674, %v651
  %v678 = vsel %vm676, %v675, %v653
  %vm679 = vcmask 785408
  %v680 = vsel %vm679, %v677, %v662
  %v681 = vsel %vm679, %v678, %v664
  %v684 = vrot.slane %v620, 6
  %v685 = vrot.slane %v621, 6
  %v686 = vsel %vm144, %v684, %v685
  %v690 = vsel %vm144, 0.0, %v684
  %v691 = vsel %vm144, %v685, 0.0
  %v694 = vrot.slane %v690, 1
  %v695 = vrot.slane %v686, 1
  %v696 = vsel %vm155, %v694, %v695
  %v697 = vrot.slane %v691, 1
  %v698 = vsel %vm155, %v695, %v697
  %699 = vrot.lane.b32.xlu0 %v696, 32
  %v700 = vpop.permute.xlu0 %699
  %701 = vrot.lane.b32.xlu0 %v698, 32
  %v702 = vpop.permute.xlu0 %701
  %v705 = vrot.slane %v690, 2
  %v706 = vrot.slane %v686, 2
  %v707 = vsel %vm167, %v705, %v706
  %v708 = vrot.slane %v691, 2
  %v709 = vsel %vm167, %v706, %v708
  %710 = vrot.lane.b32.xlu0 %v707, 64
  %v711 = vpop.permute.xlu0 %710
  %712 = vrot.lane.b32.xlu0 %v709, 64
  %v713 = vpop.permute.xlu0 %712
  %v716 = vrot.slane %v690, 3
  %v717 = vrot.slane %v686, 3
  %v718 = vsel %vm179, %v716, %v717
  %v719 = vrot.slane %v691, 3
  %v720 = vsel %vm179, %v717, %v719
  %721 = vrot.lane.b32.xlu0 %v718, 96
  %v722 = vpop.permute.xlu0 %721
  %723 = vrot.lane.b32.xlu0 %v720, 96
  %v724 = vpop.permute.xlu0 %723
  %v727 = vrot.slane %v690, 4
  %v728 = vrot.slane %v686, 4
  %v729 = vsel %vm191, %v727, %v728
  %v730 = vrot.slane %v691, 4
  %v731 = vsel %vm191, %v728, %v730
  %v734 = vsel %vm93, %v690, %v700
  %v735 = vsel %vm93, %v686, %v702
  %v736 = vsel %vm676, %v734, %v711
  %v737 = vsel %vm676, %v735, %v713
  %v738 = vsel %vm679, %v736, %v722
  %v739 = vsel %vm679, %v737, %v724
  %v740 = vpack.c.bf16 %v681, %v680
  %v741 = vpack.c.bf16 %v671, %v669
  %v742 = vpack.c.bf16 %v739, %v738
  %v743 = vpack.c.bf16 %v731, %v729
  %v744 = vld [vmem:[%s8] sm:$0xf]
  %v745 = vld [vmem:[%s8 + $0x4] sm:$0xf]
  %v746 = vld [vmem:[%s8 + $0x8] sm:$0xf]
  %v747 = vld [vmem:[%s8 + $0xc] sm:$0xf]
  %v748 = vld [vmem:[%s8 + $0x10] sm:$0xf]
  %v749 = vld [vmem:[%s8 + $0x14] sm:$0xf]
  %v750 = vld [vmem:[%s8 + $0x18] sm:$0xf]
  %v751 = vld [vmem:[%s8 + $0x1c] sm:$0xf]
  %v752 = vld [vmem:[%s8 + $0x20] sm:$0xf]
  %v753 = vld [vmem:[%s8 + $0x24] sm:$0xf]
  %v754 = vld [vmem:[%s8 + $0x28] sm:$0xf]
  %v755 = vld [vmem:[%s8 + $0x2c] sm:$0xf]
  %v756 = vld [vmem:[%s8 + $0x30] sm:$0xf]
  %v757 = vld [vmem:[%s8 + $0x34] sm:$0xf]
  %v758 = vld [vmem:[%s8 + $0x38] sm:$0xf]
  %v759 = vld [vmem:[%s8 + $0x3c] sm:$0xf]
  %v760 = vld [vmem:[%s8 + $0x40] sm:$0xf]
  %v761 = vld [vmem:[%s8 + $0x44] sm:$0xf]
  %v762 = vld [vmem:[%s8 + $0x48] sm:$0xf]
  %v763 = vld [vmem:[%s8 + $0x4c] sm:$0xf]
  %v764 = vld [vmem:[%s9] sm:$0x1]
  %v766 = vlaneseq
  %v767 = vshrl.u32 %v766, 7
  %v768 = vsub.s32 0, %v767
  %v769 = vrot.slane %v764, %v768
  %v791 = vunpack.c.l.b16 %v744
  %v792 = vunpack.c.l.b16 %v745
  %v793 = vunpack.c.l.b16 %v746
  %v794 = vunpack.c.l.b16 %v747
  %v795 = vunpack.c.l.b16 %v748
  %v796 = vunpack.c.l.b16 %v749
  %v797 = vunpack.c.l.b16 %v750
  %v798 = vunpack.c.l.b16 %v751
  %v799 = vunpack.c.l.b16 %v752
  %v800 = vunpack.c.l.b16 %v753
  %v801 = vunpack.c.l.b16 %v754
  %v802 = vunpack.c.l.b16 %v755
  %v803 = vunpack.c.l.b16 %v756
  %v804 = vunpack.c.l.b16 %v757
  %v805 = vunpack.c.l.b16 %v758
  %v806 = vunpack.c.l.b16 %v759
  %v807 = vunpack.c.l.b16 %v760
  %v808 = vunpack.c.l.b16 %v761
  %v809 = vunpack.c.l.b16 %v762
  %v810 = vunpack.c.l.b16 %v763
  %v811 = vpack.c.b16 %v792, %v791
  %v812 = vpack.c.b16 %v794, %v793
  %v813 = vpack.c.b16 %v796, %v795
  %v814 = vpack.c.b16 %v798, %v797
  %v815 = vpack.c.b16 %v800, %v799
  %v816 = vpack.c.b16 %v802, %v801
  %v817 = vpack.c.b16 %v804, %v803
  %v818 = vpack.c.b16 %v806, %v805
  %v819 = vpack.c.b16 %v808, %v807
  %v820 = vpack.c.b16 %v810, %v809
  %v832 = vsel %vm93, %v741, 0
  %v835 = vsel %vm93, %v743, 0
  %837 = vmatprep.subr.bf16.mxu0 0
  %838 = vmatpush1.bf16.msra.mxu0 %v811
  %839 = vmatprep.subr.bf16.mxu0 0
  %840 = vmatpush1.bf16.msra.mxu0 %v812
  %841 = vmatprep.subr.bf16.mxu0 0
  %842 = vmatpush1.bf16.msra.mxu0 %v813
  %843 = vmatprep.subr.bf16.mxu0 0
  %844 = vmatpush1.bf16.msra.mxu0 %v814
  %845 = vmatprep.subr.bf16.mxu0 0
  %846 = vmatpush1.bf16.msra.mxu0 %v815
  %847 = vmatprep.subr.bf16.mxu0 0
  %848 = vmatpush1.bf16.msra.mxu0 %v816
  %849 = vmatprep.subr.bf16.mxu0 0
  %850 = vmatpush1.bf16.msra.mxu0 %v817
  %851 = vmatprep.subr.bf16.mxu0 0
  %852 = vmatpush1.bf16.msra.mxu0 %v818
  %853 = vmatprep.subr.bf16.mxu0 0
  %854 = vmatpush1.bf16.msra.mxu0 %v819
  %855 = vmatprep.subr.bf16.mxu0 0
  %856 = vmatpush1.bf16.msra.mxu0 %v820
  %857 = vmatprep.subr.bf16.mxu0 0
  %858 = vmatpush1.bf16.msra.mxu0 0
  %859 = vmatprep.subr.bf16.mxu0 0
  %860 = vmatpush1.bf16.msra.mxu0 0
  %861 = vmatprep.subr.bf16.mxu0 0
  %862 = vmatpush1.bf16.msra.mxu0 0
  %863 = vmatprep.subr.bf16.mxu0 0
  %864 = vmatpush1.bf16.msra.mxu0 0
  %865 = vmatprep.subr.bf16.mxu0 0
  %866 = vmatpush1.bf16.msra.mxu0 0
  %867 = vmatprep.subr.bf16.mxu0 0
  %868 = vmatpush1.bf16.msra.mxu0 0
  %869 = vmatprep.mubr.bf16.mxu0 %v832
  %870 = vmatmul.mubr.bf16.gmra.mrb[0].mxu0 %v740
  %v871 = vpop.f32.mrb[0].mxu0
  %v872 = vadd.f32 %v769, %v871
  %v873 = vpop.f32.mrb[0].mxu0
  %v874 = vpop.f32.mrb[0].mxu0
  %v875 = vadd.f32 %v769, %v874
  %v876 = vpop.f32.mrb[0].mxu0
  %877 = vmatprep.mubr.bf16.mxu0 %v835
  %878 = vmatmul.mubr.bf16.gmra.mrb[0].mxu0 %v742
  %v879 = vpop.f32.mrb[0].mxu0
  %v880 = vadd.f32 %v769, %v879
  %v881 = vpop.f32.mrb[0].mxu0
  %v882 = vpop.f32.mrb[0].mxu0
  %v883 = vadd.f32 %v769, %v882
  %v884 = vpop.f32.mrb[0].mxu0
  %885 = vdwg.mxu0
  %v886 = vld [vmem:[%s10] sm:$0x1]
  %v887 = vld [vmem:[%s11] sm:$0x1]
  %v888 = vsel %vm93, %v872, 0.0
  %v889 = vsel %vm93, %v875, 0.0
  %v890 = vadd.f32 %v888, %v889
  %v891 = vrot.slane %v890, 4
  %v892 = vadd.f32 %v890, %v891
  %v893 = vrot.slane %v892, 2
  %v894 = vadd.f32 %v892, %v893
  %v895 = vrot.slane %v894, 1
  %v896 = vadd.f32 %v894, %v895
  %v897 = vmul.f32 %v872, %v872
  %v898 = vmul.f32 %v875, %v875
  %v899 = vsel %vm93, %v897, 0.0
  %v900 = vsel %vm93, %v898, 0.0
  %v901 = vadd.f32 %v899, %v900
  %v902 = vrot.slane %v901, 4
  %v903 = vadd.f32 %v901, %v902
  %v904 = vrot.slane %v903, 2
  %v905 = vadd.f32 %v903, %v904
  %v906 = vrot.slane %v905, 1
  %v907 = vadd.f32 %v905, %v906
  %v908 = vsel %vm93, %v880, 0.0
  %v909 = vsel %vm93, %v883, 0.0
  %v910 = vadd.f32 %v908, %v909
  %v911 = vrot.slane %v910, 4
  %v912 = vadd.f32 %v910, %v911
  %v913 = vrot.slane %v912, 2
  %v914 = vadd.f32 %v912, %v913
  %v915 = vrot.slane %v914, 1
  %v916 = vadd.f32 %v914, %v915
  %v917 = vmul.f32 %v880, %v880
  %v918 = vmul.f32 %v883, %v883
  %v919 = vsel %vm93, %v917, 0.0
  %v920 = vsel %vm93, %v918, 0.0
  %v921 = vadd.f32 %v919, %v920
  %v922 = vrot.slane %v921, 4
  %v923 = vadd.f32 %v921, %v922
  %v924 = vrot.slane %v923, 2
  %v925 = vadd.f32 %v923, %v924
  %v926 = vrot.slane %v925, 1
  %v927 = vadd.f32 %v925, %v926
  %v928 = vsel %vm412, %v896, %v907
  %v929 = vsel %vm144, %v928, %v916
  %v930 = vsel %vm415, %v929, %v927
  %v932 = vsel %vm93, %v930, 0
  %934 = vmatprep.subr.mxu0 0.0
  %935 = vmatpush1.msra.mxu0 %v368
  %936 = vmatprep.subr.mxu0 0.0
  %937 = vmatpush1.msra.mxu0 %v369
  %938 = vmatprep.subr.mxu0 0.0
  %939 = vmatpush1.msra.mxu0 %v370
  %940 = vmatprep.subr.mxu0 0.0
  %941 = vmatpush1.msra.mxu0 %v371
  %942 = vmatprep.subr.mxu0 0.0
  %943 = vmatpush1.msra.mxu0 0.0
  %944 = vmatprep.subr.mxu0 0.0
  %945 = vmatpush1.msra.mxu0 0.0
  %946 = vmatprep.subr.mxu0 0.0
  %947 = vmatpush1.msra.mxu0 0.0
  %948 = vmatprep.subr.mxu0 0.0
  %949 = vmatpush1.msra.mxu0 0.0
  %950 = vmatprep.subr.mxu0 0.0
  %951 = vmatpush1.msra.mxu0 0.0
  %952 = vmatprep.subr.mxu0 0.0
  %953 = vmatpush1.msra.mxu0 0.0
  %954 = vmatprep.subr.mxu0 0.0
  %955 = vmatpush1.msra.mxu0 0.0
  %956 = vmatprep.subr.mxu0 0.0
  %957 = vmatpush1.msra.mxu0 0.0
  %958 = vmatprep.subr.mxu0 0.0
  %959 = vmatpush1.msra.mxu0 0.0
  %960 = vmatprep.subr.mxu0 0.0
  %961 = vmatpush1.msra.mxu0 0.0
  %962 = vmatprep.subr.mxu0 0.0
  %963 = vmatpush1.msra.mxu0 0.0
  %964 = vmatprep.subr.mxu0 0.0
  %965 = vmatpush1.msra.mxu0 0.0
  %966 = vmatprep.subr.mxu0 0.0
  %967 = vmatpush1.msra.mxu0 0.0
  %968 = vmatprep.subr.mxu0 0.0
  %969 = vmatpush1.msra.mxu0 0.0
  %970 = vmatprep.subr.mxu0 0.0
  %971 = vmatpush1.msra.mxu0 0.0
  %972 = vmatprep.subr.mxu0 0.0
  %973 = vmatpush1.msra.mxu0 0.0
  %974 = vmatprep.subr.mxu0 0.0
  %975 = vmatpush1.msra.mxu0 0.0
  %976 = vmatprep.subr.mxu0 0.0
  %977 = vmatpush1.msra.mxu0 0.0
  %978 = vmatprep.subr.mxu0 0.0
  %979 = vmatpush1.msra.mxu0 0.0
  %980 = vmatprep.subr.mxu0 0.0
  %981 = vmatpush1.msra.mxu0 0.0
  %982 = vmatprep.subr.mxu0 0.0
  %983 = vmatpush1.msra.mxu0 0.0
  %984 = vmatprep.subr.mxu0 0.0
  %985 = vmatpush1.msra.mxu0 0.0
  %986 = vmatprep.subr.mxu0 0.0
  %987 = vmatpush1.msra.mxu0 0.0
  %988 = vmatprep.subr.mxu0 0.0
  %989 = vmatpush1.msra.mxu0 0.0
  %990 = vmatprep.subr.mxu0 0.0
  %991 = vmatpush1.msra.mxu0 0.0
  %992 = vmatprep.subr.mxu0 0.0
  %993 = vmatpush1.msra.mxu0 0.0
  %994 = vmatprep.subr.mxu0 0.0
  %995 = vmatpush1.msra.mxu0 0.0
  %996 = vmatprep.subr.mxu0 0.0
  %997 = vmatpush1.msra.mxu0 0.0
  %998 = vmatprep.mubr.f32.mxu0 0.0
  %999 = vmatmul.mubr.f32.gmra.mrb[0].mxu0 %v932
  %v1000 = vpop.f32.mrb[0].mxu0
  %v1001 = vadd.f32 0.0, %v1000
  %v1002 = vpop.f32.mrb[0].mxu0
  %1003 = vdwg.mxu0
  %v1004 = vmul.f32 %v1001, %v1001
  %v1006 = vrot.slane %v1004, 7
  %v1008 = vsub.f32 %v1001, %v1006
  %v1009 = vmax.f32 %v1008, 0.0
  %v1010 = vlaneseq
  %v1011 = vshrl.u32 %v1010, 7
  %v1012 = vsub.s32 0, %v1011
  %v1013 = vrot.slane %v1001, %v1012
  %v1014 = vsub.f32 %v872, %v1013
  %v1015 = vsub.f32 %v875, %v1013
  %v1016 = vadd.f32 %v1009, 1e-05
  %v1017 = vrsqrt.pop %v1016
  %v1018 = vlaneseq
  %v1019 = vshrl.u32 %v1018, 7
  %v1020 = vsub.s32 1, %v1019
  %v1021 = vrot.slane %v1017, %v1020
  %v1022 = vmul.f32 %v1014, %v1021
  %v1023 = vmul.f32 %v1015, %v1021
  %v1025 = vlaneseq
  %v1026 = vshrl.u32 %v1025, 7
  %v1027 = vsub.s32 0, %v1026
  %v1028 = vrot.slane %v886, %v1027
  %v1030 = vmul.f32 %v1022, %v1028
  %v1031 = vmul.f32 %v1023, %v1028
  %v1033 = vlaneseq
  %v1034 = vshrl.u32 %v1033, 7
  %v1035 = vsub.s32 0, %v1034
  %v1036 = vrot.slane %v887, %v1035
  %v1038 = vadd.f32 %v1030, %v1036
  %v1039 = vadd.f32 %v1031, %v1036
  %v1040 = vand.u32 2147483647, %v1038
  %v1041 = vand.u32 2147483647, %v1039
  %v1042 = vsub.f32 0.0, %v1040
  %v1043 = vsub.f32 0.0, %v1041
  %v1044 = vmul.f32 %v1042, 1.442695
  %v1045 = vpow.pop %v1044
  %v1046 = vmul.f32 %v1043, 1.442695
  %v1047 = vpow.pop %v1046
  %v1048 = vadd.f32 %v1045, 1.0
  %v1049 = vlog2.pop %v1048
  %v1050 = vmul.f32 %v1049, 0.6931472
  %v1051 = vmul.f32 -0.5, %v1045
  %v1052 = vadd.f32 %v1051, 1.0
  %v1053 = vmul.f32 %v1052, %v1045
  %v1054 = vand.u32 2147483647, %v1045
  %vm1055 = vcmp.lt.f32.partialorder %v1054, 0.0004427343
  %v1056 = vsel %vm1055, %v1053, %v1050
  %v1057 = vadd.f32 %v1047, 1.0
  %v1058 = vlog2.pop %v1057
  %v1059 = vmul.f32 %v1058, 0.6931472
  %v1060 = vmul.f32 -0.5, %v1047
  %v1061 = vadd.f32 %v1060, 1.0
  %v1062 = vmul.f32 %v1061, %v1047
  %v1063 = vand.u32 2147483647, %v1047
  %vm1064 = vcmp.lt.f32.partialorder %v1063, 0.0004427343
  %v1065 = vsel %vm1064, %v1062, %v1059
  %v1066 = vmax.f32 %v1038, 0.0
  %v1067 = vmax.f32 %v1039, 0.0
  %v1068 = vadd.f32 %v1056, %v1066
  %v1069 = vadd.f32 %v1065, %v1067
  %v1070 = vtanh.pop %v1068
  %v1071 = vtanh.pop %v1069
  %v1072 = vmul.f32 %v1038, %v1070
  %v1073 = vmul.f32 %v1039, %v1071
  %v1074 = vlaneseq
  %v1075 = vshrl.u32 %v1074, 7
  %v1076 = vsub.s32 2, %v1075
  %v1077 = vrot.slane %v1001, %v1076
  %v1078 = vsub.f32 %v880, %v1077
  %v1079 = vsub.f32 %v883, %v1077
  %v1080 = vlaneseq
  %v1081 = vshrl.u32 %v1080, 7
  %v1082 = vsub.s32 3, %v1081
  %v1083 = vrot.slane %v1017, %v1082
  %v1084 = vmul.f32 %v1078, %v1083
  %v1085 = vmul.f32 %v1079, %v1083
  %v1086 = vmul.f32 %v1084, %v1028
  %v1087 = vmul.f32 %v1085, %v1028
  %v1088 = vadd.f32 %v1086, %v1036
  %v1089 = vadd.f32 %v1087, %v1036
  %v1090 = vand.u32 2147483647, %v1088
  %v1091 = vand.u32 2147483647, %v1089
  %v1092 = vsub.f32 0.0, %v1090
  %v1093 = vsub.f32 0.0, %v1091
  %v1094 = vmul.f32 %v1092, 1.442695
  %v1095 = vpow.pop %v1094
  %v1096 = vmul.f32 %v1093, 1.442695
  %v1097 = vpow.pop %v1096
  %v1098 = vadd.f32 %v1095, 1.0
  %v1099 = vlog2.pop %v1098
  %v1100 = vmul.f32 %v1099, 0.6931472
  %v1101 = vmul.f32 -0.5, %v1095
  %v1102 = vadd.f32 %v1101, 1.0
  %v1103 = vmul.f32 %v1102, %v1095
  %v1104 = vand.u32 2147483647, %v1095
  %vm1105 = vcmp.lt.f32.partialorder %v1104, 0.0004427343
  %v1106 = vsel %vm1105, %v1103, %v1100
  %v1107 = vadd.f32 %v1097, 1.0
  %v1108 = vlog2.pop %v1107
  %v1109 = vmul.f32 %v1108, 0.6931472
  %v1110 = vmul.f32 -0.5, %v1097
  %v1111 = vadd.f32 %v1110, 1.0
  %v1112 = vmul.f32 %v1111, %v1097
  %v1113 = vand.u32 2147483647, %v1097
  %vm1114 = vcmp.lt.f32.partialorder %v1113, 0.0004427343
  %v1115 = vsel %vm1114, %v1112, %v1109
  %v1116 = vmax.f32 %v1088, 0.0
  %v1117 = vmax.f32 %v1089, 0.0
  %v1118 = vadd.f32 %v1106, %v1116
  %v1119 = vadd.f32 %v1115, %v1117
  %v1120 = vtanh.pop %v1118
  %v1121 = vtanh.pop %v1119
  %v1122 = vmul.f32 %v1088, %v1120
  %v1123 = vmul.f32 %v1089, %v1121
  %v1124 = vpack.c.bf16 %v138, %v137
  %v1125 = vld [vmem:[%s13] sm:$0xf]
  %v1126 = vld [vmem:[%s14] sm:$0x1]
  %v1128 = vlaneseq
  %v1129 = vshrl.u32 %v1128, 7
  %v1130 = vsub.s32 0, %v1129
  %v1131 = vrot.slane %v1126, %v1130
  %v1134 = vsel %vm203, %v1124, 0
  %v1137 = vsel %vm191, %v1125, 0
  %1139 = vmatprep.subr.bf16.mxu0 0
  %1140 = vmatpush1.bf16.msra.mxu0 %v1137
  %1141 = vmatprep.subr.bf16.mxu0 0
  %1142 = vmatpush1.bf16.msra.mxu0 0
  %1143 = vmatprep.subr.bf16.mxu0 0
  %1144 = vmatpush1.bf16.msra.mxu0 0
  %1145 = vmatprep.subr.bf16.mxu0 0
  %1146 = vmatpush1.bf16.msra.mxu0 0
  %1147 = vmatprep.subr.bf16.mxu0 0
  %1148 = vmatpush1.bf16.msra.mxu0 0
  %1149 = vmatprep.subr.bf16.mxu0 0
  %1150 = vmatpush1.bf16.msra.mxu0 0
  %1151 = vmatprep.subr.bf16.mxu0 0
  %1152 = vmatpush1.bf16.msra.mxu0 0
  %1153 = vmatprep.subr.bf16.mxu0 0
  %1154 = vmatpush1.bf16.msra.mxu0 0
  %1155 = vmatprep.subr.bf16.mxu0 0
  %1156 = vmatpush1.bf16.msra.mxu0 0
  %1157 = vmatprep.subr.bf16.mxu0 0
  %1158 = vmatpush1.bf16.msra.mxu0 0
  %1159 = vmatprep.subr.bf16.mxu0 0
  %1160 = vmatpush1.bf16.msra.mxu0 0
  %1161 = vmatprep.subr.bf16.mxu0 0
  %1162 = vmatpush1.bf16.msra.mxu0 0
  %1163 = vmatprep.subr.bf16.mxu0 0
  %1164 = vmatpush1.bf16.msra.mxu0 0
  %1165 = vmatprep.subr.bf16.mxu0 0
  %1166 = vmatpush1.bf16.msra.mxu0 0
  %1167 = vmatprep.subr.bf16.mxu0 0
  %1168 = vmatpush1.bf16.msra.mxu0 0
  %1169 = vmatprep.subr.bf16.mxu0 0
  %1170 = vmatpush1.bf16.msra.mxu0 0
  %1171 = vmatprep.mubr.bf16.mxu0 0
  %1172 = vmatmul.mubr.bf16.gmra.mrb[0].mxu0 %v1134
  %v1173 = vpop.f32.mrb[0].mxu0
  %v1174 = vadd.f32 %v1131, %v1173
  %v1175 = vpop.f32.mrb[0].mxu0
  %v1176 = vpop.f32.mrb[0].mxu0
  %v1177 = vadd.f32 %v1131, %v1176
  %v1178 = vpop.f32.mrb[0].mxu0
  %1179 = vdwg.mxu0
  %v1180 = vadd.f32 %v1072, %v1174
  %v1181 = vadd.f32 %v1073, %v1177
  %1182 = vst.msk [vmem:[%s15] sm:$0xff] %vm93, %v1180
  %1183 = vst.msk [vmem:[%s15 + $0x8] sm:$0xff] %vm93, %v1181
  %v1184 = vpack.c.bf16 %v141, %v140
  %v1185 = vld [vmem:[%s13] sm:$0xf]
  %v1186 = vld [vmem:[%s14] sm:$0x1]
  %v1188 = vlaneseq
  %v1189 = vshrl.u32 %v1188, 7
  %v1190 = vsub.s32 0, %v1189
  %v1191 = vrot.slane %v1186, %v1190
  %v1194 = vsel %vm203, %v1184, 0
  %v1197 = vsel %vm191, %v1185, 0
  %1199 = vmatprep.subr.bf16.mxu0 0
  %1200 = vmatpush1.bf16.msra.mxu0 %v1197
  %1201 = vmatprep.subr.bf16.mxu0 0
  %1202 = vmatpush1.bf16.msra.mxu0 0
  %1203 = vmatprep.subr.bf16.mxu0 0
  %1204 = vmatpush1.bf16.msra.mxu0 0
  %1205 = vmatprep.subr.bf16.mxu0 0
  %1206 = vmatpush1.bf16.msra.mxu0 0
  %1207 = vmatprep.subr.bf16.mxu0 0
  %1208 = vmatpush1.bf16.msra.mxu0 0
  %1209 = vmatprep.subr.bf16.mxu0 0
  %1210 = vmatpush1.bf16.msra.mxu0 0
  %1211 = vmatprep.subr.bf16.mxu0 0
  %1212 = vmatpush1.bf16.msra.mxu0 0
  %1213 = vmatprep.subr.bf16.mxu0 0
  %1214 = vmatpush1.bf16.msra.mxu0 0
  %1215 = vmatprep.subr.bf16.mxu0 0
  %1216 = vmatpush1.bf16.msra.mxu0 0
  %1217 = vmatprep.subr.bf16.mxu0 0
  %1218 = vmatpush1.bf16.msra.mxu0 0
  %1219 = vmatprep.subr.bf16.mxu0 0
  %1220 = vmatpush1.bf16.msra.mxu0 0
  %1221 = vmatprep.subr.bf16.mxu0 0
  %1222 = vmatpush1.bf16.msra.mxu0 0
  %1223 = vmatprep.subr.bf16.mxu0 0
  %1224 = vmatpush1.bf16.msra.mxu0 0
  %1225 = vmatprep.subr.bf16.mxu0 0
  %1226 = vmatpush1.bf16.msra.mxu0 0
  %1227 = vmatprep.subr.bf16.mxu0 0
  %1228 = vmatpush1.bf16.msra.mxu0 0
  %1229 = vmatprep.subr.bf16.mxu0 0
  %1230 = vmatpush1.bf16.msra.mxu0 0
  %1231 = vmatprep.mubr.bf16.mxu0 0
  %1232 = vmatmul.mubr.bf16.gmra.mrb[0].mxu0 %v1194
  %v1233 = vpop.f32.mrb[0].mxu0
  %v1234 = vadd.f32 %v1191, %v1233
  %v1235 = vpop.f32.mrb[0].mxu0
  %v1236 = vpop.f32.mrb[0].mxu0
  %v1237 = vadd.f32 %v1191, %v1236
  %v1238 = vpop.f32.mrb[0].mxu0
  %1239 = vdwg.mxu0
  %v1240 = vadd.f32 %v1122, %v1234
  %v1241 = vadd.f32 %v1123, %v1237
  %s1242 = scalar_lea.vmem %s15, 16
  %1243 = vst.msk [vmem:[%s1242] sm:$0xff] %vm93, %v1240
  %1244 = vst.msk [vmem:[%s1242 + $0x8] sm:$0xff] %vm93, %v1241
  // Predicated region
  $region62: #{concatenated_temporal_unet_fwd.13} parent=0 // pred_check
    _
  $region63: #{concatenated_temporal_unet_fwd.13} parent=0 // pred_check_branch
    %1246 = sbr.rel (0) target = $region65
  $region64: #{concatenated_temporal_unet_fwd.13} parent=0 // pred_region
    _
  $region65: #{concatenated_temporal_unet_fwd.13} parent=0 // pred_fallthru
    _
  // Predicated region
  $region66: #{concatenated_temporal_unet_fwd.13} parent=0 // pred_check
    _
  $region67: #{concatenated_temporal_unet_fwd.13} parent=0 // pred_check_branch
    %1248 = sbr.rel (0) target = $region69
  $region68: #{concatenated_temporal_unet_fwd.13} parent=0 // pred_region
    _
  $region69: #{concatenated_temporal_unet_fwd.13} parent=0 // pred_fallthru
    _

// kernel: concatenated_temporal_unet_fwd.14
$region0: #{concatenated_temporal_unet_fwd.14}
  #allocation0 [shape = 'u32[]', space=smem, size = 0x4, offset = 0x4, fixed_abs, tag = 'smem constant byte address 0x4 - core index']
  #allocation1 [shape = 'u32[144,128]{1,0:T(1,128)}', space=vmem, size = 0x12000, scoped, tag = 'internal scratch']
  %s0 = inlined_call_operand.vmem [shape: f32[2,16,32], index: 0, kind: input, shape index: {}]
  %s1 = inlined_call_operand.vmem [shape: f32[2,32], index: 1, kind: input, shape index: {}]
  %s2 = inlined_call_operand.vmem [shape: bf16[160,32], index: 2, kind: input, shape index: {}]
  %s3 = inlined_call_operand.vmem [shape: f32[1,32], index: 3, kind: input, shape index: {}]
  %s4 = inlined_call_operand.vmem [shape: f32[1,32], index: 4, kind: input, shape index: {}]
  %s5 = inlined_call_operand.vmem [shape: f32[1,32], index: 5, kind: input, shape index: {}]
  %s6 = inlined_call_operand.vmem [shape: bf16[32,32], index: 6, kind: input, shape index: {}]
  %s7 = inlined_call_operand.vmem [shape: f32[1,32], index: 7, kind: input, shape index: {}]
  %s8 = inlined_call_operand.vmem [shape: bf16[160,32], index: 8, kind: input, shape index: {}]
  %s9 = inlined_call_operand.vmem [shape: f32[1,32], index: 9, kind: input, shape index: {}]
  %s10 = inlined_call_operand.vmem [shape: f32[1,32], index: 10, kind: input, shape index: {}]
  %s11 = inlined_call_operand.vmem [shape: f32[1,32], index: 11, kind: input, shape index: {}]
  %s12 = inlined_call_operand.vmem [shape: f32[32,32], index: 12, kind: input, shape index: {}]
  %s13 = inlined_call_operand.vmem [shape: f32[2,16,32], index: 13, kind: output, shape index: {}]
  %s14 = sld [smem:[#allocation0]]
  $region62: #{concatenated_temporal_unet_fwd.14} parent=0
    _
  %s16 = ssub.s32 1, %s14
  %s17 = scalar_select 0, %s16, %s14
  // Predicated region
  $region2: #{concatenated_temporal_unet_fwd.14} parent=0 // pred_check
    _
  $region3: #{concatenated_temporal_unet_fwd.14} parent=0 // pred_check_branch
    %19 = sbr.rel (0) target = $region5
  $region4: #{concatenated_temporal_unet_fwd.14} parent=0 // pred_region
    _
  $region5: #{concatenated_temporal_unet_fwd.14} parent=0 // pred_fallthru
    _
  // Predicated region
  $region6: #{concatenated_temporal_unet_fwd.14} parent=0 // pred_check
    _
  $region7: #{concatenated_temporal_unet_fwd.14} parent=0 // pred_check_branch
    %21 = sbr.rel (0) target = $region9
  $region8: #{concatenated_temporal_unet_fwd.14} parent=0 // pred_region
    _
  $region9: #{concatenated_temporal_unet_fwd.14} parent=0 // pred_fallthru
    _
  // Predicated region
  $region10: #{concatenated_temporal_unet_fwd.14} parent=0 // pred_check
    _
  $region11: #{concatenated_temporal_unet_fwd.14} parent=0 // pred_check_branch
    %23 = sbr.rel (0) target = $region13
  $region12: #{concatenated_temporal_unet_fwd.14} parent=0 // pred_region
    _
  $region13: #{concatenated_temporal_unet_fwd.14} parent=0 // pred_fallthru
    _
  // Predicated region
  $region14: #{concatenated_temporal_unet_fwd.14} parent=0 // pred_check
    _
  $region15: #{concatenated_temporal_unet_fwd.14} parent=0 // pred_check_branch
    %25 = sbr.rel (0) target = $region17
  $region16: #{concatenated_temporal_unet_fwd.14} parent=0 // pred_region
    _
  $region17: #{concatenated_temporal_unet_fwd.14} parent=0 // pred_fallthru
    _
  // Predicated region
  $region18: #{concatenated_temporal_unet_fwd.14} parent=0 // pred_check
    _
  $region19: #{concatenated_temporal_unet_fwd.14} parent=0 // pred_check_branch
    %27 = sbr.rel (0) target = $region21
  $region20: #{concatenated_temporal_unet_fwd.14} parent=0 // pred_region
    _
  $region21: #{concatenated_temporal_unet_fwd.14} parent=0 // pred_fallthru
    _
  // Predicated region
  $region22: #{concatenated_temporal_unet_fwd.14} parent=0 // pred_check
    _
  $region23: #{concatenated_temporal_unet_fwd.14} parent=0 // pred_check_branch
    %29 = sbr.rel (0) target = $region25
  $region24: #{concatenated_temporal_unet_fwd.14} parent=0 // pred_region
    _
  $region25: #{concatenated_temporal_unet_fwd.14} parent=0 // pred_fallthru
    _
  // Predicated region
  $region26: #{concatenated_temporal_unet_fwd.14} parent=0 // pred_check
    _
  $region27: #{concatenated_temporal_unet_fwd.14} parent=0 // pred_check_branch
    %31 = sbr.rel (0) target = $region29
  $region28: #{concatenated_temporal_unet_fwd.14} parent=0 // pred_region
    _
  $region29: #{concatenated_temporal_unet_fwd.14} parent=0 // pred_fallthru
    _
  // Predicated region
  $region30: #{concatenated_temporal_unet_fwd.14} parent=0 // pred_check
    _
  $region31: #{concatenated_temporal_unet_fwd.14} parent=0 // pred_check_branch
    %33 = sbr.rel (0) target = $region33
  $region32: #{concatenated_temporal_unet_fwd.14} parent=0 // pred_region
    _
  $region33: #{concatenated_temporal_unet_fwd.14} parent=0 // pred_fallthru
    _
  // Predicated region
  $region34: #{concatenated_temporal_unet_fwd.14} parent=0 // pred_check
    _
  $region35: #{concatenated_temporal_unet_fwd.14} parent=0 // pred_check_branch
    %35 = sbr.rel (0) target = $region37
  $region36: #{concatenated_temporal_unet_fwd.14} parent=0 // pred_region
    _
  $region37: #{concatenated_temporal_unet_fwd.14} parent=0 // pred_fallthru
    _
  // Predicated region
  $region38: #{concatenated_temporal_unet_fwd.14} parent=0 // pred_check
    _
  $region39: #{concatenated_temporal_unet_fwd.14} parent=0 // pred_check_branch
    %37 = sbr.rel (0) target = $region41
  $region40: #{concatenated_temporal_unet_fwd.14} parent=0 // pred_region
    _
  $region41: #{concatenated_temporal_unet_fwd.14} parent=0 // pred_fallthru
    _
  // Predicated region
  $region42: #{concatenated_temporal_unet_fwd.14} parent=0 // pred_check
    _
  $region43: #{concatenated_temporal_unet_fwd.14} parent=0 // pred_check_branch
    %39 = sbr.rel (0) target = $region45
  $region44: #{concatenated_temporal_unet_fwd.14} parent=0 // pred_region
    _
  $region45: #{concatenated_temporal_unet_fwd.14} parent=0 // pred_fallthru
    _
  // Predicated region
  $region46: #{concatenated_temporal_unet_fwd.14} parent=0 // pred_check
    _
  $region47: #{concatenated_temporal_unet_fwd.14} parent=0 // pred_check_branch
    %41 = sbr.rel (0) target = $region49
  $region48: #{concatenated_temporal_unet_fwd.14} parent=0 // pred_region
    _
  $region49: #{concatenated_temporal_unet_fwd.14} parent=0 // pred_fallthru
    _
  // Predicated region
  $region50: #{concatenated_temporal_unet_fwd.14} parent=0 // pred_check
    _
  $region51: #{concatenated_temporal_unet_fwd.14} parent=0 // pred_check_branch
    %43 = sbr.rel (0) target = $region53
  $region52: #{concatenated_temporal_unet_fwd.14} parent=0 // pred_region
    _
  $region53: #{concatenated_temporal_unet_fwd.14} parent=0 // pred_fallthru
    _
  %v45 = vld [vmem:[%s1] sm:$0x3]
  %v46 = vand.u32 2147483647, %v45
  %v47 = vsub.f32 0.0, %v46
  %v48 = vmul.f32 %v47, 1.442695
  %v49 = vpow.pop %v48
  %v50 = vadd.f32 %v49, 1.0
  %v51 = vlog2.pop %v50
  %v52 = vmul.f32 %v51, 0.6931472
  %v53 = vmul.f32 -0.5, %v49
  %v54 = vadd.f32 %v53, 1.0
  %v55 = vmul.f32 %v54, %v49
  %v56 = vand.u32 2147483647, %v49
  %vm57 = vcmp.lt.f32.partialorder %v56, 0.0004427343
  %v58 = vsel %vm57, %v55, %v52
  %v59 = vmax.f32 %v45, 0.0
  %v60 = vadd.f32 %v58, %v59
  %v61 = vtanh.pop %v60
  %v62 = vmul.f32 %v45, %v61
  %v63 = vpack.c.bf16 %v62, %v62
  %v64 = vld [vmem:[%s6] sm:$0xf]
  %v65 = vld [vmem:[%s6 + $0x4] sm:$0xf]
  %v66 = vld [vmem:[%s6 + $0x8] sm:$0xf]
  %v67 = vld [vmem:[%s6 + $0xc] sm:$0xf]
  %v68 = vld [vmem:[%s7] sm:$0x1]
  %v70 = vlaneseq
  %v71 = vshrl.u32 %v70, 7
  %v72 = vsub.s32 0, %v71
  %v73 = vrot.slane %v68, %v72
  %v79 = vunpack.c.l.b16 %v64
  %v80 = vunpack.c.l.b16 %v65
  %v81 = vunpack.c.l.b16 %v66
  %v82 = vunpack.c.l.b16 %v67
  %v83 = vpack.c.b16 %v80, %v79
  %v84 = vpack.c.b16 %v82, %v81
  %vm87 = vcmask 261120
  %v89 = vsel %vm87, %v63, 0
  %91 = vmatprep.subr.bf16.mxu0 0
  %92 = vmatpush1.bf16.msra.mxu0 %v83
  %93 = vmatprep.subr.bf16.mxu0 0
  %94 = vmatpush1.bf16.msra.mxu0 %v84
  %95 = vmatprep.subr.bf16.mxu0 0
  %96 = vmatpush1.bf16.msra.mxu0 0
  %97 = vmatprep.subr.bf16.mxu0 0
  %98 = vmatpush1.bf16.msra.mxu0 0
  %99 = vmatprep.subr.bf16.mxu0 0
  %100 = vmatpush1.bf16.msra.mxu0 0
  %101 = vmatprep.subr.bf16.mxu0 0
  %102 = vmatpush1.bf16.msra.mxu0 0
  %103 = vmatprep.subr.bf16.mxu0 0
  %104 = vmatpush1.bf16.msra.mxu0 0
  %105 = vmatprep.subr.bf16.mxu0 0
  %106 = vmatpush1.bf16.msra.mxu0 0
  %107 = vmatprep.subr.bf16.mxu0 0
  %108 = vmatpush1.bf16.msra.mxu0 0
  %109 = vmatprep.subr.bf16.mxu0 0
  %110 = vmatpush1.bf16.msra.mxu0 0
  %111 = vmatprep.subr.bf16.mxu0 0
  %112 = vmatpush1.bf16.msra.mxu0 0
  %113 = vmatprep.subr.bf16.mxu0 0
  %114 = vmatpush1.bf16.msra.mxu0 0
  %115 = vmatprep.subr.bf16.mxu0 0
  %116 = vmatpush1.bf16.msra.mxu0 0
  %117 = vmatprep.subr.bf16.mxu0 0
  %118 = vmatpush1.bf16.msra.mxu0 0
  %119 = vmatprep.subr.bf16.mxu0 0
  %120 = vmatpush1.bf16.msra.mxu0 0
  %121 = vmatprep.subr.bf16.mxu0 0
  %122 = vmatpush1.bf16.msra.mxu0 0
  %123 = vmatprep.mubr.bf16.mxu0 0
  %124 = vmatmul.mubr.bf16.gmra.mrb[0].mxu0 %v89
  %v125 = vpop.f32.mrb[0].mxu0
  %v126 = vadd.f32 %v73, %v125
  %v127 = vpop.f32.mrb[0].mxu0
  %v128 = vpop.f32.mrb[0].mxu0
  %v129 = vpop.f32.mrb[0].mxu0
  %130 = vdwg.mxu0
  %v131 = vld [vmem:[%s0] sm:$0xff]
  %v132 = vld [vmem:[%s0 + $0x8] sm:$0xff]
  %s133 = scalar_lea.vmem %s0, 16
  %v134 = vld [vmem:[%s133] sm:$0xff]
  %v135 = vld [vmem:[%s133 + $0x8] sm:$0xff]
  %vm138 = vcmask 1041408
  %v139 = vrot.slane %v131, 6
  %v140 = vrot.slane %v132, 6
  %v141 = vsel %vm138, %v139, %v140
  %v145 = vsel %vm138, 0.0, %v139
  %v146 = vsel %vm138, %v140, 0.0
  %vm149 = vcmask 1046528
  %v150 = vrot.slane %v145, 1
  %v151 = vrot.slane %v141, 1
  %v152 = vsel %vm149, %v150, %v151
  %v153 = vrot.slane %v146, 1
  %v154 = vsel %vm149, %v151, %v153
  %155 = vrot.lane.b32.xlu0 %v152, 32
  %v156 = vpop.permute.xlu0 %155
  %157 = vrot.lane.b32.xlu0 %v154, 32
  %v158 = vpop.permute.xlu0 %157
  %vm161 = vcmask 1045504
  %v162 = vrot.slane %v145, 2
  %v163 = vrot.slane %v141, 2
  %v164 = vsel %vm161, %v162, %v163
  %v165 = vrot.slane %v146, 2
  %v166 = vsel %vm161, %v163, %v165
  %167 = vrot.lane.b32.xlu0 %v164, 64
  %v168 = vpop.permute.xlu0 %167
  %169 = vrot.lane.b32.xlu0 %v166, 64
  %v170 = vpop.permute.xlu0 %169
  %vm173 = vcmask 1044480
  %v174 = vrot.slane %v145, 3
  %v175 = vrot.slane %v141, 3
  %v176 = vsel %vm173, %v174, %v175
  %v177 = vrot.slane %v146, 3
  %v178 = vsel %vm173, %v175, %v177
  %179 = vrot.lane.b32.xlu0 %v176, 96
  %v180 = vpop.permute.xlu0 %179
  %181 = vrot.lane.b32.xlu0 %v178, 96
  %v182 = vpop.permute.xlu0 %181
  %vm185 = vcmask 1043456
  %v186 = vrot.slane %v145, 4
  %v187 = vrot.slane %v141, 4
  %v188 = vsel %vm185, %v186, %v187
  %v189 = vrot.slane %v146, 4
  %v190 = vsel %vm185, %v187, %v189
  %v193 = vsel %vm87, %v145, %v156
  %v194 = vsel %vm87, %v141, %v158
  %vm195 = vcmask 523264
  %v196 = vsel %vm195, %v193, %v168
  %v197 = vsel %vm195, %v194, %v170
  %vm198 = vcmask 785408
  %v199 = vsel %vm198, %v196, %v180
  %v200 = vsel %vm198, %v197, %v182
  %v203 = vrot.slane %v134, 6
  %v204 = vrot.slane %v135, 6
  %v205 = vsel %vm138, %v203, %v204
  %v209 = vsel %vm138, 0.0, %v203
  %v210 = vsel %vm138, %v204, 0.0
  %v213 = vrot.slane %v209, 1
  %v214 = vrot.slane %v205, 1
  %v215 = vsel %vm149, %v213, %v214
  %v216 = vrot.slane %v210, 1
  %v217 = vsel %vm149, %v214, %v216
  %218 = vrot.lane.b32.xlu0 %v215, 32
  %v219 = vpop.permute.xlu0 %218
  %220 = vrot.lane.b32.xlu0 %v217, 32
  %v221 = vpop.permute.xlu0 %220
  %v224 = vrot.slane %v209, 2
  %v225 = vrot.slane %v205, 2
  %v226 = vsel %vm161, %v224, %v225
  %v227 = vrot.slane %v210, 2
  %v228 = vsel %vm161, %v225, %v227
  %229 = vrot.lane.b32.xlu0 %v226, 64
  %v230 = vpop.permute.xlu0 %229
  %231 = vrot.lane.b32.xlu0 %v228, 64
  %v232 = vpop.permute.xlu0 %231
  %v235 = vrot.slane %v209, 3
  %v236 = vrot.slane %v205, 3
  %v237 = vsel %vm173, %v235, %v236
  %v238 = vrot.slane %v210, 3
  %v239 = vsel %vm173, %v236, %v238
  %240 = vrot.lane.b32.xlu0 %v237, 96
  %v241 = vpop.permute.xlu0 %240
  %242 = vrot.lane.b32.xlu0 %v239, 96
  %v243 = vpop.permute.xlu0 %242
  %v246 = vrot.slane %v209, 4
  %v247 = vrot.slane %v205, 4
  %v248 = vsel %vm185, %v246, %v247
  %v249 = vrot.slane %v210, 4
  %v250 = vsel %vm185, %v247, %v249
  %v253 = vsel %vm87, %v209, %v219
  %v254 = vsel %vm87, %v205, %v221
  %v255 = vsel %vm195, %v253, %v230
  %v256 = vsel %vm195, %v254, %v232
  %v257 = vsel %vm198, %v255, %v241
  %v258 = vsel %vm198, %v256, %v243
  %v259 = vpack.c.bf16 %v200, %v199
  %v260 = vpack.c.bf16 %v190, %v188
  %v261 = vpack.c.bf16 %v258, %v257
  %v262 = vpack.c.bf16 %v250, %v248
  %v263 = vld [vmem:[%s2] sm:$0xf]
  %v264 = vld [vmem:[%s2 + $0x4] sm:$0xf]
  %v265 = vld [vmem:[%s2 + $0x8] sm:$0xf]
  %v266 = vld [vmem:[%s2 + $0xc] sm:$0xf]
  %v267 = vld [vmem:[%s2 + $0x10] sm:$0xf]
  %v268 = vld [vmem:[%s2 + $0x14] sm:$0xf]
  %v269 = vld [vmem:[%s2 + $0x18] sm:$0xf]
  %v270 = vld [vmem:[%s2 + $0x1c] sm:$0xf]
  %v271 = vld [vmem:[%s2 + $0x20] sm:$0xf]
  %v272 = vld [vmem:[%s2 + $0x24] sm:$0xf]
  %v273 = vld [vmem:[%s2 + $0x28] sm:$0xf]
  %v274 = vld [vmem:[%s2 + $0x2c] sm:$0xf]
  %v275 = vld [vmem:[%s2 + $0x30] sm:$0xf]
  %v276 = vld [vmem:[%s2 + $0x34] sm:$0xf]
  %v277 = vld [vmem:[%s2 + $0x38] sm:$0xf]
  %v278 = vld [vmem:[%s2 + $0x3c] sm:$0xf]
  %v279 = vld [vmem:[%s2 + $0x40] sm:$0xf]
  %v280 = vld [vmem:[%s2 + $0x44] sm:$0xf]
  %v281 = vld [vmem:[%s2 + $0x48] sm:$0xf]
  %v282 = vld [vmem:[%s2 + $0x4c] sm:$0xf]
  %v283 = vld [vmem:[%s3] sm:$0x1]
  %v285 = vlaneseq
  %v286 = vshrl.u32 %v285, 7
  %v287 = vsub.s32 0, %v286
  %v288 = vrot.slane %v283, %v287
  %v310 = vunpack.c.l.b16 %v263
  %v311 = vunpack.c.l.b16 %v264
  %v312 = vunpack.c.l.b16 %v265
  %v313 = vunpack.c.l.b16 %v266
  %v314 = vunpack.c.l.b16 %v267
  %v315 = vunpack.c.l.b16 %v268
  %v316 = vunpack.c.l.b16 %v269
  %v317 = vunpack.c.l.b16 %v270
  %v318 = vunpack.c.l.b16 %v271
  %v319 = vunpack.c.l.b16 %v272
  %v320 = vunpack.c.l.b16 %v273
  %v321 = vunpack.c.l.b16 %v274
  %v322 = vunpack.c.l.b16 %v275
  %v323 = vunpack.c.l.b16 %v276
  %v324 = vunpack.c.l.b16 %v277
  %v325 = vunpack.c.l.b16 %v278
  %v326 = vunpack.c.l.b16 %v279
  %v327 = vunpack.c.l.b16 %v280
  %v328 = vunpack.c.l.b16 %v281
  %v329 = vunpack.c.l.b16 %v282
  %v330 = vpack.c.b16 %v311, %v310
  %v331 = vpack.c.b16 %v313, %v312
  %v332 = vpack.c.b16 %v315, %v314
  %v333 = vpack.c.b16 %v317, %v316
  %v334 = vpack.c.b16 %v319, %v318
  %v335 = vpack.c.b16 %v321, %v320
  %v336 = vpack.c.b16 %v323, %v322
  %v337 = vpack.c.b16 %v325, %v324
  %v338 = vpack.c.b16 %v327, %v326
  %v339 = vpack.c.b16 %v329, %v328
  %v351 = vsel %vm87, %v260, 0
  %v354 = vsel %vm87, %v262, 0
  %356 = vmatprep.subr.bf16.mxu0 0
  %357 = vmatpush1.bf16.msra.mxu0 %v330
  %358 = vmatprep.subr.bf16.mxu0 0
  %359 = vmatpush1.bf16.msra.mxu0 %v331
  %360 = vmatprep.subr.bf16.mxu0 0
  %361 = vmatpush1.bf16.msra.mxu0 %v332
  %362 = vmatprep.subr.bf16.mxu0 0
  %363 = vmatpush1.bf16.msra.mxu0 %v333
  %364 = vmatprep.subr.bf16.mxu0 0
  %365 = vmatpush1.bf16.msra.mxu0 %v334
  %366 = vmatprep.subr.bf16.mxu0 0
  %367 = vmatpush1.bf16.msra.mxu0 %v335
  %368 = vmatprep.subr.bf16.mxu0 0
  %369 = vmatpush1.bf16.msra.mxu0 %v336
  %370 = vmatprep.subr.bf16.mxu0 0
  %371 = vmatpush1.bf16.msra.mxu0 %v337
  %372 = vmatprep.subr.bf16.mxu0 0
  %373 = vmatpush1.bf16.msra.mxu0 %v338
  %374 = vmatprep.subr.bf16.mxu0 0
  %375 = vmatpush1.bf16.msra.mxu0 %v339
  %376 = vmatprep.subr.bf16.mxu0 0
  %377 = vmatpush1.bf16.msra.mxu0 0
  %378 = vmatprep.subr.bf16.mxu0 0
  %379 = vmatpush1.bf16.msra.mxu0 0
  %380 = vmatprep.subr.bf16.mxu0 0
  %381 = vmatpush1.bf16.msra.mxu0 0
  %382 = vmatprep.subr.bf16.mxu0 0
  %383 = vmatpush1.bf16.msra.mxu0 0
  %384 = vmatprep.subr.bf16.mxu0 0
  %385 = vmatpush1.bf16.msra.mxu0 0
  %386 = vmatprep.subr.bf16.mxu0 0
  %387 = vmatpush1.bf16.msra.mxu0 0
  %388 = vmatprep.mubr.bf16.mxu0 %v351
  %389 = vmatmul.mubr.bf16.gmra.mrb[0].mxu0 %v259
  %v390 = vpop.f32.mrb[0].mxu0
  %v391 = vadd.f32 %v288, %v390
  %v392 = vpop.f32.mrb[0].mxu0
  %v393 = vpop.f32.mrb[0].mxu0
  %v394 = vadd.f32 %v288, %v393
  %v395 = vpop.f32.mrb[0].mxu0
  %396 = vmatprep.mubr.bf16.mxu0 %v354
  %397 = vmatmul.mubr.bf16.gmra.mrb[0].mxu0 %v261
  %v398 = vpop.f32.mrb[0].mxu0
  %v399 = vadd.f32 %v288, %v398
  %v400 = vpop.f32.mrb[0].mxu0
  %v401 = vpop.f32.mrb[0].mxu0
  %v402 = vadd.f32 %v288, %v401
  %v403 = vpop.f32.mrb[0].mxu0
  %404 = vdwg.mxu0
  %v405 = vld [vmem:[%s4] sm:$0x1]
  %v406 = vld [vmem:[%s5] sm:$0x1]
  %v407 = vld [vmem:[%s12] sm:$0xff]
  %v408 = vld [vmem:[%s12 + $0x8] sm:$0xff]
  %v409 = vld [vmem:[%s12 + $0x10] sm:$0xff]
  %v410 = vld [vmem:[%s12 + $0x18] sm:$0xff]
  %v411 = vsel %vm87, %v391, 0.0
  %v412 = vsel %vm87, %v394, 0.0
  %v413 = vadd.f32 %v411, %v412
  %v414 = vrot.slane %v413, 4
  %v415 = vadd.f32 %v413, %v414
  %v416 = vrot.slane %v415, 2
  %v417 = vadd.f32 %v415, %v416
  %v418 = vrot.slane %v417, 1
  %v419 = vadd.f32 %v417, %v418
  %v420 = vmul.f32 %v391, %v391
  %v421 = vmul.f32 %v394, %v394
  %v422 = vsel %vm87, %v420, 0.0
  %v423 = vsel %vm87, %v421, 0.0
  %v424 = vadd.f32 %v422, %v423
  %v425 = vrot.slane %v424, 4
  %v426 = vadd.f32 %v424, %v425
  %v427 = vrot.slane %v426, 2
  %v428 = vadd.f32 %v426, %v427
  %v429 = vrot.slane %v428, 1
  %v430 = vadd.f32 %v428, %v429
  %v431 = vsel %vm87, %v399, 0.0
  %v432 = vsel %vm87, %v402, 0.0
  %v433 = vadd.f32 %v431, %v432
  %v434 = vrot.slane %v433, 4
  %v435 = vadd.f32 %v433, %v434
  %v436 = vrot.slane %v435, 2
  %v437 = vadd.f32 %v435, %v436
  %v438 = vrot.slane %v437, 1
  %v439 = vadd.f32 %v437, %v438
  %v440 = vmul.f32 %v399, %v399
  %v441 = vmul.f32 %v402, %v402
  %v442 = vsel %vm87, %v440, 0.0
  %v443 = vsel %vm87, %v441, 0.0
  %v444 = vadd.f32 %v442, %v443
  %v445 = vrot.slane %v444, 4
  %v446 = vadd.f32 %v444, %v445
  %v447 = vrot.slane %v446, 2
  %v448 = vadd.f32 %v446, %v447
  %v449 = vrot.slane %v448, 1
  %v450 = vadd.f32 %v448, %v449
  %vm451 = vcmask 1040384
  %v452 = vsel %vm451, %v419, %v430
  %v453 = vsel %vm138, %v452, %v439
  %vm454 = vcmask 1042432
  %v455 = vsel %vm454, %v453, %v450
  %v457 = vsel %vm87, %v455, 0
  %459 = vmatprep.subr.mxu0 0.0
  %460 = vmatpush1.msra.mxu0 %v407
  %461 = vmatprep.subr.mxu0 0.0
  %462 = vmatpush1.msra.mxu0 %v408
  %463 = vmatprep.subr.mxu0 0.0
  %464 = vmatpush1.msra.mxu0 %v409
  %465 = vmatprep.subr.mxu0 0.0
  %466 = vmatpush1.msra.mxu0 %v410
  %467 = vmatprep.subr.mxu0 0.0
  %468 = vmatpush1.msra.mxu0 0.0
  %469 = vmatprep.subr.mxu0 0.0
  %470 = vmatpush1.msra.mxu0 0.0
  %471 = vmatprep.subr.mxu0 0.0
  %472 = vmatpush1.msra.mxu0 0.0
  %473 = vmatprep.subr.mxu0 0.0
  %474 = vmatpush1.msra.mxu0 0.0
  %475 = vmatprep.subr.mxu0 0.0
  %476 = vmatpush1.msra.mxu0 0.0
  %477 = vmatprep.subr.mxu0 0.0
  %478 = vmatpush1.msra.mxu0 0.0
  %479 = vmatprep.subr.mxu0 0.0
  %480 = vmatpush1.msra.mxu0 0.0
  %481 = vmatprep.subr.mxu0 0.0
  %482 = vmatpush1.msra.mxu0 0.0
  %483 = vmatprep.subr.mxu0 0.0
  %484 = vmatpush1.msra.mxu0 0.0
  %485 = vmatprep.subr.mxu0 0.0
  %486 = vmatpush1.msra.mxu0 0.0
  %487 = vmatprep.subr.mxu0 0.0
  %488 = vmatpush1.msra.mxu0 0.0
  %489 = vmatprep.subr.mxu0 0.0
  %490 = vmatpush1.msra.mxu0 0.0
  %491 = vmatprep.subr.mxu0 0.0
  %492 = vmatpush1.msra.mxu0 0.0
  %493 = vmatprep.subr.mxu0 0.0
  %494 = vmatpush1.msra.mxu0 0.0
  %495 = vmatprep.subr.mxu0 0.0
  %496 = vmatpush1.msra.mxu0 0.0
  %497 = vmatprep.subr.mxu0 0.0
  %498 = vmatpush1.msra.mxu0 0.0
  %499 = vmatprep.subr.mxu0 0.0
  %500 = vmatpush1.msra.mxu0 0.0
  %501 = vmatprep.subr.mxu0 0.0
  %502 = vmatpush1.msra.mxu0 0.0
  %503 = vmatprep.subr.mxu0 0.0
  %504 = vmatpush1.msra.mxu0 0.0
  %505 = vmatprep.subr.mxu0 0.0
  %506 = vmatpush1.msra.mxu0 0.0
  %507 = vmatprep.subr.mxu0 0.0
  %508 = vmatpush1.msra.mxu0 0.0
  %509 = vmatprep.subr.mxu0 0.0
  %510 = vmatpush1.msra.mxu0 0.0
  %511 = vmatprep.subr.mxu0 0.0
  %512 = vmatpush1.msra.mxu0 0.0
  %513 = vmatprep.subr.mxu0 0.0
  %514 = vmatpush1.msra.mxu0 0.0
  %515 = vmatprep.subr.mxu0 0.0
  %516 = vmatpush1.msra.mxu0 0.0
  %517 = vmatprep.subr.mxu0 0.0
  %518 = vmatpush1.msra.mxu0 0.0
  %519 = vmatprep.subr.mxu0 0.0
  %520 = vmatpush1.msra.mxu0 0.0
  %521 = vmatprep.subr.mxu0 0.0
  %522 = vmatpush1.msra.mxu0 0.0
  %523 = vmatprep.mubr.f32.mxu0 0.0
  %524 = vmatmul.mubr.f32.gmra.mrb[0].mxu0 %v457
  %v525 = vpop.f32.mrb[0].mxu0
  %v526 = vadd.f32 0.0, %v525
  %v527 = vpop.f32.mrb[0].mxu0
  %528 = vdwg.mxu0
  %v529 = vmul.f32 %v526, %v526
  %v531 = vrot.slane %v529, 7
  %v533 = vsub.f32 %v526, %v531
  %v534 = vmax.f32 %v533, 0.0
  %v535 = vlaneseq
  %v536 = vshrl.u32 %v535, 7
  %v537 = vsub.s32 0, %v536
  %v538 = vrot.slane %v526, %v537
  %v539 = vsub.f32 %v391, %v538
  %v540 = vsub.f32 %v394, %v538
  %v541 = vadd.f32 %v534, 1e-05
  %v542 = vrsqrt.pop %v541
  %v543 = vlaneseq
  %v544 = vshrl.u32 %v543, 7
  %v545 = vsub.s32 1, %v544
  %v546 = vrot.slane %v542, %v545
  %v547 = vmul.f32 %v539, %v546
  %v548 = vmul.f32 %v540, %v546
  %v550 = vlaneseq
  %v551 = vshrl.u32 %v550, 7
  %v552 = vsub.s32 0, %v551
  %v553 = vrot.slane %v405, %v552
  %v555 = vmul.f32 %v547, %v553
  %v556 = vmul.f32 %v548, %v553
  %v558 = vlaneseq
  %v559 = vshrl.u32 %v558, 7
  %v560 = vsub.s32 0, %v559
  %v561 = vrot.slane %v406, %v560
  %v563 = vadd.f32 %v555, %v561
  %v564 = vadd.f32 %v556, %v561
  %v565 = vand.u32 2147483647, %v563
  %v566 = vand.u32 2147483647, %v564
  %v567 = vsub.f32 0.0, %v565
  %v568 = vsub.f32 0.0, %v566
  %v569 = vmul.f32 %v567, 1.442695
  %v570 = vpow.pop %v569
  %v571 = vmul.f32 %v568, 1.442695
  %v572 = vpow.pop %v571
  %v573 = vadd.f32 %v570, 1.0
  %v574 = vlog2.pop %v573
  %v575 = vmul.f32 %v574, 0.6931472
  %v576 = vmul.f32 -0.5, %v570
  %v577 = vadd.f32 %v576, 1.0
  %v578 = vmul.f32 %v577, %v570
  %v579 = vand.u32 2147483647, %v570
  %vm580 = vcmp.lt.f32.partialorder %v579, 0.0004427343
  %v581 = vsel %vm580, %v578, %v575
  %v582 = vadd.f32 %v572, 1.0
  %v583 = vlog2.pop %v582
  %v584 = vmul.f32 %v583, 0.6931472
  %v585 = vmul.f32 -0.5, %v572
  %v586 = vadd.f32 %v585, 1.0
  %v587 = vmul.f32 %v586, %v572
  %v588 = vand.u32 2147483647, %v572
  %vm589 = vcmp.lt.f32.partialorder %v588, 0.0004427343
  %v590 = vsel %vm589, %v587, %v584
  %v591 = vmax.f32 %v563, 0.0
  %v592 = vmax.f32 %v564, 0.0
  %v593 = vadd.f32 %v581, %v591
  %v594 = vadd.f32 %v590, %v592
  %v595 = vtanh.pop %v593
  %v596 = vtanh.pop %v594
  %v597 = vmul.f32 %v563, %v595
  %v598 = vmul.f32 %v564, %v596
  %v599 = vlaneseq
  %v600 = vshrl.u32 %v599, 7
  %v601 = vsub.s32 2, %v600
  %v602 = vrot.slane %v526, %v601
  %v603 = vsub.f32 %v399, %v602
  %v604 = vsub.f32 %v402, %v602
  %v605 = vlaneseq
  %v606 = vshrl.u32 %v605, 7
  %v607 = vsub.s32 3, %v606
  %v608 = vrot.slane %v542, %v607
  %v609 = vmul.f32 %v603, %v608
  %v610 = vmul.f32 %v604, %v608
  %v611 = vmul.f32 %v609, %v553
  %v612 = vmul.f32 %v610, %v553
  %v613 = vadd.f32 %v611, %v561
  %v614 = vadd.f32 %v612, %v561
  %v615 = vand.u32 2147483647, %v613
  %v616 = vand.u32 2147483647, %v614
  %v617 = vsub.f32 0.0, %v615
  %v618 = vsub.f32 0.0, %v616
  %v619 = vmul.f32 %v617, 1.442695
  %v620 = vpow.pop %v619
  %v621 = vmul.f32 %v618, 1.442695
  %v622 = vpow.pop %v621
  %v623 = vadd.f32 %v620, 1.0
  %v624 = vlog2.pop %v623
  %v625 = vmul.f32 %v624, 0.6931472
  %v626 = vmul.f32 -0.5, %v620
  %v627 = vadd.f32 %v626, 1.0
  %v628 = vmul.f32 %v627, %v620
  %v629 = vand.u32 2147483647, %v620
  %vm630 = vcmp.lt.f32.partialorder %v629, 0.0004427343
  %v631 = vsel %vm630, %v628, %v625
  %v632 = vadd.f32 %v622, 1.0
  %v633 = vlog2.pop %v632
  %v634 = vmul.f32 %v633, 0.6931472
  %v635 = vmul.f32 -0.5, %v622
  %v636 = vadd.f32 %v635, 1.0
  %v637 = vmul.f32 %v636, %v622
  %v638 = vand.u32 2147483647, %v622
  %vm639 = vcmp.lt.f32.partialorder %v638, 0.0004427343
  %v640 = vsel %vm639, %v637, %v634
  %v641 = vmax.f32 %v613, 0.0
  %v642 = vmax.f32 %v614, 0.0
  %v643 = vadd.f32 %v631, %v641
  %v644 = vadd.f32 %v640, %v642
  %v645 = vtanh.pop %v643
  %v646 = vtanh.pop %v644
  %v647 = vmul.f32 %v613, %v645
  %v648 = vmul.f32 %v614, %v646
  %v649 = vlaneseq
  %v650 = vshrl.u32 %v649, 7
  %v651 = vsub.s32 0, %v650
  %v652 = vrot.slane %v126, %v651
  %v653 = vadd.f32 %v597, %v652
  %v654 = vadd.f32 %v598, %v652
  %v655 = vlaneseq
  %v656 = vshrl.u32 %v655, 7
  %v657 = vsub.s32 1, %v656
  %v658 = vrot.slane %v126, %v657
  %v659 = vadd.f32 %v647, %v658
  %v660 = vadd.f32 %v648, %v658
  %v663 = vrot.slane %v653, 6
  %v664 = vrot.slane %v654, 6
  %v665 = vsel %vm138, %v663, %v664
  %v669 = vsel %vm138, 0.0, %v663
  %v670 = vsel %vm138, %v664, 0.0
  %v673 = vrot.slane %v669, 1
  %v674 = vrot.slane %v665, 1
  %v675 = vsel %vm149, %v673, %v674
  %v676 = vrot.slane %v670, 1
  %v677 = vsel %vm149, %v674, %v676
  %678 = vrot.lane.b32.xlu0 %v675, 32
  %v679 = vpop.permute.xlu0 %678
  %680 = vrot.lane.b32.xlu0 %v677, 32
  %v681 = vpop.permute.xlu0 %680
  %v684 = vrot.slane %v669, 2
  %v685 = vrot.slane %v665, 2
  %v686 = vsel %vm161, %v684, %v685
  %v687 = vrot.slane %v670, 2
  %v688 = vsel %vm161, %v685, %v687
  %689 = vrot.lane.b32.xlu0 %v686, 64
  %v690 = vpop.permute.xlu0 %689
  %691 = vrot.lane.b32.xlu0 %v688, 64
  %v692 = vpop.permute.xlu0 %691
  %v695 = vrot.slane %v669, 3
  %v696 = vrot.slane %v665, 3
  %v697 = vsel %vm173, %v695, %v696
  %v698 = vrot.slane %v670, 3
  %v699 = vsel %vm173, %v696, %v698
  %700 = vrot.lane.b32.xlu0 %v697, 96
  %v701 = vpop.permute.xlu0 %700
  %702 = vrot.lane.b32.xlu0 %v699, 96
  %v703 = vpop.permute.xlu0 %702
  %v706 = vrot.slane %v669, 4
  %v707 = vrot.slane %v665, 4
  %v708 = vsel %vm185, %v706, %v707
  %v709 = vrot.slane %v670, 4
  %v710 = vsel %vm185, %v707, %v709
  %v713 = vsel %vm87, %v669, %v679
  %v714 = vsel %vm87, %v665, %v681
  %v715 = vsel %vm195, %v713, %v690
  %v716 = vsel %vm195, %v714, %v692
  %v717 = vsel %vm198, %v715, %v701
  %v718 = vsel %vm198, %v716, %v703
  %v721 = vrot.slane %v659, 6
  %v722 = vrot.slane %v660, 6
  %v723 = vsel %vm138, %v721, %v722
  %v727 = vsel %vm138, 0.0, %v721
  %v728 = vsel %vm138, %v722, 0.0
  %v731 = vrot.slane %v727, 1
  %v732 = vrot.slane %v723, 1
  %v733 = vsel %vm149, %v731, %v732
  %v734 = vrot.slane %v728, 1
  %v735 = vsel %vm149, %v732, %v734
  %736 = vrot.lane.b32.xlu0 %v733, 32
  %v737 = vpop.permute.xlu0 %736
  %738 = vrot.lane.b32.xlu0 %v735, 32
  %v739 = vpop.permute.xlu0 %738
  %v742 = vrot.slane %v727, 2
  %v743 = vrot.slane %v723, 2
  %v744 = vsel %vm161, %v742, %v743
  %v745 = vrot.slane %v728, 2
  %v746 = vsel %vm161, %v743, %v745
  %747 = vrot.lane.b32.xlu0 %v744, 64
  %v748 = vpop.permute.xlu0 %747
  %749 = vrot.lane.b32.xlu0 %v746, 64
  %v750 = vpop.permute.xlu0 %749
  %v753 = vrot.slane %v727, 3
  %v754 = vrot.slane %v723, 3
  %v755 = vsel %vm173, %v753, %v754
  %v756 = vrot.slane %v728, 3
  %v757 = vsel %vm173, %v754, %v756
  %758 = vrot.lane.b32.xlu0 %v755, 96
  %v759 = vpop.permute.xlu0 %758
  %760 = vrot.lane.b32.xlu0 %v757, 96
  %v761 = vpop.permute.xlu0 %760
  %v764 = vrot.slane %v727, 4
  %v765 = vrot.slane %v723, 4
  %v766 = vsel %vm185, %v764, %v765
  %v767 = vrot.slane %v728, 4
  %v768 = vsel %vm185, %v765, %v767
  %v771 = vsel %vm87, %v727, %v737
  %v772 = vsel %vm87, %v723, %v739
  %v773 = vsel %vm195, %v771, %v748
  %v774 = vsel %vm195, %v772, %v750
  %v775 = vsel %vm198, %v773, %v759
  %v776 = vsel %vm198, %v774, %v761
  %v777 = vpack.c.bf16 %v718, %v717
  %v778 = vpack.c.bf16 %v710, %v708
  %v779 = vpack.c.bf16 %v776, %v775
  %v780 = vpack.c.bf16 %v768, %v766
  %v781 = vld [vmem:[%s8] sm:$0xf]
  %v782 = vld [vmem:[%s8 + $0x4] sm:$0xf]
  %v783 = vld [vmem:[%s8 + $0x8] sm:$0xf]
  %v784 = vld [vmem:[%s8 + $0xc] sm:$0xf]
  %v785 = vld [vmem:[%s8 + $0x10] sm:$0xf]
  %v786 = vld [vmem:[%s8 + $0x14] sm:$0xf]
  %v787 = vld [vmem:[%s8 + $0x18] sm:$0xf]
  %v788 = vld [vmem:[%s8 + $0x1c] sm:$0xf]
  %v789 = vld [vmem:[%s8 + $0x20] sm:$0xf]
  %v790 = vld [vmem:[%s8 + $0x24] sm:$0xf]
  %v791 = vld [vmem:[%s8 + $0x28] sm:$0xf]
  %v792 = vld [vmem:[%s8 + $0x2c] sm:$0xf]
  %v793 = vld [vmem:[%s8 + $0x30] sm:$0xf]
  %v794 = vld [vmem:[%s8 + $0x34] sm:$0xf]
  %v795 = vld [vmem:[%s8 + $0x38] sm:$0xf]
  %v796 = vld [vmem:[%s8 + $0x3c] sm:$0xf]
  %v797 = vld [vmem:[%s8 + $0x40] sm:$0xf]
  %v798 = vld [vmem:[%s8 + $0x44] sm:$0xf]
  %v799 = vld [vmem:[%s8 + $0x48] sm:$0xf]
  %v800 = vld [vmem:[%s8 + $0x4c] sm:$0xf]
  %v801 = vld [vmem:[%s9] sm:$0x1]
  %v803 = vlaneseq
  %v804 = vshrl.u32 %v803, 7
  %v805 = vsub.s32 0, %v804
  %v806 = vrot.slane %v801, %v805
  %v828 = vunpack.c.l.b16 %v781
  %v829 = vunpack.c.l.b16 %v782
  %v830 = vunpack.c.l.b16 %v783
  %v831 = vunpack.c.l.b16 %v784
  %v832 = vunpack.c.l.b16 %v785
  %v833 = vunpack.c.l.b16 %v786
  %v834 = vunpack.c.l.b16 %v787
  %v835 = vunpack.c.l.b16 %v788
  %v836 = vunpack.c.l.b16 %v789
  %v837 = vunpack.c.l.b16 %v790
  %v838 = vunpack.c.l.b16 %v791
  %v839 = vunpack.c.l.b16 %v792
  %v840 = vunpack.c.l.b16 %v793
  %v841 = vunpack.c.l.b16 %v794
  %v842 = vunpack.c.l.b16 %v795
  %v843 = vunpack.c.l.b16 %v796
  %v844 = vunpack.c.l.b16 %v797
  %v845 = vunpack.c.l.b16 %v798
  %v846 = vunpack.c.l.b16 %v799
  %v847 = vunpack.c.l.b16 %v800
  %v848 = vpack.c.b16 %v829, %v828
  %v849 = vpack.c.b16 %v831, %v830
  %v850 = vpack.c.b16 %v833, %v832
  %v851 = vpack.c.b16 %v835, %v834
  %v852 = vpack.c.b16 %v837, %v836
  %v853 = vpack.c.b16 %v839, %v838
  %v854 = vpack.c.b16 %v841, %v840
  %v855 = vpack.c.b16 %v843, %v842
  %v856 = vpack.c.b16 %v845, %v844
  %v857 = vpack.c.b16 %v847, %v846
  %v869 = vsel %vm87, %v778, 0
  %v872 = vsel %vm87, %v780, 0
  %874 = vmatprep.subr.bf16.mxu0 0
  %875 = vmatpush1.bf16.msra.mxu0 %v848
  %876 = vmatprep.subr.bf16.mxu0 0
  %877 = vmatpush1.bf16.msra.mxu0 %v849
  %878 = vmatprep.subr.bf16.mxu0 0
  %879 = vmatpush1.bf16.msra.mxu0 %v850
  %880 = vmatprep.subr.bf16.mxu0 0
  %881 = vmatpush1.bf16.msra.mxu0 %v851
  %882 = vmatprep.subr.bf16.mxu0 0
  %883 = vmatpush1.bf16.msra.mxu0 %v852
  %884 = vmatprep.subr.bf16.mxu0 0
  %885 = vmatpush1.bf16.msra.mxu0 %v853
  %886 = vmatprep.subr.bf16.mxu0 0
  %887 = vmatpush1.bf16.msra.mxu0 %v854
  %888 = vmatprep.subr.bf16.mxu0 0
  %889 = vmatpush1.bf16.msra.mxu0 %v855
  %890 = vmatprep.subr.bf16.mxu0 0
  %891 = vmatpush1.bf16.msra.mxu0 %v856
  %892 = vmatprep.subr.bf16.mxu0 0
  %893 = vmatpush1.bf16.msra.mxu0 %v857
  %894 = vmatprep.subr.bf16.mxu0 0
  %895 = vmatpush1.bf16.msra.mxu0 0
  %896 = vmatprep.subr.bf16.mxu0 0
  %897 = vmatpush1.bf16.msra.mxu0 0
  %898 = vmatprep.subr.bf16.mxu0 0
  %899 = vmatpush1.bf16.msra.mxu0 0
  %900 = vmatprep.subr.bf16.mxu0 0
  %901 = vmatpush1.bf16.msra.mxu0 0
  %902 = vmatprep.subr.bf16.mxu0 0
  %903 = vmatpush1.bf16.msra.mxu0 0
  %904 = vmatprep.subr.bf16.mxu0 0
  %905 = vmatpush1.bf16.msra.mxu0 0
  %906 = vmatprep.mubr.bf16.mxu0 %v869
  %907 = vmatmul.mubr.bf16.gmra.mrb[0].mxu0 %v777
  %v908 = vpop.f32.mrb[0].mxu0
  %v909 = vadd.f32 %v806, %v908
  %v910 = vpop.f32.mrb[0].mxu0
  %v911 = vpop.f32.mrb[0].mxu0
  %v912 = vadd.f32 %v806, %v911
  %v913 = vpop.f32.mrb[0].mxu0
  %914 = vmatprep.mubr.bf16.mxu0 %v872
  %915 = vmatmul.mubr.bf16.gmra.mrb[0].mxu0 %v779
  %v916 = vpop.f32.mrb[0].mxu0
  %v917 = vadd.f32 %v806, %v916
  %v918 = vpop.f32.mrb[0].mxu0
  %v919 = vpop.f32.mrb[0].mxu0
  %v920 = vadd.f32 %v806, %v919
  %v921 = vpop.f32.mrb[0].mxu0
  %922 = vdwg.mxu0
  %v923 = vld [vmem:[%s10] sm:$0x1]
  %v924 = vld [vmem:[%s11] sm:$0x1]
  %v925 = vsel %vm87, %v909, 0.0
  %v926 = vsel %vm87, %v912, 0.0
  %v927 = vadd.f32 %v925, %v926
  %v928 = vrot.slane %v927, 4
  %v929 = vadd.f32 %v927, %v928
  %v930 = vrot.slane %v929, 2
  %v931 = vadd.f32 %v929, %v930
  %v932 = vrot.slane %v931, 1
  %v933 = vadd.f32 %v931, %v932
  %v934 = vmul.f32 %v909, %v909
  %v935 = vmul.f32 %v912, %v912
  %v936 = vsel %vm87, %v934, 0.0
  %v937 = vsel %vm87, %v935, 0.0
  %v938 = vadd.f32 %v936, %v937
  %v939 = vrot.slane %v938, 4
  %v940 = vadd.f32 %v938, %v939
  %v941 = vrot.slane %v940, 2
  %v942 = vadd.f32 %v940, %v941
  %v943 = vrot.slane %v942, 1
  %v944 = vadd.f32 %v942, %v943
  %v945 = vsel %vm87, %v917, 0.0
  %v946 = vsel %vm87, %v920, 0.0
  %v947 = vadd.f32 %v945, %v946
  %v948 = vrot.slane %v947, 4
  %v949 = vadd.f32 %v947, %v948
  %v950 = vrot.slane %v949, 2
  %v951 = vadd.f32 %v949, %v950
  %v952 = vrot.slane %v951, 1
  %v953 = vadd.f32 %v951, %v952
  %v954 = vmul.f32 %v917, %v917
  %v955 = vmul.f32 %v920, %v920
  %v956 = vsel %vm87, %v954, 0.0
  %v957 = vsel %vm87, %v955, 0.0
  %v958 = vadd.f32 %v956, %v957
  %v959 = vrot.slane %v958, 4
  %v960 = vadd.f32 %v958, %v959
  %v961 = vrot.slane %v960, 2
  %v962 = vadd.f32 %v960, %v961
  %v963 = vrot.slane %v962, 1
  %v964 = vadd.f32 %v962, %v963
  %v965 = vsel %vm451, %v933, %v944
  %v966 = vsel %vm138, %v965, %v953
  %v967 = vsel %vm454, %v966, %v964
  %v969 = vsel %vm87, %v967, 0
  %971 = vmatprep.subr.mxu0 0.0
  %972 = vmatpush1.msra.mxu0 %v407
  %973 = vmatprep.subr.mxu0 0.0
  %974 = vmatpush1.msra.mxu0 %v408
  %975 = vmatprep.subr.mxu0 0.0
  %976 = vmatpush1.msra.mxu0 %v409
  %977 = vmatprep.subr.mxu0 0.0
  %978 = vmatpush1.msra.mxu0 %v410
  %979 = vmatprep.subr.mxu0 0.0
  %980 = vmatpush1.msra.mxu0 0.0
  %981 = vmatprep.subr.mxu0 0.0
  %982 = vmatpush1.msra.mxu0 0.0
  %983 = vmatprep.subr.mxu0 0.0
  %984 = vmatpush1.msra.mxu0 0.0
  %985 = vmatprep.subr.mxu0 0.0
  %986 = vmatpush1.msra.mxu0 0.0
  %987 = vmatprep.subr.mxu0 0.0
  %988 = vmatpush1.msra.mxu0 0.0
  %989 = vmatprep.subr.mxu0 0.0
  %990 = vmatpush1.msra.mxu0 0.0
  %991 = vmatprep.subr.mxu0 0.0
  %992 = vmatpush1.msra.mxu0 0.0
  %993 = vmatprep.subr.mxu0 0.0
  %994 = vmatpush1.msra.mxu0 0.0
  %995 = vmatprep.subr.mxu0 0.0
  %996 = vmatpush1.msra.mxu0 0.0
  %997 = vmatprep.subr.mxu0 0.0
  %998 = vmatpush1.msra.mxu0 0.0
  %999 = vmatprep.subr.mxu0 0.0
  %1000 = vmatpush1.msra.mxu0 0.0
  %1001 = vmatprep.subr.mxu0 0.0
  %1002 = vmatpush1.msra.mxu0 0.0
  %1003 = vmatprep.subr.mxu0 0.0
  %1004 = vmatpush1.msra.mxu0 0.0
  %1005 = vmatprep.subr.mxu0 0.0
  %1006 = vmatpush1.msra.mxu0 0.0
  %1007 = vmatprep.subr.mxu0 0.0
  %1008 = vmatpush1.msra.mxu0 0.0
  %1009 = vmatprep.subr.mxu0 0.0
  %1010 = vmatpush1.msra.mxu0 0.0
  %1011 = vmatprep.subr.mxu0 0.0
  %1012 = vmatpush1.msra.mxu0 0.0
  %1013 = vmatprep.subr.mxu0 0.0
  %1014 = vmatpush1.msra.mxu0 0.0
  %1015 = vmatprep.subr.mxu0 0.0
  %1016 = vmatpush1.msra.mxu0 0.0
  %1017 = vmatprep.subr.mxu0 0.0
  %1018 = vmatpush1.msra.mxu0 0.0
  %1019 = vmatprep.subr.mxu0 0.0
  %1020 = vmatpush1.msra.mxu0 0.0
  %1021 = vmatprep.subr.mxu0 0.0
  %1022 = vmatpush1.msra.mxu0 0.0
  %1023 = vmatprep.subr.mxu0 0.0
  %1024 = vmatpush1.msra.mxu0 0.0
  %1025 = vmatprep.subr.mxu0 0.0
  %1026 = vmatpush1.msra.mxu0 0.0
  %1027 = vmatprep.subr.mxu0 0.0
  %1028 = vmatpush1.msra.mxu0 0.0
  %1029 = vmatprep.subr.mxu0 0.0
  %1030 = vmatpush1.msra.mxu0 0.0
  %1031 = vmatprep.subr.mxu0 0.0
  %1032 = vmatpush1.msra.mxu0 0.0
  %1033 = vmatprep.subr.mxu0 0.0
  %1034 = vmatpush1.msra.mxu0 0.0
  %1035 = vmatprep.mubr.f32.mxu0 0.0
  %1036 = vmatmul.mubr.f32.gmra.mrb[0].mxu0 %v969
  %v1037 = vpop.f32.mrb[0].mxu0
  %v1038 = vadd.f32 0.0, %v1037
  %v1039 = vpop.f32.mrb[0].mxu0
  %1040 = vdwg.mxu0
  %v1041 = vmul.f32 %v1038, %v1038
  %v1043 = vrot.slane %v1041, 7
  %v1045 = vsub.f32 %v1038, %v1043
  %v1046 = vmax.f32 %v1045, 0.0
  %v1047 = vlaneseq
  %v1048 = vshrl.u32 %v1047, 7
  %v1049 = vsub.s32 0, %v1048
  %v1050 = vrot.slane %v1038, %v1049
  %v1051 = vsub.f32 %v909, %v1050
  %v1052 = vsub.f32 %v912, %v1050
  %v1053 = vadd.f32 %v1046, 1e-05
  %v1054 = vrsqrt.pop %v1053
  %v1055 = vlaneseq
  %v1056 = vshrl.u32 %v1055, 7
  %v1057 = vsub.s32 1, %v1056
  %v1058 = vrot.slane %v1054, %v1057
  %v1059 = vmul.f32 %v1051, %v1058
  %v1060 = vmul.f32 %v1052, %v1058
  %v1062 = vlaneseq
  %v1063 = vshrl.u32 %v1062, 7
  %v1064 = vsub.s32 0, %v1063
  %v1065 = vrot.slane %v923, %v1064
  %v1067 = vmul.f32 %v1059, %v1065
  %v1068 = vmul.f32 %v1060, %v1065
  %v1070 = vlaneseq
  %v1071 = vshrl.u32 %v1070, 7
  %v1072 = vsub.s32 0, %v1071
  %v1073 = vrot.slane %v924, %v1072
  %v1075 = vadd.f32 %v1067, %v1073
  %v1076 = vadd.f32 %v1068, %v1073
  %v1077 = vand.u32 2147483647, %v1075
  %v1078 = vand.u32 2147483647, %v1076
  %v1079 = vsub.f32 0.0, %v1077
  %v1080 = vsub.f32 0.0, %v1078
  %v1081 = vmul.f32 %v1079, 1.442695
  %v1082 = vpow.pop %v1081
  %v1083 = vmul.f32 %v1080, 1.442695
  %v1084 = vpow.pop %v1083
  %v1085 = vadd.f32 %v1082, 1.0
  %v1086 = vlog2.pop %v1085
  %v1087 = vmul.f32 %v1086, 0.6931472
  %v1088 = vmul.f32 -0.5, %v1082
  %v1089 = vadd.f32 %v1088, 1.0
  %v1090 = vmul.f32 %v1089, %v1082
  %v1091 = vand.u32 2147483647, %v1082
  %vm1092 = vcmp.lt.f32.partialorder %v1091, 0.0004427343
  %v1093 = vsel %vm1092, %v1090, %v1087
  %v1094 = vadd.f32 %v1084, 1.0
  %v1095 = vlog2.pop %v1094
  %v1096 = vmul.f32 %v1095, 0.6931472
  %v1097 = vmul.f32 -0.5, %v1084
  %v1098 = vadd.f32 %v1097, 1.0
  %v1099 = vmul.f32 %v1098, %v1084
  %v1100 = vand.u32 2147483647, %v1084
  %vm1101 = vcmp.lt.f32.partialorder %v1100, 0.0004427343
  %v1102 = vsel %vm1101, %v1099, %v1096
  %v1103 = vmax.f32 %v1075, 0.0
  %v1104 = vmax.f32 %v1076, 0.0
  %v1105 = vadd.f32 %v1093, %v1103
  %v1106 = vadd.f32 %v1102, %v1104
  %v1107 = vtanh.pop %v1105
  %v1108 = vtanh.pop %v1106
  %v1109 = vmul.f32 %v1075, %v1107
  %v1110 = vmul.f32 %v1076, %v1108
  %v1111 = vlaneseq
  %v1112 = vshrl.u32 %v1111, 7
  %v1113 = vsub.s32 2, %v1112
  %v1114 = vrot.slane %v1038, %v1113
  %v1115 = vsub.f32 %v917, %v1114
  %v1116 = vsub.f32 %v920, %v1114
  %v1117 = vlaneseq
  %v1118 = vshrl.u32 %v1117, 7
  %v1119 = vsub.s32 3, %v1118
  %v1120 = vrot.slane %v1054, %v1119
  %v1121 = vmul.f32 %v1115, %v1120
  %v1122 = vmul.f32 %v1116, %v1120
  %v1123 = vmul.f32 %v1121, %v1065
  %v1124 = vmul.f32 %v1122, %v1065
  %v1125 = vadd.f32 %v1123, %v1073
  %v1126 = vadd.f32 %v1124, %v1073
  %v1127 = vand.u32 2147483647, %v1125
  %v1128 = vand.u32 2147483647, %v1126
  %v1129 = vsub.f32 0.0, %v1127
  %v1130 = vsub.f32 0.0, %v1128
  %v1131 = vmul.f32 %v1129, 1.442695
  %v1132 = vpow.pop %v1131
  %v1133 = vmul.f32 %v1130, 1.442695
  %v1134 = vpow.pop %v1133
  %v1135 = vadd.f32 %v1132, 1.0
  %v1136 = vlog2.pop %v1135
  %v1137 = vmul.f32 %v1136, 0.6931472
  %v1138 = vmul.f32 -0.5, %v1132
  %v1139 = vadd.f32 %v1138, 1.0
  %v1140 = vmul.f32 %v1139, %v1132
  %v1141 = vand.u32 2147483647, %v1132
  %vm1142 = vcmp.lt.f32.partialorder %v1141, 0.0004427343
  %v1143 = vsel %vm1142, %v1140, %v1137
  %v1144 = vadd.f32 %v1134, 1.0
  %v1145 = vlog2.pop %v1144
  %v1146 = vmul.f32 %v1145, 0.6931472
  %v1147 = vmul.f32 -0.5, %v1134
  %v1148 = vadd.f32 %v1147, 1.0
  %v1149 = vmul.f32 %v1148, %v1134
  %v1150 = vand.u32 2147483647, %v1134
  %vm1151 = vcmp.lt.f32.partialorder %v1150, 0.0004427343
  %v1152 = vsel %vm1151, %v1149, %v1146
  %v1153 = vmax.f32 %v1125, 0.0
  %v1154 = vmax.f32 %v1126, 0.0
  %v1155 = vadd.f32 %v1143, %v1153
  %v1156 = vadd.f32 %v1152, %v1154
  %v1157 = vtanh.pop %v1155
  %v1158 = vtanh.pop %v1156
  %v1159 = vmul.f32 %v1125, %v1157
  %v1160 = vmul.f32 %v1126, %v1158
  %v1161 = vadd.f32 %v1109, %v131
  %v1162 = vadd.f32 %v1110, %v132
  %1163 = vst.msk [vmem:[%s13] sm:$0xff] %vm87, %v1161
  %1164 = vst.msk [vmem:[%s13 + $0x8] sm:$0xff] %vm87, %v1162
  %v1165 = vadd.f32 %v1159, %v134
  %v1166 = vadd.f32 %v1160, %v135
  %s1167 = scalar_lea.vmem %s13, 16
  %1168 = vst.msk [vmem:[%s1167] sm:$0xff] %vm87, %v1165
  %1169 = vst.msk [vmem:[%s1167 + $0x8] sm:$0xff] %vm87, %v1166
  // Predicated region
  $region54: #{concatenated_temporal_unet_fwd.14} parent=0 // pred_check
    _
  $region55: #{concatenated_temporal_unet_fwd.14} parent=0 // pred_check_branch
    %1171 = sbr.rel (0) target = $region57
  $region56: #{concatenated_temporal_unet_fwd.14} parent=0 // pred_region
    _
  $region57: #{concatenated_temporal_unet_fwd.14} parent=0 // pred_fallthru
    _
  // Predicated region
  $region58: #{concatenated_temporal_unet_fwd.14} parent=0 // pred_check
    _
  $region59: #{concatenated_temporal_unet_fwd.14} parent=0 // pred_check_branch
    %1173 = sbr.rel (0) target = $region61
  $region60: #{concatenated_temporal_unet_fwd.14} parent=0 // pred_region
    _
  $region61: #{concatenated_temporal_unet_fwd.14} parent=0 // pred_fallthru
    _

// kernel: concatenated_temporal_unet_fwd.16
$region0: #{concatenated_temporal_unet_fwd.16}
  #allocation0 [shape = 'u32[]', space=smem, size = 0x4, offset = 0x4, fixed_abs, tag = 'smem constant byte address 0x4 - core index']
  #allocation1 [shape = 'u32[144,128]{1,0:T(1,128)}', space=vmem, size = 0x12000, scoped, tag = 'internal scratch']
  %s0 = inlined_call_operand.vmem [shape: f32[2,8,32], index: 0, kind: input, shape index: {}]
  %s1 = inlined_call_operand.vmem [shape: f32[2,32], index: 1, kind: input, shape index: {}]
  %s2 = inlined_call_operand.vmem [shape: bf16[160,64], index: 2, kind: input, shape index: {}]
  %s3 = inlined_call_operand.vmem [shape: f32[1,64], index: 3, kind: input, shape index: {}]
  %s4 = inlined_call_operand.vmem [shape: f32[1,64], index: 4, kind: input, shape index: {}]
  %s5 = inlined_call_operand.vmem [shape: f32[1,64], index: 5, kind: input, shape index: {}]
  %s6 = inlined_call_operand.vmem [shape: bf16[32,64], index: 6, kind: input, shape index: {}]
  %s7 = inlined_call_operand.vmem [shape: f32[1,64], index: 7, kind: input, shape index: {}]
  %s8 = inlined_call_operand.vmem [shape: bf16[320,64], index: 8, kind: input, shape index: {}]
  %s9 = inlined_call_operand.vmem [shape: f32[1,64], index: 9, kind: input, shape index: {}]
  %s10 = inlined_call_operand.vmem [shape: f32[1,64], index: 10, kind: input, shape index: {}]
  %s11 = inlined_call_operand.vmem [shape: f32[1,64], index: 11, kind: input, shape index: {}]
  %s12 = inlined_call_operand.vmem [shape: f32[64,64], index: 12, kind: input, shape index: {}]
  %s13 = inlined_call_operand.vmem [shape: bf16[32,64], index: 13, kind: input, shape index: {}]
  %s14 = inlined_call_operand.vmem [shape: f32[1,64], index: 14, kind: input, shape index: {}]
  %s15 = inlined_call_operand.vmem [shape: f32[2,8,64], index: 15, kind: output, shape index: {}]
  %s16 = sld [smem:[#allocation0]]
  $region70: #{concatenated_temporal_unet_fwd.16} parent=0
    _
  %s18 = ssub.s32 1, %s16
  %s19 = scalar_select 0, %s18, %s16
  // Predicated region
  $region2: #{concatenated_temporal_unet_fwd.16} parent=0 // pred_check
    _
  $region3: #{concatenated_temporal_unet_fwd.16} parent=0 // pred_check_branch
    %21 = sbr.rel (0) target = $region5
  $region4: #{concatenated_temporal_unet_fwd.16} parent=0 // pred_region
    _
  $region5: #{concatenated_temporal_unet_fwd.16} parent=0 // pred_fallthru
    _
  // Predicated region
  $region6: #{concatenated_temporal_unet_fwd.16} parent=0 // pred_check
    _
  $region7: #{concatenated_temporal_unet_fwd.16} parent=0 // pred_check_branch
    %23 = sbr.rel (0) target = $region9
  $region8: #{concatenated_temporal_unet_fwd.16} parent=0 // pred_region
    _
  $region9: #{concatenated_temporal_unet_fwd.16} parent=0 // pred_fallthru
    _
  // Predicated region
  $region10: #{concatenated_temporal_unet_fwd.16} parent=0 // pred_check
    _
  $region11: #{concatenated_temporal_unet_fwd.16} parent=0 // pred_check_branch
    %25 = sbr.rel (0) target = $region13
  $region12: #{concatenated_temporal_unet_fwd.16} parent=0 // pred_region
    _
  $region13: #{concatenated_temporal_unet_fwd.16} parent=0 // pred_fallthru
    _
  // Predicated region
  $region14: #{concatenated_temporal_unet_fwd.16} parent=0 // pred_check
    _
  $region15: #{concatenated_temporal_unet_fwd.16} parent=0 // pred_check_branch
    %27 = sbr.rel (0) target = $region17
  $region16: #{concatenated_temporal_unet_fwd.16} parent=0 // pred_region
    _
  $region17: #{concatenated_temporal_unet_fwd.16} parent=0 // pred_fallthru
    _
  // Predicated region
  $region18: #{concatenated_temporal_unet_fwd.16} parent=0 // pred_check
    _
  $region19: #{concatenated_temporal_unet_fwd.16} parent=0 // pred_check_branch
    %29 = sbr.rel (0) target = $region21
  $region20: #{concatenated_temporal_unet_fwd.16} parent=0 // pred_region
    _
  $region21: #{concatenated_temporal_unet_fwd.16} parent=0 // pred_fallthru
    _
  // Predicated region
  $region22: #{concatenated_temporal_unet_fwd.16} parent=0 // pred_check
    _
  $region23: #{concatenated_temporal_unet_fwd.16} parent=0 // pred_check_branch
    %31 = sbr.rel (0) target = $region25
  $region24: #{concatenated_temporal_unet_fwd.16} parent=0 // pred_region
    _
  $region25: #{concatenated_temporal_unet_fwd.16} parent=0 // pred_fallthru
    _
  // Predicated region
  $region26: #{concatenated_temporal_unet_fwd.16} parent=0 // pred_check
    _
  $region27: #{concatenated_temporal_unet_fwd.16} parent=0 // pred_check_branch
    %33 = sbr.rel (0) target = $region29
  $region28: #{concatenated_temporal_unet_fwd.16} parent=0 // pred_region
    _
  $region29: #{concatenated_temporal_unet_fwd.16} parent=0 // pred_fallthru
    _
  // Predicated region
  $region30: #{concatenated_temporal_unet_fwd.16} parent=0 // pred_check
    _
  $region31: #{concatenated_temporal_unet_fwd.16} parent=0 // pred_check_branch
    %35 = sbr.rel (0) target = $region33
  $region32: #{concatenated_temporal_unet_fwd.16} parent=0 // pred_region
    _
  $region33: #{concatenated_temporal_unet_fwd.16} parent=0 // pred_fallthru
    _
  // Predicated region
  $region34: #{concatenated_temporal_unet_fwd.16} parent=0 // pred_check
    _
  $region35: #{concatenated_temporal_unet_fwd.16} parent=0 // pred_check_branch
    %37 = sbr.rel (0) target = $region37
  $region36: #{concatenated_temporal_unet_fwd.16} parent=0 // pred_region
    _
  $region37: #{concatenated_temporal_unet_fwd.16} parent=0 // pred_fallthru
    _
  // Predicated region
  $region38: #{concatenated_temporal_unet_fwd.16} parent=0 // pred_check
    _
  $region39: #{concatenated_temporal_unet_fwd.16} parent=0 // pred_check_branch
    %39 = sbr.rel (0) target = $region41
  $region40: #{concatenated_temporal_unet_fwd.16} parent=0 // pred_region
    _
  $region41: #{concatenated_temporal_unet_fwd.16} parent=0 // pred_fallthru
    _
  // Predicated region
  $region42: #{concatenated_temporal_unet_fwd.16} parent=0 // pred_check
    _
  $region43: #{concatenated_temporal_unet_fwd.16} parent=0 // pred_check_branch
    %41 = sbr.rel (0) target = $region45
  $region44: #{concatenated_temporal_unet_fwd.16} parent=0 // pred_region
    _
  $region45: #{concatenated_temporal_unet_fwd.16} parent=0 // pred_fallthru
    _
  // Predicated region
  $region46: #{concatenated_temporal_unet_fwd.16} parent=0 // pred_check
    _
  $region47: #{concatenated_temporal_unet_fwd.16} parent=0 // pred_check_branch
    %43 = sbr.rel (0) target = $region49
  $region48: #{concatenated_temporal_unet_fwd.16} parent=0 // pred_region
    _
  $region49: #{concatenated_temporal_unet_fwd.16} parent=0 // pred_fallthru
    _
  // Predicated region
  $region50: #{concatenated_temporal_unet_fwd.16} parent=0 // pred_check
    _
  $region51: #{concatenated_temporal_unet_fwd.16} parent=0 // pred_check_branch
    %45 = sbr.rel (0) target = $region53
  $region52: #{concatenated_temporal_unet_fwd.16} parent=0 // pred_region
    _
  $region53: #{concatenated_temporal_unet_fwd.16} parent=0 // pred_fallthru
    _
  // Predicated region
  $region54: #{concatenated_temporal_unet_fwd.16} parent=0 // pred_check
    _
  $region55: #{concatenated_temporal_unet_fwd.16} parent=0 // pred_check_branch
    %47 = sbr.rel (0) target = $region57
  $region56: #{concatenated_temporal_unet_fwd.16} parent=0 // pred_region
    _
  $region57: #{concatenated_temporal_unet_fwd.16} parent=0 // pred_fallthru
    _
  // Predicated region
  $region58: #{concatenated_temporal_unet_fwd.16} parent=0 // pred_check
    _
  $region59: #{concatenated_temporal_unet_fwd.16} parent=0 // pred_check_branch
    %49 = sbr.rel (0) target = $region61
  $region60: #{concatenated_temporal_unet_fwd.16} parent=0 // pred_region
    _
  $region61: #{concatenated_temporal_unet_fwd.16} parent=0 // pred_fallthru
    _
  %v51 = vld [vmem:[%s1] sm:$0x3]
  %v52 = vand.u32 2147483647, %v51
  %v53 = vsub.f32 0.0, %v52
  %v54 = vmul.f32 %v53, 1.442695
  %v55 = vpow.pop %v54
  %v56 = vadd.f32 %v55, 1.0
  %v57 = vlog2.pop %v56
  %v58 = vmul.f32 %v57, 0.6931472
  %v59 = vmul.f32 -0.5, %v55
  %v60 = vadd.f32 %v59, 1.0
  %v61 = vmul.f32 %v60, %v55
  %v62 = vand.u32 2147483647, %v55
  %vm63 = vcmp.lt.f32.partialorder %v62, 0.0004427343
  %v64 = vsel %vm63, %v61, %v58
  %v65 = vmax.f32 %v51, 0.0
  %v66 = vadd.f32 %v64, %v65
  %v67 = vtanh.pop %v66
  %v68 = vmul.f32 %v51, %v67
  %v69 = vpack.c.bf16 %v68, %v68
  %v70 = vld [vmem:[%s6] sm:$0xf]
  %v71 = vld [vmem:[%s6 + $0x4] sm:$0xf]
  %v72 = vld [vmem:[%s6 + $0x8] sm:$0xf]
  %v73 = vld [vmem:[%s6 + $0xc] sm:$0xf]
  %v74 = vld [vmem:[%s7] sm:$0x1]
  %v76 = vlaneseq
  %v77 = vshrl.u32 %v76, 7
  %v78 = vsub.s32 0, %v77
  %v79 = vrot.slane %v74, %v78
  %v85 = vunpack.c.l.b16 %v70
  %v86 = vunpack.c.l.b16 %v71
  %v87 = vunpack.c.l.b16 %v72
  %v88 = vunpack.c.l.b16 %v73
  %v89 = vpack.c.b16 %v86, %v85
  %v90 = vpack.c.b16 %v88, %v87
  %vm93 = vcmask 261120
  %v95 = vsel %vm93, %v69, 0
  %97 = vmatprep.subr.bf16.mxu0 0
  %98 = vmatpush1.bf16.msra.mxu0 %v89
  %99 = vmatprep.subr.bf16.mxu0 0
  %100 = vmatpush1.bf16.msra.mxu0 %v90
  %101 = vmatprep.subr.bf16.mxu0 0
  %102 = vmatpush1.bf16.msra.mxu0 0
  %103 = vmatprep.subr.bf16.mxu0 0
  %104 = vmatpush1.bf16.msra.mxu0 0
  %105 = vmatprep.subr.bf16.mxu0 0
  %106 = vmatpush1.bf16.msra.mxu0 0
  %107 = vmatprep.subr.bf16.mxu0 0
  %108 = vmatpush1.bf16.msra.mxu0 0
  %109 = vmatprep.subr.bf16.mxu0 0
  %110 = vmatpush1.bf16.msra.mxu0 0
  %111 = vmatprep.subr.bf16.mxu0 0
  %112 = vmatpush1.bf16.msra.mxu0 0
  %113 = vmatprep.subr.bf16.mxu0 0
  %114 = vmatpush1.bf16.msra.mxu0 0
  %115 = vmatprep.subr.bf16.mxu0 0
  %116 = vmatpush1.bf16.msra.mxu0 0
  %117 = vmatprep.subr.bf16.mxu0 0
  %118 = vmatpush1.bf16.msra.mxu0 0
  %119 = vmatprep.subr.bf16.mxu0 0
  %120 = vmatpush1.bf16.msra.mxu0 0
  %121 = vmatprep.subr.bf16.mxu0 0
  %122 = vmatpush1.bf16.msra.mxu0 0
  %123 = vmatprep.subr.bf16.mxu0 0
  %124 = vmatpush1.bf16.msra.mxu0 0
  %125 = vmatprep.subr.bf16.mxu0 0
  %126 = vmatpush1.bf16.msra.mxu0 0
  %127 = vmatprep.subr.bf16.mxu0 0
  %128 = vmatpush1.bf16.msra.mxu0 0
  %129 = vmatprep.mubr.bf16.mxu0 0
  %130 = vmatmul.mubr.bf16.gmra.mrb[0].mxu0 %v95
  %v131 = vpop.f32.mrb[0].mxu0
  %v132 = vadd.f32 %v79, %v131
  %v133 = vpop.f32.mrb[0].mxu0
  %v134 = vpop.f32.mrb[0].mxu0
  %v135 = vpop.f32.mrb[0].mxu0
  %136 = vdwg.mxu0
  %v137 = vld [vmem:[%s0] sm:$0xff]
  %s138 = scalar_lea.vmem %s0, 8
  %v139 = vld [vmem:[%s138] sm:$0xff]
  %v141 = vrot.slane %v137, 6
  %vm143 = vcmask 1041408
  %v144 = vsel %vm143, 0.0, %v141
  %v145 = vsel %vm143, %v141, 0.0
  %vm148 = vcmask 1046528
  %v149 = vrot.slane %v144, 1
  %v150 = vrot.slane %v145, 1
  %v151 = vsel %vm148, %v149, %v150
  %152 = vrot.lane.b32.xlu0 %v151, 32
  %v153 = vpop.permute.xlu0 %152
  %vm155 = vcmask 1045504
  %v156 = vrot.slane %v144, 2
  %v157 = vrot.slane %v145, 2
  %v158 = vsel %vm155, %v156, %v157
  %159 = vrot.lane.b32.xlu0 %v158, 64
  %v160 = vpop.permute.xlu0 %159
  %vm162 = vcmask 1044480
  %v163 = vrot.slane %v144, 3
  %v164 = vrot.slane %v145, 3
  %v165 = vsel %vm162, %v163, %v164
  %166 = vrot.lane.b32.xlu0 %v165, 96
  %v167 = vpop.permute.xlu0 %166
  %vm169 = vcmask 1043456
  %v170 = vrot.slane %v144, 4
  %v171 = vrot.slane %v145, 4
  %v172 = vsel %vm169, %v170, %v171
  %v174 = vsel %vm93, %v144, %v153
  %vm175 = vcmask 523264
  %v176 = vsel %vm175, %v174, %v160
  %vm177 = vcmask 785408
  %v178 = vsel %vm177, %v176, %v167
  %v180 = vrot.slane %v139, 6
  %v182 = vsel %vm143, 0.0, %v180
  %v183 = vsel %vm143, %v180, 0.0
  %v186 = vrot.slane %v182, 1
  %v187 = vrot.slane %v183, 1
  %v188 = vsel %vm148, %v186, %v187
  %189 = vrot.lane.b32.xlu0 %v188, 32
  %v190 = vpop.permute.xlu0 %189
  %v192 = vrot.slane %v182, 2
  %v193 = vrot.slane %v183, 2
  %v194 = vsel %vm155, %v192, %v193
  %195 = vrot.lane.b32.xlu0 %v194, 64
  %v196 = vpop.permute.xlu0 %195
  %v198 = vrot.slane %v182, 3
  %v199 = vrot.slane %v183, 3
  %v200 = vsel %vm162, %v198, %v199
  %201 = vrot.lane.b32.xlu0 %v200, 96
  %v202 = vpop.permute.xlu0 %201
  %v204 = vrot.slane %v182, 4
  %v205 = vrot.slane %v183, 4
  %v206 = vsel %vm169, %v204, %v205
  %v208 = vsel %vm93, %v182, %v190
  %v209 = vsel %vm175, %v208, %v196
  %v210 = vsel %vm177, %v209, %v202
  %v211 = vpack.c.bf16 %v210, %v178
  %v212 = vpack.c.bf16 %v206, %v172
  %v213 = vld [vmem:[%s2] sm:$0xf]
  %v214 = vld [vmem:[%s2 + $0x4] sm:$0xf]
  %v215 = vld [vmem:[%s2 + $0x8] sm:$0xf]
  %v216 = vld [vmem:[%s2 + $0xc] sm:$0xf]
  %v217 = vld [vmem:[%s2 + $0x10] sm:$0xf]
  %v218 = vld [vmem:[%s2 + $0x14] sm:$0xf]
  %v219 = vld [vmem:[%s2 + $0x18] sm:$0xf]
  %v220 = vld [vmem:[%s2 + $0x1c] sm:$0xf]
  %v221 = vld [vmem:[%s2 + $0x20] sm:$0xf]
  %v222 = vld [vmem:[%s2 + $0x24] sm:$0xf]
  %v223 = vld [vmem:[%s2 + $0x28] sm:$0xf]
  %v224 = vld [vmem:[%s2 + $0x2c] sm:$0xf]
  %v225 = vld [vmem:[%s2 + $0x30] sm:$0xf]
  %v226 = vld [vmem:[%s2 + $0x34] sm:$0xf]
  %v227 = vld [vmem:[%s2 + $0x38] sm:$0xf]
  %v228 = vld [vmem:[%s2 + $0x3c] sm:$0xf]
  %v229 = vld [vmem:[%s2 + $0x40] sm:$0xf]
  %v230 = vld [vmem:[%s2 + $0x44] sm:$0xf]
  %v231 = vld [vmem:[%s2 + $0x48] sm:$0xf]
  %v232 = vld [vmem:[%s2 + $0x4c] sm:$0xf]
  %v233 = vld [vmem:[%s3] sm:$0x1]
  %v235 = vlaneseq
  %v236 = vshrl.u32 %v235, 7
  %v237 = vsub.s32 0, %v236
  %v238 = vrot.slane %v233, %v237
  %v260 = vunpack.c.l.b16 %v213
  %v261 = vunpack.c.l.b16 %v214
  %v262 = vunpack.c.l.b16 %v215
  %v263 = vunpack.c.l.b16 %v216
  %v264 = vunpack.c.l.b16 %v217
  %v265 = vunpack.c.l.b16 %v218
  %v266 = vunpack.c.l.b16 %v219
  %v267 = vunpack.c.l.b16 %v220
  %v268 = vunpack.c.l.b16 %v221
  %v269 = vunpack.c.l.b16 %v222
  %v270 = vunpack.c.l.b16 %v223
  %v271 = vunpack.c.l.b16 %v224
  %v272 = vunpack.c.l.b16 %v225
  %v273 = vunpack.c.l.b16 %v226
  %v274 = vunpack.c.l.b16 %v227
  %v275 = vunpack.c.l.b16 %v228
  %v276 = vunpack.c.l.b16 %v229
  %v277 = vunpack.c.l.b16 %v230
  %v278 = vunpack.c.l.b16 %v231
  %v279 = vunpack.c.l.b16 %v232
  %v280 = vpack.c.b16 %v261, %v260
  %v281 = vpack.c.b16 %v263, %v262
  %v282 = vpack.c.b16 %v265, %v264
  %v283 = vpack.c.b16 %v267, %v266
  %v284 = vpack.c.b16 %v269, %v268
  %v285 = vpack.c.b16 %v271, %v270
  %v286 = vpack.c.b16 %v273, %v272
  %v287 = vpack.c.b16 %v275, %v274
  %v288 = vpack.c.b16 %v277, %v276
  %v289 = vpack.c.b16 %v279, %v278
  %v301 = vsel %vm93, %v212, 0
  %303 = vmatprep.subr.bf16.mxu0 0
  %304 = vmatpush1.bf16.msra.mxu0 %v280
  %305 = vmatprep.subr.bf16.mxu0 0
  %306 = vmatpush1.bf16.msra.mxu0 %v281
  %307 = vmatprep.subr.bf16.mxu0 0
  %308 = vmatpush1.bf16.msra.mxu0 %v282
  %309 = vmatprep.subr.bf16.mxu0 0
  %310 = vmatpush1.bf16.msra.mxu0 %v283
  %311 = vmatprep.subr.bf16.mxu0 0
  %312 = vmatpush1.bf16.msra.mxu0 %v284
  %313 = vmatprep.subr.bf16.mxu0 0
  %314 = vmatpush1.bf16.msra.mxu0 %v285
  %315 = vmatprep.subr.bf16.mxu0 0
  %316 = vmatpush1.bf16.msra.mxu0 %v286
  %317 = vmatprep.subr.bf16.mxu0 0
  %318 = vmatpush1.bf16.msra.mxu0 %v287
  %319 = vmatprep.subr.bf16.mxu0 0
  %320 = vmatpush1.bf16.msra.mxu0 %v288
  %321 = vmatprep.subr.bf16.mxu0 0
  %322 = vmatpush1.bf16.msra.mxu0 %v289
  %323 = vmatprep.subr.bf16.mxu0 0
  %324 = vmatpush1.bf16.msra.mxu0 0
  %325 = vmatprep.subr.bf16.mxu0 0
  %326 = vmatpush1.bf16.msra.mxu0 0
  %327 = vmatprep.subr.bf16.mxu0 0
  %328 = vmatpush1.bf16.msra.mxu0 0
  %329 = vmatprep.subr.bf16.mxu0 0
  %330 = vmatpush1.bf16.msra.mxu0 0
  %331 = vmatprep.subr.bf16.mxu0 0
  %332 = vmatpush1.bf16.msra.mxu0 0
  %333 = vmatprep.subr.bf16.mxu0 0
  %334 = vmatpush1.bf16.msra.mxu0 0
  %335 = vmatprep.mubr.bf16.mxu0 %v301
  %336 = vmatmul.mubr.bf16.gmra.mrb[0].mxu0 %v211
  %v337 = vpop.f32.mrb[0].mxu0
  %v338 = vadd.f32 %v238, %v337
  %v339 = vpop.f32.mrb[0].mxu0
  %v340 = vpop.f32.mrb[0].mxu0
  %v341 = vadd.f32 %v238, %v340
  %v342 = vpop.f32.mrb[0].mxu0
  %343 = vdwg.mxu0
  %v344 = vld [vmem:[%s4] sm:$0x1]
  %v345 = vld [vmem:[%s5] sm:$0x1]
  %v346 = vld [vmem:[%s12] sm:$0xff]
  %v347 = vld [vmem:[%s12 + $0x8] sm:$0xff]
  %v348 = vld [vmem:[%s12 + $0x10] sm:$0xff]
  %v349 = vld [vmem:[%s12 + $0x18] sm:$0xff]
  %v350 = vld [vmem:[%s12 + $0x20] sm:$0xff]
  %v351 = vld [vmem:[%s12 + $0x28] sm:$0xff]
  %v352 = vld [vmem:[%s12 + $0x30] sm:$0xff]
  %v353 = vld [vmem:[%s12 + $0x38] sm:$0xff]
  %v354 = vsel %vm175, %v338, 0.0
  %v355 = vrot.slane %v354, 4
  %v356 = vadd.f32 %v354, %v355
  %v357 = vrot.slane %v356, 2
  %v358 = vadd.f32 %v356, %v357
  %v359 = vrot.slane %v358, 1
  %v360 = vadd.f32 %v358, %v359
  %v361 = vmul.f32 %v338, %v338
  %v362 = vsel %vm175, %v361, 0.0
  %v363 = vrot.slane %v362, 4
  %v364 = vadd.f32 %v362, %v363
  %v365 = vrot.slane %v364, 2
  %v366 = vadd.f32 %v364, %v365
  %v367 = vrot.slane %v366, 1
  %v368 = vadd.f32 %v366, %v367
  %v369 = vsel %vm175, %v341, 0.0
  %v370 = vrot.slane %v369, 4
  %v371 = vadd.f32 %v369, %v370
  %v372 = vrot.slane %v371, 2
  %v373 = vadd.f32 %v371, %v372
  %v374 = vrot.slane %v373, 1
  %v375 = vadd.f32 %v373, %v374
  %v376 = vmul.f32 %v341, %v341
  %v377 = vsel %vm175, %v376, 0.0
  %v378 = vrot.slane %v377, 4
  %v379 = vadd.f32 %v377, %v378
  %v380 = vrot.slane %v379, 2
  %v381 = vadd.f32 %v379, %v380
  %v382 = vrot.slane %v381, 1
  %v383 = vadd.f32 %v381, %v382
  %vm384 = vcmask 1040384
  %v385 = vsel %vm384, %v360, %v368
  %v386 = vsel %vm143, %v385, %v375
  %vm387 = vcmask 1042432
  %v388 = vsel %vm387, %v386, %v383
  %v390 = vsel %vm175, %v388, 0
  %392 = vmatprep.subr.mxu0 0.0
  %393 = vmatpush1.msra.mxu0 %v346
  %394 = vmatprep.subr.mxu0 0.0
  %395 = vmatpush1.msra.mxu0 %v347
  %396 = vmatprep.subr.mxu0 0.0
  %397 = vmatpush1.msra.mxu0 %v348
  %398 = vmatprep.subr.mxu0 0.0
  %399 = vmatpush1.msra.mxu0 %v349
  %400 = vmatprep.subr.mxu0 0.0
  %401 = vmatpush1.msra.mxu0 %v350
  %402 = vmatprep.subr.mxu0 0.0
  %403 = vmatpush1.msra.mxu0 %v351
  %404 = vmatprep.subr.mxu0 0.0
  %405 = vmatpush1.msra.mxu0 %v352
  %406 = vmatprep.subr.mxu0 0.0
  %407 = vmatpush1.msra.mxu0 %v353
  %408 = vmatprep.subr.mxu0 0.0
  %409 = vmatpush1.msra.mxu0 0.0
  %410 = vmatprep.subr.mxu0 0.0
  %411 = vmatpush1.msra.mxu0 0.0
  %412 = vmatprep.subr.mxu0 0.0
  %413 = vmatpush1.msra.mxu0 0.0
  %414 = vmatprep.subr.mxu0 0.0
  %415 = vmatpush1.msra.mxu0 0.0
  %416 = vmatprep.subr.mxu0 0.0
  %417 = vmatpush1.msra.mxu0 0.0
  %418 = vmatprep.subr.mxu0 0.0
  %419 = vmatpush1.msra.mxu0 0.0
  %420 = vmatprep.subr.mxu0 0.0
  %421 = vmatpush1.msra.mxu0 0.0
  %422 = vmatprep.subr.mxu0 0.0
  %423 = vmatpush1.msra.mxu0 0.0
  %424 = vmatprep.subr.mxu0 0.0
  %425 = vmatpush1.msra.mxu0 0.0
  %426 = vmatprep.subr.mxu0 0.0
  %427 = vmatpush1.msra.mxu0 0.0
  %428 = vmatprep.subr.mxu0 0.0
  %429 = vmatpush1.msra.mxu0 0.0
  %430 = vmatprep.subr.mxu0 0.0
  %431 = vmatpush1.msra.mxu0 0.0
  %432 = vmatprep.subr.mxu0 0.0
  %433 = vmatpush1.msra.mxu0 0.0
  %434 = vmatprep.subr.mxu0 0.0
  %435 = vmatpush1.msra.mxu0 0.0
  %436 = vmatprep.subr.mxu0 0.0
  %437 = vmatpush1.msra.mxu0 0.0
  %438 = vmatprep.subr.mxu0 0.0
  %439 = vmatpush1.msra.mxu0 0.0
  %440 = vmatprep.subr.mxu0 0.0
  %441 = vmatpush1.msra.mxu0 0.0
  %442 = vmatprep.subr.mxu0 0.0
  %443 = vmatpush1.msra.mxu0 0.0
  %444 = vmatprep.subr.mxu0 0.0
  %445 = vmatpush1.msra.mxu0 0.0
  %446 = vmatprep.subr.mxu0 0.0
  %447 = vmatpush1.msra.mxu0 0.0
  %448 = vmatprep.subr.mxu0 0.0
  %449 = vmatpush1.msra.mxu0 0.0
  %450 = vmatprep.subr.mxu0 0.0
  %451 = vmatpush1.msra.mxu0 0.0
  %452 = vmatprep.subr.mxu0 0.0
  %453 = vmatpush1.msra.mxu0 0.0
  %454 = vmatprep.subr.mxu0 0.0
  %455 = vmatpush1.msra.mxu0 0.0
  %456 = vmatprep.mubr.f32.mxu0 0.0
  %457 = vmatmul.mubr.f32.gmra.mrb[0].mxu0 %v390
  %v458 = vpop.f32.mrb[0].mxu0
  %v459 = vadd.f32 0.0, %v458
  %v460 = vpop.f32.mrb[0].mxu0
  %461 = vdwg.mxu0
  %v462 = vmul.f32 %v459, %v459
  %v464 = vrot.slane %v462, 7
  %v466 = vsub.f32 %v459, %v464
  %v467 = vmax.f32 %v466, 0.0
  %v468 = vlaneseq
  %v469 = vshrl.u32 %v468, 7
  %v470 = vsub.s32 0, %v469
  %v471 = vrot.slane %v459, %v470
  %v472 = vsub.f32 %v338, %v471
  %v473 = vadd.f32 %v467, 1e-05
  %v474 = vrsqrt.pop %v473
  %v475 = vlaneseq
  %v476 = vshrl.u32 %v475, 7
  %v477 = vsub.s32 1, %v476
  %v478 = vrot.slane %v474, %v477
  %v479 = vmul.f32 %v472, %v478
  %v481 = vlaneseq
  %v482 = vshrl.u32 %v481, 7
  %v483 = vsub.s32 0, %v482
  %v484 = vrot.slane %v344, %v483
  %v486 = vmul.f32 %v479, %v484
  %v488 = vlaneseq
  %v489 = vshrl.u32 %v488, 7
  %v490 = vsub.s32 0, %v489
  %v491 = vrot.slane %v345, %v490
  %v493 = vadd.f32 %v486, %v491
  %v494 = vand.u32 2147483647, %v493
  %v495 = vsub.f32 0.0, %v494
  %v496 = vmul.f32 %v495, 1.442695
  %v497 = vpow.pop %v496
  %v498 = vadd.f32 %v497, 1.0
  %v499 = vlog2.pop %v498
  %v500 = vmul.f32 %v499, 0.6931472
  %v501 = vmul.f32 -0.5, %v497
  %v502 = vadd.f32 %v501, 1.0
  %v503 = vmul.f32 %v502, %v497
  %v504 = vand.u32 2147483647, %v497
  %vm505 = vcmp.lt.f32.partialorder %v504, 0.0004427343
  %v506 = vsel %vm505, %v503, %v500
  %v507 = vmax.f32 %v493, 0.0
  %v508 = vadd.f32 %v506, %v507
  %v509 = vtanh.pop %v508
  %v510 = vmul.f32 %v493, %v509
  %v511 = vlaneseq
  %v512 = vshrl.u32 %v511, 7
  %v513 = vsub.s32 2, %v512
  %v514 = vrot.slane %v459, %v513
  %v515 = vsub.f32 %v341, %v514
  %v516 = vlaneseq
  %v517 = vshrl.u32 %v516, 7
  %v518 = vsub.s32 3, %v517
  %v519 = vrot.slane %v474, %v518
  %v520 = vmul.f32 %v515, %v519
  %v521 = vmul.f32 %v520, %v484
  %v522 = vadd.f32 %v521, %v491
  %v523 = vand.u32 2147483647, %v522
  %v524 = vsub.f32 0.0, %v523
  %v525 = vmul.f32 %v524, 1.442695
  %v526 = vpow.pop %v525
  %v527 = vadd.f32 %v526, 1.0
  %v528 = vlog2.pop %v527
  %v529 = vmul.f32 %v528, 0.6931472
  %v530 = vmul.f32 -0.5, %v526
  %v531 = vadd.f32 %v530, 1.0
  %v532 = vmul.f32 %v531, %v526
  %v533 = vand.u32 2147483647, %v526
  %vm534 = vcmp.lt.f32.partialorder %v533, 0.0004427343
  %v535 = vsel %vm534, %v532, %v529
  %v536 = vmax.f32 %v522, 0.0
  %v537 = vadd.f32 %v535, %v536
  %v538 = vtanh.pop %v537
  %v539 = vmul.f32 %v522, %v538
  %v540 = vlaneseq
  %v541 = vshrl.u32 %v540, 7
  %v542 = vsub.s32 0, %v541
  %v543 = vrot.slane %v132, %v542
  %v544 = vadd.f32 %v510, %v543
  %v545 = vlaneseq
  %v546 = vshrl.u32 %v545, 7
  %v547 = vsub.s32 1, %v546
  %v548 = vrot.slane %v132, %v547
  %v549 = vadd.f32 %v539, %v548
  %v551 = vrot.slane %v544, 6
  %v553 = vsel %vm143, 0.0, %v551
  %v554 = vsel %vm143, %v551, 0.0
  %v557 = vrot.slane %v553, 1
  %v558 = vrot.slane %v554, 1
  %v559 = vsel %vm148, %v557, %v558
  %560 = vrot.lane.b32.xlu0 %v559, 64
  %v561 = vpop.permute.xlu0 %560
  %v563 = vrot.slane %v553, 2
  %v564 = vrot.slane %v554, 2
  %v565 = vsel %vm155, %v563, %v564
  %v567 = vrot.slane %v553, 3
  %v568 = vrot.slane %v554, 3
  %v569 = vsel %vm162, %v567, %v568
  %570 = vrot.lane.b32.xlu0 %v569, 64
  %v571 = vpop.permute.xlu0 %570
  %v573 = vrot.slane %v553, 4
  %v574 = vrot.slane %v554, 4
  %v575 = vsel %vm169, %v573, %v574
  %v577 = vsel %vm175, %v553, %v561
  %v578 = vsel %vm175, %v565, %v571
  %v580 = vrot.slane %v549, 6
  %v582 = vsel %vm143, 0.0, %v580
  %v583 = vsel %vm143, %v580, 0.0
  %v586 = vrot.slane %v582, 1
  %v587 = vrot.slane %v583, 1
  %v588 = vsel %vm148, %v586, %v587
  %589 = vrot.lane.b32.xlu0 %v588, 64
  %v590 = vpop.permute.xlu0 %589
  %v592 = vrot.slane %v582, 2
  %v593 = vrot.slane %v583, 2
  %v594 = vsel %vm155, %v592, %v593
  %v596 = vrot.slane %v582, 3
  %v597 = vrot.slane %v583, 3
  %v598 = vsel %vm162, %v596, %v597
  %599 = vrot.lane.b32.xlu0 %v598, 64
  %v600 = vpop.permute.xlu0 %599
  %v602 = vrot.slane %v582, 4
  %v603 = vrot.slane %v583, 4
  %v604 = vsel %vm169, %v602, %v603
  %v606 = vsel %vm175, %v582, %v590
  %v607 = vsel %vm175, %v594, %v600
  %v608 = vpack.c.bf16 %v606, %v577
  %v609 = vpack.c.bf16 %v607, %v578
  %v610 = vpack.c.bf16 %v604, %v575
  %v611 = vld [vmem:[%s8] sm:$0xf]
  %v612 = vld [vmem:[%s8 + $0x4] sm:$0xf]
  %v613 = vld [vmem:[%s8 + $0x8] sm:$0xf]
  %v614 = vld [vmem:[%s8 + $0xc] sm:$0xf]
  %v615 = vld [vmem:[%s8 + $0x10] sm:$0xf]
  %v616 = vld [vmem:[%s8 + $0x14] sm:$0xf]
  %v617 = vld [vmem:[%s8 + $0x18] sm:$0xf]
  %v618 = vld [vmem:[%s8 + $0x1c] sm:$0xf]
  %v619 = vld [vmem:[%s8 + $0x20] sm:$0xf]
  %v620 = vld [vmem:[%s8 + $0x24] sm:$0xf]
  %v621 = vld [vmem:[%s8 + $0x28] sm:$0xf]
  %v622 = vld [vmem:[%s8 + $0x2c] sm:$0xf]
  %v623 = vld [vmem:[%s8 + $0x30] sm:$0xf]
  %v624 = vld [vmem:[%s8 + $0x34] sm:$0xf]
  %v625 = vld [vmem:[%s8 + $0x38] sm:$0xf]
  %v626 = vld [vmem:[%s8 + $0x3c] sm:$0xf]
  %v627 = vld [vmem:[%s8 + $0x40] sm:$0xf]
  %v628 = vld [vmem:[%s8 + $0x44] sm:$0xf]
  %v629 = vld [vmem:[%s8 + $0x48] sm:$0xf]
  %v630 = vld [vmem:[%s8 + $0x4c] sm:$0xf]
  %v631 = vld [vmem:[%s8 + $0x50] sm:$0xf]
  %v632 = vld [vmem:[%s8 + $0x54] sm:$0xf]
  %v633 = vld [vmem:[%s8 + $0x58] sm:$0xf]
  %v634 = vld [vmem:[%s8 + $0x5c] sm:$0xf]
  %v635 = vld [vmem:[%s8 + $0x60] sm:$0xf]
  %v636 = vld [vmem:[%s8 + $0x64] sm:$0xf]
  %v637 = vld [vmem:[%s8 + $0x68] sm:$0xf]
  %v638 = vld [vmem:[%s8 + $0x6c] sm:$0xf]
  %v639 = vld [vmem:[%s8 + $0x70] sm:$0xf]
  %v640 = vld [vmem:[%s8 + $0x74] sm:$0xf]
  %v641 = vld [vmem:[%s8 + $0x78] sm:$0xf]
  %v642 = vld [vmem:[%s8 + $0x7c] sm:$0xf]
  %v643 = vld [vmem:[%s8 + $0x80] sm:$0xf]
  %v644 = vld [vmem:[%s8 + $0x84] sm:$0xf]
  %v645 = vld [vmem:[%s8 + $0x88] sm:$0xf]
  %v646 = vld [vmem:[%s8 + $0x8c] sm:$0xf]
  %v647 = vld [vmem:[%s8 + $0x90] sm:$0xf]
  %v648 = vld [vmem:[%s8 + $0x94] sm:$0xf]
  %v649 = vld [vmem:[%s8 + $0x98] sm:$0xf]
  %v650 = vld [vmem:[%s8 + $0x9c] sm:$0xf]
  %v651 = vld [vmem:[%s9] sm:$0x1]
  %v653 = vlaneseq
  %v654 = vshrl.u32 %v653, 7
  %v655 = vsub.s32 0, %v654
  %v656 = vrot.slane %v651, %v655
  %v698 = vunpack.c.l.b16 %v611
  %v699 = vunpack.c.l.b16 %v612
  %v700 = vunpack.c.l.b16 %v613
  %v701 = vunpack.c.l.b16 %v614
  %v702 = vunpack.c.l.b16 %v615
  %v703 = vunpack.c.l.b16 %v616
  %v704 = vunpack.c.l.b16 %v617
  %v705 = vunpack.c.l.b16 %v618
  %v706 = vunpack.c.l.b16 %v619
  %v707 = vunpack.c.l.b16 %v620
  %v708 = vunpack.c.l.b16 %v621
  %v709 = vunpack.c.l.b16 %v622
  %v710 = vunpack.c.l.b16 %v623
  %v711 = vunpack.c.l.b16 %v624
  %v712 = vunpack.c.l.b16 %v625
  %v713 = vunpack.c.l.b16 %v626
  %v714 = vunpack.c.l.b16 %v627
  %v715 = vunpack.c.l.b16 %v628
  %v716 = vunpack.c.l.b16 %v629
  %v717 = vunpack.c.l.b16 %v630
  %v718 = vunpack.c.l.b16 %v631
  %v719 = vunpack.c.l.b16 %v632
  %v720 = vunpack.c.l.b16 %v633
  %v721 = vunpack.c.l.b16 %v634
  %v722 = vunpack.c.l.b16 %v635
  %v723 = vunpack.c.l.b16 %v636
  %v724 = vunpack.c.l.b16 %v637
  %v725 = vunpack.c.l.b16 %v638
  %v726 = vunpack.c.l.b16 %v639
  %v727 = vunpack.c.l.b16 %v640
  %v728 = vunpack.c.l.b16 %v641
  %v729 = vunpack.c.l.b16 %v642
  %v730 = vunpack.c.l.b16 %v643
  %v731 = vunpack.c.l.b16 %v644
  %v732 = vunpack.c.l.b16 %v645
  %v733 = vunpack.c.l.b16 %v646
  %v734 = vunpack.c.l.b16 %v647
  %v735 = vunpack.c.l.b16 %v648
  %v736 = vunpack.c.l.b16 %v649
  %v737 = vunpack.c.l.b16 %v650
  %v738 = vpack.c.b16 %v699, %v698
  %v739 = vpack.c.b16 %v701, %v700
  %v740 = vpack.c.b16 %v703, %v702
  %v741 = vpack.c.b16 %v705, %v704
  %v742 = vpack.c.b16 %v707, %v706
  %v743 = vpack.c.b16 %v709, %v708
  %v744 = vpack.c.b16 %v711, %v710
  %v745 = vpack.c.b16 %v713, %v712
  %v746 = vpack.c.b16 %v715, %v714
  %v747 = vpack.c.b16 %v717, %v716
  %v748 = vpack.c.b16 %v719, %v718
  %v749 = vpack.c.b16 %v721, %v720
  %v750 = vpack.c.b16 %v723, %v722
  %v751 = vpack.c.b16 %v725, %v724
  %v752 = vpack.c.b16 %v727, %v726
  %v753 = vpack.c.b16 %v729, %v728
  %v754 = vpack.c.b16 %v731, %v730
  %v755 = vpack.c.b16 %v733, %v732
  %v756 = vpack.c.b16 %v735, %v734
  %v757 = vpack.c.b16 %v737, %v736
  %v779 = vsel %vm175, %v610, 0
  %781 = vmatprep.subr.bf16.mxu0 0
  %782 = vmatpush1.bf16.msra.mxu0 %v738
  %783 = vmatprep.subr.bf16.mxu0 0
  %784 = vmatpush1.bf16.msra.mxu0 %v739
  %785 = vmatprep.subr.bf16.mxu0 0
  %786 = vmatpush1.bf16.msra.mxu0 %v740
  %787 = vmatprep.subr.bf16.mxu0 0
  %788 = vmatpush1.bf16.msra.mxu0 %v741
  %789 = vmatprep.subr.bf16.mxu0 0
  %790 = vmatpush1.bf16.msra.mxu0 %v742
  %791 = vmatprep.subr.bf16.mxu0 0
  %792 = vmatpush1.bf16.msra.mxu0 %v743
  %793 = vmatprep.subr.bf16.mxu0 0
  %794 = vmatpush1.bf16.msra.mxu0 %v744
  %795 = vmatprep.subr.bf16.mxu0 0
  %796 = vmatpush1.bf16.msra.mxu0 %v745
  %797 = vmatprep.subr.bf16.mxu0 0
  %798 = vmatpush1.bf16.msra.mxu0 %v746
  %799 = vmatprep.subr.bf16.mxu0 0
  %800 = vmatpush1.bf16.msra.mxu0 %v747
  %801 = vmatprep.subr.bf16.mxu0 0
  %802 = vmatpush1.bf16.msra.mxu0 %v748
  %803 = vmatprep.subr.bf16.mxu0 0
  %804 = vmatpush1.bf16.msra.mxu0 %v749
  %805 = vmatprep.subr.bf16.mxu0 0
  %806 = vmatpush1.bf16.msra.mxu0 %v750
  %807 = vmatprep.subr.bf16.mxu0 0
  %808 = vmatpush1.bf16.msra.mxu0 %v751
  %809 = vmatprep.subr.bf16.mxu0 0
  %810 = vmatpush1.bf16.msra.mxu0 %v752
  %811 = vmatprep.subr.bf16.mxu0 0
  %812 = vmatpush1.bf16.msra.mxu0 %v753
  %813 = vmatprep.mubr.bf16.mxu0 %v609
  %814 = vmatmul.mubr.bf16.gmra.mrb[0].mxu0 %v608
  %v815 = vpop.f32.mrb[0].mxu0
  %v816 = vadd.f32 %v656, %v815
  %v817 = vpop.f32.mrb[0].mxu0
  %v818 = vpop.f32.mrb[0].mxu0
  %v819 = vadd.f32 %v656, %v818
  %v820 = vpop.f32.mrb[0].mxu0
  %821 = vdwg.mxu0
  %822 = vmatprep.subr.bf16.mxu0 0
  %823 = vmatpush1.bf16.msra.mxu0 %v754
  %824 = vmatprep.subr.bf16.mxu0 0
  %825 = vmatpush1.bf16.msra.mxu0 %v755
  %826 = vmatprep.subr.bf16.mxu0 0
  %827 = vmatpush1.bf16.msra.mxu0 %v756
  %828 = vmatprep.subr.bf16.mxu0 0
  %829 = vmatpush1.bf16.msra.mxu0 %v757
  %830 = vmatprep.subr.bf16.mxu0 0
  %831 = vmatpush1.bf16.msra.mxu0 0
  %832 = vmatprep.subr.bf16.mxu0 0
  %833 = vmatpush1.bf16.msra.mxu0 0
  %834 = vmatprep.subr.bf16.mxu0 0
  %835 = vmatpush1.bf16.msra.mxu0 0
  %836 = vmatprep.subr.bf16.mxu0 0
  %837 = vmatpush1.bf16.msra.mxu0 0
  %838 = vmatprep.subr.bf16.mxu0 0
  %839 = vmatpush1.bf16.msra.mxu0 0
  %840 = vmatprep.subr.bf16.mxu0 0
  %841 = vmatpush1.bf16.msra.mxu0 0
  %842 = vmatprep.subr.bf16.mxu0 0
  %843 = vmatpush1.bf16.msra.mxu0 0
  %844 = vmatprep.subr.bf16.mxu0 0
  %845 = vmatpush1.bf16.msra.mxu0 0
  %846 = vmatprep.subr.bf16.mxu0 0
  %847 = vmatpush1.bf16.msra.mxu0 0
  %848 = vmatprep.subr.bf16.mxu0 0
  %849 = vmatpush1.bf16.msra.mxu0 0
  %850 = vmatprep.subr.bf16.mxu0 0
  %851 = vmatpush1.bf16.msra.mxu0 0
  %852 = vmatprep.subr.bf16.mxu0 0
  %853 = vmatpush1.bf16.msra.mxu0 0
  %854 = vmatprep.mubr.bf16.mxu0 0
  %855 = vmatmul.mubr.bf16.gmra.mrb[0].mxu0 %v779
  %v856 = vpop.f32.mrb[0].mxu0
  %v857 = vadd.f32 %v816, %v856
  %v858 = vpop.f32.mrb[0].mxu0
  %v859 = vpop.f32.mrb[0].mxu0
  %v860 = vadd.f32 %v819, %v859
  %v861 = vpop.f32.mrb[0].mxu0
  %862 = vdwg.mxu0
  %v863 = vld [vmem:[%s10] sm:$0x1]
  %v864 = vld [vmem:[%s11] sm:$0x1]
  %v865 = vsel %vm175, %v857, 0.0
  %v866 = vrot.slane %v865, 4
  %v867 = vadd.f32 %v865, %v866
  %v868 = vrot.slane %v867, 2
  %v869 = vadd.f32 %v867, %v868
  %v870 = vrot.slane %v869, 1
  %v871 = vadd.f32 %v869, %v870
  %v872 = vmul.f32 %v857, %v857
  %v873 = vsel %vm175, %v872, 0.0
  %v874 = vrot.slane %v873, 4
  %v875 = vadd.f32 %v873, %v874
  %v876 = vrot.slane %v875, 2
  %v877 = vadd.f32 %v875, %v876
  %v878 = vrot.slane %v877, 1
  %v879 = vadd.f32 %v877, %v878
  %v880 = vsel %vm175, %v860, 0.0
  %v881 = vrot.slane %v880, 4
  %v882 = vadd.f32 %v880, %v881
  %v883 = vrot.slane %v882, 2
  %v884 = vadd.f32 %v882, %v883
  %v885 = vrot.slane %v884, 1
  %v886 = vadd.f32 %v884, %v885
  %v887 = vmul.f32 %v860, %v860
  %v888 = vsel %vm175, %v887, 0.0
  %v889 = vrot.slane %v888, 4
  %v890 = vadd.f32 %v888, %v889
  %v891 = vrot.slane %v890, 2
  %v892 = vadd.f32 %v890, %v891
  %v893 = vrot.slane %v892, 1
  %v894 = vadd.f32 %v892, %v893
  %v895 = vsel %vm384, %v871, %v879
  %v896 = vsel %vm143, %v895, %v886
  %v897 = vsel %vm387, %v896, %v894
  %v899 = vsel %vm175, %v897, 0
  %901 = vmatprep.subr.mxu0 0.0
  %902 = vmatpush1.msra.mxu0 %v346
  %903 = vmatprep.subr.mxu0 0.0
  %904 = vmatpush1.msra.mxu0 %v347
  %905 = vmatprep.subr.mxu0 0.0
  %906 = vmatpush1.msra.mxu0 %v348
  %907 = vmatprep.subr.mxu0 0.0
  %908 = vmatpush1.msra.mxu0 %v349
  %909 = vmatprep.subr.mxu0 0.0
  %910 = vmatpush1.msra.mxu0 %v350
  %911 = vmatprep.subr.mxu0 0.0
  %912 = vmatpush1.msra.mxu0 %v351
  %913 = vmatprep.subr.mxu0 0.0
  %914 = vmatpush1.msra.mxu0 %v352
  %915 = vmatprep.subr.mxu0 0.0
  %916 = vmatpush1.msra.mxu0 %v353
  %917 = vmatprep.subr.mxu0 0.0
  %918 = vmatpush1.msra.mxu0 0.0
  %919 = vmatprep.subr.mxu0 0.0
  %920 = vmatpush1.msra.mxu0 0.0
  %921 = vmatprep.subr.mxu0 0.0
  %922 = vmatpush1.msra.mxu0 0.0
  %923 = vmatprep.subr.mxu0 0.0
  %924 = vmatpush1.msra.mxu0 0.0
  %925 = vmatprep.subr.mxu0 0.0
  %926 = vmatpush1.msra.mxu0 0.0
  %927 = vmatprep.subr.mxu0 0.0
  %928 = vmatpush1.msra.mxu0 0.0
  %929 = vmatprep.subr.mxu0 0.0
  %930 = vmatpush1.msra.mxu0 0.0
  %931 = vmatprep.subr.mxu0 0.0
  %932 = vmatpush1.msra.mxu0 0.0
  %933 = vmatprep.subr.mxu0 0.0
  %934 = vmatpush1.msra.mxu0 0.0
  %935 = vmatprep.subr.mxu0 0.0
  %936 = vmatpush1.msra.mxu0 0.0
  %937 = vmatprep.subr.mxu0 0.0
  %938 = vmatpush1.msra.mxu0 0.0
  %939 = vmatprep.subr.mxu0 0.0
  %940 = vmatpush1.msra.mxu0 0.0
  %941 = vmatprep.subr.mxu0 0.0
  %942 = vmatpush1.msra.mxu0 0.0
  %943 = vmatprep.subr.mxu0 0.0
  %944 = vmatpush1.msra.mxu0 0.0
  %945 = vmatprep.subr.mxu0 0.0
  %946 = vmatpush1.msra.mxu0 0.0
  %947 = vmatprep.subr.mxu0 0.0
  %948 = vmatpush1.msra.mxu0 0.0
  %949 = vmatprep.subr.mxu0 0.0
  %950 = vmatpush1.msra.mxu0 0.0
  %951 = vmatprep.subr.mxu0 0.0
  %952 = vmatpush1.msra.mxu0 0.0
  %953 = vmatprep.subr.mxu0 0.0
  %954 = vmatpush1.msra.mxu0 0.0
  %955 = vmatprep.subr.mxu0 0.0
  %956 = vmatpush1.msra.mxu0 0.0
  %957 = vmatprep.subr.mxu0 0.0
  %958 = vmatpush1.msra.mxu0 0.0
  %959 = vmatprep.subr.mxu0 0.0
  %960 = vmatpush1.msra.mxu0 0.0
  %961 = vmatprep.subr.mxu0 0.0
  %962 = vmatpush1.msra.mxu0 0.0
  %963 = vmatprep.subr.mxu0 0.0
  %964 = vmatpush1.msra.mxu0 0.0
  %965 = vmatprep.mubr.f32.mxu0 0.0
  %966 = vmatmul.mubr.f32.gmra.mrb[0].mxu0 %v899
  %v967 = vpop.f32.mrb[0].mxu0
  %v968 = vadd.f32 0.0, %v967
  %v969 = vpop.f32.mrb[0].mxu0
  %970 = vdwg.mxu0
  %v971 = vmul.f32 %v968, %v968
  %v973 = vrot.slane %v971, 7
  %v975 = vsub.f32 %v968, %v973
  %v976 = vmax.f32 %v975, 0.0
  %v977 = vlaneseq
  %v978 = vshrl.u32 %v977, 7
  %v979 = vsub.s32 0, %v978
  %v980 = vrot.slane %v968, %v979
  %v981 = vsub.f32 %v857, %v980
  %v982 = vadd.f32 %v976, 1e-05
  %v983 = vrsqrt.pop %v982
  %v984 = vlaneseq
  %v985 = vshrl.u32 %v984, 7
  %v986 = vsub.s32 1, %v985
  %v987 = vrot.slane %v983, %v986
  %v988 = vmul.f32 %v981, %v987
  %v990 = vlaneseq
  %v991 = vshrl.u32 %v990, 7
  %v992 = vsub.s32 0, %v991
  %v993 = vrot.slane %v863, %v992
  %v995 = vmul.f32 %v988, %v993
  %v997 = vlaneseq
  %v998 = vshrl.u32 %v997, 7
  %v999 = vsub.s32 0, %v998
  %v1000 = vrot.slane %v864, %v999
  %v1002 = vadd.f32 %v995, %v1000
  %v1003 = vand.u32 2147483647, %v1002
  %v1004 = vsub.f32 0.0, %v1003
  %v1005 = vmul.f32 %v1004, 1.442695
  %v1006 = vpow.pop %v1005
  %v1007 = vadd.f32 %v1006, 1.0
  %v1008 = vlog2.pop %v1007
  %v1009 = vmul.f32 %v1008, 0.6931472
  %v1010 = vmul.f32 -0.5, %v1006
  %v1011 = vadd.f32 %v1010, 1.0
  %v1012 = vmul.f32 %v1011, %v1006
  %v1013 = vand.u32 2147483647, %v1006
  %vm1014 = vcmp.lt.f32.partialorder %v1013, 0.0004427343
  %v1015 = vsel %vm1014, %v1012, %v1009
  %v1016 = vmax.f32 %v1002, 0.0
  %v1017 = vadd.f32 %v1015, %v1016
  %v1018 = vtanh.pop %v1017
  %v1019 = vmul.f32 %v1002, %v1018
  %v1020 = vlaneseq
  %v1021 = vshrl.u32 %v1020, 7
  %v1022 = vsub.s32 2, %v1021
  %v1023 = vrot.slane %v968, %v1022
  %v1024 = vsub.f32 %v860, %v1023
  %v1025 = vlaneseq
  %v1026 = vshrl.u32 %v1025, 7
  %v1027 = vsub.s32 3, %v1026
  %v1028 = vrot.slane %v983, %v1027
  %v1029 = vmul.f32 %v1024, %v1028
  %v1030 = vmul.f32 %v1029, %v993
  %v1031 = vadd.f32 %v1030, %v1000
  %v1032 = vand.u32 2147483647, %v1031
  %v1033 = vsub.f32 0.0, %v1032
  %v1034 = vmul.f32 %v1033, 1.442695
  %v1035 = vpow.pop %v1034
  %v1036 = vadd.f32 %v1035, 1.0
  %v1037 = vlog2.pop %v1036
  %v1038 = vmul.f32 %v1037, 0.6931472
  %v1039 = vmul.f32 -0.5, %v1035
  %v1040 = vadd.f32 %v1039, 1.0
  %v1041 = vmul.f32 %v1040, %v1035
  %v1042 = vand.u32 2147483647, %v1035
  %vm1043 = vcmp.lt.f32.partialorder %v1042, 0.0004427343
  %v1044 = vsel %vm1043, %v1041, %v1038
  %v1045 = vmax.f32 %v1031, 0.0
  %v1046 = vadd.f32 %v1044, %v1045
  %v1047 = vtanh.pop %v1046
  %v1048 = vmul.f32 %v1031, %v1047
  %v1049 = vpack.c.bf16 %v137, %v137
  %v1050 = vld [vmem:[%s13] sm:$0xf]
  %v1051 = vld [vmem:[%s13 + $0x4] sm:$0xf]
  %v1052 = vld [vmem:[%s13 + $0x8] sm:$0xf]
  %v1053 = vld [vmem:[%s13 + $0xc] sm:$0xf]
  %v1054 = vld [vmem:[%s14] sm:$0x1]
  %v1056 = vlaneseq
  %v1057 = vshrl.u32 %v1056, 7
  %v1058 = vsub.s32 0, %v1057
  %v1059 = vrot.slane %v1054, %v1058
  %v1065 = vunpack.c.l.b16 %v1050
  %v1066 = vunpack.c.l.b16 %v1051
  %v1067 = vunpack.c.l.b16 %v1052
  %v1068 = vunpack.c.l.b16 %v1053
  %v1069 = vpack.c.b16 %v1066, %v1065
  %v1070 = vpack.c.b16 %v1068, %v1067
  %v1074 = vsel %vm93, %v1049, 0
  %1076 = vmatprep.subr.bf16.mxu0 0
  %1077 = vmatpush1.bf16.msra.mxu0 %v1069
  %1078 = vmatprep.subr.bf16.mxu0 0
  %1079 = vmatpush1.bf16.msra.mxu0 %v1070
  %1080 = vmatprep.subr.bf16.mxu0 0
  %1081 = vmatpush1.bf16.msra.mxu0 0
  %1082 = vmatprep.subr.bf16.mxu0 0
  %1083 = vmatpush1.bf16.msra.mxu0 0
  %1084 = vmatprep.subr.bf16.mxu0 0
  %1085 = vmatpush1.bf16.msra.mxu0 0
  %1086 = vmatprep.subr.bf16.mxu0 0
  %1087 = vmatpush1.bf16.msra.mxu0 0
  %1088 = vmatprep.subr.bf16.mxu0 0
  %1089 = vmatpush1.bf16.msra.mxu0 0
  %1090 = vmatprep.subr.bf16.mxu0 0
  %1091 = vmatpush1.bf16.msra.mxu0 0
  %1092 = vmatprep.subr.bf16.mxu0 0
  %1093 = vmatpush1.bf16.msra.mxu0 0
  %1094 = vmatprep.subr.bf16.mxu0 0
  %1095 = vmatpush1.bf16.msra.mxu0 0
  %1096 = vmatprep.subr.bf16.mxu0 0
  %1097 = vmatpush1.bf16.msra.mxu0 0
  %1098 = vmatprep.subr.bf16.mxu0 0
  %1099 = vmatpush1.bf16.msra.mxu0 0
  %1100 = vmatprep.subr.bf16.mxu0 0
  %1101 = vmatpush1.bf16.msra.mxu0 0
  %1102 = vmatprep.subr.bf16.mxu0 0
  %1103 = vmatpush1.bf16.msra.mxu0 0
  %1104 = vmatprep.subr.bf16.mxu0 0
  %1105 = vmatpush1.bf16.msra.mxu0 0
  %1106 = vmatprep.subr.bf16.mxu0 0
  %1107 = vmatpush1.bf16.msra.mxu0 0
  %1108 = vmatprep.mubr.bf16.mxu0 0
  %1109 = vmatmul.mubr.bf16.gmra.mrb[0].mxu0 %v1074
  %v1110 = vpop.f32.mrb[0].mxu0
  %v1111 = vadd.f32 %v1059, %v1110
  %v1112 = vpop.f32.mrb[0].mxu0
  %v1113 = vpop.f32.mrb[0].mxu0
  %v1114 = vpop.f32.mrb[0].mxu0
  %1115 = vdwg.mxu0
  %v1116 = vadd.f32 %v1019, %v1111
  %1117 = vst.msk [vmem:[%s15] sm:$0xff] %vm175, %v1116
  %v1118 = vpack.c.bf16 %v139, %v139
  %v1119 = vld [vmem:[%s13] sm:$0xf]
  %v1120 = vld [vmem:[%s13 + $0x4] sm:$0xf]
  %v1121 = vld [vmem:[%s13 + $0x8] sm:$0xf]
  %v1122 = vld [vmem:[%s13 + $0xc] sm:$0xf]
  %v1123 = vld [vmem:[%s14] sm:$0x1]
  %v1125 = vlaneseq
  %v1126 = vshrl.u32 %v1125, 7
  %v1127 = vsub.s32 0, %v1126
  %v1128 = vrot.slane %v1123, %v1127
  %v1134 = vunpack.c.l.b16 %v1119
  %v1135 = vunpack.c.l.b16 %v1120
  %v1136 = vunpack.c.l.b16 %v1121
  %v1137 = vunpack.c.l.b16 %v1122
  %v1138 = vpack.c.b16 %v1135, %v1134
  %v1139 = vpack.c.b16 %v1137, %v1136
  %v1143 = vsel %vm93, %v1118, 0
  %1145 = vmatprep.subr.bf16.mxu0 0
  %1146 = vmatpush1.bf16.msra.mxu0 %v1138
  %1147 = vmatprep.subr.bf16.mxu0 0
  %1148 = vmatpush1.bf16.msra.mxu0 %v1139
  %1149 = vmatprep.subr.bf16.mxu0 0
  %1150 = vmatpush1.bf16.msra.mxu0 0
  %1151 = vmatprep.subr.bf16.mxu0 0
  %1152 = vmatpush1.bf16.msra.mxu0 0
  %1153 = vmatprep.subr.bf16.mxu0 0
  %1154 = vmatpush1.bf16.msra.mxu0 0
  %1155 = vmatprep.subr.bf16.mxu0 0
  %1156 = vmatpush1.bf16.msra.mxu0 0
  %1157 = vmatprep.subr.bf16.mxu0 0
  %1158 = vmatpush1.bf16.msra.mxu0 0
  %1159 = vmatprep.subr.bf16.mxu0 0
  %1160 = vmatpush1.bf16.msra.mxu0 0
  %1161 = vmatprep.subr.bf16.mxu0 0
  %1162 = vmatpush1.bf16.msra.mxu0 0
  %1163 = vmatprep.subr.bf16.mxu0 0
  %1164 = vmatpush1.bf16.msra.mxu0 0
  %1165 = vmatprep.subr.bf16.mxu0 0
  %1166 = vmatpush1.bf16.msra.mxu0 0
  %1167 = vmatprep.subr.bf16.mxu0 0
  %1168 = vmatpush1.bf16.msra.mxu0 0
  %1169 = vmatprep.subr.bf16.mxu0 0
  %1170 = vmatpush1.bf16.msra.mxu0 0
  %1171 = vmatprep.subr.bf16.mxu0 0
  %1172 = vmatpush1.bf16.msra.mxu0 0
  %1173 = vmatprep.subr.bf16.mxu0 0
  %1174 = vmatpush1.bf16.msra.mxu0 0
  %1175 = vmatprep.subr.bf16.mxu0 0
  %1176 = vmatpush1.bf16.msra.mxu0 0
  %1177 = vmatprep.mubr.bf16.mxu0 0
  %1178 = vmatmul.mubr.bf16.gmra.mrb[0].mxu0 %v1143
  %v1179 = vpop.f32.mrb[0].mxu0
  %v1180 = vadd.f32 %v1128, %v1179
  %v1181 = vpop.f32.mrb[0].mxu0
  %v1182 = vpop.f32.mrb[0].mxu0
  %v1183 = vpop.f32.mrb[0].mxu0
  %1184 = vdwg.mxu0
  %v1185 = vadd.f32 %v1048, %v1180
  %s1186 = scalar_lea.vmem %s15, 8
  %1187 = vst.msk [vmem:[%s1186] sm:$0xff] %vm175, %v1185
  // Predicated region
  $region62: #{concatenated_temporal_unet_fwd.16} parent=0 // pred_check
    _
  $region63: #{concatenated_temporal_unet_fwd.16} parent=0 // pred_check_branch
    %1189 = sbr.rel (0) target = $region65
  $region64: #{concatenated_temporal_unet_fwd.16} parent=0 // pred_region
    _
  $region65: #{concatenated_temporal_unet_fwd.16} parent=0 // pred_fallthru
    _
  // Predicated region
  $region66: #{concatenated_temporal_unet_fwd.16} parent=0 // pred_check
    _
  $region67: #{concatenated_temporal_unet_fwd.16} parent=0 // pred_check_branch
    %1191 = sbr.rel (0) target = $region69
  $region68: #{concatenated_temporal_unet_fwd.16} parent=0 // pred_region
    _
  $region69: #{concatenated_temporal_unet_fwd.16} parent=0 // pred_fallthru
    _

// kernel: concatenated_temporal_unet_fwd.17
$region0: #{concatenated_temporal_unet_fwd.17}
  #allocation0 [shape = 'u32[]', space=smem, size = 0x4, offset = 0x4, fixed_abs, tag = 'smem constant byte address 0x4 - core index']
  #allocation1 [shape = 'u32[144,128]{1,0:T(1,128)}', space=vmem, size = 0x12000, scoped, tag = 'internal scratch']
  %s0 = inlined_call_operand.vmem [shape: f32[2,8,64], index: 0, kind: input, shape index: {}]
  %s1 = inlined_call_operand.vmem [shape: f32[2,32], index: 1, kind: input, shape index: {}]
  %s2 = inlined_call_operand.vmem [shape: bf16[320,64], index: 2, kind: input, shape index: {}]
  %s3 = inlined_call_operand.vmem [shape: f32[1,64], index: 3, kind: input, shape index: {}]
  %s4 = inlined_call_operand.vmem [shape: f32[1,64], index: 4, kind: input, shape index: {}]
  %s5 = inlined_call_operand.vmem [shape: f32[1,64], index: 5, kind: input, shape index: {}]
  %s6 = inlined_call_operand.vmem [shape: bf16[32,64], index: 6, kind: input, shape index: {}]
  %s7 = inlined_call_operand.vmem [shape: f32[1,64], index: 7, kind: input, shape index: {}]
  %s8 = inlined_call_operand.vmem [shape: bf16[320,64], index: 8, kind: input, shape index: {}]
  %s9 = inlined_call_operand.vmem [shape: f32[1,64], index: 9, kind: input, shape index: {}]
  %s10 = inlined_call_operand.vmem [shape: f32[1,64], index: 10, kind: input, shape index: {}]
  %s11 = inlined_call_operand.vmem [shape: f32[1,64], index: 11, kind: input, shape index: {}]
  %s12 = inlined_call_operand.vmem [shape: f32[64,64], index: 12, kind: input, shape index: {}]
  %s13 = inlined_call_operand.vmem [shape: f32[2,8,64], index: 13, kind: output, shape index: {}]
  %s14 = sld [smem:[#allocation0]]
  $region62: #{concatenated_temporal_unet_fwd.17} parent=0
    _
  %s16 = ssub.s32 1, %s14
  %s17 = scalar_select 0, %s16, %s14
  // Predicated region
  $region2: #{concatenated_temporal_unet_fwd.17} parent=0 // pred_check
    _
  $region3: #{concatenated_temporal_unet_fwd.17} parent=0 // pred_check_branch
    %19 = sbr.rel (0) target = $region5
  $region4: #{concatenated_temporal_unet_fwd.17} parent=0 // pred_region
    _
  $region5: #{concatenated_temporal_unet_fwd.17} parent=0 // pred_fallthru
    _
  // Predicated region
  $region6: #{concatenated_temporal_unet_fwd.17} parent=0 // pred_check
    _
  $region7: #{concatenated_temporal_unet_fwd.17} parent=0 // pred_check_branch
    %21 = sbr.rel (0) target = $region9
  $region8: #{concatenated_temporal_unet_fwd.17} parent=0 // pred_region
    _
  $region9: #{concatenated_temporal_unet_fwd.17} parent=0 // pred_fallthru
    _
  // Predicated region
  $region10: #{concatenated_temporal_unet_fwd.17} parent=0 // pred_check
    _
  $region11: #{concatenated_temporal_unet_fwd.17} parent=0 // pred_check_branch
    %23 = sbr.rel (0) target = $region13
  $region12: #{concatenated_temporal_unet_fwd.17} parent=0 // pred_region
    _
  $region13: #{concatenated_temporal_unet_fwd.17} parent=0 // pred_fallthru
    _
  // Predicated region
  $region14: #{concatenated_temporal_unet_fwd.17} parent=0 // pred_check
    _
  $region15: #{concatenated_temporal_unet_fwd.17} parent=0 // pred_check_branch
    %25 = sbr.rel (0) target = $region17
  $region16: #{concatenated_temporal_unet_fwd.17} parent=0 // pred_region
    _
  $region17: #{concatenated_temporal_unet_fwd.17} parent=0 // pred_fallthru
    _
  // Predicated region
  $region18: #{concatenated_temporal_unet_fwd.17} parent=0 // pred_check
    _
  $region19: #{concatenated_temporal_unet_fwd.17} parent=0 // pred_check_branch
    %27 = sbr.rel (0) target = $region21
  $region20: #{concatenated_temporal_unet_fwd.17} parent=0 // pred_region
    _
  $region21: #{concatenated_temporal_unet_fwd.17} parent=0 // pred_fallthru
    _
  // Predicated region
  $region22: #{concatenated_temporal_unet_fwd.17} parent=0 // pred_check
    _
  $region23: #{concatenated_temporal_unet_fwd.17} parent=0 // pred_check_branch
    %29 = sbr.rel (0) target = $region25
  $region24: #{concatenated_temporal_unet_fwd.17} parent=0 // pred_region
    _
  $region25: #{concatenated_temporal_unet_fwd.17} parent=0 // pred_fallthru
    _
  // Predicated region
  $region26: #{concatenated_temporal_unet_fwd.17} parent=0 // pred_check
    _
  $region27: #{concatenated_temporal_unet_fwd.17} parent=0 // pred_check_branch
    %31 = sbr.rel (0) target = $region29
  $region28: #{concatenated_temporal_unet_fwd.17} parent=0 // pred_region
    _
  $region29: #{concatenated_temporal_unet_fwd.17} parent=0 // pred_fallthru
    _
  // Predicated region
  $region30: #{concatenated_temporal_unet_fwd.17} parent=0 // pred_check
    _
  $region31: #{concatenated_temporal_unet_fwd.17} parent=0 // pred_check_branch
    %33 = sbr.rel (0) target = $region33
  $region32: #{concatenated_temporal_unet_fwd.17} parent=0 // pred_region
    _
  $region33: #{concatenated_temporal_unet_fwd.17} parent=0 // pred_fallthru
    _
  // Predicated region
  $region34: #{concatenated_temporal_unet_fwd.17} parent=0 // pred_check
    _
  $region35: #{concatenated_temporal_unet_fwd.17} parent=0 // pred_check_branch
    %35 = sbr.rel (0) target = $region37
  $region36: #{concatenated_temporal_unet_fwd.17} parent=0 // pred_region
    _
  $region37: #{concatenated_temporal_unet_fwd.17} parent=0 // pred_fallthru
    _
  // Predicated region
  $region38: #{concatenated_temporal_unet_fwd.17} parent=0 // pred_check
    _
  $region39: #{concatenated_temporal_unet_fwd.17} parent=0 // pred_check_branch
    %37 = sbr.rel (0) target = $region41
  $region40: #{concatenated_temporal_unet_fwd.17} parent=0 // pred_region
    _
  $region41: #{concatenated_temporal_unet_fwd.17} parent=0 // pred_fallthru
    _
  // Predicated region
  $region42: #{concatenated_temporal_unet_fwd.17} parent=0 // pred_check
    _
  $region43: #{concatenated_temporal_unet_fwd.17} parent=0 // pred_check_branch
    %39 = sbr.rel (0) target = $region45
  $region44: #{concatenated_temporal_unet_fwd.17} parent=0 // pred_region
    _
  $region45: #{concatenated_temporal_unet_fwd.17} parent=0 // pred_fallthru
    _
  // Predicated region
  $region46: #{concatenated_temporal_unet_fwd.17} parent=0 // pred_check
    _
  $region47: #{concatenated_temporal_unet_fwd.17} parent=0 // pred_check_branch
    %41 = sbr.rel (0) target = $region49
  $region48: #{concatenated_temporal_unet_fwd.17} parent=0 // pred_region
    _
  $region49: #{concatenated_temporal_unet_fwd.17} parent=0 // pred_fallthru
    _
  // Predicated region
  $region50: #{concatenated_temporal_unet_fwd.17} parent=0 // pred_check
    _
  $region51: #{concatenated_temporal_unet_fwd.17} parent=0 // pred_check_branch
    %43 = sbr.rel (0) target = $region53
  $region52: #{concatenated_temporal_unet_fwd.17} parent=0 // pred_region
    _
  $region53: #{concatenated_temporal_unet_fwd.17} parent=0 // pred_fallthru
    _
  %v45 = vld [vmem:[%s1] sm:$0x3]
  %v46 = vand.u32 2147483647, %v45
  %v47 = vsub.f32 0.0, %v46
  %v48 = vmul.f32 %v47, 1.442695
  %v49 = vpow.pop %v48
  %v50 = vadd.f32 %v49, 1.0
  %v51 = vlog2.pop %v50
  %v52 = vmul.f32 %v51, 0.6931472
  %v53 = vmul.f32 -0.5, %v49
  %v54 = vadd.f32 %v53, 1.0
  %v55 = vmul.f32 %v54, %v49
  %v56 = vand.u32 2147483647, %v49
  %vm57 = vcmp.lt.f32.partialorder %v56, 0.0004427343
  %v58 = vsel %vm57, %v55, %v52
  %v59 = vmax.f32 %v45, 0.0
  %v60 = vadd.f32 %v58, %v59
  %v61 = vtanh.pop %v60
  %v62 = vmul.f32 %v45, %v61
  %v63 = vpack.c.bf16 %v62, %v62
  %v64 = vld [vmem:[%s6] sm:$0xf]
  %v65 = vld [vmem:[%s6 + $0x4] sm:$0xf]
  %v66 = vld [vmem:[%s6 + $0x8] sm:$0xf]
  %v67 = vld [vmem:[%s6 + $0xc] sm:$0xf]
  %v68 = vld [vmem:[%s7] sm:$0x1]
  %v70 = vlaneseq
  %v71 = vshrl.u32 %v70, 7
  %v72 = vsub.s32 0, %v71
  %v73 = vrot.slane %v68, %v72
  %v79 = vunpack.c.l.b16 %v64
  %v80 = vunpack.c.l.b16 %v65
  %v81 = vunpack.c.l.b16 %v66
  %v82 = vunpack.c.l.b16 %v67
  %v83 = vpack.c.b16 %v80, %v79
  %v84 = vpack.c.b16 %v82, %v81
  %vm87 = vcmask 261120
  %v89 = vsel %vm87, %v63, 0
  %91 = vmatprep.subr.bf16.mxu0 0
  %92 = vmatpush1.bf16.msra.mxu0 %v83
  %93 = vmatprep.subr.bf16.mxu0 0
  %94 = vmatpush1.bf16.msra.mxu0 %v84
  %95 = vmatprep.subr.bf16.mxu0 0
  %96 = vmatpush1.bf16.msra.mxu0 0
  %97 = vmatprep.subr.bf16.mxu0 0
  %98 = vmatpush1.bf16.msra.mxu0 0
  %99 = vmatprep.subr.bf16.mxu0 0
  %100 = vmatpush1.bf16.msra.mxu0 0
  %101 = vmatprep.subr.bf16.mxu0 0
  %102 = vmatpush1.bf16.msra.mxu0 0
  %103 = vmatprep.subr.bf16.mxu0 0
  %104 = vmatpush1.bf16.msra.mxu0 0
  %105 = vmatprep.subr.bf16.mxu0 0
  %106 = vmatpush1.bf16.msra.mxu0 0
  %107 = vmatprep.subr.bf16.mxu0 0
  %108 = vmatpush1.bf16.msra.mxu0 0
  %109 = vmatprep.subr.bf16.mxu0 0
  %110 = vmatpush1.bf16.msra.mxu0 0
  %111 = vmatprep.subr.bf16.mxu0 0
  %112 = vmatpush1.bf16.msra.mxu0 0
  %113 = vmatprep.subr.bf16.mxu0 0
  %114 = vmatpush1.bf16.msra.mxu0 0
  %115 = vmatprep.subr.bf16.mxu0 0
  %116 = vmatpush1.bf16.msra.mxu0 0
  %117 = vmatprep.subr.bf16.mxu0 0
  %118 = vmatpush1.bf16.msra.mxu0 0
  %119 = vmatprep.subr.bf16.mxu0 0
  %120 = vmatpush1.bf16.msra.mxu0 0
  %121 = vmatprep.subr.bf16.mxu0 0
  %122 = vmatpush1.bf16.msra.mxu0 0
  %123 = vmatprep.mubr.bf16.mxu0 0
  %124 = vmatmul.mubr.bf16.gmra.mrb[0].mxu0 %v89
  %v125 = vpop.f32.mrb[0].mxu0
  %v126 = vadd.f32 %v73, %v125
  %v127 = vpop.f32.mrb[0].mxu0
  %v128 = vpop.f32.mrb[0].mxu0
  %v129 = vpop.f32.mrb[0].mxu0
  %130 = vdwg.mxu0
  %v131 = vld [vmem:[%s0] sm:$0xff]
  %s132 = scalar_lea.vmem %s0, 8
  %v133 = vld [vmem:[%s132] sm:$0xff]
  %v135 = vrot.slane %v131, 6
  %vm137 = vcmask 1041408
  %v138 = vsel %vm137, 0.0, %v135
  %v139 = vsel %vm137, %v135, 0.0
  %vm142 = vcmask 1046528
  %v143 = vrot.slane %v138, 1
  %v144 = vrot.slane %v139, 1
  %v145 = vsel %vm142, %v143, %v144
  %146 = vrot.lane.b32.xlu0 %v145, 64
  %v147 = vpop.permute.xlu0 %146
  %vm149 = vcmask 1045504
  %v150 = vrot.slane %v138, 2
  %v151 = vrot.slane %v139, 2
  %v152 = vsel %vm149, %v150, %v151
  %vm154 = vcmask 1044480
  %v155 = vrot.slane %v138, 3
  %v156 = vrot.slane %v139, 3
  %v157 = vsel %vm154, %v155, %v156
  %158 = vrot.lane.b32.xlu0 %v157, 64
  %v159 = vpop.permute.xlu0 %158
  %vm161 = vcmask 1043456
  %v162 = vrot.slane %v138, 4
  %v163 = vrot.slane %v139, 4
  %v164 = vsel %vm161, %v162, %v163
  %vm166 = vcmask 523264
  %v167 = vsel %vm166, %v138, %v147
  %v168 = vsel %vm166, %v152, %v159
  %v170 = vrot.slane %v133, 6
  %v172 = vsel %vm137, 0.0, %v170
  %v173 = vsel %vm137, %v170, 0.0
  %v176 = vrot.slane %v172, 1
  %v177 = vrot.slane %v173, 1
  %v178 = vsel %vm142, %v176, %v177
  %179 = vrot.lane.b32.xlu0 %v178, 64
  %v180 = vpop.permute.xlu0 %179
  %v182 = vrot.slane %v172, 2
  %v183 = vrot.slane %v173, 2
  %v184 = vsel %vm149, %v182, %v183
  %v186 = vrot.slane %v172, 3
  %v187 = vrot.slane %v173, 3
  %v188 = vsel %vm154, %v186, %v187
  %189 = vrot.lane.b32.xlu0 %v188, 64
  %v190 = vpop.permute.xlu0 %189
  %v192 = vrot.slane %v172, 4
  %v193 = vrot.slane %v173, 4
  %v194 = vsel %vm161, %v192, %v193
  %v196 = vsel %vm166, %v172, %v180
  %v197 = vsel %vm166, %v184, %v190
  %v198 = vpack.c.bf16 %v196, %v167
  %v199 = vpack.c.bf16 %v197, %v168
  %v200 = vpack.c.bf16 %v194, %v164
  %v201 = vld [vmem:[%s2] sm:$0xf]
  %v202 = vld [vmem:[%s2 + $0x4] sm:$0xf]
  %v203 = vld [vmem:[%s2 + $0x8] sm:$0xf]
  %v204 = vld [vmem:[%s2 + $0xc] sm:$0xf]
  %v205 = vld [vmem:[%s2 + $0x10] sm:$0xf]
  %v206 = vld [vmem:[%s2 + $0x14] sm:$0xf]
  %v207 = vld [vmem:[%s2 + $0x18] sm:$0xf]
  %v208 = vld [vmem:[%s2 + $0x1c] sm:$0xf]
  %v209 = vld [vmem:[%s2 + $0x20] sm:$0xf]
  %v210 = vld [vmem:[%s2 + $0x24] sm:$0xf]
  %v211 = vld [vmem:[%s2 + $0x28] sm:$0xf]
  %v212 = vld [vmem:[%s2 + $0x2c] sm:$0xf]
  %v213 = vld [vmem:[%s2 + $0x30] sm:$0xf]
  %v214 = vld [vmem:[%s2 + $0x34] sm:$0xf]
  %v215 = vld [vmem:[%s2 + $0x38] sm:$0xf]
  %v216 = vld [vmem:[%s2 + $0x3c] sm:$0xf]
  %v217 = vld [vmem:[%s2 + $0x40] sm:$0xf]
  %v218 = vld [vmem:[%s2 + $0x44] sm:$0xf]
  %v219 = vld [vmem:[%s2 + $0x48] sm:$0xf]
  %v220 = vld [vmem:[%s2 + $0x4c] sm:$0xf]
  %v221 = vld [vmem:[%s2 + $0x50] sm:$0xf]
  %v222 = vld [vmem:[%s2 + $0x54] sm:$0xf]
  %v223 = vld [vmem:[%s2 + $0x58] sm:$0xf]
  %v224 = vld [vmem:[%s2 + $0x5c] sm:$0xf]
  %v225 = vld [vmem:[%s2 + $0x60] sm:$0xf]
  %v226 = vld [vmem:[%s2 + $0x64] sm:$0xf]
  %v227 = vld [vmem:[%s2 + $0x68] sm:$0xf]
  %v228 = vld [vmem:[%s2 + $0x6c] sm:$0xf]
  %v229 = vld [vmem:[%s2 + $0x70] sm:$0xf]
  %v230 = vld [vmem:[%s2 + $0x74] sm:$0xf]
  %v231 = vld [vmem:[%s2 + $0x78] sm:$0xf]
  %v232 = vld [vmem:[%s2 + $0x7c] sm:$0xf]
  %v233 = vld [vmem:[%s2 + $0x80] sm:$0xf]
  %v234 = vld [vmem:[%s2 + $0x84] sm:$0xf]
  %v235 = vld [vmem:[%s2 + $0x88] sm:$0xf]
  %v236 = vld [vmem:[%s2 + $0x8c] sm:$0xf]
  %v237 = vld [vmem:[%s2 + $0x90] sm:$0xf]
  %v238 = vld [vmem:[%s2 + $0x94] sm:$0xf]
  %v239 = vld [vmem:[%s2 + $0x98] sm:$0xf]
  %v240 = vld [vmem:[%s2 + $0x9c] sm:$0xf]
  %v241 = vld [vmem:[%s3] sm:$0x1]
  %v243 = vlaneseq
  %v244 = vshrl.u32 %v243, 7
  %v245 = vsub.s32 0, %v244
  %v246 = vrot.slane %v241, %v245
  %v288 = vunpack.c.l.b16 %v201
  %v289 = vunpack.c.l.b16 %v202
  %v290 = vunpack.c.l.b16 %v203
  %v291 = vunpack.c.l.b16 %v204
  %v292 = vunpack.c.l.b16 %v205
  %v293 = vunpack.c.l.b16 %v206
  %v294 = vunpack.c.l.b16 %v207
  %v295 = vunpack.c.l.b16 %v208
  %v296 = vunpack.c.l.b16 %v209
  %v297 = vunpack.c.l.b16 %v210
  %v298 = vunpack.c.l.b16 %v211
  %v299 = vunpack.c.l.b16 %v212
  %v300 = vunpack.c.l.b16 %v213
  %v301 = vunpack.c.l.b16 %v214
  %v302 = vunpack.c.l.b16 %v215
  %v303 = vunpack.c.l.b16 %v216
  %v304 = vunpack.c.l.b16 %v217
  %v305 = vunpack.c.l.b16 %v218
  %v306 = vunpack.c.l.b16 %v219
  %v307 = vunpack.c.l.b16 %v220
  %v308 = vunpack.c.l.b16 %v221
  %v309 = vunpack.c.l.b16 %v222
  %v310 = vunpack.c.l.b16 %v223
  %v311 = vunpack.c.l.b16 %v224
  %v312 = vunpack.c.l.b16 %v225
  %v313 = vunpack.c.l.b16 %v226
  %v314 = vunpack.c.l.b16 %v227
  %v315 = vunpack.c.l.b16 %v228
  %v316 = vunpack.c.l.b16 %v229
  %v317 = vunpack.c.l.b16 %v230
  %v318 = vunpack.c.l.b16 %v231
  %v319 = vunpack.c.l.b16 %v232
  %v320 = vunpack.c.l.b16 %v233
  %v321 = vunpack.c.l.b16 %v234
  %v322 = vunpack.c.l.b16 %v235
  %v323 = vunpack.c.l.b16 %v236
  %v324 = vunpack.c.l.b16 %v237
  %v325 = vunpack.c.l.b16 %v238
  %v326 = vunpack.c.l.b16 %v239
  %v327 = vunpack.c.l.b16 %v240
  %v328 = vpack.c.b16 %v289, %v288
  %v329 = vpack.c.b16 %v291, %v290
  %v330 = vpack.c.b16 %v293, %v292
  %v331 = vpack.c.b16 %v295, %v294
  %v332 = vpack.c.b16 %v297, %v296
  %v333 = vpack.c.b16 %v299, %v298
  %v334 = vpack.c.b16 %v301, %v300
  %v335 = vpack.c.b16 %v303, %v302
  %v336 = vpack.c.b16 %v305, %v304
  %v337 = vpack.c.b16 %v307, %v306
  %v338 = vpack.c.b16 %v309, %v308
  %v339 = vpack.c.b16 %v311, %v310
  %v340 = vpack.c.b16 %v313, %v312
  %v341 = vpack.c.b16 %v315, %v314
  %v342 = vpack.c.b16 %v317, %v316
  %v343 = vpack.c.b16 %v319, %v318
  %v344 = vpack.c.b16 %v321, %v320
  %v345 = vpack.c.b16 %v323, %v322
  %v346 = vpack.c.b16 %v325, %v324
  %v347 = vpack.c.b16 %v327, %v326
  %v369 = vsel %vm166, %v200, 0
  %371 = vmatprep.subr.bf16.mxu0 0
  %372 = vmatpush1.bf16.msra.mxu0 %v328
  %373 = vmatprep.subr.bf16.mxu0 0
  %374 = vmatpush1.bf16.msra.mxu0 %v329
  %375 = vmatprep.subr.bf16.mxu0 0
  %376 = vmatpush1.bf16.msra.mxu0 %v330
  %377 = vmatprep.subr.bf16.mxu0 0
  %378 = vmatpush1.bf16.msra.mxu0 %v331
  %379 = vmatprep.subr.bf16.mxu0 0
  %380 = vmatpush1.bf16.msra.mxu0 %v332
  %381 = vmatprep.subr.bf16.mxu0 0
  %382 = vmatpush1.bf16.msra.mxu0 %v333
  %383 = vmatprep.subr.bf16.mxu0 0
  %384 = vmatpush1.bf16.msra.mxu0 %v334
  %385 = vmatprep.subr.bf16.mxu0 0
  %386 = vmatpush1.bf16.msra.mxu0 %v335
  %387 = vmatprep.subr.bf16.mxu0 0
  %388 = vmatpush1.bf16.msra.mxu0 %v336
  %389 = vmatprep.subr.bf16.mxu0 0
  %390 = vmatpush1.bf16.msra.mxu0 %v337
  %391 = vmatprep.subr.bf16.mxu0 0
  %392 = vmatpush1.bf16.msra.mxu0 %v338
  %393 = vmatprep.subr.bf16.mxu0 0
  %394 = vmatpush1.bf16.msra.mxu0 %v339
  %395 = vmatprep.subr.bf16.mxu0 0
  %396 = vmatpush1.bf16.msra.mxu0 %v340
  %397 = vmatprep.subr.bf16.mxu0 0
  %398 = vmatpush1.bf16.msra.mxu0 %v341
  %399 = vmatprep.subr.bf16.mxu0 0
  %400 = vmatpush1.bf16.msra.mxu0 %v342
  %401 = vmatprep.subr.bf16.mxu0 0
  %402 = vmatpush1.bf16.msra.mxu0 %v343
  %403 = vmatprep.mubr.bf16.mxu0 %v199
  %404 = vmatmul.mubr.bf16.gmra.mrb[0].mxu0 %v198
  %v405 = vpop.f32.mrb[0].mxu0
  %v406 = vadd.f32 %v246, %v405
  %v407 = vpop.f32.mrb[0].mxu0
  %v408 = vpop.f32.mrb[0].mxu0
  %v409 = vadd.f32 %v246, %v408
  %v410 = vpop.f32.mrb[0].mxu0
  %411 = vdwg.mxu0
  %412 = vmatprep.subr.bf16.mxu0 0
  %413 = vmatpush1.bf16.msra.mxu0 %v344
  %414 = vmatprep.subr.bf16.mxu0 0
  %415 = vmatpush1.bf16.msra.mxu0 %v345
  %416 = vmatprep.subr.bf16.mxu0 0
  %417 = vmatpush1.bf16.msra.mxu0 %v346
  %418 = vmatprep.subr.bf16.mxu0 0
  %419 = vmatpush1.bf16.msra.mxu0 %v347
  %420 = vmatprep.subr.bf16.mxu0 0
  %421 = vmatpush1.bf16.msra.mxu0 0
  %422 = vmatprep.subr.bf16.mxu0 0
  %423 = vmatpush1.bf16.msra.mxu0 0
  %424 = vmatprep.subr.bf16.mxu0 0
  %425 = vmatpush1.bf16.msra.mxu0 0
  %426 = vmatprep.subr.bf16.mxu0 0
  %427 = vmatpush1.bf16.msra.mxu0 0
  %428 = vmatprep.subr.bf16.mxu0 0
  %429 = vmatpush1.bf16.msra.mxu0 0
  %430 = vmatprep.subr.bf16.mxu0 0
  %431 = vmatpush1.bf16.msra.mxu0 0
  %432 = vmatprep.subr.bf16.mxu0 0
  %433 = vmatpush1.bf16.msra.mxu0 0
  %434 = vmatprep.subr.bf16.mxu0 0
  %435 = vmatpush1.bf16.msra.mxu0 0
  %436 = vmatprep.subr.bf16.mxu0 0
  %437 = vmatpush1.bf16.msra.mxu0 0
  %438 = vmatprep.subr.bf16.mxu0 0
  %439 = vmatpush1.bf16.msra.mxu0 0
  %440 = vmatprep.subr.bf16.mxu0 0
  %441 = vmatpush1.bf16.msra.mxu0 0
  %442 = vmatprep.subr.bf16.mxu0 0
  %443 = vmatpush1.bf16.msra.mxu0 0
  %444 = vmatprep.mubr.bf16.mxu0 0
  %445 = vmatmul.mubr.bf16.gmra.mrb[0].mxu0 %v369
  %v446 = vpop.f32.mrb[0].mxu0
  %v447 = vadd.f32 %v406, %v446
  %v448 = vpop.f32.mrb[0].mxu0
  %v449 = vpop.f32.mrb[0].mxu0
  %v450 = vadd.f32 %v409, %v449
  %v451 = vpop.f32.mrb[0].mxu0
  %452 = vdwg.mxu0
  %v453 = vld [vmem:[%s4] sm:$0x1]
  %v454 = vld [vmem:[%s5] sm:$0x1]
  %v455 = vld [vmem:[%s12] sm:$0xff]
  %v456 = vld [vmem:[%s12 + $0x8] sm:$0xff]
  %v457 = vld [vmem:[%s12 + $0x10] sm:$0xff]
  %v458 = vld [vmem:[%s12 + $0x18] sm:$0xff]
  %v459 = vld [vmem:[%s12 + $0x20] sm:$0xff]
  %v460 = vld [vmem:[%s12 + $0x28] sm:$0xff]
  %v461 = vld [vmem:[%s12 + $0x30] sm:$0xff]
  %v462 = vld [vmem:[%s12 + $0x38] sm:$0xff]
  %v463 = vsel %vm166, %v447, 0.0
  %v464 = vrot.slane %v463, 4
  %v465 = vadd.f32 %v463, %v464
  %v466 = vrot.slane %v465, 2
  %v467 = vadd.f32 %v465, %v466
  %v468 = vrot.slane %v467, 1
  %v469 = vadd.f32 %v467, %v468
  %v470 = vmul.f32 %v447, %v447
  %v471 = vsel %vm166, %v470, 0.0
  %v472 = vrot.slane %v471, 4
  %v473 = vadd.f32 %v471, %v472
  %v474 = vrot.slane %v473, 2
  %v475 = vadd.f32 %v473, %v474
  %v476 = vrot.slane %v475, 1
  %v477 = vadd.f32 %v475, %v476
  %v478 = vsel %vm166, %v450, 0.0
  %v479 = vrot.slane %v478, 4
  %v480 = vadd.f32 %v478, %v479
  %v481 = vrot.slane %v480, 2
  %v482 = vadd.f32 %v480, %v481
  %v483 = vrot.slane %v482, 1
  %v484 = vadd.f32 %v482, %v483
  %v485 = vmul.f32 %v450, %v450
  %v486 = vsel %vm166, %v485, 0.0
  %v487 = vrot.slane %v486, 4
  %v488 = vadd.f32 %v486, %v487
  %v489 = vrot.slane %v488, 2
  %v490 = vadd.f32 %v488, %v489
  %v491 = vrot.slane %v490, 1
  %v492 = vadd.f32 %v490, %v491
  %vm493 = vcmask 1040384
  %v494 = vsel %vm493, %v469, %v477
  %v495 = vsel %vm137, %v494, %v484
  %vm496 = vcmask 1042432
  %v497 = vsel %vm496, %v495, %v492
  %v499 = vsel %vm166, %v497, 0
  %501 = vmatprep.subr.mxu0 0.0
  %502 = vmatpush1.msra.mxu0 %v455
  %503 = vmatprep.subr.mxu0 0.0
  %504 = vmatpush1.msra.mxu0 %v456
  %505 = vmatprep.subr.mxu0 0.0
  %506 = vmatpush1.msra.mxu0 %v457
  %507 = vmatprep.subr.mxu0 0.0
  %508 = vmatpush1.msra.mxu0 %v458
  %509 = vmatprep.subr.mxu0 0.0
  %510 = vmatpush1.msra.mxu0 %v459
  %511 = vmatprep.subr.mxu0 0.0
  %512 = vmatpush1.msra.mxu0 %v460
  %513 = vmatprep.subr.mxu0 0.0
  %514 = vmatpush1.msra.mxu0 %v461
  %515 = vmatprep.subr.mxu0 0.0
  %516 = vmatpush1.msra.mxu0 %v462
  %517 = vmatprep.subr.mxu0 0.0
  %518 = vmatpush1.msra.mxu0 0.0
  %519 = vmatprep.subr.mxu0 0.0
  %520 = vmatpush1.msra.mxu0 0.0
  %521 = vmatprep.subr.mxu0 0.0
  %522 = vmatpush1.msra.mxu0 0.0
  %523 = vmatprep.subr.mxu0 0.0
  %524 = vmatpush1.msra.mxu0 0.0
  %525 = vmatprep.subr.mxu0 0.0
  %526 = vmatpush1.msra.mxu0 0.0
  %527 = vmatprep.subr.mxu0 0.0
  %528 = vmatpush1.msra.mxu0 0.0
  %529 = vmatprep.subr.mxu0 0.0
  %530 = vmatpush1.msra.mxu0 0.0
  %531 = vmatprep.subr.mxu0 0.0
  %532 = vmatpush1.msra.mxu0 0.0
  %533 = vmatprep.subr.mxu0 0.0
  %534 = vmatpush1.msra.mxu0 0.0
  %535 = vmatprep.subr.mxu0 0.0
  %536 = vmatpush1.msra.mxu0 0.0
  %537 = vmatprep.subr.mxu0 0.0
  %538 = vmatpush1.msra.mxu0 0.0
  %539 = vmatprep.subr.mxu0 0.0
  %540 = vmatpush1.msra.mxu0 0.0
  %541 = vmatprep.subr.mxu0 0.0
  %542 = vmatpush1.msra.mxu0 0.0
  %543 = vmatprep.subr.mxu0 0.0
  %544 = vmatpush1.msra.mxu0 0.0
  %545 = vmatprep.subr.mxu0 0.0
  %546 = vmatpush1.msra.mxu0 0.0
  %547 = vmatprep.subr.mxu0 0.0
  %548 = vmatpush1.msra.mxu0 0.0
  %549 = vmatprep.subr.mxu0 0.0
  %550 = vmatpush1.msra.mxu0 0.0
  %551 = vmatprep.subr.mxu0 0.0
  %552 = vmatpush1.msra.mxu0 0.0
  %553 = vmatprep.subr.mxu0 0.0
  %554 = vmatpush1.msra.mxu0 0.0
  %555 = vmatprep.subr.mxu0 0.0
  %556 = vmatpush1.msra.mxu0 0.0
  %557 = vmatprep.subr.mxu0 0.0
  %558 = vmatpush1.msra.mxu0 0.0
  %559 = vmatprep.subr.mxu0 0.0
  %560 = vmatpush1.msra.mxu0 0.0
  %561 = vmatprep.subr.mxu0 0.0
  %562 = vmatpush1.msra.mxu0 0.0
  %563 = vmatprep.subr.mxu0 0.0
  %564 = vmatpush1.msra.mxu0 0.0
  %565 = vmatprep.mubr.f32.mxu0 0.0
  %566 = vmatmul.mubr.f32.gmra.mrb[0].mxu0 %v499
  %v567 = vpop.f32.mrb[0].mxu0
  %v568 = vadd.f32 0.0, %v567
  %v569 = vpop.f32.mrb[0].mxu0
  %570 = vdwg.mxu0
  %v571 = vmul.f32 %v568, %v568
  %v573 = vrot.slane %v571, 7
  %v575 = vsub.f32 %v568, %v573
  %v576 = vmax.f32 %v575, 0.0
  %v577 = vlaneseq
  %v578 = vshrl.u32 %v577, 7
  %v579 = vsub.s32 0, %v578
  %v580 = vrot.slane %v568, %v579
  %v581 = vsub.f32 %v447, %v580
  %v582 = vadd.f32 %v576, 1e-05
  %v583 = vrsqrt.pop %v582
  %v584 = vlaneseq
  %v585 = vshrl.u32 %v584, 7
  %v586 = vsub.s32 1, %v585
  %v587 = vrot.slane %v583, %v586
  %v588 = vmul.f32 %v581, %v587
  %v590 = vlaneseq
  %v591 = vshrl.u32 %v590, 7
  %v592 = vsub.s32 0, %v591
  %v593 = vrot.slane %v453, %v592
  %v595 = vmul.f32 %v588, %v593
  %v597 = vlaneseq
  %v598 = vshrl.u32 %v597, 7
  %v599 = vsub.s32 0, %v598
  %v600 = vrot.slane %v454, %v599
  %v602 = vadd.f32 %v595, %v600
  %v603 = vand.u32 2147483647, %v602
  %v604 = vsub.f32 0.0, %v603
  %v605 = vmul.f32 %v604, 1.442695
  %v606 = vpow.pop %v605
  %v607 = vadd.f32 %v606, 1.0
  %v608 = vlog2.pop %v607
  %v609 = vmul.f32 %v608, 0.6931472
  %v610 = vmul.f32 -0.5, %v606
  %v611 = vadd.f32 %v610, 1.0
  %v612 = vmul.f32 %v611, %v606
  %v613 = vand.u32 2147483647, %v606
  %vm614 = vcmp.lt.f32.partialorder %v613, 0.0004427343
  %v615 = vsel %vm614, %v612, %v609
  %v616 = vmax.f32 %v602, 0.0
  %v617 = vadd.f32 %v615, %v616
  %v618 = vtanh.pop %v617
  %v619 = vmul.f32 %v602, %v618
  %v620 = vlaneseq
  %v621 = vshrl.u32 %v620, 7
  %v622 = vsub.s32 2, %v621
  %v623 = vrot.slane %v568, %v622
  %v624 = vsub.f32 %v450, %v623
  %v625 = vlaneseq
  %v626 = vshrl.u32 %v625, 7
  %v627 = vsub.s32 3, %v626
  %v628 = vrot.slane %v583, %v627
  %v629 = vmul.f32 %v624, %v628
  %v630 = vmul.f32 %v629, %v593
  %v631 = vadd.f32 %v630, %v600
  %v632 = vand.u32 2147483647, %v631
  %v633 = vsub.f32 0.0, %v632
  %v634 = vmul.f32 %v633, 1.442695
  %v635 = vpow.pop %v634
  %v636 = vadd.f32 %v635, 1.0
  %v637 = vlog2.pop %v636
  %v638 = vmul.f32 %v637, 0.6931472
  %v639 = vmul.f32 -0.5, %v635
  %v640 = vadd.f32 %v639, 1.0
  %v641 = vmul.f32 %v640, %v635
  %v642 = vand.u32 2147483647, %v635
  %vm643 = vcmp.lt.f32.partialorder %v642, 0.0004427343
  %v644 = vsel %vm643, %v641, %v638
  %v645 = vmax.f32 %v631, 0.0
  %v646 = vadd.f32 %v644, %v645
  %v647 = vtanh.pop %v646
  %v648 = vmul.f32 %v631, %v647
  %v649 = vlaneseq
  %v650 = vshrl.u32 %v649, 7
  %v651 = vsub.s32 0, %v650
  %v652 = vrot.slane %v126, %v651
  %v653 = vadd.f32 %v619, %v652
  %v654 = vlaneseq
  %v655 = vshrl.u32 %v654, 7
  %v656 = vsub.s32 1, %v655
  %v657 = vrot.slane %v126, %v656
  %v658 = vadd.f32 %v648, %v657
  %v660 = vrot.slane %v653, 6
  %v662 = vsel %vm137, 0.0, %v660
  %v663 = vsel %vm137, %v660, 0.0
  %v666 = vrot.slane %v662, 1
  %v667 = vrot.slane %v663, 1
  %v668 = vsel %vm142, %v666, %v667
  %669 = vrot.lane.b32.xlu0 %v668, 64
  %v670 = vpop.permute.xlu0 %669
  %v672 = vrot.slane %v662, 2
  %v673 = vrot.slane %v663, 2
  %v674 = vsel %vm149, %v672, %v673
  %v676 = vrot.slane %v662, 3
  %v677 = vrot.slane %v663, 3
  %v678 = vsel %vm154, %v676, %v677
  %679 = vrot.lane.b32.xlu0 %v678, 64
  %v680 = vpop.permute.xlu0 %679
  %v682 = vrot.slane %v662, 4
  %v683 = vrot.slane %v663, 4
  %v684 = vsel %vm161, %v682, %v683
  %v686 = vsel %vm166, %v662, %v670
  %v687 = vsel %vm166, %v674, %v680
  %v689 = vrot.slane %v658, 6
  %v691 = vsel %vm137, 0.0, %v689
  %v692 = vsel %vm137, %v689, 0.0
  %v695 = vrot.slane %v691, 1
  %v696 = vrot.slane %v692, 1
  %v697 = vsel %vm142, %v695, %v696
  %698 = vrot.lane.b32.xlu0 %v697, 64
  %v699 = vpop.permute.xlu0 %698
  %v701 = vrot.slane %v691, 2
  %v702 = vrot.slane %v692, 2
  %v703 = vsel %vm149, %v701, %v702
  %v705 = vrot.slane %v691, 3
  %v706 = vrot.slane %v692, 3
  %v707 = vsel %vm154, %v705, %v706
  %708 = vrot.lane.b32.xlu0 %v707, 64
  %v709 = vpop.permute.xlu0 %708
  %v711 = vrot.slane %v691, 4
  %v712 = vrot.slane %v692, 4
  %v713 = vsel %vm161, %v711, %v712
  %v715 = vsel %vm166, %v691, %v699
  %v716 = vsel %vm166, %v703, %v709
  %v717 = vpack.c.bf16 %v715, %v686
  %v718 = vpack.c.bf16 %v716, %v687
  %v719 = vpack.c.bf16 %v713, %v684
  %v720 = vld [vmem:[%s8] sm:$0xf]
  %v721 = vld [vmem:[%s8 + $0x4] sm:$0xf]
  %v722 = vld [vmem:[%s8 + $0x8] sm:$0xf]
  %v723 = vld [vmem:[%s8 + $0xc] sm:$0xf]
  %v724 = vld [vmem:[%s8 + $0x10] sm:$0xf]
  %v725 = vld [vmem:[%s8 + $0x14] sm:$0xf]
  %v726 = vld [vmem:[%s8 + $0x18] sm:$0xf]
  %v727 = vld [vmem:[%s8 + $0x1c] sm:$0xf]
  %v728 = vld [vmem:[%s8 + $0x20] sm:$0xf]
  %v729 = vld [vmem:[%s8 + $0x24] sm:$0xf]
  %v730 = vld [vmem:[%s8 + $0x28] sm:$0xf]
  %v731 = vld [vmem:[%s8 + $0x2c] sm:$0xf]
  %v732 = vld [vmem:[%s8 + $0x30] sm:$0xf]
  %v733 = vld [vmem:[%s8 + $0x34] sm:$0xf]
  %v734 = vld [vmem:[%s8 + $0x38] sm:$0xf]
  %v735 = vld [vmem:[%s8 + $0x3c] sm:$0xf]
  %v736 = vld [vmem:[%s8 + $0x40] sm:$0xf]
  %v737 = vld [vmem:[%s8 + $0x44] sm:$0xf]
  %v738 = vld [vmem:[%s8 + $0x48] sm:$0xf]
  %v739 = vld [vmem:[%s8 + $0x4c] sm:$0xf]
  %v740 = vld [vmem:[%s8 + $0x50] sm:$0xf]
  %v741 = vld [vmem:[%s8 + $0x54] sm:$0xf]
  %v742 = vld [vmem:[%s8 + $0x58] sm:$0xf]
  %v743 = vld [vmem:[%s8 + $0x5c] sm:$0xf]
  %v744 = vld [vmem:[%s8 + $0x60] sm:$0xf]
  %v745 = vld [vmem:[%s8 + $0x64] sm:$0xf]
  %v746 = vld [vmem:[%s8 + $0x68] sm:$0xf]
  %v747 = vld [vmem:[%s8 + $0x6c] sm:$0xf]
  %v748 = vld [vmem:[%s8 + $0x70] sm:$0xf]
  %v749 = vld [vmem:[%s8 + $0x74] sm:$0xf]
  %v750 = vld [vmem:[%s8 + $0x78] sm:$0xf]
  %v751 = vld [vmem:[%s8 + $0x7c] sm:$0xf]
  %v752 = vld [vmem:[%s8 + $0x80] sm:$0xf]
  %v753 = vld [vmem:[%s8 + $0x84] sm:$0xf]
  %v754 = vld [vmem:[%s8 + $0x88] sm:$0xf]
  %v755 = vld [vmem:[%s8 + $0x8c] sm:$0xf]
  %v756 = vld [vmem:[%s8 + $0x90] sm:$0xf]
  %v757 = vld [vmem:[%s8 + $0x94] sm:$0xf]
  %v758 = vld [vmem:[%s8 + $0x98] sm:$0xf]
  %v759 = vld [vmem:[%s8 + $0x9c] sm:$0xf]
  %v760 = vld [vmem:[%s9] sm:$0x1]
  %v762 = vlaneseq
  %v763 = vshrl.u32 %v762, 7
  %v764 = vsub.s32 0, %v763
  %v765 = vrot.slane %v760, %v764
  %v807 = vunpack.c.l.b16 %v720
  %v808 = vunpack.c.l.b16 %v721
  %v809 = vunpack.c.l.b16 %v722
  %v810 = vunpack.c.l.b16 %v723
  %v811 = vunpack.c.l.b16 %v724
  %v812 = vunpack.c.l.b16 %v725
  %v813 = vunpack.c.l.b16 %v726
  %v814 = vunpack.c.l.b16 %v727
  %v815 = vunpack.c.l.b16 %v728
  %v816 = vunpack.c.l.b16 %v729
  %v817 = vunpack.c.l.b16 %v730
  %v818 = vunpack.c.l.b16 %v731
  %v819 = vunpack.c.l.b16 %v732
  %v820 = vunpack.c.l.b16 %v733
  %v821 = vunpack.c.l.b16 %v734
  %v822 = vunpack.c.l.b16 %v735
  %v823 = vunpack.c.l.b16 %v736
  %v824 = vunpack.c.l.b16 %v737
  %v825 = vunpack.c.l.b16 %v738
  %v826 = vunpack.c.l.b16 %v739
  %v827 = vunpack.c.l.b16 %v740
  %v828 = vunpack.c.l.b16 %v741
  %v829 = vunpack.c.l.b16 %v742
  %v830 = vunpack.c.l.b16 %v743
  %v831 = vunpack.c.l.b16 %v744
  %v832 = vunpack.c.l.b16 %v745
  %v833 = vunpack.c.l.b16 %v746
  %v834 = vunpack.c.l.b16 %v747
  %v835 = vunpack.c.l.b16 %v748
  %v836 = vunpack.c.l.b16 %v749
  %v837 = vunpack.c.l.b16 %v750
  %v838 = vunpack.c.l.b16 %v751
  %v839 = vunpack.c.l.b16 %v752
  %v840 = vunpack.c.l.b16 %v753
  %v841 = vunpack.c.l.b16 %v754
  %v842 = vunpack.c.l.b16 %v755
  %v843 = vunpack.c.l.b16 %v756
  %v844 = vunpack.c.l.b16 %v757
  %v845 = vunpack.c.l.b16 %v758
  %v846 = vunpack.c.l.b16 %v759
  %v847 = vpack.c.b16 %v808, %v807
  %v848 = vpack.c.b16 %v810, %v809
  %v849 = vpack.c.b16 %v812, %v811
  %v850 = vpack.c.b16 %v814, %v813
  %v851 = vpack.c.b16 %v816, %v815
  %v852 = vpack.c.b16 %v818, %v817
  %v853 = vpack.c.b16 %v820, %v819
  %v854 = vpack.c.b16 %v822, %v821
  %v855 = vpack.c.b16 %v824, %v823
  %v856 = vpack.c.b16 %v826, %v825
  %v857 = vpack.c.b16 %v828, %v827
  %v858 = vpack.c.b16 %v830, %v829
  %v859 = vpack.c.b16 %v832, %v831
  %v860 = vpack.c.b16 %v834, %v833
  %v861 = vpack.c.b16 %v836, %v835
  %v862 = vpack.c.b16 %v838, %v837
  %v863 = vpack.c.b16 %v840, %v839
  %v864 = vpack.c.b16 %v842, %v841
  %v865 = vpack.c.b16 %v844, %v843
  %v866 = vpack.c.b16 %v846, %v845
  %v888 = vsel %vm166, %v719, 0
  %890 = vmatprep.subr.bf16.mxu0 0
  %891 = vmatpush1.bf16.msra.mxu0 %v847
  %892 = vmatprep.subr.bf16.mxu0 0
  %893 = vmatpush1.bf16.msra.mxu0 %v848
  %894 = vmatprep.subr.bf16.mxu0 0
  %895 = vmatpush1.bf16.msra.mxu0 %v849
  %896 = vmatprep.subr.bf16.mxu0 0
  %897 = vmatpush1.bf16.msra.mxu0 %v850
  %898 = vmatprep.subr.bf16.mxu0 0
  %899 = vmatpush1.bf16.msra.mxu0 %v851
  %900 = vmatprep.subr.bf16.mxu0 0
  %901 = vmatpush1.bf16.msra.mxu0 %v852
  %902 = vmatprep.subr.bf16.mxu0 0
  %903 = vmatpush1.bf16.msra.mxu0 %v853
  %904 = vmatprep.subr.bf16.mxu0 0
  %905 = vmatpush1.bf16.msra.mxu0 %v854
  %906 = vmatprep.subr.bf16.mxu0 0
  %907 = vmatpush1.bf16.msra.mxu0 %v855
  %908 = vmatprep.subr.bf16.mxu0 0
  %909 = vmatpush1.bf16.msra.mxu0 %v856
  %910 = vmatprep.subr.bf16.mxu0 0
  %911 = vmatpush1.bf16.msra.mxu0 %v857
  %912 = vmatprep.subr.bf16.mxu0 0
  %913 = vmatpush1.bf16.msra.mxu0 %v858
  %914 = vmatprep.subr.bf16.mxu0 0
  %915 = vmatpush1.bf16.msra.mxu0 %v859
  %916 = vmatprep.subr.bf16.mxu0 0
  %917 = vmatpush1.bf16.msra.mxu0 %v860
  %918 = vmatprep.subr.bf16.mxu0 0
  %919 = vmatpush1.bf16.msra.mxu0 %v861
  %920 = vmatprep.subr.bf16.mxu0 0
  %921 = vmatpush1.bf16.msra.mxu0 %v862
  %922 = vmatprep.mubr.bf16.mxu0 %v718
  %923 = vmatmul.mubr.bf16.gmra.mrb[0].mxu0 %v717
  %v924 = vpop.f32.mrb[0].mxu0
  %v925 = vadd.f32 %v765, %v924
  %v926 = vpop.f32.mrb[0].mxu0
  %v927 = vpop.f32.mrb[0].mxu0
  %v928 = vadd.f32 %v765, %v927
  %v929 = vpop.f32.mrb[0].mxu0
  %930 = vdwg.mxu0
  %931 = vmatprep.subr.bf16.mxu0 0
  %932 = vmatpush1.bf16.msra.mxu0 %v863
  %933 = vmatprep.subr.bf16.mxu0 0
  %934 = vmatpush1.bf16.msra.mxu0 %v864
  %935 = vmatprep.subr.bf16.mxu0 0
  %936 = vmatpush1.bf16.msra.mxu0 %v865
  %937 = vmatprep.subr.bf16.mxu0 0
  %938 = vmatpush1.bf16.msra.mxu0 %v866
  %939 = vmatprep.subr.bf16.mxu0 0
  %940 = vmatpush1.bf16.msra.mxu0 0
  %941 = vmatprep.subr.bf16.mxu0 0
  %942 = vmatpush1.bf16.msra.mxu0 0
  %943 = vmatprep.subr.bf16.mxu0 0
  %944 = vmatpush1.bf16.msra.mxu0 0
  %945 = vmatprep.subr.bf16.mxu0 0
  %946 = vmatpush1.bf16.msra.mxu0 0
  %947 = vmatprep.subr.bf16.mxu0 0
  %948 = vmatpush1.bf16.msra.mxu0 0
  %949 = vmatprep.subr.bf16.mxu0 0
  %950 = vmatpush1.bf16.msra.mxu0 0
  %951 = vmatprep.subr.bf16.mxu0 0
  %952 = vmatpush1.bf16.msra.mxu0 0
  %953 = vmatprep.subr.bf16.mxu0 0
  %954 = vmatpush1.bf16.msra.mxu0 0
  %955 = vmatprep.subr.bf16.mxu0 0
  %956 = vmatpush1.bf16.msra.mxu0 0
  %957 = vmatprep.subr.bf16.mxu0 0
  %958 = vmatpush1.bf16.msra.mxu0 0
  %959 = vmatprep.subr.bf16.mxu0 0
  %960 = vmatpush1.bf16.msra.mxu0 0
  %961 = vmatprep.subr.bf16.mxu0 0
  %962 = vmatpush1.bf16.msra.mxu0 0
  %963 = vmatprep.mubr.bf16.mxu0 0
  %964 = vmatmul.mubr.bf16.gmra.mrb[0].mxu0 %v888
  %v965 = vpop.f32.mrb[0].mxu0
  %v966 = vadd.f32 %v925, %v965
  %v967 = vpop.f32.mrb[0].mxu0
  %v968 = vpop.f32.mrb[0].mxu0
  %v969 = vadd.f32 %v928, %v968
  %v970 = vpop.f32.mrb[0].mxu0
  %971 = vdwg.mxu0
  %v972 = vld [vmem:[%s10] sm:$0x1]
  %v973 = vld [vmem:[%s11] sm:$0x1]
  %v974 = vsel %vm166, %v966, 0.0
  %v975 = vrot.slane %v974, 4
  %v976 = vadd.f32 %v974, %v975
  %v977 = vrot.slane %v976, 2
  %v978 = vadd.f32 %v976, %v977
  %v979 = vrot.slane %v978, 1
  %v980 = vadd.f32 %v978, %v979
  %v981 = vmul.f32 %v966, %v966
  %v982 = vsel %vm166, %v981, 0.0
  %v983 = vrot.slane %v982, 4
  %v984 = vadd.f32 %v982, %v983
  %v985 = vrot.slane %v984, 2
  %v986 = vadd.f32 %v984, %v985
  %v987 = vrot.slane %v986, 1
  %v988 = vadd.f32 %v986, %v987
  %v989 = vsel %vm166, %v969, 0.0
  %v990 = vrot.slane %v989, 4
  %v991 = vadd.f32 %v989, %v990
  %v992 = vrot.slane %v991, 2
  %v993 = vadd.f32 %v991, %v992
  %v994 = vrot.slane %v993, 1
  %v995 = vadd.f32 %v993, %v994
  %v996 = vmul.f32 %v969, %v969
  %v997 = vsel %vm166, %v996, 0.0
  %v998 = vrot.slane %v997, 4
  %v999 = vadd.f32 %v997, %v998
  %v1000 = vrot.slane %v999, 2
  %v1001 = vadd.f32 %v999, %v1000
  %v1002 = vrot.slane %v1001, 1
  %v1003 = vadd.f32 %v1001, %v1002
  %v1004 = vsel %vm493, %v980, %v988
  %v1005 = vsel %vm137, %v1004, %v995
  %v1006 = vsel %vm496, %v1005, %v1003
  %v1008 = vsel %vm166, %v1006, 0
  %1010 = vmatprep.subr.mxu0 0.0
  %1011 = vmatpush1.msra.mxu0 %v455
  %1012 = vmatprep.subr.mxu0 0.0
  %1013 = vmatpush1.msra.mxu0 %v456
  %1014 = vmatprep.subr.mxu0 0.0
  %1015 = vmatpush1.msra.mxu0 %v457
  %1016 = vmatprep.subr.mxu0 0.0
  %1017 = vmatpush1.msra.mxu0 %v458
  %1018 = vmatprep.subr.mxu0 0.0
  %1019 = vmatpush1.msra.mxu0 %v459
  %1020 = vmatprep.subr.mxu0 0.0
  %1021 = vmatpush1.msra.mxu0 %v460
  %1022 = vmatprep.subr.mxu0 0.0
  %1023 = vmatpush1.msra.mxu0 %v461
  %1024 = vmatprep.subr.mxu0 0.0
  %1025 = vmatpush1.msra.mxu0 %v462
  %1026 = vmatprep.subr.mxu0 0.0
  %1027 = vmatpush1.msra.mxu0 0.0
  %1028 = vmatprep.subr.mxu0 0.0
  %1029 = vmatpush1.msra.mxu0 0.0
  %1030 = vmatprep.subr.mxu0 0.0
  %1031 = vmatpush1.msra.mxu0 0.0
  %1032 = vmatprep.subr.mxu0 0.0
  %1033 = vmatpush1.msra.mxu0 0.0
  %1034 = vmatprep.subr.mxu0 0.0
  %1035 = vmatpush1.msra.mxu0 0.0
  %1036 = vmatprep.subr.mxu0 0.0
  %1037 = vmatpush1.msra.mxu0 0.0
  %1038 = vmatprep.subr.mxu0 0.0
  %1039 = vmatpush1.msra.mxu0 0.0
  %1040 = vmatprep.subr.mxu0 0.0
  %1041 = vmatpush1.msra.mxu0 0.0
  %1042 = vmatprep.subr.mxu0 0.0
  %1043 = vmatpush1.msra.mxu0 0.0
  %1044 = vmatprep.subr.mxu0 0.0
  %1045 = vmatpush1.msra.mxu0 0.0
  %1046 = vmatprep.subr.mxu0 0.0
  %1047 = vmatpush1.msra.mxu0 0.0
  %1048 = vmatprep.subr.mxu0 0.0
  %1049 = vmatpush1.msra.mxu0 0.0
  %1050 = vmatprep.subr.mxu0 0.0
  %1051 = vmatpush1.msra.mxu0 0.0
  %1052 = vmatprep.subr.mxu0 0.0
  %1053 = vmatpush1.msra.mxu0 0.0
  %1054 = vmatprep.subr.mxu0 0.0
  %1055 = vmatpush1.msra.mxu0 0.0
  %1056 = vmatprep.subr.mxu0 0.0
  %1057 = vmatpush1.msra.mxu0 0.0
  %1058 = vmatprep.subr.mxu0 0.0
  %1059 = vmatpush1.msra.mxu0 0.0
  %1060 = vmatprep.subr.mxu0 0.0
  %1061 = vmatpush1.msra.mxu0 0.0
  %1062 = vmatprep.subr.mxu0 0.0
  %1063 = vmatpush1.msra.mxu0 0.0
  %1064 = vmatprep.subr.mxu0 0.0
  %1065 = vmatpush1.msra.mxu0 0.0
  %1066 = vmatprep.subr.mxu0 0.0
  %1067 = vmatpush1.msra.mxu0 0.0
  %1068 = vmatprep.subr.mxu0 0.0
  %1069 = vmatpush1.msra.mxu0 0.0
  %1070 = vmatprep.subr.mxu0 0.0
  %1071 = vmatpush1.msra.mxu0 0.0
  %1072 = vmatprep.subr.mxu0 0.0
  %1073 = vmatpush1.msra.mxu0 0.0
  %1074 = vmatprep.mubr.f32.mxu0 0.0
  %1075 = vmatmul.mubr.f32.gmra.mrb[0].mxu0 %v1008
  %v1076 = vpop.f32.mrb[0].mxu0
  %v1077 = vadd.f32 0.0, %v1076
  %v1078 = vpop.f32.mrb[0].mxu0
  %1079 = vdwg.mxu0
  %v1080 = vmul.f32 %v1077, %v1077
  %v1082 = vrot.slane %v1080, 7
  %v1084 = vsub.f32 %v1077, %v1082
  %v1085 = vmax.f32 %v1084, 0.0
  %v1086 = vlaneseq
  %v1087 = vshrl.u32 %v1086, 7
  %v1088 = vsub.s32 0, %v1087
  %v1089 = vrot.slane %v1077, %v1088
  %v1090 = vsub.f32 %v966, %v1089
  %v1091 = vadd.f32 %v1085, 1e-05
  %v1092 = vrsqrt.pop %v1091
  %v1093 = vlaneseq
  %v1094 = vshrl.u32 %v1093, 7
  %v1095 = vsub.s32 1, %v1094
  %v1096 = vrot.slane %v1092, %v1095
  %v1097 = vmul.f32 %v1090, %v1096
  %v1099 = vlaneseq
  %v1100 = vshrl.u32 %v1099, 7
  %v1101 = vsub.s32 0, %v1100
  %v1102 = vrot.slane %v972, %v1101
  %v1104 = vmul.f32 %v1097, %v1102
  %v1106 = vlaneseq
  %v1107 = vshrl.u32 %v1106, 7
  %v1108 = vsub.s32 0, %v1107
  %v1109 = vrot.slane %v973, %v1108
  %v1111 = vadd.f32 %v1104, %v1109
  %v1112 = vand.u32 2147483647, %v1111
  %v1113 = vsub.f32 0.0, %v1112
  %v1114 = vmul.f32 %v1113, 1.442695
  %v1115 = vpow.pop %v1114
  %v1116 = vadd.f32 %v1115, 1.0
  %v1117 = vlog2.pop %v1116
  %v1118 = vmul.f32 %v1117, 0.6931472
  %v1119 = vmul.f32 -0.5, %v1115
  %v1120 = vadd.f32 %v1119, 1.0
  %v1121 = vmul.f32 %v1120, %v1115
  %v1122 = vand.u32 2147483647, %v1115
  %vm1123 = vcmp.lt.f32.partialorder %v1122, 0.0004427343
  %v1124 = vsel %vm1123, %v1121, %v1118
  %v1125 = vmax.f32 %v1111, 0.0
  %v1126 = vadd.f32 %v1124, %v1125
  %v1127 = vtanh.pop %v1126
  %v1128 = vmul.f32 %v1111, %v1127
  %v1129 = vlaneseq
  %v1130 = vshrl.u32 %v1129, 7
  %v1131 = vsub.s32 2, %v1130
  %v1132 = vrot.slane %v1077, %v1131
  %v1133 = vsub.f32 %v969, %v1132
  %v1134 = vlaneseq
  %v1135 = vshrl.u32 %v1134, 7
  %v1136 = vsub.s32 3, %v1135
  %v1137 = vrot.slane %v1092, %v1136
  %v1138 = vmul.f32 %v1133, %v1137
  %v1139 = vmul.f32 %v1138, %v1102
  %v1140 = vadd.f32 %v1139, %v1109
  %v1141 = vand.u32 2147483647, %v1140
  %v1142 = vsub.f32 0.0, %v1141
  %v1143 = vmul.f32 %v1142, 1.442695
  %v1144 = vpow.pop %v1143
  %v1145 = vadd.f32 %v1144, 1.0
  %v1146 = vlog2.pop %v1145
  %v1147 = vmul.f32 %v1146, 0.6931472
  %v1148 = vmul.f32 -0.5, %v1144
  %v1149 = vadd.f32 %v1148, 1.0
  %v1150 = vmul.f32 %v1149, %v1144
  %v1151 = vand.u32 2147483647, %v1144
  %vm1152 = vcmp.lt.f32.partialorder %v1151, 0.0004427343
  %v1153 = vsel %vm1152, %v1150, %v1147
  %v1154 = vmax.f32 %v1140, 0.0
  %v1155 = vadd.f32 %v1153, %v1154
  %v1156 = vtanh.pop %v1155
  %v1157 = vmul.f32 %v1140, %v1156
  %v1158 = vadd.f32 %v1128, %v131
  %1159 = vst.msk [vmem:[%s13] sm:$0xff] %vm166, %v1158
  %v1160 = vadd.f32 %v1157, %v133
  %s1161 = scalar_lea.vmem %s13, 8
  %1162 = vst.msk [vmem:[%s1161] sm:$0xff] %vm166, %v1160
  // Predicated region
  $region54: #{concatenated_temporal_unet_fwd.17} parent=0 // pred_check
    _
  $region55: #{concatenated_temporal_unet_fwd.17} parent=0 // pred_check_branch
    %1164 = sbr.rel (0) target = $region57
  $region56: #{concatenated_temporal_unet_fwd.17} parent=0 // pred_region
    _
  $region57: #{concatenated_temporal_unet_fwd.17} parent=0 // pred_fallthru
    _
  // Predicated region
  $region58: #{concatenated_temporal_unet_fwd.17} parent=0 // pred_check
    _
  $region59: #{concatenated_temporal_unet_fwd.17} parent=0 // pred_check_branch
    %1166 = sbr.rel (0) target = $region61
  $region60: #{concatenated_temporal_unet_fwd.17} parent=0 // pred_region
    _
  $region61: #{concatenated_temporal_unet_fwd.17} parent=0 // pred_fallthru
    _

// kernel: concatenated_temporal_unet_fwd.21
$region0: #{concatenated_temporal_unet_fwd.21}
  #allocation0 [shape = 'u32[]', space=smem, size = 0x4, offset = 0x4, fixed_abs, tag = 'smem constant byte address 0x4 - core index']
  #allocation1 [shape = 'u32[144,128]{1,0:T(1,128)}', space=vmem, size = 0x12000, scoped, tag = 'internal scratch']
  %s0 = inlined_call_operand.vmem [shape: f32[2,8,32], index: 0, kind: input, shape index: {}]
  %s1 = inlined_call_operand.vmem [shape: f32[2,32], index: 1, kind: input, shape index: {}]
  %s2 = inlined_call_operand.vmem [shape: bf16[160,32], index: 2, kind: input, shape index: {}]
  %s3 = inlined_call_operand.vmem [shape: f32[1,32], index: 3, kind: input, shape index: {}]
  %s4 = inlined_call_operand.vmem [shape: f32[1,32], index: 4, kind: input, shape index: {}]
  %s5 = inlined_call_operand.vmem [shape: f32[1,32], index: 5, kind: input, shape index: {}]
  %s6 = inlined_call_operand.vmem [shape: bf16[32,32], index: 6, kind: input, shape index: {}]
  %s7 = inlined_call_operand.vmem [shape: f32[1,32], index: 7, kind: input, shape index: {}]
  %s8 = inlined_call_operand.vmem [shape: bf16[160,32], index: 8, kind: input, shape index: {}]
  %s9 = inlined_call_operand.vmem [shape: f32[1,32], index: 9, kind: input, shape index: {}]
  %s10 = inlined_call_operand.vmem [shape: f32[1,32], index: 10, kind: input, shape index: {}]
  %s11 = inlined_call_operand.vmem [shape: f32[1,32], index: 11, kind: input, shape index: {}]
  %s12 = inlined_call_operand.vmem [shape: f32[32,32], index: 12, kind: input, shape index: {}]
  %s13 = inlined_call_operand.vmem [shape: f32[2,8,32], index: 13, kind: output, shape index: {}]
  %s14 = sld [smem:[#allocation0]]
  $region62: #{concatenated_temporal_unet_fwd.21} parent=0
    _
  %s16 = ssub.s32 1, %s14
  %s17 = scalar_select 0, %s16, %s14
  // Predicated region
  $region2: #{concatenated_temporal_unet_fwd.21} parent=0 // pred_check
    _
  $region3: #{concatenated_temporal_unet_fwd.21} parent=0 // pred_check_branch
    %19 = sbr.rel (0) target = $region5
  $region4: #{concatenated_temporal_unet_fwd.21} parent=0 // pred_region
    _
  $region5: #{concatenated_temporal_unet_fwd.21} parent=0 // pred_fallthru
    _
  // Predicated region
  $region6: #{concatenated_temporal_unet_fwd.21} parent=0 // pred_check
    _
  $region7: #{concatenated_temporal_unet_fwd.21} parent=0 // pred_check_branch
    %21 = sbr.rel (0) target = $region9
  $region8: #{concatenated_temporal_unet_fwd.21} parent=0 // pred_region
    _
  $region9: #{concatenated_temporal_unet_fwd.21} parent=0 // pred_fallthru
    _
  // Predicated region
  $region10: #{concatenated_temporal_unet_fwd.21} parent=0 // pred_check
    _
  $region11: #{concatenated_temporal_unet_fwd.21} parent=0 // pred_check_branch
    %23 = sbr.rel (0) target = $region13
  $region12: #{concatenated_temporal_unet_fwd.21} parent=0 // pred_region
    _
  $region13: #{concatenated_temporal_unet_fwd.21} parent=0 // pred_fallthru
    _
  // Predicated region
  $region14: #{concatenated_temporal_unet_fwd.21} parent=0 // pred_check
    _
  $region15: #{concatenated_temporal_unet_fwd.21} parent=0 // pred_check_branch
    %25 = sbr.rel (0) target = $region17
  $region16: #{concatenated_temporal_unet_fwd.21} parent=0 // pred_region
    _
  $region17: #{concatenated_temporal_unet_fwd.21} parent=0 // pred_fallthru
    _
  // Predicated region
  $region18: #{concatenated_temporal_unet_fwd.21} parent=0 // pred_check
    _
  $region19: #{concatenated_temporal_unet_fwd.21} parent=0 // pred_check_branch
    %27 = sbr.rel (0) target = $region21
  $region20: #{concatenated_temporal_unet_fwd.21} parent=0 // pred_region
    _
  $region21: #{concatenated_temporal_unet_fwd.21} parent=0 // pred_fallthru
    _
  // Predicated region
  $region22: #{concatenated_temporal_unet_fwd.21} parent=0 // pred_check
    _
  $region23: #{concatenated_temporal_unet_fwd.21} parent=0 // pred_check_branch
    %29 = sbr.rel (0) target = $region25
  $region24: #{concatenated_temporal_unet_fwd.21} parent=0 // pred_region
    _
  $region25: #{concatenated_temporal_unet_fwd.21} parent=0 // pred_fallthru
    _
  // Predicated region
  $region26: #{concatenated_temporal_unet_fwd.21} parent=0 // pred_check
    _
  $region27: #{concatenated_temporal_unet_fwd.21} parent=0 // pred_check_branch
    %31 = sbr.rel (0) target = $region29
  $region28: #{concatenated_temporal_unet_fwd.21} parent=0 // pred_region
    _
  $region29: #{concatenated_temporal_unet_fwd.21} parent=0 // pred_fallthru
    _
  // Predicated region
  $region30: #{concatenated_temporal_unet_fwd.21} parent=0 // pred_check
    _
  $region31: #{concatenated_temporal_unet_fwd.21} parent=0 // pred_check_branch
    %33 = sbr.rel (0) target = $region33
  $region32: #{concatenated_temporal_unet_fwd.21} parent=0 // pred_region
    _
  $region33: #{concatenated_temporal_unet_fwd.21} parent=0 // pred_fallthru
    _
  // Predicated region
  $region34: #{concatenated_temporal_unet_fwd.21} parent=0 // pred_check
    _
  $region35: #{concatenated_temporal_unet_fwd.21} parent=0 // pred_check_branch
    %35 = sbr.rel (0) target = $region37
  $region36: #{concatenated_temporal_unet_fwd.21} parent=0 // pred_region
    _
  $region37: #{concatenated_temporal_unet_fwd.21} parent=0 // pred_fallthru
    _
  // Predicated region
  $region38: #{concatenated_temporal_unet_fwd.21} parent=0 // pred_check
    _
  $region39: #{concatenated_temporal_unet_fwd.21} parent=0 // pred_check_branch
    %37 = sbr.rel (0) target = $region41
  $region40: #{concatenated_temporal_unet_fwd.21} parent=0 // pred_region
    _
  $region41: #{concatenated_temporal_unet_fwd.21} parent=0 // pred_fallthru
    _
  // Predicated region
  $region42: #{concatenated_temporal_unet_fwd.21} parent=0 // pred_check
    _
  $region43: #{concatenated_temporal_unet_fwd.21} parent=0 // pred_check_branch
    %39 = sbr.rel (0) target = $region45
  $region44: #{concatenated_temporal_unet_fwd.21} parent=0 // pred_region
    _
  $region45: #{concatenated_temporal_unet_fwd.21} parent=0 // pred_fallthru
    _
  // Predicated region
  $region46: #{concatenated_temporal_unet_fwd.21} parent=0 // pred_check
    _
  $region47: #{concatenated_temporal_unet_fwd.21} parent=0 // pred_check_branch
    %41 = sbr.rel (0) target = $region49
  $region48: #{concatenated_temporal_unet_fwd.21} parent=0 // pred_region
    _
  $region49: #{concatenated_temporal_unet_fwd.21} parent=0 // pred_fallthru
    _
  // Predicated region
  $region50: #{concatenated_temporal_unet_fwd.21} parent=0 // pred_check
    _
  $region51: #{concatenated_temporal_unet_fwd.21} parent=0 // pred_check_branch
    %43 = sbr.rel (0) target = $region53
  $region52: #{concatenated_temporal_unet_fwd.21} parent=0 // pred_region
    _
  $region53: #{concatenated_temporal_unet_fwd.21} parent=0 // pred_fallthru
    _
  %v45 = vld [vmem:[%s1] sm:$0x3]
  %v46 = vand.u32 2147483647, %v45
  %v47 = vsub.f32 0.0, %v46
  %v48 = vmul.f32 %v47, 1.442695
  %v49 = vpow.pop %v48
  %v50 = vadd.f32 %v49, 1.0
  %v51 = vlog2.pop %v50
  %v52 = vmul.f32 %v51, 0.6931472
  %v53 = vmul.f32 -0.5, %v49
  %v54 = vadd.f32 %v53, 1.0
  %v55 = vmul.f32 %v54, %v49
  %v56 = vand.u32 2147483647, %v49
  %vm57 = vcmp.lt.f32.partialorder %v56, 0.0004427343
  %v58 = vsel %vm57, %v55, %v52
  %v59 = vmax.f32 %v45, 0.0
  %v60 = vadd.f32 %v58, %v59
  %v61 = vtanh.pop %v60
  %v62 = vmul.f32 %v45, %v61
  %v63 = vpack.c.bf16 %v62, %v62
  %v64 = vld [vmem:[%s6] sm:$0xf]
  %v65 = vld [vmem:[%s6 + $0x4] sm:$0xf]
  %v66 = vld [vmem:[%s6 + $0x8] sm:$0xf]
  %v67 = vld [vmem:[%s6 + $0xc] sm:$0xf]
  %v68 = vld [vmem:[%s7] sm:$0x1]
  %v70 = vlaneseq
  %v71 = vshrl.u32 %v70, 7
  %v72 = vsub.s32 0, %v71
  %v73 = vrot.slane %v68, %v72
  %v79 = vunpack.c.l.b16 %v64
  %v80 = vunpack.c.l.b16 %v65
  %v81 = vunpack.c.l.b16 %v66
  %v82 = vunpack.c.l.b16 %v67
  %v83 = vpack.c.b16 %v80, %v79
  %v84 = vpack.c.b16 %v82, %v81
  %vm87 = vcmask 261120
  %v89 = vsel %vm87, %v63, 0
  %91 = vmatprep.subr.bf16.mxu0 0
  %92 = vmatpush1.bf16.msra.mxu0 %v83
  %93 = vmatprep.subr.bf16.mxu0 0
  %94 = vmatpush1.bf16.msra.mxu0 %v84
  %95 = vmatprep.subr.bf16.mxu0 0
  %96 = vmatpush1.bf16.msra.mxu0 0
  %97 = vmatprep.subr.bf16.mxu0 0
  %98 = vmatpush1.bf16.msra.mxu0 0
  %99 = vmatprep.subr.bf16.mxu0 0
  %100 = vmatpush1.bf16.msra.mxu0 0
  %101 = vmatprep.subr.bf16.mxu0 0
  %102 = vmatpush1.bf16.msra.mxu0 0
  %103 = vmatprep.subr.bf16.mxu0 0
  %104 = vmatpush1.bf16.msra.mxu0 0
  %105 = vmatprep.subr.bf16.mxu0 0
  %106 = vmatpush1.bf16.msra.mxu0 0
  %107 = vmatprep.subr.bf16.mxu0 0
  %108 = vmatpush1.bf16.msra.mxu0 0
  %109 = vmatprep.subr.bf16.mxu0 0
  %110 = vmatpush1.bf16.msra.mxu0 0
  %111 = vmatprep.subr.bf16.mxu0 0
  %112 = vmatpush1.bf16.msra.mxu0 0
  %113 = vmatprep.subr.bf16.mxu0 0
  %114 = vmatpush1.bf16.msra.mxu0 0
  %115 = vmatprep.subr.bf16.mxu0 0
  %116 = vmatpush1.bf16.msra.mxu0 0
  %117 = vmatprep.subr.bf16.mxu0 0
  %118 = vmatpush1.bf16.msra.mxu0 0
  %119 = vmatprep.subr.bf16.mxu0 0
  %120 = vmatpush1.bf16.msra.mxu0 0
  %121 = vmatprep.subr.bf16.mxu0 0
  %122 = vmatpush1.bf16.msra.mxu0 0
  %123 = vmatprep.mubr.bf16.mxu0 0
  %124 = vmatmul.mubr.bf16.gmra.mrb[0].mxu0 %v89
  %v125 = vpop.f32.mrb[0].mxu0
  %v126 = vadd.f32 %v73, %v125
  %v127 = vpop.f32.mrb[0].mxu0
  %v128 = vpop.f32.mrb[0].mxu0
  %v129 = vpop.f32.mrb[0].mxu0
  %130 = vdwg.mxu0
  %v131 = vld [vmem:[%s0] sm:$0xff]
  %s132 = scalar_lea.vmem %s0, 8
  %v133 = vld [vmem:[%s132] sm:$0xff]
  %v135 = vrot.slane %v131, 6
  %vm137 = vcmask 1041408
  %v138 = vsel %vm137, 0.0, %v135
  %v139 = vsel %vm137, %v135, 0.0
  %vm142 = vcmask 1046528
  %v143 = vrot.slane %v138, 1
  %v144 = vrot.slane %v139, 1
  %v145 = vsel %vm142, %v143, %v144
  %146 = vrot.lane.b32.xlu0 %v145, 32
  %v147 = vpop.permute.xlu0 %146
  %vm149 = vcmask 1045504
  %v150 = vrot.slane %v138, 2
  %v151 = vrot.slane %v139, 2
  %v152 = vsel %vm149, %v150, %v151
  %153 = vrot.lane.b32.xlu0 %v152, 64
  %v154 = vpop.permute.xlu0 %153
  %vm156 = vcmask 1044480
  %v157 = vrot.slane %v138, 3
  %v158 = vrot.slane %v139, 3
  %v159 = vsel %vm156, %v157, %v158
  %160 = vrot.lane.b32.xlu0 %v159, 96
  %v161 = vpop.permute.xlu0 %160
  %vm163 = vcmask 1043456
  %v164 = vrot.slane %v138, 4
  %v165 = vrot.slane %v139, 4
  %v166 = vsel %vm163, %v164, %v165
  %v168 = vsel %vm87, %v138, %v147
  %vm169 = vcmask 523264
  %v170 = vsel %vm169, %v168, %v154
  %vm171 = vcmask 785408
  %v172 = vsel %vm171, %v170, %v161
  %v174 = vrot.slane %v133, 6
  %v176 = vsel %vm137, 0.0, %v174
  %v177 = vsel %vm137, %v174, 0.0
  %v180 = vrot.slane %v176, 1
  %v181 = vrot.slane %v177, 1
  %v182 = vsel %vm142, %v180, %v181
  %183 = vrot.lane.b32.xlu0 %v182, 32
  %v184 = vpop.permute.xlu0 %183
  %v186 = vrot.slane %v176, 2
  %v187 = vrot.slane %v177, 2
  %v188 = vsel %vm149, %v186, %v187
  %189 = vrot.lane.b32.xlu0 %v188, 64
  %v190 = vpop.permute.xlu0 %189
  %v192 = vrot.slane %v176, 3
  %v193 = vrot.slane %v177, 3
  %v194 = vsel %vm156, %v192, %v193
  %195 = vrot.lane.b32.xlu0 %v194, 96
  %v196 = vpop.permute.xlu0 %195
  %v198 = vrot.slane %v176, 4
  %v199 = vrot.slane %v177, 4
  %v200 = vsel %vm163, %v198, %v199
  %v202 = vsel %vm87, %v176, %v184
  %v203 = vsel %vm169, %v202, %v190
  %v204 = vsel %vm171, %v203, %v196
  %v205 = vpack.c.bf16 %v204, %v172
  %v206 = vpack.c.bf16 %v200, %v166
  %v207 = vld [vmem:[%s2] sm:$0xf]
  %v208 = vld [vmem:[%s2 + $0x4] sm:$0xf]
  %v209 = vld [vmem:[%s2 + $0x8] sm:$0xf]
  %v210 = vld [vmem:[%s2 + $0xc] sm:$0xf]
  %v211 = vld [vmem:[%s2 + $0x10] sm:$0xf]
  %v212 = vld [vmem:[%s2 + $0x14] sm:$0xf]
  %v213 = vld [vmem:[%s2 + $0x18] sm:$0xf]
  %v214 = vld [vmem:[%s2 + $0x1c] sm:$0xf]
  %v215 = vld [vmem:[%s2 + $0x20] sm:$0xf]
  %v216 = vld [vmem:[%s2 + $0x24] sm:$0xf]
  %v217 = vld [vmem:[%s2 + $0x28] sm:$0xf]
  %v218 = vld [vmem:[%s2 + $0x2c] sm:$0xf]
  %v219 = vld [vmem:[%s2 + $0x30] sm:$0xf]
  %v220 = vld [vmem:[%s2 + $0x34] sm:$0xf]
  %v221 = vld [vmem:[%s2 + $0x38] sm:$0xf]
  %v222 = vld [vmem:[%s2 + $0x3c] sm:$0xf]
  %v223 = vld [vmem:[%s2 + $0x40] sm:$0xf]
  %v224 = vld [vmem:[%s2 + $0x44] sm:$0xf]
  %v225 = vld [vmem:[%s2 + $0x48] sm:$0xf]
  %v226 = vld [vmem:[%s2 + $0x4c] sm:$0xf]
  %v227 = vld [vmem:[%s3] sm:$0x1]
  %v229 = vlaneseq
  %v230 = vshrl.u32 %v229, 7
  %v231 = vsub.s32 0, %v230
  %v232 = vrot.slane %v227, %v231
  %v254 = vunpack.c.l.b16 %v207
  %v255 = vunpack.c.l.b16 %v208
  %v256 = vunpack.c.l.b16 %v209
  %v257 = vunpack.c.l.b16 %v210
  %v258 = vunpack.c.l.b16 %v211
  %v259 = vunpack.c.l.b16 %v212
  %v260 = vunpack.c.l.b16 %v213
  %v261 = vunpack.c.l.b16 %v214
  %v262 = vunpack.c.l.b16 %v215
  %v263 = vunpack.c.l.b16 %v216
  %v264 = vunpack.c.l.b16 %v217
  %v265 = vunpack.c.l.b16 %v218
  %v266 = vunpack.c.l.b16 %v219
  %v267 = vunpack.c.l.b16 %v220
  %v268 = vunpack.c.l.b16 %v221
  %v269 = vunpack.c.l.b16 %v222
  %v270 = vunpack.c.l.b16 %v223
  %v271 = vunpack.c.l.b16 %v224
  %v272 = vunpack.c.l.b16 %v225
  %v273 = vunpack.c.l.b16 %v226
  %v274 = vpack.c.b16 %v255, %v254
  %v275 = vpack.c.b16 %v257, %v256
  %v276 = vpack.c.b16 %v259, %v258
  %v277 = vpack.c.b16 %v261, %v260
  %v278 = vpack.c.b16 %v263, %v262
  %v279 = vpack.c.b16 %v265, %v264
  %v280 = vpack.c.b16 %v267, %v266
  %v281 = vpack.c.b16 %v269, %v268
  %v282 = vpack.c.b16 %v271, %v270
  %v283 = vpack.c.b16 %v273, %v272
  %v295 = vsel %vm87, %v206, 0
  %297 = vmatprep.subr.bf16.mxu0 0
  %298 = vmatpush1.bf16.msra.mxu0 %v274
  %299 = vmatprep.subr.bf16.mxu0 0
  %300 = vmatpush1.bf16.msra.mxu0 %v275
  %301 = vmatprep.subr.bf16.mxu0 0
  %302 = vmatpush1.bf16.msra.mxu0 %v276
  %303 = vmatprep.subr.bf16.mxu0 0
  %304 = vmatpush1.bf16.msra.mxu0 %v277
  %305 = vmatprep.subr.bf16.mxu0 0
  %306 = vmatpush1.bf16.msra.mxu0 %v278
  %307 = vmatprep.subr.bf16.mxu0 0
  %308 = vmatpush1.bf16.msra.mxu0 %v279
  %309 = vmatprep.subr.bf16.mxu0 0
  %310 = vmatpush1.bf16.msra.mxu0 %v280
  %311 = vmatprep.subr.bf16.mxu0 0
  %312 = vmatpush1.bf16.msra.mxu0 %v281
  %313 = vmatprep.subr.bf16.mxu0 0
  %314 = vmatpush1.bf16.msra.mxu0 %v282
  %315 = vmatprep.subr.bf16.mxu0 0
  %316 = vmatpush1.bf16.msra.mxu0 %v283
  %317 = vmatprep.subr.bf16.mxu0 0
  %318 = vmatpush1.bf16.msra.mxu0 0
  %319 = vmatprep.subr.bf16.mxu0 0
  %320 = vmatpush1.bf16.msra.mxu0 0
  %321 = vmatprep.subr.bf16.mxu0 0
  %322 = vmatpush1.bf16.msra.mxu0 0
  %323 = vmatprep.subr.bf16.mxu0 0
  %324 = vmatpush1.bf16.msra.mxu0 0
  %325 = vmatprep.subr.bf16.mxu0 0
  %326 = vmatpush1.bf16.msra.mxu0 0
  %327 = vmatprep.subr.bf16.mxu0 0
  %328 = vmatpush1.bf16.msra.mxu0 0
  %329 = vmatprep.mubr.bf16.mxu0 %v295
  %330 = vmatmul.mubr.bf16.gmra.mrb[0].mxu0 %v205
  %v331 = vpop.f32.mrb[0].mxu0
  %v332 = vadd.f32 %v232, %v331
  %v333 = vpop.f32.mrb[0].mxu0
  %v334 = vpop.f32.mrb[0].mxu0
  %v335 = vadd.f32 %v232, %v334
  %v336 = vpop.f32.mrb[0].mxu0
  %337 = vdwg.mxu0
  %v338 = vld [vmem:[%s4] sm:$0x1]
  %v339 = vld [vmem:[%s5] sm:$0x1]
  %v340 = vld [vmem:[%s12] sm:$0xff]
  %v341 = vld [vmem:[%s12 + $0x8] sm:$0xff]
  %v342 = vld [vmem:[%s12 + $0x10] sm:$0xff]
  %v343 = vld [vmem:[%s12 + $0x18] sm:$0xff]
  %v344 = vsel %vm87, %v332, 0.0
  %v345 = vrot.slane %v344, 4
  %v346 = vadd.f32 %v344, %v345
  %v347 = vrot.slane %v346, 2
  %v348 = vadd.f32 %v346, %v347
  %v349 = vrot.slane %v348, 1
  %v350 = vadd.f32 %v348, %v349
  %v351 = vmul.f32 %v332, %v332
  %v352 = vsel %vm87, %v351, 0.0
  %v353 = vrot.slane %v352, 4
  %v354 = vadd.f32 %v352, %v353
  %v355 = vrot.slane %v354, 2
  %v356 = vadd.f32 %v354, %v355
  %v357 = vrot.slane %v356, 1
  %v358 = vadd.f32 %v356, %v357
  %v359 = vsel %vm87, %v335, 0.0
  %v360 = vrot.slane %v359, 4
  %v361 = vadd.f32 %v359, %v360
  %v362 = vrot.slane %v361, 2
  %v363 = vadd.f32 %v361, %v362
  %v364 = vrot.slane %v363, 1
  %v365 = vadd.f32 %v363, %v364
  %v366 = vmul.f32 %v335, %v335
  %v367 = vsel %vm87, %v366, 0.0
  %v368 = vrot.slane %v367, 4
  %v369 = vadd.f32 %v367, %v368
  %v370 = vrot.slane %v369, 2
  %v371 = vadd.f32 %v369, %v370
  %v372 = vrot.slane %v371, 1
  %v373 = vadd.f32 %v371, %v372
  %vm374 = vcmask 1040384
  %v375 = vsel %vm374, %v350, %v358
  %v376 = vsel %vm137, %v375, %v365
  %vm377 = vcmask 1042432
  %v378 = vsel %vm377, %v376, %v373
  %v380 = vsel %vm87, %v378, 0
  %382 = vmatprep.subr.mxu0 0.0
  %383 = vmatpush1.msra.mxu0 %v340
  %384 = vmatprep.subr.mxu0 0.0
  %385 = vmatpush1.msra.mxu0 %v341
  %386 = vmatprep.subr.mxu0 0.0
  %387 = vmatpush1.msra.mxu0 %v342
  %388 = vmatprep.subr.mxu0 0.0
  %389 = vmatpush1.msra.mxu0 %v343
  %390 = vmatprep.subr.mxu0 0.0
  %391 = vmatpush1.msra.mxu0 0.0
  %392 = vmatprep.subr.mxu0 0.0
  %393 = vmatpush1.msra.mxu0 0.0
  %394 = vmatprep.subr.mxu0 0.0
  %395 = vmatpush1.msra.mxu0 0.0
  %396 = vmatprep.subr.mxu0 0.0
  %397 = vmatpush1.msra.mxu0 0.0
  %398 = vmatprep.subr.mxu0 0.0
  %399 = vmatpush1.msra.mxu0 0.0
  %400 = vmatprep.subr.mxu0 0.0
  %401 = vmatpush1.msra.mxu0 0.0
  %402 = vmatprep.subr.mxu0 0.0
  %403 = vmatpush1.msra.mxu0 0.0
  %404 = vmatprep.subr.mxu0 0.0
  %405 = vmatpush1.msra.mxu0 0.0
  %406 = vmatprep.subr.mxu0 0.0
  %407 = vmatpush1.msra.mxu0 0.0
  %408 = vmatprep.subr.mxu0 0.0
  %409 = vmatpush1.msra.mxu0 0.0
  %410 = vmatprep.subr.mxu0 0.0
  %411 = vmatpush1.msra.mxu0 0.0
  %412 = vmatprep.subr.mxu0 0.0
  %413 = vmatpush1.msra.mxu0 0.0
  %414 = vmatprep.subr.mxu0 0.0
  %415 = vmatpush1.msra.mxu0 0.0
  %416 = vmatprep.subr.mxu0 0.0
  %417 = vmatpush1.msra.mxu0 0.0
  %418 = vmatprep.subr.mxu0 0.0
  %419 = vmatpush1.msra.mxu0 0.0
  %420 = vmatprep.subr.mxu0 0.0
  %421 = vmatpush1.msra.mxu0 0.0
  %422 = vmatprep.subr.mxu0 0.0
  %423 = vmatpush1.msra.mxu0 0.0
  %424 = vmatprep.subr.mxu0 0.0
  %425 = vmatpush1.msra.mxu0 0.0
  %426 = vmatprep.subr.mxu0 0.0
  %427 = vmatpush1.msra.mxu0 0.0
  %428 = vmatprep.subr.mxu0 0.0
  %429 = vmatpush1.msra.mxu0 0.0
  %430 = vmatprep.subr.mxu0 0.0
  %431 = vmatpush1.msra.mxu0 0.0
  %432 = vmatprep.subr.mxu0 0.0
  %433 = vmatpush1.msra.mxu0 0.0
  %434 = vmatprep.subr.mxu0 0.0
  %435 = vmatpush1.msra.mxu0 0.0
  %436 = vmatprep.subr.mxu0 0.0
  %437 = vmatpush1.msra.mxu0 0.0
  %438 = vmatprep.subr.mxu0 0.0
  %439 = vmatpush1.msra.mxu0 0.0
  %440 = vmatprep.subr.mxu0 0.0
  %441 = vmatpush1.msra.mxu0 0.0
  %442 = vmatprep.subr.mxu0 0.0
  %443 = vmatpush1.msra.mxu0 0.0
  %444 = vmatprep.subr.mxu0 0.0
  %445 = vmatpush1.msra.mxu0 0.0
  %446 = vmatprep.mubr.f32.mxu0 0.0
  %447 = vmatmul.mubr.f32.gmra.mrb[0].mxu0 %v380
  %v448 = vpop.f32.mrb[0].mxu0
  %v449 = vadd.f32 0.0, %v448
  %v450 = vpop.f32.mrb[0].mxu0
  %451 = vdwg.mxu0
  %v452 = vmul.f32 %v449, %v449
  %v454 = vrot.slane %v452, 7
  %v456 = vsub.f32 %v449, %v454
  %v457 = vmax.f32 %v456, 0.0
  %v458 = vlaneseq
  %v459 = vshrl.u32 %v458, 7
  %v460 = vsub.s32 0, %v459
  %v461 = vrot.slane %v449, %v460
  %v462 = vsub.f32 %v332, %v461
  %v463 = vadd.f32 %v457, 1e-05
  %v464 = vrsqrt.pop %v463
  %v465 = vlaneseq
  %v466 = vshrl.u32 %v465, 7
  %v467 = vsub.s32 1, %v466
  %v468 = vrot.slane %v464, %v467
  %v469 = vmul.f32 %v462, %v468
  %v471 = vlaneseq
  %v472 = vshrl.u32 %v471, 7
  %v473 = vsub.s32 0, %v472
  %v474 = vrot.slane %v338, %v473
  %v476 = vmul.f32 %v469, %v474
  %v478 = vlaneseq
  %v479 = vshrl.u32 %v478, 7
  %v480 = vsub.s32 0, %v479
  %v481 = vrot.slane %v339, %v480
  %v483 = vadd.f32 %v476, %v481
  %v484 = vand.u32 2147483647, %v483
  %v485 = vsub.f32 0.0, %v484
  %v486 = vmul.f32 %v485, 1.442695
  %v487 = vpow.pop %v486
  %v488 = vadd.f32 %v487, 1.0
  %v489 = vlog2.pop %v488
  %v490 = vmul.f32 %v489, 0.6931472
  %v491 = vmul.f32 -0.5, %v487
  %v492 = vadd.f32 %v491, 1.0
  %v493 = vmul.f32 %v492, %v487
  %v494 = vand.u32 2147483647, %v487
  %vm495 = vcmp.lt.f32.partialorder %v494, 0.0004427343
  %v496 = vsel %vm495, %v493, %v490
  %v497 = vmax.f32 %v483, 0.0
  %v498 = vadd.f32 %v496, %v497
  %v499 = vtanh.pop %v498
  %v500 = vmul.f32 %v483, %v499
  %v501 = vlaneseq
  %v502 = vshrl.u32 %v501, 7
  %v503 = vsub.s32 2, %v502
  %v504 = vrot.slane %v449, %v503
  %v505 = vsub.f32 %v335, %v504
  %v506 = vlaneseq
  %v507 = vshrl.u32 %v506, 7
  %v508 = vsub.s32 3, %v507
  %v509 = vrot.slane %v464, %v508
  %v510 = vmul.f32 %v505, %v509
  %v511 = vmul.f32 %v510, %v474
  %v512 = vadd.f32 %v511, %v481
  %v513 = vand.u32 2147483647, %v512
  %v514 = vsub.f32 0.0, %v513
  %v515 = vmul.f32 %v514, 1.442695
  %v516 = vpow.pop %v515
  %v517 = vadd.f32 %v516, 1.0
  %v518 = vlog2.pop %v517
  %v519 = vmul.f32 %v518, 0.6931472
  %v520 = vmul.f32 -0.5, %v516
  %v521 = vadd.f32 %v520, 1.0
  %v522 = vmul.f32 %v521, %v516
  %v523 = vand.u32 2147483647, %v516
  %vm524 = vcmp.lt.f32.partialorder %v523, 0.0004427343
  %v525 = vsel %vm524, %v522, %v519
  %v526 = vmax.f32 %v512, 0.0
  %v527 = vadd.f32 %v525, %v526
  %v528 = vtanh.pop %v527
  %v529 = vmul.f32 %v512, %v528
  %v530 = vlaneseq
  %v531 = vshrl.u32 %v530, 7
  %v532 = vsub.s32 0, %v531
  %v533 = vrot.slane %v126, %v532
  %v534 = vadd.f32 %v500, %v533
  %v535 = vlaneseq
  %v536 = vshrl.u32 %v535, 7
  %v537 = vsub.s32 1, %v536
  %v538 = vrot.slane %v126, %v537
  %v539 = vadd.f32 %v529, %v538
  %v541 = vrot.slane %v534, 6
  %v543 = vsel %vm137, 0.0, %v541
  %v544 = vsel %vm137, %v541, 0.0
  %v547 = vrot.slane %v543, 1
  %v548 = vrot.slane %v544, 1
  %v549 = vsel %vm142, %v547, %v548
  %550 = vrot.lane.b32.xlu0 %v549, 32
  %v551 = vpop.permute.xlu0 %550
  %v553 = vrot.slane %v543, 2
  %v554 = vrot.slane %v544, 2
  %v555 = vsel %vm149, %v553, %v554
  %556 = vrot.lane.b32.xlu0 %v555, 64
  %v557 = vpop.permute.xlu0 %556
  %v559 = vrot.slane %v543, 3
  %v560 = vrot.slane %v544, 3
  %v561 = vsel %vm156, %v559, %v560
  %562 = vrot.lane.b32.xlu0 %v561, 96
  %v563 = vpop.permute.xlu0 %562
  %v565 = vrot.slane %v543, 4
  %v566 = vrot.slane %v544, 4
  %v567 = vsel %vm163, %v565, %v566
  %v569 = vsel %vm87, %v543, %v551
  %v570 = vsel %vm169, %v569, %v557
  %v571 = vsel %vm171, %v570, %v563
  %v573 = vrot.slane %v539, 6
  %v575 = vsel %vm137, 0.0, %v573
  %v576 = vsel %vm137, %v573, 0.0
  %v579 = vrot.slane %v575, 1
  %v580 = vrot.slane %v576, 1
  %v581 = vsel %vm142, %v579, %v580
  %582 = vrot.lane.b32.xlu0 %v581, 32
  %v583 = vpop.permute.xlu0 %582
  %v585 = vrot.slane %v575, 2
  %v586 = vrot.slane %v576, 2
  %v587 = vsel %vm149, %v585, %v586
  %588 = vrot.lane.b32.xlu0 %v587, 64
  %v589 = vpop.permute.xlu0 %588
  %v591 = vrot.slane %v575, 3
  %v592 = vrot.slane %v576, 3
  %v593 = vsel %vm156, %v591, %v592
  %594 = vrot.lane.b32.xlu0 %v593, 96
  %v595 = vpop.permute.xlu0 %594
  %v597 = vrot.slane %v575, 4
  %v598 = vrot.slane %v576, 4
  %v599 = vsel %vm163, %v597, %v598
  %v601 = vsel %vm87, %v575, %v583
  %v602 = vsel %vm169, %v601, %v589
  %v603 = vsel %vm171, %v602, %v595
  %v604 = vpack.c.bf16 %v603, %v571
  %v605 = vpack.c.bf16 %v599, %v567
  %v606 = vld [vmem:[%s8] sm:$0xf]
  %v607 = vld [vmem:[%s8 + $0x4] sm:$0xf]
  %v608 = vld [vmem:[%s8 + $0x8] sm:$0xf]
  %v609 = vld [vmem:[%s8 + $0xc] sm:$0xf]
  %v610 = vld [vmem:[%s8 + $0x10] sm:$0xf]
  %v611 = vld [vmem:[%s8 + $0x14] sm:$0xf]
  %v612 = vld [vmem:[%s8 + $0x18] sm:$0xf]
  %v613 = vld [vmem:[%s8 + $0x1c] sm:$0xf]
  %v614 = vld [vmem:[%s8 + $0x20] sm:$0xf]
  %v615 = vld [vmem:[%s8 + $0x24] sm:$0xf]
  %v616 = vld [vmem:[%s8 + $0x28] sm:$0xf]
  %v617 = vld [vmem:[%s8 + $0x2c] sm:$0xf]
  %v618 = vld [vmem:[%s8 + $0x30] sm:$0xf]
  %v619 = vld [vmem:[%s8 + $0x34] sm:$0xf]
  %v620 = vld [vmem:[%s8 + $0x38] sm:$0xf]
  %v621 = vld [vmem:[%s8 + $0x3c] sm:$0xf]
  %v622 = vld [vmem:[%s8 + $0x40] sm:$0xf]
  %v623 = vld [vmem:[%s8 + $0x44] sm:$0xf]
  %v624 = vld [vmem:[%s8 + $0x48] sm:$0xf]
  %v625 = vld [vmem:[%s8 + $0x4c] sm:$0xf]
  %v626 = vld [vmem:[%s9] sm:$0x1]
  %v628 = vlaneseq
  %v629 = vshrl.u32 %v628, 7
  %v630 = vsub.s32 0, %v629
  %v631 = vrot.slane %v626, %v630
  %v653 = vunpack.c.l.b16 %v606
  %v654 = vunpack.c.l.b16 %v607
  %v655 = vunpack.c.l.b16 %v608
  %v656 = vunpack.c.l.b16 %v609
  %v657 = vunpack.c.l.b16 %v610
  %v658 = vunpack.c.l.b16 %v611
  %v659 = vunpack.c.l.b16 %v612
  %v660 = vunpack.c.l.b16 %v613
  %v661 = vunpack.c.l.b16 %v614
  %v662 = vunpack.c.l.b16 %v615
  %v663 = vunpack.c.l.b16 %v616
  %v664 = vunpack.c.l.b16 %v617
  %v665 = vunpack.c.l.b16 %v618
  %v666 = vunpack.c.l.b16 %v619
  %v667 = vunpack.c.l.b16 %v620
  %v668 = vunpack.c.l.b16 %v621
  %v669 = vunpack.c.l.b16 %v622
  %v670 = vunpack.c.l.b16 %v623
  %v671 = vunpack.c.l.b16 %v624
  %v672 = vunpack.c.l.b16 %v625
  %v673 = vpack.c.b16 %v654, %v653
  %v674 = vpack.c.b16 %v656, %v655
  %v675 = vpack.c.b16 %v658, %v657
  %v676 = vpack.c.b16 %v660, %v659
  %v677 = vpack.c.b16 %v662, %v661
  %v678 = vpack.c.b16 %v664, %v663
  %v679 = vpack.c.b16 %v666, %v665
  %v680 = vpack.c.b16 %v668, %v667
  %v681 = vpack.c.b16 %v670, %v669
  %v682 = vpack.c.b16 %v672, %v671
  %v694 = vsel %vm87, %v605, 0
  %696 = vmatprep.subr.bf16.mxu0 0
  %697 = vmatpush1.bf16.msra.mxu0 %v673
  %698 = vmatprep.subr.bf16.mxu0 0
  %699 = vmatpush1.bf16.msra.mxu0 %v674
  %700 = vmatprep.subr.bf16.mxu0 0
  %701 = vmatpush1.bf16.msra.mxu0 %v675
  %702 = vmatprep.subr.bf16.mxu0 0
  %703 = vmatpush1.bf16.msra.mxu0 %v676
  %704 = vmatprep.subr.bf16.mxu0 0
  %705 = vmatpush1.bf16.msra.mxu0 %v677
  %706 = vmatprep.subr.bf16.mxu0 0
  %707 = vmatpush1.bf16.msra.mxu0 %v678
  %708 = vmatprep.subr.bf16.mxu0 0
  %709 = vmatpush1.bf16.msra.mxu0 %v679
  %710 = vmatprep.subr.bf16.mxu0 0
  %711 = vmatpush1.bf16.msra.mxu0 %v680
  %712 = vmatprep.subr.bf16.mxu0 0
  %713 = vmatpush1.bf16.msra.mxu0 %v681
  %714 = vmatprep.subr.bf16.mxu0 0
  %715 = vmatpush1.bf16.msra.mxu0 %v682
  %716 = vmatprep.subr.bf16.mxu0 0
  %717 = vmatpush1.bf16.msra.mxu0 0
  %718 = vmatprep.subr.bf16.mxu0 0
  %719 = vmatpush1.bf16.msra.mxu0 0
  %720 = vmatprep.subr.bf16.mxu0 0
  %721 = vmatpush1.bf16.msra.mxu0 0
  %722 = vmatprep.subr.bf16.mxu0 0
  %723 = vmatpush1.bf16.msra.mxu0 0
  %724 = vmatprep.subr.bf16.mxu0 0
  %725 = vmatpush1.bf16.msra.mxu0 0
  %726 = vmatprep.subr.bf16.mxu0 0
  %727 = vmatpush1.bf16.msra.mxu0 0
  %728 = vmatprep.mubr.bf16.mxu0 %v694
  %729 = vmatmul.mubr.bf16.gmra.mrb[0].mxu0 %v604
  %v730 = vpop.f32.mrb[0].mxu0
  %v731 = vadd.f32 %v631, %v730
  %v732 = vpop.f32.mrb[0].mxu0
  %v733 = vpop.f32.mrb[0].mxu0
  %v734 = vadd.f32 %v631, %v733
  %v735 = vpop.f32.mrb[0].mxu0
  %736 = vdwg.mxu0
  %v737 = vld [vmem:[%s10] sm:$0x1]
  %v738 = vld [vmem:[%s11] sm:$0x1]
  %v739 = vsel %vm87, %v731, 0.0
  %v740 = vrot.slane %v739, 4
  %v741 = vadd.f32 %v739, %v740
  %v742 = vrot.slane %v741, 2
  %v743 = vadd.f32 %v741, %v742
  %v744 = vrot.slane %v743, 1
  %v745 = vadd.f32 %v743, %v744
  %v746 = vmul.f32 %v731, %v731
  %v747 = vsel %vm87, %v746, 0.0
  %v748 = vrot.slane %v747, 4
  %v749 = vadd.f32 %v747, %v748
  %v750 = vrot.slane %v749, 2
  %v751 = vadd.f32 %v749, %v750
  %v752 = vrot.slane %v751, 1
  %v753 = vadd.f32 %v751, %v752
  %v754 = vsel %vm87, %v734, 0.0
  %v755 = vrot.slane %v754, 4
  %v756 = vadd.f32 %v754, %v755
  %v757 = vrot.slane %v756, 2
  %v758 = vadd.f32 %v756, %v757
  %v759 = vrot.slane %v758, 1
  %v760 = vadd.f32 %v758, %v759
  %v761 = vmul.f32 %v734, %v734
  %v762 = vsel %vm87, %v761, 0.0
  %v763 = vrot.slane %v762, 4
  %v764 = vadd.f32 %v762, %v763
  %v765 = vrot.slane %v764, 2
  %v766 = vadd.f32 %v764, %v765
  %v767 = vrot.slane %v766, 1
  %v768 = vadd.f32 %v766, %v767
  %v769 = vsel %vm374, %v745, %v753
  %v770 = vsel %vm137, %v769, %v760
  %v771 = vsel %vm377, %v770, %v768
  %v773 = vsel %vm87, %v771, 0
  %775 = vmatprep.subr.mxu0 0.0
  %776 = vmatpush1.msra.mxu0 %v340
  %777 = vmatprep.subr.mxu0 0.0
  %778 = vmatpush1.msra.mxu0 %v341
  %779 = vmatprep.subr.mxu0 0.0
  %780 = vmatpush1.msra.mxu0 %v342
  %781 = vmatprep.subr.mxu0 0.0
  %782 = vmatpush1.msra.mxu0 %v343
  %783 = vmatprep.subr.mxu0 0.0
  %784 = vmatpush1.msra.mxu0 0.0
  %785 = vmatprep.subr.mxu0 0.0
  %786 = vmatpush1.msra.mxu0 0.0
  %787 = vmatprep.subr.mxu0 0.0
  %788 = vmatpush1.msra.mxu0 0.0
  %789 = vmatprep.subr.mxu0 0.0
  %790 = vmatpush1.msra.mxu0 0.0
  %791 = vmatprep.subr.mxu0 0.0
  %792 = vmatpush1.msra.mxu0 0.0
  %793 = vmatprep.subr.mxu0 0.0
  %794 = vmatpush1.msra.mxu0 0.0
  %795 = vmatprep.subr.mxu0 0.0
  %796 = vmatpush1.msra.mxu0 0.0
  %797 = vmatprep.subr.mxu0 0.0
  %798 = vmatpush1.msra.mxu0 0.0
  %799 = vmatprep.subr.mxu0 0.0
  %800 = vmatpush1.msra.mxu0 0.0
  %801 = vmatprep.subr.mxu0 0.0
  %802 = vmatpush1.msra.mxu0 0.0
  %803 = vmatprep.subr.mxu0 0.0
  %804 = vmatpush1.msra.mxu0 0.0
  %805 = vmatprep.subr.mxu0 0.0
  %806 = vmatpush1.msra.mxu0 0.0
  %807 = vmatprep.subr.mxu0 0.0
  %808 = vmatpush1.msra.mxu0 0.0
  %809 = vmatprep.subr.mxu0 0.0
  %810 = vmatpush1.msra.mxu0 0.0
  %811 = vmatprep.subr.mxu0 0.0
  %812 = vmatpush1.msra.mxu0 0.0
  %813 = vmatprep.subr.mxu0 0.0
  %814 = vmatpush1.msra.mxu0 0.0
  %815 = vmatprep.subr.mxu0 0.0
  %816 = vmatpush1.msra.mxu0 0.0
  %817 = vmatprep.subr.mxu0 0.0
  %818 = vmatpush1.msra.mxu0 0.0
  %819 = vmatprep.subr.mxu0 0.0
  %820 = vmatpush1.msra.mxu0 0.0
  %821 = vmatprep.subr.mxu0 0.0
  %822 = vmatpush1.msra.mxu0 0.0
  %823 = vmatprep.subr.mxu0 0.0
  %824 = vmatpush1.msra.mxu0 0.0
  %825 = vmatprep.subr.mxu0 0.0
  %826 = vmatpush1.msra.mxu0 0.0
  %827 = vmatprep.subr.mxu0 0.0
  %828 = vmatpush1.msra.mxu0 0.0
  %829 = vmatprep.subr.mxu0 0.0
  %830 = vmatpush1.msra.mxu0 0.0
  %831 = vmatprep.subr.mxu0 0.0
  %832 = vmatpush1.msra.mxu0 0.0
  %833 = vmatprep.subr.mxu0 0.0
  %834 = vmatpush1.msra.mxu0 0.0
  %835 = vmatprep.subr.mxu0 0.0
  %836 = vmatpush1.msra.mxu0 0.0
  %837 = vmatprep.subr.mxu0 0.0
  %838 = vmatpush1.msra.mxu0 0.0
  %839 = vmatprep.mubr.f32.mxu0 0.0
  %840 = vmatmul.mubr.f32.gmra.mrb[0].mxu0 %v773
  %v841 = vpop.f32.mrb[0].mxu0
  %v842 = vadd.f32 0.0, %v841
  %v843 = vpop.f32.mrb[0].mxu0
  %844 = vdwg.mxu0
  %v845 = vmul.f32 %v842, %v842
  %v847 = vrot.slane %v845, 7
  %v849 = vsub.f32 %v842, %v847
  %v850 = vmax.f32 %v849, 0.0
  %v851 = vlaneseq
  %v852 = vshrl.u32 %v851, 7
  %v853 = vsub.s32 0, %v852
  %v854 = vrot.slane %v842, %v853
  %v855 = vsub.f32 %v731, %v854
  %v856 = vadd.f32 %v850, 1e-05
  %v857 = vrsqrt.pop %v856
  %v858 = vlaneseq
  %v859 = vshrl.u32 %v858, 7
  %v860 = vsub.s32 1, %v859
  %v861 = vrot.slane %v857, %v860
  %v862 = vmul.f32 %v855, %v861
  %v864 = vlaneseq
  %v865 = vshrl.u32 %v864, 7
  %v866 = vsub.s32 0, %v865
  %v867 = vrot.slane %v737, %v866
  %v869 = vmul.f32 %v862, %v867
  %v871 = vlaneseq
  %v872 = vshrl.u32 %v871, 7
  %v873 = vsub.s32 0, %v872
  %v874 = vrot.slane %v738, %v873
  %v876 = vadd.f32 %v869, %v874
  %v877 = vand.u32 2147483647, %v876
  %v878 = vsub.f32 0.0, %v877
  %v879 = vmul.f32 %v878, 1.442695
  %v880 = vpow.pop %v879
  %v881 = vadd.f32 %v880, 1.0
  %v882 = vlog2.pop %v881
  %v883 = vmul.f32 %v882, 0.6931472
  %v884 = vmul.f32 -0.5, %v880
  %v885 = vadd.f32 %v884, 1.0
  %v886 = vmul.f32 %v885, %v880
  %v887 = vand.u32 2147483647, %v880
  %vm888 = vcmp.lt.f32.partialorder %v887, 0.0004427343
  %v889 = vsel %vm888, %v886, %v883
  %v890 = vmax.f32 %v876, 0.0
  %v891 = vadd.f32 %v889, %v890
  %v892 = vtanh.pop %v891
  %v893 = vmul.f32 %v876, %v892
  %v894 = vlaneseq
  %v895 = vshrl.u32 %v894, 7
  %v896 = vsub.s32 2, %v895
  %v897 = vrot.slane %v842, %v896
  %v898 = vsub.f32 %v734, %v897
  %v899 = vlaneseq
  %v900 = vshrl.u32 %v899, 7
  %v901 = vsub.s32 3, %v900
  %v902 = vrot.slane %v857, %v901
  %v903 = vmul.f32 %v898, %v902
  %v904 = vmul.f32 %v903, %v867
  %v905 = vadd.f32 %v904, %v874
  %v906 = vand.u32 2147483647, %v905
  %v907 = vsub.f32 0.0, %v906
  %v908 = vmul.f32 %v907, 1.442695
  %v909 = vpow.pop %v908
  %v910 = vadd.f32 %v909, 1.0
  %v911 = vlog2.pop %v910
  %v912 = vmul.f32 %v911, 0.6931472
  %v913 = vmul.f32 -0.5, %v909
  %v914 = vadd.f32 %v913, 1.0
  %v915 = vmul.f32 %v914, %v909
  %v916 = vand.u32 2147483647, %v909
  %vm917 = vcmp.lt.f32.partialorder %v916, 0.0004427343
  %v918 = vsel %vm917, %v915, %v912
  %v919 = vmax.f32 %v905, 0.0
  %v920 = vadd.f32 %v918, %v919
  %v921 = vtanh.pop %v920
  %v922 = vmul.f32 %v905, %v921
  %v923 = vadd.f32 %v893, %v131
  %924 = vst.msk [vmem:[%s13] sm:$0xff] %vm87, %v923
  %v925 = vadd.f32 %v922, %v133
  %s926 = scalar_lea.vmem %s13, 8
  %927 = vst.msk [vmem:[%s926] sm:$0xff] %vm87, %v925
  // Predicated region
  $region54: #{concatenated_temporal_unet_fwd.21} parent=0 // pred_check
    _
  $region55: #{concatenated_temporal_unet_fwd.21} parent=0 // pred_check_branch
    %929 = sbr.rel (0) target = $region57
  $region56: #{concatenated_temporal_unet_fwd.21} parent=0 // pred_region
    _
  $region57: #{concatenated_temporal_unet_fwd.21} parent=0 // pred_fallthru
    _
  // Predicated region
  $region58: #{concatenated_temporal_unet_fwd.21} parent=0 // pred_check
    _
  $region59: #{concatenated_temporal_unet_fwd.21} parent=0 // pred_check_branch
    %931 = sbr.rel (0) target = $region61
  $region60: #{concatenated_temporal_unet_fwd.21} parent=0 // pred_region
    _
  $region61: #{concatenated_temporal_unet_fwd.21} parent=0 // pred_fallthru
    _

// kernel: concatenated_temporal_unet_fwd.22
$region0: #{concatenated_temporal_unet_fwd.22}
  #allocation0 [shape = 'u32[]', space=smem, size = 0x4, offset = 0x4, fixed_abs, tag = 'smem constant byte address 0x4 - core index']
  #allocation1 [shape = 'u32[144,128]{1,0:T(1,128)}', space=vmem, size = 0x12000, scoped, tag = 'internal scratch']
  %s0 = inlined_call_operand.vmem [shape: f32[16,64], index: 0, kind: input, shape index: {}]
  %s1 = inlined_call_operand.vmem [shape: f32[16,64], index: 1, kind: input, shape index: {}]
  %s2 = inlined_call_operand.vmem [shape: bf16[64,32], index: 2, kind: input, shape index: {}]
  %s3 = inlined_call_operand.vmem [shape: bf16[64,32], index: 3, kind: input, shape index: {}]
  %s4 = inlined_call_operand.vmem [shape: f32[1,32], index: 4, kind: input, shape index: {}]
  %s5 = inlined_call_operand.vmem [shape: f32[16,64], index: 5, kind: output, shape index: {}]
  %s6 = sld [smem:[#allocation0]]
  $region30: #{concatenated_temporal_unet_fwd.22} parent=0
    _
  %s8 = ssub.s32 1, %s6
  %s9 = scalar_select 0, %s8, %s6
  // Predicated region
  $region2: #{concatenated_temporal_unet_fwd.22} parent=0 // pred_check
    _
  $region3: #{concatenated_temporal_unet_fwd.22} parent=0 // pred_check_branch
    %11 = sbr.rel (0) target = $region5
  $region4: #{concatenated_temporal_unet_fwd.22} parent=0 // pred_region
    _
  $region5: #{concatenated_temporal_unet_fwd.22} parent=0 // pred_fallthru
    _
  // Predicated region
  $region6: #{concatenated_temporal_unet_fwd.22} parent=0 // pred_check
    _
  $region7: #{concatenated_temporal_unet_fwd.22} parent=0 // pred_check_branch
    %13 = sbr.rel (0) target = $region9
  $region8: #{concatenated_temporal_unet_fwd.22} parent=0 // pred_region
    _
  $region9: #{concatenated_temporal_unet_fwd.22} parent=0 // pred_fallthru
    _
  // Predicated region
  $region10: #{concatenated_temporal_unet_fwd.22} parent=0 // pred_check
    _
  $region11: #{concatenated_temporal_unet_fwd.22} parent=0 // pred_check_branch
    %15 = sbr.rel (0) target = $region13
  $region12: #{concatenated_temporal_unet_fwd.22} parent=0 // pred_region
    _
  $region13: #{concatenated_temporal_unet_fwd.22} parent=0 // pred_fallthru
    _
  // Predicated region
  $region14: #{concatenated_temporal_unet_fwd.22} parent=0 // pred_check
    _
  $region15: #{concatenated_temporal_unet_fwd.22} parent=0 // pred_check_branch
    %17 = sbr.rel (0) target = $region17
  $region16: #{concatenated_temporal_unet_fwd.22} parent=0 // pred_region
    _
  $region17: #{concatenated_temporal_unet_fwd.22} parent=0 // pred_fallthru
    _
  // Predicated region
  $region18: #{concatenated_temporal_unet_fwd.22} parent=0 // pred_check
    _
  $region19: #{concatenated_temporal_unet_fwd.22} parent=0 // pred_check_branch
    %19 = sbr.rel (0) target = $region21
  $region20: #{concatenated_temporal_unet_fwd.22} parent=0 // pred_region
    _
  $region21: #{concatenated_temporal_unet_fwd.22} parent=0 // pred_fallthru
    _
  %v21 = vld [vmem:[%s0] sm:$0xff]
  %v22 = vld [vmem:[%s0 + $0x8] sm:$0xff]
  %v23 = vpack.c.bf16 %v22, %v21
  %v24 = vld [vmem:[%s2] sm:$0xf]
  %v25 = vld [vmem:[%s2 + $0x4] sm:$0xf]
  %v26 = vld [vmem:[%s2 + $0x8] sm:$0xf]
  %v27 = vld [vmem:[%s2 + $0xc] sm:$0xf]
  %v28 = vld [vmem:[%s2 + $0x10] sm:$0xf]
  %v29 = vld [vmem:[%s2 + $0x14] sm:$0xf]
  %v30 = vld [vmem:[%s2 + $0x18] sm:$0xf]
  %v31 = vld [vmem:[%s2 + $0x1c] sm:$0xf]
  %v32 = vld [vmem:[%s4] sm:$0x1]
  %v34 = vlaneseq
  %v35 = vshrl.u32 %v34, 7
  %v36 = vsub.s32 0, %v35
  %v37 = vrot.slane %v32, %v36
  %v47 = vunpack.c.l.b16 %v24
  %v48 = vunpack.c.l.b16 %v25
  %v49 = vunpack.c.l.b16 %v26
  %v50 = vunpack.c.l.b16 %v27
  %v51 = vunpack.c.l.b16 %v28
  %v52 = vunpack.c.l.b16 %v29
  %v53 = vunpack.c.l.b16 %v30
  %v54 = vunpack.c.l.b16 %v31
  %v55 = vpack.c.b16 %v48, %v47
  %v56 = vpack.c.b16 %v50, %v49
  %v57 = vpack.c.b16 %v52, %v51
  %v58 = vpack.c.b16 %v54, %v53
  %vm63 = vcmask 523264
  %v65 = vsel %vm63, %v23, 0
  %67 = vmatprep.subr.bf16.mxu0 0
  %68 = vmatpush1.bf16.msra.mxu0 %v55
  %69 = vmatprep.subr.bf16.mxu0 0
  %70 = vmatpush1.bf16.msra.mxu0 %v56
  %71 = vmatprep.subr.bf16.mxu0 0
  %72 = vmatpush1.bf16.msra.mxu0 %v57
  %73 = vmatprep.subr.bf16.mxu0 0
  %74 = vmatpush1.bf16.msra.mxu0 %v58
  %75 = vmatprep.subr.bf16.mxu0 0
  %76 = vmatpush1.bf16.msra.mxu0 0
  %77 = vmatprep.subr.bf16.mxu0 0
  %78 = vmatpush1.bf16.msra.mxu0 0
  %79 = vmatprep.subr.bf16.mxu0 0
  %80 = vmatpush1.bf16.msra.mxu0 0
  %81 = vmatprep.subr.bf16.mxu0 0
  %82 = vmatpush1.bf16.msra.mxu0 0
  %83 = vmatprep.subr.bf16.mxu0 0
  %84 = vmatpush1.bf16.msra.mxu0 0
  %85 = vmatprep.subr.bf16.mxu0 0
  %86 = vmatpush1.bf16.msra.mxu0 0
  %87 = vmatprep.subr.bf16.mxu0 0
  %88 = vmatpush1.bf16.msra.mxu0 0
  %89 = vmatprep.subr.bf16.mxu0 0
  %90 = vmatpush1.bf16.msra.mxu0 0
  %91 = vmatprep.subr.bf16.mxu0 0
  %92 = vmatpush1.bf16.msra.mxu0 0
  %93 = vmatprep.subr.bf16.mxu0 0
  %94 = vmatpush1.bf16.msra.mxu0 0
  %95 = vmatprep.subr.bf16.mxu0 0
  %96 = vmatpush1.bf16.msra.mxu0 0
  %97 = vmatprep.subr.bf16.mxu0 0
  %98 = vmatpush1.bf16.msra.mxu0 0
  %99 = vmatprep.mubr.bf16.mxu0 0
  %100 = vmatmul.mubr.bf16.gmra.mrb[0].mxu0 %v65
  %v101 = vpop.f32.mrb[0].mxu0
  %v102 = vadd.f32 %v37, %v101
  %v103 = vpop.f32.mrb[0].mxu0
  %v104 = vpop.f32.mrb[0].mxu0
  %v105 = vadd.f32 %v37, %v104
  %v106 = vpop.f32.mrb[0].mxu0
  %107 = vdwg.mxu0
  %v108 = vld [vmem:[%s1] sm:$0xff]
  %v109 = vld [vmem:[%s1 + $0x8] sm:$0xff]
  %v110 = vpack.c.bf16 %v109, %v108
  %v111 = vld [vmem:[%s3] sm:$0xf]
  %v112 = vld [vmem:[%s3 + $0x4] sm:$0xf]
  %v113 = vld [vmem:[%s3 + $0x8] sm:$0xf]
  %v114 = vld [vmem:[%s3 + $0xc] sm:$0xf]
  %v115 = vld [vmem:[%s3 + $0x10] sm:$0xf]
  %v116 = vld [vmem:[%s3 + $0x14] sm:$0xf]
  %v117 = vld [vmem:[%s3 + $0x18] sm:$0xf]
  %v118 = vld [vmem:[%s3 + $0x1c] sm:$0xf]
  %v127 = vunpack.c.l.b16 %v111
  %v128 = vunpack.c.l.b16 %v112
  %v129 = vunpack.c.l.b16 %v113
  %v130 = vunpack.c.l.b16 %v114
  %v131 = vunpack.c.l.b16 %v115
  %v132 = vunpack.c.l.b16 %v116
  %v133 = vunpack.c.l.b16 %v117
  %v134 = vunpack.c.l.b16 %v118
  %v135 = vpack.c.b16 %v128, %v127
  %v136 = vpack.c.b16 %v130, %v129
  %v137 = vpack.c.b16 %v132, %v131
  %v138 = vpack.c.b16 %v134, %v133
  %v144 = vsel %vm63, %v110, 0
  %146 = vmatprep.subr.bf16.mxu0 0
  %147 = vmatpush1.bf16.msra.mxu0 %v135
  %148 = vmatprep.subr.bf16.mxu0 0
  %149 = vmatpush1.bf16.msra.mxu0 %v136
  %150 = vmatprep.subr.bf16.mxu0 0
  %151 = vmatpush1.bf16.msra.mxu0 %v137
  %152 = vmatprep.subr.bf16.mxu0 0
  %153 = vmatpush1.bf16.msra.mxu0 %v138
  %154 = vmatprep.subr.bf16.mxu0 0
  %155 = vmatpush1.bf16.msra.mxu0 0
  %156 = vmatprep.subr.bf16.mxu0 0
  %157 = vmatpush1.bf16.msra.mxu0 0
  %158 = vmatprep.subr.bf16.mxu0 0
  %159 = vmatpush1.bf16.msra.mxu0 0
  %160 = vmatprep.subr.bf16.mxu0 0
  %161 = vmatpush1.bf16.msra.mxu0 0
  %162 = vmatprep.subr.bf16.mxu0 0
  %163 = vmatpush1.bf16.msra.mxu0 0
  %164 = vmatprep.subr.bf16.mxu0 0
  %165 = vmatpush1.bf16.msra.mxu0 0
  %166 = vmatprep.subr.bf16.mxu0 0
  %167 = vmatpush1.bf16.msra.mxu0 0
  %168 = vmatprep.subr.bf16.mxu0 0
  %169 = vmatpush1.bf16.msra.mxu0 0
  %170 = vmatprep.subr.bf16.mxu0 0
  %171 = vmatpush1.bf16.msra.mxu0 0
  %172 = vmatprep.subr.bf16.mxu0 0
  %173 = vmatpush1.bf16.msra.mxu0 0
  %174 = vmatprep.subr.bf16.mxu0 0
  %175 = vmatpush1.bf16.msra.mxu0 0
  %176 = vmatprep.subr.bf16.mxu0 0
  %177 = vmatpush1.bf16.msra.mxu0 0
  %178 = vmatprep.mubr.bf16.mxu0 0
  %179 = vmatmul.mubr.bf16.gmra.mrb[0].mxu0 %v144
  %v180 = vpop.f32.mrb[0].mxu0
  %v181 = vadd.f32 %v37, %v180
  %v182 = vpop.f32.mrb[0].mxu0
  %v183 = vpop.f32.mrb[0].mxu0
  %v184 = vadd.f32 %v37, %v183
  %v185 = vpop.f32.mrb[0].mxu0
  %186 = vdwg.mxu0
  %189 = vrot.lane.b32.xlu0 %v181, 32
  %v190 = vpop.permute.xlu0 %189
  %191 = vrot.lane.b32.xlu0 %v184, 32
  %v192 = vpop.permute.xlu0 %191
  %vm195 = vcmask 261120
  %v196 = vsel %vm195, %v102, %v190
  %v197 = vsel %vm195, %v105, %v192
  %198 = vst.msk [vmem:[%s5] sm:$0xff] %vm63, %v196
  %199 = vst.msk [vmem:[%s5 + $0x8] sm:$0xff] %vm63, %v197
  // Predicated region
  $region22: #{concatenated_temporal_unet_fwd.22} parent=0 // pred_check
    _
  $region23: #{concatenated_temporal_unet_fwd.22} parent=0 // pred_check_branch
    %201 = sbr.rel (0) target = $region25
  $region24: #{concatenated_temporal_unet_fwd.22} parent=0 // pred_region
    _
  $region25: #{concatenated_temporal_unet_fwd.22} parent=0 // pred_fallthru
    _
  // Predicated region
  $region26: #{concatenated_temporal_unet_fwd.22} parent=0 // pred_check
    _
  $region27: #{concatenated_temporal_unet_fwd.22} parent=0 // pred_check_branch
    %203 = sbr.rel (0) target = $region29
  $region28: #{concatenated_temporal_unet_fwd.22} parent=0 // pred_region
    _
  $region29: #{concatenated_temporal_unet_fwd.22} parent=0 // pred_fallthru
    _

// kernel: concatenated_temporal_unet_fwd.20
$region0: #{concatenated_temporal_unet_fwd.20}
  #allocation0 [shape = 'u32[]', space=smem, size = 0x4, offset = 0x4, fixed_abs, tag = 'smem constant byte address 0x4 - core index']
  #allocation1 [shape = 'u32[144,128]{1,0:T(1,128)}', space=vmem, size = 0x12000, scoped, tag = 'internal scratch']
  %s0 = inlined_call_operand.vmem [shape: f32[2,8,128], index: 0, kind: input, shape index: {}]
  %s1 = inlined_call_operand.vmem [shape: f32[2,32], index: 1, kind: input, shape index: {}]
  %s2 = inlined_call_operand.vmem [shape: bf16[640,32], index: 2, kind: input, shape index: {}]
  %s3 = inlined_call_operand.vmem [shape: f32[1,32], index: 3, kind: input, shape index: {}]
  %s4 = inlined_call_operand.vmem [shape: f32[1,32], index: 4, kind: input, shape index: {}]
  %s5 = inlined_call_operand.vmem [shape: f32[1,32], index: 5, kind: input, shape index: {}]
  %s6 = inlined_call_operand.vmem [shape: bf16[32,32], index: 6, kind: input, shape index: {}]
  %s7 = inlined_call_operand.vmem [shape: f32[1,32], index: 7, kind: input, shape index: {}]
  %s8 = inlined_call_operand.vmem [shape: bf16[160,32], index: 8, kind: input, shape index: {}]
  %s9 = inlined_call_operand.vmem [shape: f32[1,32], index: 9, kind: input, shape index: {}]
  %s10 = inlined_call_operand.vmem [shape: f32[1,32], index: 10, kind: input, shape index: {}]
  %s11 = inlined_call_operand.vmem [shape: f32[1,32], index: 11, kind: input, shape index: {}]
  %s12 = inlined_call_operand.vmem [shape: f32[32,32], index: 12, kind: input, shape index: {}]
  %s13 = inlined_call_operand.vmem [shape: bf16[128,32], index: 13, kind: input, shape index: {}]
  %s14 = inlined_call_operand.vmem [shape: f32[1,32], index: 14, kind: input, shape index: {}]
  %s15 = inlined_call_operand.vmem [shape: f32[2,8,32], index: 15, kind: output, shape index: {}]
  %s16 = sld [smem:[#allocation0]]
  $region70: #{concatenated_temporal_unet_fwd.20} parent=0
    _
  %s18 = ssub.s32 1, %s16
  %s19 = scalar_select 0, %s18, %s16
  // Predicated region
  $region2: #{concatenated_temporal_unet_fwd.20} parent=0 // pred_check
    _
  $region3: #{concatenated_temporal_unet_fwd.20} parent=0 // pred_check_branch
    %21 = sbr.rel (0) target = $region5
  $region4: #{concatenated_temporal_unet_fwd.20} parent=0 // pred_region
    _
  $region5: #{concatenated_temporal_unet_fwd.20} parent=0 // pred_fallthru
    _
  // Predicated region
  $region6: #{concatenated_temporal_unet_fwd.20} parent=0 // pred_check
    _
  $region7: #{concatenated_temporal_unet_fwd.20} parent=0 // pred_check_branch
    %23 = sbr.rel (0) target = $region9
  $region8: #{concatenated_temporal_unet_fwd.20} parent=0 // pred_region
    _
  $region9: #{concatenated_temporal_unet_fwd.20} parent=0 // pred_fallthru
    _
  // Predicated region
  $region10: #{concatenated_temporal_unet_fwd.20} parent=0 // pred_check
    _
  $region11: #{concatenated_temporal_unet_fwd.20} parent=0 // pred_check_branch
    %25 = sbr.rel (0) target = $region13
  $region12: #{concatenated_temporal_unet_fwd.20} parent=0 // pred_region
    _
  $region13: #{concatenated_temporal_unet_fwd.20} parent=0 // pred_fallthru
    _
  // Predicated region
  $region14: #{concatenated_temporal_unet_fwd.20} parent=0 // pred_check
    _
  $region15: #{concatenated_temporal_unet_fwd.20} parent=0 // pred_check_branch
    %27 = sbr.rel (0) target = $region17
  $region16: #{concatenated_temporal_unet_fwd.20} parent=0 // pred_region
    _
  $region17: #{concatenated_temporal_unet_fwd.20} parent=0 // pred_fallthru
    _
  // Predicated region
  $region18: #{concatenated_temporal_unet_fwd.20} parent=0 // pred_check
    _
  $region19: #{concatenated_temporal_unet_fwd.20} parent=0 // pred_check_branch
    %29 = sbr.rel (0) target = $region21
  $region20: #{concatenated_temporal_unet_fwd.20} parent=0 // pred_region
    _
  $region21: #{concatenated_temporal_unet_fwd.20} parent=0 // pred_fallthru
    _
  // Predicated region
  $region22: #{concatenated_temporal_unet_fwd.20} parent=0 // pred_check
    _
  $region23: #{concatenated_temporal_unet_fwd.20} parent=0 // pred_check_branch
    %31 = sbr.rel (0) target = $region25
  $region24: #{concatenated_temporal_unet_fwd.20} parent=0 // pred_region
    _
  $region25: #{concatenated_temporal_unet_fwd.20} parent=0 // pred_fallthru
    _
  // Predicated region
  $region26: #{concatenated_temporal_unet_fwd.20} parent=0 // pred_check
    _
  $region27: #{concatenated_temporal_unet_fwd.20} parent=0 // pred_check_branch
    %33 = sbr.rel (0) target = $region29
  $region28: #{concatenated_temporal_unet_fwd.20} parent=0 // pred_region
    _
  $region29: #{concatenated_temporal_unet_fwd.20} parent=0 // pred_fallthru
    _
  // Predicated region
  $region30: #{concatenated_temporal_unet_fwd.20} parent=0 // pred_check
    _
  $region31: #{concatenated_temporal_unet_fwd.20} parent=0 // pred_check_branch
    %35 = sbr.rel (0) target = $region33
  $region32: #{concatenated_temporal_unet_fwd.20} parent=0 // pred_region
    _
  $region33: #{concatenated_temporal_unet_fwd.20} parent=0 // pred_fallthru
    _
  // Predicated region
  $region34: #{concatenated_temporal_unet_fwd.20} parent=0 // pred_check
    _
  $region35: #{concatenated_temporal_unet_fwd.20} parent=0 // pred_check_branch
    %37 = sbr.rel (0) target = $region37
  $region36: #{concatenated_temporal_unet_fwd.20} parent=0 // pred_region
    _
  $region37: #{concatenated_temporal_unet_fwd.20} parent=0 // pred_fallthru
    _
  // Predicated region
  $region38: #{concatenated_temporal_unet_fwd.20} parent=0 // pred_check
    _
  $region39: #{concatenated_temporal_unet_fwd.20} parent=0 // pred_check_branch
    %39 = sbr.rel (0) target = $region41
  $region40: #{concatenated_temporal_unet_fwd.20} parent=0 // pred_region
    _
  $region41: #{concatenated_temporal_unet_fwd.20} parent=0 // pred_fallthru
    _
  // Predicated region
  $region42: #{concatenated_temporal_unet_fwd.20} parent=0 // pred_check
    _
  $region43: #{concatenated_temporal_unet_fwd.20} parent=0 // pred_check_branch
    %41 = sbr.rel (0) target = $region45
  $region44: #{concatenated_temporal_unet_fwd.20} parent=0 // pred_region
    _
  $region45: #{concatenated_temporal_unet_fwd.20} parent=0 // pred_fallthru
    _
  // Predicated region
  $region46: #{concatenated_temporal_unet_fwd.20} parent=0 // pred_check
    _
  $region47: #{concatenated_temporal_unet_fwd.20} parent=0 // pred_check_branch
    %43 = sbr.rel (0) target = $region49
  $region48: #{concatenated_temporal_unet_fwd.20} parent=0 // pred_region
    _
  $region49: #{concatenated_temporal_unet_fwd.20} parent=0 // pred_fallthru
    _
  // Predicated region
  $region50: #{concatenated_temporal_unet_fwd.20} parent=0 // pred_check
    _
  $region51: #{concatenated_temporal_unet_fwd.20} parent=0 // pred_check_branch
    %45 = sbr.rel (0) target = $region53
  $region52: #{concatenated_temporal_unet_fwd.20} parent=0 // pred_region
    _
  $region53: #{concatenated_temporal_unet_fwd.20} parent=0 // pred_fallthru
    _
  // Predicated region
  $region54: #{concatenated_temporal_unet_fwd.20} parent=0 // pred_check
    _
  $region55: #{concatenated_temporal_unet_fwd.20} parent=0 // pred_check_branch
    %47 = sbr.rel (0) target = $region57
  $region56: #{concatenated_temporal_unet_fwd.20} parent=0 // pred_region
    _
  $region57: #{concatenated_temporal_unet_fwd.20} parent=0 // pred_fallthru
    _
  // Predicated region
  $region58: #{concatenated_temporal_unet_fwd.20} parent=0 // pred_check
    _
  $region59: #{concatenated_temporal_unet_fwd.20} parent=0 // pred_check_branch
    %49 = sbr.rel (0) target = $region61
  $region60: #{concatenated_temporal_unet_fwd.20} parent=0 // pred_region
    _
  $region61: #{concatenated_temporal_unet_fwd.20} parent=0 // pred_fallthru
    _
  %v51 = vld [vmem:[%s1] sm:$0x3]
  %v52 = vand.u32 2147483647, %v51
  %v53 = vsub.f32 0.0, %v52
  %v54 = vmul.f32 %v53, 1.442695
  %v55 = vpow.pop %v54
  %v56 = vadd.f32 %v55, 1.0
  %v57 = vlog2.pop %v56
  %v58 = vmul.f32 %v57, 0.6931472
  %v59 = vmul.f32 -0.5, %v55
  %v60 = vadd.f32 %v59, 1.0
  %v61 = vmul.f32 %v60, %v55
  %v62 = vand.u32 2147483647, %v55
  %vm63 = vcmp.lt.f32.partialorder %v62, 0.0004427343
  %v64 = vsel %vm63, %v61, %v58
  %v65 = vmax.f32 %v51, 0.0
  %v66 = vadd.f32 %v64, %v65
  %v67 = vtanh.pop %v66
  %v68 = vmul.f32 %v51, %v67
  %v69 = vpack.c.bf16 %v68, %v68
  %v70 = vld [vmem:[%s6] sm:$0xf]
  %v71 = vld [vmem:[%s6 + $0x4] sm:$0xf]
  %v72 = vld [vmem:[%s6 + $0x8] sm:$0xf]
  %v73 = vld [vmem:[%s6 + $0xc] sm:$0xf]
  %v74 = vld [vmem:[%s7] sm:$0x1]
  %v76 = vlaneseq
  %v77 = vshrl.u32 %v76, 7
  %v78 = vsub.s32 0, %v77
  %v79 = vrot.slane %v74, %v78
  %v85 = vunpack.c.l.b16 %v70
  %v86 = vunpack.c.l.b16 %v71
  %v87 = vunpack.c.l.b16 %v72
  %v88 = vunpack.c.l.b16 %v73
  %v89 = vpack.c.b16 %v86, %v85
  %v90 = vpack.c.b16 %v88, %v87
  %vm93 = vcmask 261120
  %v95 = vsel %vm93, %v69, 0
  %97 = vmatprep.subr.bf16.mxu0 0
  %98 = vmatpush1.bf16.msra.mxu0 %v89
  %99 = vmatprep.subr.bf16.mxu0 0
  %100 = vmatpush1.bf16.msra.mxu0 %v90
  %101 = vmatprep.subr.bf16.mxu0 0
  %102 = vmatpush1.bf16.msra.mxu0 0
  %103 = vmatprep.subr.bf16.mxu0 0
  %104 = vmatpush1.bf16.msra.mxu0 0
  %105 = vmatprep.subr.bf16.mxu0 0
  %106 = vmatpush1.bf16.msra.mxu0 0
  %107 = vmatprep.subr.bf16.mxu0 0
  %108 = vmatpush1.bf16.msra.mxu0 0
  %109 = vmatprep.subr.bf16.mxu0 0
  %110 = vmatpush1.bf16.msra.mxu0 0
  %111 = vmatprep.subr.bf16.mxu0 0
  %112 = vmatpush1.bf16.msra.mxu0 0
  %113 = vmatprep.subr.bf16.mxu0 0
  %114 = vmatpush1.bf16.msra.mxu0 0
  %115 = vmatprep.subr.bf16.mxu0 0
  %116 = vmatpush1.bf16.msra.mxu0 0
  %117 = vmatprep.subr.bf16.mxu0 0
  %118 = vmatpush1.bf16.msra.mxu0 0
  %119 = vmatprep.subr.bf16.mxu0 0
  %120 = vmatpush1.bf16.msra.mxu0 0
  %121 = vmatprep.subr.bf16.mxu0 0
  %122 = vmatpush1.bf16.msra.mxu0 0
  %123 = vmatprep.subr.bf16.mxu0 0
  %124 = vmatpush1.bf16.msra.mxu0 0
  %125 = vmatprep.subr.bf16.mxu0 0
  %126 = vmatpush1.bf16.msra.mxu0 0
  %127 = vmatprep.subr.bf16.mxu0 0
  %128 = vmatpush1.bf16.msra.mxu0 0
  %129 = vmatprep.mubr.bf16.mxu0 0
  %130 = vmatmul.mubr.bf16.gmra.mrb[0].mxu0 %v95
  %v131 = vpop.f32.mrb[0].mxu0
  %v132 = vadd.f32 %v79, %v131
  %v133 = vpop.f32.mrb[0].mxu0
  %v134 = vpop.f32.mrb[0].mxu0
  %v135 = vpop.f32.mrb[0].mxu0
  %136 = vdwg.mxu0
  %v137 = vld [vmem:[%s0] sm:$0xff]
  %s138 = scalar_lea.vmem %s0, 8
  %v139 = vld [vmem:[%s138] sm:$0xff]
  %v141 = vrot.slane %v137, 6
  %vm143 = vcmask 1041408
  %v144 = vsel %vm143, 0.0, %v141
  %v145 = vsel %vm143, %v141, 0.0
  %vm148 = vcmask 1046528
  %v149 = vrot.slane %v144, 1
  %v150 = vrot.slane %v145, 1
  %v151 = vsel %vm148, %v149, %v150
  %vm153 = vcmask 1045504
  %v154 = vrot.slane %v144, 2
  %v155 = vrot.slane %v145, 2
  %v156 = vsel %vm153, %v154, %v155
  %vm158 = vcmask 1044480
  %v159 = vrot.slane %v144, 3
  %v160 = vrot.slane %v145, 3
  %v161 = vsel %vm158, %v159, %v160
  %vm163 = vcmask 1043456
  %v164 = vrot.slane %v144, 4
  %v165 = vrot.slane %v145, 4
  %v166 = vsel %vm163, %v164, %v165
  %v169 = vrot.slane %v139, 6
  %v171 = vsel %vm143, 0.0, %v169
  %v172 = vsel %vm143, %v169, 0.0
  %v175 = vrot.slane %v171, 1
  %v176 = vrot.slane %v172, 1
  %v177 = vsel %vm148, %v175, %v176
  %v179 = vrot.slane %v171, 2
  %v180 = vrot.slane %v172, 2
  %v181 = vsel %vm153, %v179, %v180
  %v183 = vrot.slane %v171, 3
  %v184 = vrot.slane %v172, 3
  %v185 = vsel %vm158, %v183, %v184
  %v187 = vrot.slane %v171, 4
  %v188 = vrot.slane %v172, 4
  %v189 = vsel %vm163, %v187, %v188
  %v191 = vpack.c.bf16 %v171, %v144
  %v192 = vpack.c.bf16 %v177, %v151
  %v193 = vpack.c.bf16 %v181, %v156
  %v194 = vpack.c.bf16 %v185, %v161
  %v195 = vpack.c.bf16 %v189, %v166
  %v196 = vld [vmem:[%s2] sm:$0xf]
  %v197 = vld [vmem:[%s2 + $0x4] sm:$0xf]
  %v198 = vld [vmem:[%s2 + $0x8] sm:$0xf]
  %v199 = vld [vmem:[%s2 + $0xc] sm:$0xf]
  %v200 = vld [vmem:[%s2 + $0x10] sm:$0xf]
  %v201 = vld [vmem:[%s2 + $0x14] sm:$0xf]
  %v202 = vld [vmem:[%s2 + $0x18] sm:$0xf]
  %v203 = vld [vmem:[%s2 + $0x1c] sm:$0xf]
  %v204 = vld [vmem:[%s2 + $0x20] sm:$0xf]
  %v205 = vld [vmem:[%s2 + $0x24] sm:$0xf]
  %v206 = vld [vmem:[%s2 + $0x28] sm:$0xf]
  %v207 = vld [vmem:[%s2 + $0x2c] sm:$0xf]
  %v208 = vld [vmem:[%s2 + $0x30] sm:$0xf]
  %v209 = vld [vmem:[%s2 + $0x34] sm:$0xf]
  %v210 = vld [vmem:[%s2 + $0x38] sm:$0xf]
  %v211 = vld [vmem:[%s2 + $0x3c] sm:$0xf]
  %v212 = vld [vmem:[%s2 + $0x40] sm:$0xf]
  %v213 = vld [vmem:[%s2 + $0x44] sm:$0xf]
  %v214 = vld [vmem:[%s2 + $0x48] sm:$0xf]
  %v215 = vld [vmem:[%s2 + $0x4c] sm:$0xf]
  %v216 = vld [vmem:[%s2 + $0x50] sm:$0xf]
  %v217 = vld [vmem:[%s2 + $0x54] sm:$0xf]
  %v218 = vld [vmem:[%s2 + $0x58] sm:$0xf]
  %v219 = vld [vmem:[%s2 + $0x5c] sm:$0xf]
  %v220 = vld [vmem:[%s2 + $0x60] sm:$0xf]
  %v221 = vld [vmem:[%s2 + $0x64] sm:$0xf]
  %v222 = vld [vmem:[%s2 + $0x68] sm:$0xf]
  %v223 = vld [vmem:[%s2 + $0x6c] sm:$0xf]
  %v224 = vld [vmem:[%s2 + $0x70] sm:$0xf]
  %v225 = vld [vmem:[%s2 + $0x74] sm:$0xf]
  %v226 = vld [vmem:[%s2 + $0x78] sm:$0xf]
  %v227 = vld [vmem:[%s2 + $0x7c] sm:$0xf]
  %v228 = vld [vmem:[%s2 + $0x80] sm:$0xf]
  %v229 = vld [vmem:[%s2 + $0x84] sm:$0xf]
  %v230 = vld [vmem:[%s2 + $0x88] sm:$0xf]
  %v231 = vld [vmem:[%s2 + $0x8c] sm:$0xf]
  %v232 = vld [vmem:[%s2 + $0x90] sm:$0xf]
  %v233 = vld [vmem:[%s2 + $0x94] sm:$0xf]
  %v234 = vld [vmem:[%s2 + $0x98] sm:$0xf]
  %v235 = vld [vmem:[%s2 + $0x9c] sm:$0xf]
  %v236 = vld [vmem:[%s2 + $0xa0] sm:$0xf]
  %v237 = vld [vmem:[%s2 + $0xa4] sm:$0xf]
  %v238 = vld [vmem:[%s2 + $0xa8] sm:$0xf]
  %v239 = vld [vmem:[%s2 + $0xac] sm:$0xf]
  %v240 = vld [vmem:[%s2 + $0xb0] sm:$0xf]
  %v241 = vld [vmem:[%s2 + $0xb4] sm:$0xf]
  %v242 = vld [vmem:[%s2 + $0xb8] sm:$0xf]
  %v243 = vld [vmem:[%s2 + $0xbc] sm:$0xf]
  %v244 = vld [vmem:[%s2 + $0xc0] sm:$0xf]
  %v245 = vld [vmem:[%s2 + $0xc4] sm:$0xf]
  %v246 = vld [vmem:[%s2 + $0xc8] sm:$0xf]
  %v247 = vld [vmem:[%s2 + $0xcc] sm:$0xf]
  %v248 = vld [vmem:[%s2 + $0xd0] sm:$0xf]
  %v249 = vld [vmem:[%s2 + $0xd4] sm:$0xf]
  %v250 = vld [vmem:[%s2 + $0xd8] sm:$0xf]
  %v251 = vld [vmem:[%s2 + $0xdc] sm:$0xf]
  %v252 = vld [vmem:[%s2 + $0xe0] sm:$0xf]
  %v253 = vld [vmem:[%s2 + $0xe4] sm:$0xf]
  %v254 = vld [vmem:[%s2 + $0xe8] sm:$0xf]
  %v255 = vld [vmem:[%s2 + $0xec] sm:$0xf]
  %v256 = vld [vmem:[%s2 + $0xf0] sm:$0xf]
  %v257 = vld [vmem:[%s2 + $0xf4] sm:$0xf]
  %v258 = vld [vmem:[%s2 + $0xf8] sm:$0xf]
  %v259 = vld [vmem:[%s2 + $0xfc] sm:$0xf]
  %v260 = vld [vmem:[%s2 + $0x100] sm:$0xf]
  %v261 = vld [vmem:[%s2 + $0x104] sm:$0xf]
  %v262 = vld [vmem:[%s2 + $0x108] sm:$0xf]
  %v263 = vld [vmem:[%s2 + $0x10c] sm:$0xf]
  %v264 = vld [vmem:[%s2 + $0x110] sm:$0xf]
  %v265 = vld [vmem:[%s2 + $0x114] sm:$0xf]
  %v266 = vld [vmem:[%s2 + $0x118] sm:$0xf]
  %v267 = vld [vmem:[%s2 + $0x11c] sm:$0xf]
  %v268 = vld [vmem:[%s2 + $0x120] sm:$0xf]
  %v269 = vld [vmem:[%s2 + $0x124] sm:$0xf]
  %v270 = vld [vmem:[%s2 + $0x128] sm:$0xf]
  %v271 = vld [vmem:[%s2 + $0x12c] sm:$0xf]
  %v272 = vld [vmem:[%s2 + $0x130] sm:$0xf]
  %v273 = vld [vmem:[%s2 + $0x134] sm:$0xf]
  %v274 = vld [vmem:[%s2 + $0x138] sm:$0xf]
  %v275 = vld [vmem:[%s2 + $0x13c] sm:$0xf]
  %v276 = vld [vmem:[%s3] sm:$0x1]
  %v278 = vlaneseq
  %v279 = vshrl.u32 %v278, 7
  %v280 = vsub.s32 0, %v279
  %v281 = vrot.slane %v276, %v280
  %v363 = vunpack.c.l.b16 %v196
  %v364 = vunpack.c.l.b16 %v197
  %v365 = vunpack.c.l.b16 %v198
  %v366 = vunpack.c.l.b16 %v199
  %v367 = vunpack.c.l.b16 %v200
  %v368 = vunpack.c.l.b16 %v201
  %v369 = vunpack.c.l.b16 %v202
  %v370 = vunpack.c.l.b16 %v203
  %v371 = vunpack.c.l.b16 %v204
  %v372 = vunpack.c.l.b16 %v205
  %v373 = vunpack.c.l.b16 %v206
  %v374 = vunpack.c.l.b16 %v207
  %v375 = vunpack.c.l.b16 %v208
  %v376 = vunpack.c.l.b16 %v209
  %v377 = vunpack.c.l.b16 %v210
  %v378 = vunpack.c.l.b16 %v211
  %v379 = vunpack.c.l.b16 %v212
  %v380 = vunpack.c.l.b16 %v213
  %v381 = vunpack.c.l.b16 %v214
  %v382 = vunpack.c.l.b16 %v215
  %v383 = vunpack.c.l.b16 %v216
  %v384 = vunpack.c.l.b16 %v217
  %v385 = vunpack.c.l.b16 %v218
  %v386 = vunpack.c.l.b16 %v219
  %v387 = vunpack.c.l.b16 %v220
  %v388 = vunpack.c.l.b16 %v221
  %v389 = vunpack.c.l.b16 %v222
  %v390 = vunpack.c.l.b16 %v223
  %v391 = vunpack.c.l.b16 %v224
  %v392 = vunpack.c.l.b16 %v225
  %v393 = vunpack.c.l.b16 %v226
  %v394 = vunpack.c.l.b16 %v227
  %v395 = vunpack.c.l.b16 %v228
  %v396 = vunpack.c.l.b16 %v229
  %v397 = vunpack.c.l.b16 %v230
  %v398 = vunpack.c.l.b16 %v231
  %v399 = vunpack.c.l.b16 %v232
  %v400 = vunpack.c.l.b16 %v233
  %v401 = vunpack.c.l.b16 %v234
  %v402 = vunpack.c.l.b16 %v235
  %v403 = vunpack.c.l.b16 %v236
  %v404 = vunpack.c.l.b16 %v237
  %v405 = vunpack.c.l.b16 %v238
  %v406 = vunpack.c.l.b16 %v239
  %v407 = vunpack.c.l.b16 %v240
  %v408 = vunpack.c.l.b16 %v241
  %v409 = vunpack.c.l.b16 %v242
  %v410 = vunpack.c.l.b16 %v243
  %v411 = vunpack.c.l.b16 %v244
  %v412 = vunpack.c.l.b16 %v245
  %v413 = vunpack.c.l.b16 %v246
  %v414 = vunpack.c.l.b16 %v247
  %v415 = vunpack.c.l.b16 %v248
  %v416 = vunpack.c.l.b16 %v249
  %v417 = vunpack.c.l.b16 %v250
  %v418 = vunpack.c.l.b16 %v251
  %v419 = vunpack.c.l.b16 %v252
  %v420 = vunpack.c.l.b16 %v253
  %v421 = vunpack.c.l.b16 %v254
  %v422 = vunpack.c.l.b16 %v255
  %v423 = vunpack.c.l.b16 %v256
  %v424 = vunpack.c.l.b16 %v257
  %v425 = vunpack.c.l.b16 %v258
  %v426 = vunpack.c.l.b16 %v259
  %v427 = vunpack.c.l.b16 %v260
  %v428 = vunpack.c.l.b16 %v261
  %v429 = vunpack.c.l.b16 %v262
  %v430 = vunpack.c.l.b16 %v263
  %v431 = vunpack.c.l.b16 %v264
  %v432 = vunpack.c.l.b16 %v265
  %v433 = vunpack.c.l.b16 %v266
  %v434 = vunpack.c.l.b16 %v267
  %v435 = vunpack.c.l.b16 %v268
  %v436 = vunpack.c.l.b16 %v269
  %v437 = vunpack.c.l.b16 %v270
  %v438 = vunpack.c.l.b16 %v271
  %v439 = vunpack.c.l.b16 %v272
  %v440 = vunpack.c.l.b16 %v273
  %v441 = vunpack.c.l.b16 %v274
  %v442 = vunpack.c.l.b16 %v275
  %v443 = vpack.c.b16 %v364, %v363
  %v444 = vpack.c.b16 %v366, %v365
  %v445 = vpack.c.b16 %v368, %v367
  %v446 = vpack.c.b16 %v370, %v369
  %v447 = vpack.c.b16 %v372, %v371
  %v448 = vpack.c.b16 %v374, %v373
  %v449 = vpack.c.b16 %v376, %v375
  %v450 = vpack.c.b16 %v378, %v377
  %v451 = vpack.c.b16 %v380, %v379
  %v452 = vpack.c.b16 %v382, %v381
  %v453 = vpack.c.b16 %v384, %v383
  %v454 = vpack.c.b16 %v386, %v385
  %v455 = vpack.c.b16 %v388, %v387
  %v456 = vpack.c.b16 %v390, %v389
  %v457 = vpack.c.b16 %v392, %v391
  %v458 = vpack.c.b16 %v394, %v393
  %v459 = vpack.c.b16 %v396, %v395
  %v460 = vpack.c.b16 %v398, %v397
  %v461 = vpack.c.b16 %v400, %v399
  %v462 = vpack.c.b16 %v402, %v401
  %v463 = vpack.c.b16 %v404, %v403
  %v464 = vpack.c.b16 %v406, %v405
  %v465 = vpack.c.b16 %v408, %v407
  %v466 = vpack.c.b16 %v410, %v409
  %v467 = vpack.c.b16 %v412, %v411
  %v468 = vpack.c.b16 %v414, %v413
  %v469 = vpack.c.b16 %v416, %v415
  %v470 = vpack.c.b16 %v418, %v417
  %v471 = vpack.c.b16 %v420, %v419
  %v472 = vpack.c.b16 %v422, %v421
  %v473 = vpack.c.b16 %v424, %v423
  %v474 = vpack.c.b16 %v426, %v425
  %v475 = vpack.c.b16 %v428, %v427
  %v476 = vpack.c.b16 %v430, %v429
  %v477 = vpack.c.b16 %v432, %v431
  %v478 = vpack.c.b16 %v434, %v433
  %v479 = vpack.c.b16 %v436, %v435
  %v480 = vpack.c.b16 %v438, %v437
  %v481 = vpack.c.b16 %v440, %v439
  %v482 = vpack.c.b16 %v442, %v441
  %523 = vmatprep.subr.bf16.mxu0 0
  %524 = vmatpush1.bf16.msra.mxu0 %v443
  %525 = vmatprep.subr.bf16.mxu0 0
  %526 = vmatpush1.bf16.msra.mxu0 %v444
  %527 = vmatprep.subr.bf16.mxu0 0
  %528 = vmatpush1.bf16.msra.mxu0 %v445
  %529 = vmatprep.subr.bf16.mxu0 0
  %530 = vmatpush1.bf16.msra.mxu0 %v446
  %531 = vmatprep.subr.bf16.mxu0 0
  %532 = vmatpush1.bf16.msra.mxu0 %v447
  %533 = vmatprep.subr.bf16.mxu0 0
  %534 = vmatpush1.bf16.msra.mxu0 %v448
  %535 = vmatprep.subr.bf16.mxu0 0
  %536 = vmatpush1.bf16.msra.mxu0 %v449
  %537 = vmatprep.subr.bf16.mxu0 0
  %538 = vmatpush1.bf16.msra.mxu0 %v450
  %539 = vmatprep.subr.bf16.mxu0 0
  %540 = vmatpush1.bf16.msra.mxu0 %v451
  %541 = vmatprep.subr.bf16.mxu0 0
  %542 = vmatpush1.bf16.msra.mxu0 %v452
  %543 = vmatprep.subr.bf16.mxu0 0
  %544 = vmatpush1.bf16.msra.mxu0 %v453
  %545 = vmatprep.subr.bf16.mxu0 0
  %546 = vmatpush1.bf16.msra.mxu0 %v454
  %547 = vmatprep.subr.bf16.mxu0 0
  %548 = vmatpush1.bf16.msra.mxu0 %v455
  %549 = vmatprep.subr.bf16.mxu0 0
  %550 = vmatpush1.bf16.msra.mxu0 %v456
  %551 = vmatprep.subr.bf16.mxu0 0
  %552 = vmatpush1.bf16.msra.mxu0 %v457
  %553 = vmatprep.subr.bf16.mxu0 0
  %554 = vmatpush1.bf16.msra.mxu0 %v458
  %555 = vmatprep.mubr.bf16.mxu0 %v192
  %556 = vmatmul.mubr.bf16.gmra.mrb[0].mxu0 %v191
  %v557 = vpop.f32.mrb[0].mxu0
  %v558 = vadd.f32 %v281, %v557
  %v559 = vpop.f32.mrb[0].mxu0
  %v560 = vpop.f32.mrb[0].mxu0
  %v561 = vadd.f32 %v281, %v560
  %v562 = vpop.f32.mrb[0].mxu0
  %563 = vdwg.mxu0
  %564 = vmatprep.subr.bf16.mxu0 0
  %565 = vmatpush1.bf16.msra.mxu0 %v459
  %566 = vmatprep.subr.bf16.mxu0 0
  %567 = vmatpush1.bf16.msra.mxu0 %v460
  %568 = vmatprep.subr.bf16.mxu0 0
  %569 = vmatpush1.bf16.msra.mxu0 %v461
  %570 = vmatprep.subr.bf16.mxu0 0
  %571 = vmatpush1.bf16.msra.mxu0 %v462
  %572 = vmatprep.subr.bf16.mxu0 0
  %573 = vmatpush1.bf16.msra.mxu0 %v463
  %574 = vmatprep.subr.bf16.mxu0 0
  %575 = vmatpush1.bf16.msra.mxu0 %v464
  %576 = vmatprep.subr.bf16.mxu0 0
  %577 = vmatpush1.bf16.msra.mxu0 %v465
  %578 = vmatprep.subr.bf16.mxu0 0
  %579 = vmatpush1.bf16.msra.mxu0 %v466
  %580 = vmatprep.subr.bf16.mxu0 0
  %581 = vmatpush1.bf16.msra.mxu0 %v467
  %582 = vmatprep.subr.bf16.mxu0 0
  %583 = vmatpush1.bf16.msra.mxu0 %v468
  %584 = vmatprep.subr.bf16.mxu0 0
  %585 = vmatpush1.bf16.msra.mxu0 %v469
  %586 = vmatprep.subr.bf16.mxu0 0
  %587 = vmatpush1.bf16.msra.mxu0 %v470
  %588 = vmatprep.subr.bf16.mxu0 0
  %589 = vmatpush1.bf16.msra.mxu0 %v471
  %590 = vmatprep.subr.bf16.mxu0 0
  %591 = vmatpush1.bf16.msra.mxu0 %v472
  %592 = vmatprep.subr.bf16.mxu0 0
  %593 = vmatpush1.bf16.msra.mxu0 %v473
  %594 = vmatprep.subr.bf16.mxu0 0
  %595 = vmatpush1.bf16.msra.mxu0 %v474
  %596 = vmatprep.mubr.bf16.mxu0 %v194
  %597 = vmatmul.mubr.bf16.gmra.mrb[0].mxu0 %v193
  %v598 = vpop.f32.mrb[0].mxu0
  %v599 = vadd.f32 %v558, %v598
  %v600 = vpop.f32.mrb[0].mxu0
  %v601 = vpop.f32.mrb[0].mxu0
  %v602 = vadd.f32 %v561, %v601
  %v603 = vpop.f32.mrb[0].mxu0
  %604 = vdwg.mxu0
  %605 = vmatprep.subr.bf16.mxu0 0
  %606 = vmatpush1.bf16.msra.mxu0 %v475
  %607 = vmatprep.subr.bf16.mxu0 0
  %608 = vmatpush1.bf16.msra.mxu0 %v476
  %609 = vmatprep.subr.bf16.mxu0 0
  %610 = vmatpush1.bf16.msra.mxu0 %v477
  %611 = vmatprep.subr.bf16.mxu0 0
  %612 = vmatpush1.bf16.msra.mxu0 %v478
  %613 = vmatprep.subr.bf16.mxu0 0
  %614 = vmatpush1.bf16.msra.mxu0 %v479
  %615 = vmatprep.subr.bf16.mxu0 0
  %616 = vmatpush1.bf16.msra.mxu0 %v480
  %617 = vmatprep.subr.bf16.mxu0 0
  %618 = vmatpush1.bf16.msra.mxu0 %v481
  %619 = vmatprep.subr.bf16.mxu0 0
  %620 = vmatpush1.bf16.msra.mxu0 %v482
  %621 = vmatprep.subr.bf16.mxu0 0
  %622 = vmatpush1.bf16.msra.mxu0 0
  %623 = vmatprep.subr.bf16.mxu0 0
  %624 = vmatpush1.bf16.msra.mxu0 0
  %625 = vmatprep.subr.bf16.mxu0 0
  %626 = vmatpush1.bf16.msra.mxu0 0
  %627 = vmatprep.subr.bf16.mxu0 0
  %628 = vmatpush1.bf16.msra.mxu0 0
  %629 = vmatprep.subr.bf16.mxu0 0
  %630 = vmatpush1.bf16.msra.mxu0 0
  %631 = vmatprep.subr.bf16.mxu0 0
  %632 = vmatpush1.bf16.msra.mxu0 0
  %633 = vmatprep.subr.bf16.mxu0 0
  %634 = vmatpush1.bf16.msra.mxu0 0
  %635 = vmatprep.subr.bf16.mxu0 0
  %636 = vmatpush1.bf16.msra.mxu0 0
  %637 = vmatprep.mubr.bf16.mxu0 0
  %638 = vmatmul.mubr.bf16.gmra.mrb[0].mxu0 %v195
  %v639 = vpop.f32.mrb[0].mxu0
  %v640 = vadd.f32 %v599, %v639
  %v641 = vpop.f32.mrb[0].mxu0
  %v642 = vpop.f32.mrb[0].mxu0
  %v643 = vadd.f32 %v602, %v642
  %v644 = vpop.f32.mrb[0].mxu0
  %645 = vdwg.mxu0
  %v646 = vld [vmem:[%s4] sm:$0x1]
  %v647 = vld [vmem:[%s5] sm:$0x1]
  %v648 = vld [vmem:[%s12] sm:$0xff]
  %v649 = vld [vmem:[%s12 + $0x8] sm:$0xff]
  %v650 = vld [vmem:[%s12 + $0x10] sm:$0xff]
  %v651 = vld [vmem:[%s12 + $0x18] sm:$0xff]
  %v652 = vsel %vm93, %v640, 0.0
  %v653 = vrot.slane %v652, 4
  %v654 = vadd.f32 %v652, %v653
  %v655 = vrot.slane %v654, 2
  %v656 = vadd.f32 %v654, %v655
  %v657 = vrot.slane %v656, 1
  %v658 = vadd.f32 %v656, %v657
  %v659 = vmul.f32 %v640, %v640
  %v660 = vsel %vm93, %v659, 0.0
  %v661 = vrot.slane %v660, 4
  %v662 = vadd.f32 %v660, %v661
  %v663 = vrot.slane %v662, 2
  %v664 = vadd.f32 %v662, %v663
  %v665 = vrot.slane %v664, 1
  %v666 = vadd.f32 %v664, %v665
  %v667 = vsel %vm93, %v643, 0.0
  %v668 = vrot.slane %v667, 4
  %v669 = vadd.f32 %v667, %v668
  %v670 = vrot.slane %v669, 2
  %v671 = vadd.f32 %v669, %v670
  %v672 = vrot.slane %v671, 1
  %v673 = vadd.f32 %v671, %v672
  %v674 = vmul.f32 %v643, %v643
  %v675 = vsel %vm93, %v674, 0.0
  %v676 = vrot.slane %v675, 4
  %v677 = vadd.f32 %v675, %v676
  %v678 = vrot.slane %v677, 2
  %v679 = vadd.f32 %v677, %v678
  %v680 = vrot.slane %v679, 1
  %v681 = vadd.f32 %v679, %v680
  %vm682 = vcmask 1040384
  %v683 = vsel %vm682, %v658, %v666
  %v684 = vsel %vm143, %v683, %v673
  %vm685 = vcmask 1042432
  %v686 = vsel %vm685, %v684, %v681
  %v688 = vsel %vm93, %v686, 0
  %690 = vmatprep.subr.mxu0 0.0
  %691 = vmatpush1.msra.mxu0 %v648
  %692 = vmatprep.subr.mxu0 0.0
  %693 = vmatpush1.msra.mxu0 %v649
  %694 = vmatprep.subr.mxu0 0.0
  %695 = vmatpush1.msra.mxu0 %v650
  %696 = vmatprep.subr.mxu0 0.0
  %697 = vmatpush1.msra.mxu0 %v651
  %698 = vmatprep.subr.mxu0 0.0
  %699 = vmatpush1.msra.mxu0 0.0
  %700 = vmatprep.subr.mxu0 0.0
  %701 = vmatpush1.msra.mxu0 0.0
  %702 = vmatprep.subr.mxu0 0.0
  %703 = vmatpush1.msra.mxu0 0.0
  %704 = vmatprep.subr.mxu0 0.0
  %705 = vmatpush1.msra.mxu0 0.0
  %706 = vmatprep.subr.mxu0 0.0
  %707 = vmatpush1.msra.mxu0 0.0
  %708 = vmatprep.subr.mxu0 0.0
  %709 = vmatpush1.msra.mxu0 0.0
  %710 = vmatprep.subr.mxu0 0.0
  %711 = vmatpush1.msra.mxu0 0.0
  %712 = vmatprep.subr.mxu0 0.0
  %713 = vmatpush1.msra.mxu0 0.0
  %714 = vmatprep.subr.mxu0 0.0
  %715 = vmatpush1.msra.mxu0 0.0
  %716 = vmatprep.subr.mxu0 0.0
  %717 = vmatpush1.msra.mxu0 0.0
  %718 = vmatprep.subr.mxu0 0.0
  %719 = vmatpush1.msra.mxu0 0.0
  %720 = vmatprep.subr.mxu0 0.0
  %721 = vmatpush1.msra.mxu0 0.0
  %722 = vmatprep.subr.mxu0 0.0
  %723 = vmatpush1.msra.mxu0 0.0
  %724 = vmatprep.subr.mxu0 0.0
  %725 = vmatpush1.msra.mxu0 0.0
  %726 = vmatprep.subr.mxu0 0.0
  %727 = vmatpush1.msra.mxu0 0.0
  %728 = vmatprep.subr.mxu0 0.0
  %729 = vmatpush1.msra.mxu0 0.0
  %730 = vmatprep.subr.mxu0 0.0
  %731 = vmatpush1.msra.mxu0 0.0
  %732 = vmatprep.subr.mxu0 0.0
  %733 = vmatpush1.msra.mxu0 0.0
  %734 = vmatprep.subr.mxu0 0.0
  %735 = vmatpush1.msra.mxu0 0.0
  %736 = vmatprep.subr.mxu0 0.0
  %737 = vmatpush1.msra.mxu0 0.0
  %738 = vmatprep.subr.mxu0 0.0
  %739 = vmatpush1.msra.mxu0 0.0
  %740 = vmatprep.subr.mxu0 0.0
  %741 = vmatpush1.msra.mxu0 0.0
  %742 = vmatprep.subr.mxu0 0.0
  %743 = vmatpush1.msra.mxu0 0.0
  %744 = vmatprep.subr.mxu0 0.0
  %745 = vmatpush1.msra.mxu0 0.0
  %746 = vmatprep.subr.mxu0 0.0
  %747 = vmatpush1.msra.mxu0 0.0
  %748 = vmatprep.subr.mxu0 0.0
  %749 = vmatpush1.msra.mxu0 0.0
  %750 = vmatprep.subr.mxu0 0.0
  %751 = vmatpush1.msra.mxu0 0.0
  %752 = vmatprep.subr.mxu0 0.0
  %753 = vmatpush1.msra.mxu0 0.0
  %754 = vmatprep.mubr.f32.mxu0 0.0
  %755 = vmatmul.mubr.f32.gmra.mrb[0].mxu0 %v688
  %v756 = vpop.f32.mrb[0].mxu0
  %v757 = vadd.f32 0.0, %v756
  %v758 = vpop.f32.mrb[0].mxu0
  %759 = vdwg.mxu0
  %v760 = vmul.f32 %v757, %v757
  %v762 = vrot.slane %v760, 7
  %v764 = vsub.f32 %v757, %v762
  %v765 = vmax.f32 %v764, 0.0
  %v766 = vlaneseq
  %v767 = vshrl.u32 %v766, 7
  %v768 = vsub.s32 0, %v767
  %v769 = vrot.slane %v757, %v768
  %v770 = vsub.f32 %v640, %v769
  %v771 = vadd.f32 %v765, 1e-05
  %v772 = vrsqrt.pop %v771
  %v773 = vlaneseq
  %v774 = vshrl.u32 %v773, 7
  %v775 = vsub.s32 1, %v774
  %v776 = vrot.slane %v772, %v775
  %v777 = vmul.f32 %v770, %v776
  %v779 = vlaneseq
  %v780 = vshrl.u32 %v779, 7
  %v781 = vsub.s32 0, %v780
  %v782 = vrot.slane %v646, %v781
  %v784 = vmul.f32 %v777, %v782
  %v786 = vlaneseq
  %v787 = vshrl.u32 %v786, 7
  %v788 = vsub.s32 0, %v787
  %v789 = vrot.slane %v647, %v788
  %v791 = vadd.f32 %v784, %v789
  %v792 = vand.u32 2147483647, %v791
  %v793 = vsub.f32 0.0, %v792
  %v794 = vmul.f32 %v793, 1.442695
  %v795 = vpow.pop %v794
  %v796 = vadd.f32 %v795, 1.0
  %v797 = vlog2.pop %v796
  %v798 = vmul.f32 %v797, 0.6931472
  %v799 = vmul.f32 -0.5, %v795
  %v800 = vadd.f32 %v799, 1.0
  %v801 = vmul.f32 %v800, %v795
  %v802 = vand.u32 2147483647, %v795
  %vm803 = vcmp.lt.f32.partialorder %v802, 0.0004427343
  %v804 = vsel %vm803, %v801, %v798
  %v805 = vmax.f32 %v791, 0.0
  %v806 = vadd.f32 %v804, %v805
  %v807 = vtanh.pop %v806
  %v808 = vmul.f32 %v791, %v807
  %v809 = vlaneseq
  %v810 = vshrl.u32 %v809, 7
  %v811 = vsub.s32 2, %v810
  %v812 = vrot.slane %v757, %v811
  %v813 = vsub.f32 %v643, %v812
  %v814 = vlaneseq
  %v815 = vshrl.u32 %v814, 7
  %v816 = vsub.s32 3, %v815
  %v817 = vrot.slane %v772, %v816
  %v818 = vmul.f32 %v813, %v817
  %v819 = vmul.f32 %v818, %v782
  %v820 = vadd.f32 %v819, %v789
  %v821 = vand.u32 2147483647, %v820
  %v822 = vsub.f32 0.0, %v821
  %v823 = vmul.f32 %v822, 1.442695
  %v824 = vpow.pop %v823
  %v825 = vadd.f32 %v824, 1.0
  %v826 = vlog2.pop %v825
  %v827 = vmul.f32 %v826, 0.6931472
  %v828 = vmul.f32 -0.5, %v824
  %v829 = vadd.f32 %v828, 1.0
  %v830 = vmul.f32 %v829, %v824
  %v831 = vand.u32 2147483647, %v824
  %vm832 = vcmp.lt.f32.partialorder %v831, 0.0004427343
  %v833 = vsel %vm832, %v830, %v827
  %v834 = vmax.f32 %v820, 0.0
  %v835 = vadd.f32 %v833, %v834
  %v836 = vtanh.pop %v835
  %v837 = vmul.f32 %v820, %v836
  %v838 = vlaneseq
  %v839 = vshrl.u32 %v838, 7
  %v840 = vsub.s32 0, %v839
  %v841 = vrot.slane %v132, %v840
  %v842 = vadd.f32 %v808, %v841
  %v843 = vlaneseq
  %v844 = vshrl.u32 %v843, 7
  %v845 = vsub.s32 1, %v844
  %v846 = vrot.slane %v132, %v845
  %v847 = vadd.f32 %v837, %v846
  %v849 = vrot.slane %v842, 6
  %v851 = vsel %vm143, 0.0, %v849
  %v852 = vsel %vm143, %v849, 0.0
  %v855 = vrot.slane %v851, 1
  %v856 = vrot.slane %v852, 1
  %v857 = vsel %vm148, %v855, %v856
  %858 = vrot.lane.b32.xlu0 %v857, 32
  %v859 = vpop.permute.xlu0 %858
  %v861 = vrot.slane %v851, 2
  %v862 = vrot.slane %v852, 2
  %v863 = vsel %vm153, %v861, %v862
  %864 = vrot.lane.b32.xlu0 %v863, 64
  %v865 = vpop.permute.xlu0 %864
  %v867 = vrot.slane %v851, 3
  %v868 = vrot.slane %v852, 3
  %v869 = vsel %vm158, %v867, %v868
  %870 = vrot.lane.b32.xlu0 %v869, 96
  %v871 = vpop.permute.xlu0 %870
  %v873 = vrot.slane %v851, 4
  %v874 = vrot.slane %v852, 4
  %v875 = vsel %vm163, %v873, %v874
  %v877 = vsel %vm93, %v851, %v859
  %vm878 = vcmask 523264
  %v879 = vsel %vm878, %v877, %v865
  %vm880 = vcmask 785408
  %v881 = vsel %vm880, %v879, %v871
  %v883 = vrot.slane %v847, 6
  %v885 = vsel %vm143, 0.0, %v883
  %v886 = vsel %vm143, %v883, 0.0
  %v889 = vrot.slane %v885, 1
  %v890 = vrot.slane %v886, 1
  %v891 = vsel %vm148, %v889, %v890
  %892 = vrot.lane.b32.xlu0 %v891, 32
  %v893 = vpop.permute.xlu0 %892
  %v895 = vrot.slane %v885, 2
  %v896 = vrot.slane %v886, 2
  %v897 = vsel %vm153, %v895, %v896
  %898 = vrot.lane.b32.xlu0 %v897, 64
  %v899 = vpop.permute.xlu0 %898
  %v901 = vrot.slane %v885, 3
  %v902 = vrot.slane %v886, 3
  %v903 = vsel %vm158, %v901, %v902
  %904 = vrot.lane.b32.xlu0 %v903, 96
  %v905 = vpop.permute.xlu0 %904
  %v907 = vrot.slane %v885, 4
  %v908 = vrot.slane %v886, 4
  %v909 = vsel %vm163, %v907, %v908
  %v911 = vsel %vm93, %v885, %v893
  %v912 = vsel %vm878, %v911, %v899
  %v913 = vsel %vm880, %v912, %v905
  %v914 = vpack.c.bf16 %v913, %v881
  %v915 = vpack.c.bf16 %v909, %v875
  %v916 = vld [vmem:[%s8] sm:$0xf]
  %v917 = vld [vmem:[%s8 + $0x4] sm:$0xf]
  %v918 = vld [vmem:[%s8 + $0x8] sm:$0xf]
  %v919 = vld [vmem:[%s8 + $0xc] sm:$0xf]
  %v920 = vld [vmem:[%s8 + $0x10] sm:$0xf]
  %v921 = vld [vmem:[%s8 + $0x14] sm:$0xf]
  %v922 = vld [vmem:[%s8 + $0x18] sm:$0xf]
  %v923 = vld [vmem:[%s8 + $0x1c] sm:$0xf]
  %v924 = vld [vmem:[%s8 + $0x20] sm:$0xf]
  %v925 = vld [vmem:[%s8 + $0x24] sm:$0xf]
  %v926 = vld [vmem:[%s8 + $0x28] sm:$0xf]
  %v927 = vld [vmem:[%s8 + $0x2c] sm:$0xf]
  %v928 = vld [vmem:[%s8 + $0x30] sm:$0xf]
  %v929 = vld [vmem:[%s8 + $0x34] sm:$0xf]
  %v930 = vld [vmem:[%s8 + $0x38] sm:$0xf]
  %v931 = vld [vmem:[%s8 + $0x3c] sm:$0xf]
  %v932 = vld [vmem:[%s8 + $0x40] sm:$0xf]
  %v933 = vld [vmem:[%s8 + $0x44] sm:$0xf]
  %v934 = vld [vmem:[%s8 + $0x48] sm:$0xf]
  %v935 = vld [vmem:[%s8 + $0x4c] sm:$0xf]
  %v936 = vld [vmem:[%s9] sm:$0x1]
  %v938 = vlaneseq
  %v939 = vshrl.u32 %v938, 7
  %v940 = vsub.s32 0, %v939
  %v941 = vrot.slane %v936, %v940
  %v963 = vunpack.c.l.b16 %v916
  %v964 = vunpack.c.l.b16 %v917
  %v965 = vunpack.c.l.b16 %v918
  %v966 = vunpack.c.l.b16 %v919
  %v967 = vunpack.c.l.b16 %v920
  %v968 = vunpack.c.l.b16 %v921
  %v969 = vunpack.c.l.b16 %v922
  %v970 = vunpack.c.l.b16 %v923
  %v971 = vunpack.c.l.b16 %v924
  %v972 = vunpack.c.l.b16 %v925
  %v973 = vunpack.c.l.b16 %v926
  %v974 = vunpack.c.l.b16 %v927
  %v975 = vunpack.c.l.b16 %v928
  %v976 = vunpack.c.l.b16 %v929
  %v977 = vunpack.c.l.b16 %v930
  %v978 = vunpack.c.l.b16 %v931
  %v979 = vunpack.c.l.b16 %v932
  %v980 = vunpack.c.l.b16 %v933
  %v981 = vunpack.c.l.b16 %v934
  %v982 = vunpack.c.l.b16 %v935
  %v983 = vpack.c.b16 %v964, %v963
  %v984 = vpack.c.b16 %v966, %v965
  %v985 = vpack.c.b16 %v968, %v967
  %v986 = vpack.c.b16 %v970, %v969
  %v987 = vpack.c.b16 %v972, %v971
  %v988 = vpack.c.b16 %v974, %v973
  %v989 = vpack.c.b16 %v976, %v975
  %v990 = vpack.c.b16 %v978, %v977
  %v991 = vpack.c.b16 %v980, %v979
  %v992 = vpack.c.b16 %v982, %v981
  %v1004 = vsel %vm93, %v915, 0
  %1006 = vmatprep.subr.bf16.mxu0 0
  %1007 = vmatpush1.bf16.msra.mxu0 %v983
  %1008 = vmatprep.subr.bf16.mxu0 0
  %1009 = vmatpush1.bf16.msra.mxu0 %v984
  %1010 = vmatprep.subr.bf16.mxu0 0
  %1011 = vmatpush1.bf16.msra.mxu0 %v985
  %1012 = vmatprep.subr.bf16.mxu0 0
  %1013 = vmatpush1.bf16.msra.mxu0 %v986
  %1014 = vmatprep.subr.bf16.mxu0 0
  %1015 = vmatpush1.bf16.msra.mxu0 %v987
  %1016 = vmatprep.subr.bf16.mxu0 0
  %1017 = vmatpush1.bf16.msra.mxu0 %v988
  %1018 = vmatprep.subr.bf16.mxu0 0
  %1019 = vmatpush1.bf16.msra.mxu0 %v989
  %1020 = vmatprep.subr.bf16.mxu0 0
  %1021 = vmatpush1.bf16.msra.mxu0 %v990
  %1022 = vmatprep.subr.bf16.mxu0 0
  %1023 = vmatpush1.bf16.msra.mxu0 %v991
  %1024 = vmatprep.subr.bf16.mxu0 0
  %1025 = vmatpush1.bf16.msra.mxu0 %v992
  %1026 = vmatprep.subr.bf16.mxu0 0
  %1027 = vmatpush1.bf16.msra.mxu0 0
  %1028 = vmatprep.subr.bf16.mxu0 0
  %1029 = vmatpush1.bf16.msra.mxu0 0
  %1030 = vmatprep.subr.bf16.mxu0 0
  %1031 = vmatpush1.bf16.msra.mxu0 0
  %1032 = vmatprep.subr.bf16.mxu0 0
  %1033 = vmatpush1.bf16.msra.mxu0 0
  %1034 = vmatprep.subr.bf16.mxu0 0
  %1035 = vmatpush1.bf16.msra.mxu0 0
  %1036 = vmatprep.subr.bf16.mxu0 0
  %1037 = vmatpush1.bf16.msra.mxu0 0
  %1038 = vmatprep.mubr.bf16.mxu0 %v1004
  %1039 = vmatmul.mubr.bf16.gmra.mrb[0].mxu0 %v914
  %v1040 = vpop.f32.mrb[0].mxu0
  %v1041 = vadd.f32 %v941, %v1040
  %v1042 = vpop.f32.mrb[0].mxu0
  %v1043 = vpop.f32.mrb[0].mxu0
  %v1044 = vadd.f32 %v941, %v1043
  %v1045 = vpop.f32.mrb[0].mxu0
  %1046 = vdwg.mxu0
  %v1047 = vld [vmem:[%s10] sm:$0x1]
  %v1048 = vld [vmem:[%s11] sm:$0x1]
  %v1049 = vsel %vm93, %v1041, 0.0
  %v1050 = vrot.slane %v1049, 4
  %v1051 = vadd.f32 %v1049, %v1050
  %v1052 = vrot.slane %v1051, 2
  %v1053 = vadd.f32 %v1051, %v1052
  %v1054 = vrot.slane %v1053, 1
  %v1055 = vadd.f32 %v1053, %v1054
  %v1056 = vmul.f32 %v1041, %v1041
  %v1057 = vsel %vm93, %v1056, 0.0
  %v1058 = vrot.slane %v1057, 4
  %v1059 = vadd.f32 %v1057, %v1058
  %v1060 = vrot.slane %v1059, 2
  %v1061 = vadd.f32 %v1059, %v1060
  %v1062 = vrot.slane %v1061, 1
  %v1063 = vadd.f32 %v1061, %v1062
  %v1064 = vsel %vm93, %v1044, 0.0
  %v1065 = vrot.slane %v1064, 4
  %v1066 = vadd.f32 %v1064, %v1065
  %v1067 = vrot.slane %v1066, 2
  %v1068 = vadd.f32 %v1066, %v1067
  %v1069 = vrot.slane %v1068, 1
  %v1070 = vadd.f32 %v1068, %v1069
  %v1071 = vmul.f32 %v1044, %v1044
  %v1072 = vsel %vm93, %v1071, 0.0
  %v1073 = vrot.slane %v1072, 4
  %v1074 = vadd.f32 %v1072, %v1073
  %v1075 = vrot.slane %v1074, 2
  %v1076 = vadd.f32 %v1074, %v1075
  %v1077 = vrot.slane %v1076, 1
  %v1078 = vadd.f32 %v1076, %v1077
  %v1079 = vsel %vm682, %v1055, %v1063
  %v1080 = vsel %vm143, %v1079, %v1070
  %v1081 = vsel %vm685, %v1080, %v1078
  %v1083 = vsel %vm93, %v1081, 0
  %1085 = vmatprep.subr.mxu0 0.0
  %1086 = vmatpush1.msra.mxu0 %v648
  %1087 = vmatprep.subr.mxu0 0.0
  %1088 = vmatpush1.msra.mxu0 %v649
  %1089 = vmatprep.subr.mxu0 0.0
  %1090 = vmatpush1.msra.mxu0 %v650
  %1091 = vmatprep.subr.mxu0 0.0
  %1092 = vmatpush1.msra.mxu0 %v651
  %1093 = vmatprep.subr.mxu0 0.0
  %1094 = vmatpush1.msra.mxu0 0.0
  %1095 = vmatprep.subr.mxu0 0.0
  %1096 = vmatpush1.msra.mxu0 0.0
  %1097 = vmatprep.subr.mxu0 0.0
  %1098 = vmatpush1.msra.mxu0 0.0
  %1099 = vmatprep.subr.mxu0 0.0
  %1100 = vmatpush1.msra.mxu0 0.0
  %1101 = vmatprep.subr.mxu0 0.0
  %1102 = vmatpush1.msra.mxu0 0.0
  %1103 = vmatprep.subr.mxu0 0.0
  %1104 = vmatpush1.msra.mxu0 0.0
  %1105 = vmatprep.subr.mxu0 0.0
  %1106 = vmatpush1.msra.mxu0 0.0
  %1107 = vmatprep.subr.mxu0 0.0
  %1108 = vmatpush1.msra.mxu0 0.0
  %1109 = vmatprep.subr.mxu0 0.0
  %1110 = vmatpush1.msra.mxu0 0.0
  %1111 = vmatprep.subr.mxu0 0.0
  %1112 = vmatpush1.msra.mxu0 0.0
  %1113 = vmatprep.subr.mxu0 0.0
  %1114 = vmatpush1.msra.mxu0 0.0
  %1115 = vmatprep.subr.mxu0 0.0
  %1116 = vmatpush1.msra.mxu0 0.0
  %1117 = vmatprep.subr.mxu0 0.0
  %1118 = vmatpush1.msra.mxu0 0.0
  %1119 = vmatprep.subr.mxu0 0.0
  %1120 = vmatpush1.msra.mxu0 0.0
  %1121 = vmatprep.subr.mxu0 0.0
  %1122 = vmatpush1.msra.mxu0 0.0
  %1123 = vmatprep.subr.mxu0 0.0
  %1124 = vmatpush1.msra.mxu0 0.0
  %1125 = vmatprep.subr.mxu0 0.0
  %1126 = vmatpush1.msra.mxu0 0.0
  %1127 = vmatprep.subr.mxu0 0.0
  %1128 = vmatpush1.msra.mxu0 0.0
  %1129 = vmatprep.subr.mxu0 0.0
  %1130 = vmatpush1.msra.mxu0 0.0
  %1131 = vmatprep.subr.mxu0 0.0
  %1132 = vmatpush1.msra.mxu0 0.0
  %1133 = vmatprep.subr.mxu0 0.0
  %1134 = vmatpush1.msra.mxu0 0.0
  %1135 = vmatprep.subr.mxu0 0.0
  %1136 = vmatpush1.msra.mxu0 0.0
  %1137 = vmatprep.subr.mxu0 0.0
  %1138 = vmatpush1.msra.mxu0 0.0
  %1139 = vmatprep.subr.mxu0 0.0
  %1140 = vmatpush1.msra.mxu0 0.0
  %1141 = vmatprep.subr.mxu0 0.0
  %1142 = vmatpush1.msra.mxu0 0.0
  %1143 = vmatprep.subr.mxu0 0.0
  %1144 = vmatpush1.msra.mxu0 0.0
  %1145 = vmatprep.subr.mxu0 0.0
  %1146 = vmatpush1.msra.mxu0 0.0
  %1147 = vmatprep.subr.mxu0 0.0
  %1148 = vmatpush1.msra.mxu0 0.0
  %1149 = vmatprep.mubr.f32.mxu0 0.0
  %1150 = vmatmul.mubr.f32.gmra.mrb[0].mxu0 %v1083
  %v1151 = vpop.f32.mrb[0].mxu0
  %v1152 = vadd.f32 0.0, %v1151
  %v1153 = vpop.f32.mrb[0].mxu0
  %1154 = vdwg.mxu0
  %v1155 = vmul.f32 %v1152, %v1152
  %v1157 = vrot.slane %v1155, 7
  %v1159 = vsub.f32 %v1152, %v1157
  %v1160 = vmax.f32 %v1159, 0.0
  %v1161 = vlaneseq
  %v1162 = vshrl.u32 %v1161, 7
  %v1163 = vsub.s32 0, %v1162
  %v1164 = vrot.slane %v1152, %v1163
  %v1165 = vsub.f32 %v1041, %v1164
  %v1166 = vadd.f32 %v1160, 1e-05
  %v1167 = vrsqrt.pop %v1166
  %v1168 = vlaneseq
  %v1169 = vshrl.u32 %v1168, 7
  %v1170 = vsub.s32 1, %v1169
  %v1171 = vrot.slane %v1167, %v1170
  %v1172 = vmul.f32 %v1165, %v1171
  %v1174 = vlaneseq
  %v1175 = vshrl.u32 %v1174, 7
  %v1176 = vsub.s32 0, %v1175
  %v1177 = vrot.slane %v1047, %v1176
  %v1179 = vmul.f32 %v1172, %v1177
  %v1181 = vlaneseq
  %v1182 = vshrl.u32 %v1181, 7
  %v1183 = vsub.s32 0, %v1182
  %v1184 = vrot.slane %v1048, %v1183
  %v1186 = vadd.f32 %v1179, %v1184
  %v1187 = vand.u32 2147483647, %v1186
  %v1188 = vsub.f32 0.0, %v1187
  %v1189 = vmul.f32 %v1188, 1.442695
  %v1190 = vpow.pop %v1189
  %v1191 = vadd.f32 %v1190, 1.0
  %v1192 = vlog2.pop %v1191
  %v1193 = vmul.f32 %v1192, 0.6931472
  %v1194 = vmul.f32 -0.5, %v1190
  %v1195 = vadd.f32 %v1194, 1.0
  %v1196 = vmul.f32 %v1195, %v1190
  %v1197 = vand.u32 2147483647, %v1190
  %vm1198 = vcmp.lt.f32.partialorder %v1197, 0.0004427343
  %v1199 = vsel %vm1198, %v1196, %v1193
  %v1200 = vmax.f32 %v1186, 0.0
  %v1201 = vadd.f32 %v1199, %v1200
  %v1202 = vtanh.pop %v1201
  %v1203 = vmul.f32 %v1186, %v1202
  %v1204 = vlaneseq
  %v1205 = vshrl.u32 %v1204, 7
  %v1206 = vsub.s32 2, %v1205
  %v1207 = vrot.slane %v1152, %v1206
  %v1208 = vsub.f32 %v1044, %v1207
  %v1209 = vlaneseq
  %v1210 = vshrl.u32 %v1209, 7
  %v1211 = vsub.s32 3, %v1210
  %v1212 = vrot.slane %v1167, %v1211
  %v1213 = vmul.f32 %v1208, %v1212
  %v1214 = vmul.f32 %v1213, %v1177
  %v1215 = vadd.f32 %v1214, %v1184
  %v1216 = vand.u32 2147483647, %v1215
  %v1217 = vsub.f32 0.0, %v1216
  %v1218 = vmul.f32 %v1217, 1.442695
  %v1219 = vpow.pop %v1218
  %v1220 = vadd.f32 %v1219, 1.0
  %v1221 = vlog2.pop %v1220
  %v1222 = vmul.f32 %v1221, 0.6931472
  %v1223 = vmul.f32 -0.5, %v1219
  %v1224 = vadd.f32 %v1223, 1.0
  %v1225 = vmul.f32 %v1224, %v1219
  %v1226 = vand.u32 2147483647, %v1219
  %vm1227 = vcmp.lt.f32.partialorder %v1226, 0.0004427343
  %v1228 = vsel %vm1227, %v1225, %v1222
  %v1229 = vmax.f32 %v1215, 0.0
  %v1230 = vadd.f32 %v1228, %v1229
  %v1231 = vtanh.pop %v1230
  %v1232 = vmul.f32 %v1215, %v1231
  %v1233 = vpack.c.bf16 %v137, %v137
  %v1234 = vld [vmem:[%s13] sm:$0xf]
  %v1235 = vld [vmem:[%s13 + $0x4] sm:$0xf]
  %v1236 = vld [vmem:[%s13 + $0x8] sm:$0xf]
  %v1237 = vld [vmem:[%s13 + $0xc] sm:$0xf]
  %v1238 = vld [vmem:[%s13 + $0x10] sm:$0xf]
  %v1239 = vld [vmem:[%s13 + $0x14] sm:$0xf]
  %v1240 = vld [vmem:[%s13 + $0x18] sm:$0xf]
  %v1241 = vld [vmem:[%s13 + $0x1c] sm:$0xf]
  %v1242 = vld [vmem:[%s13 + $0x20] sm:$0xf]
  %v1243 = vld [vmem:[%s13 + $0x24] sm:$0xf]
  %v1244 = vld [vmem:[%s13 + $0x28] sm:$0xf]
  %v1245 = vld [vmem:[%s13 + $0x2c] sm:$0xf]
  %v1246 = vld [vmem:[%s13 + $0x30] sm:$0xf]
  %v1247 = vld [vmem:[%s13 + $0x34] sm:$0xf]
  %v1248 = vld [vmem:[%s13 + $0x38] sm:$0xf]
  %v1249 = vld [vmem:[%s13 + $0x3c] sm:$0xf]
  %v1250 = vld [vmem:[%s14] sm:$0x1]
  %v1252 = vlaneseq
  %v1253 = vshrl.u32 %v1252, 7
  %v1254 = vsub.s32 0, %v1253
  %v1255 = vrot.slane %v1250, %v1254
  %v1273 = vunpack.c.l.b16 %v1234
  %v1274 = vunpack.c.l.b16 %v1235
  %v1275 = vunpack.c.l.b16 %v1236
  %v1276 = vunpack.c.l.b16 %v1237
  %v1277 = vunpack.c.l.b16 %v1238
  %v1278 = vunpack.c.l.b16 %v1239
  %v1279 = vunpack.c.l.b16 %v1240
  %v1280 = vunpack.c.l.b16 %v1241
  %v1281 = vunpack.c.l.b16 %v1242
  %v1282 = vunpack.c.l.b16 %v1243
  %v1283 = vunpack.c.l.b16 %v1244
  %v1284 = vunpack.c.l.b16 %v1245
  %v1285 = vunpack.c.l.b16 %v1246
  %v1286 = vunpack.c.l.b16 %v1247
  %v1287 = vunpack.c.l.b16 %v1248
  %v1288 = vunpack.c.l.b16 %v1249
  %v1289 = vpack.c.b16 %v1274, %v1273
  %v1290 = vpack.c.b16 %v1276, %v1275
  %v1291 = vpack.c.b16 %v1278, %v1277
  %v1292 = vpack.c.b16 %v1280, %v1279
  %v1293 = vpack.c.b16 %v1282, %v1281
  %v1294 = vpack.c.b16 %v1284, %v1283
  %v1295 = vpack.c.b16 %v1286, %v1285
  %v1296 = vpack.c.b16 %v1288, %v1287
  %1305 = vmatprep.subr.bf16.mxu0 0
  %1306 = vmatpush1.bf16.msra.mxu0 %v1289
  %1307 = vmatprep.subr.bf16.mxu0 0
  %1308 = vmatpush1.bf16.msra.mxu0 %v1290
  %1309 = vmatprep.subr.bf16.mxu0 0
  %1310 = vmatpush1.bf16.msra.mxu0 %v1291
  %1311 = vmatprep.subr.bf16.mxu0 0
  %1312 = vmatpush1.bf16.msra.mxu0 %v1292
  %1313 = vmatprep.subr.bf16.mxu0 0
  %1314 = vmatpush1.bf16.msra.mxu0 %v1293
  %1315 = vmatprep.subr.bf16.mxu0 0
  %1316 = vmatpush1.bf16.msra.mxu0 %v1294
  %1317 = vmatprep.subr.bf16.mxu0 0
  %1318 = vmatpush1.bf16.msra.mxu0 %v1295
  %1319 = vmatprep.subr.bf16.mxu0 0
  %1320 = vmatpush1.bf16.msra.mxu0 %v1296
  %1321 = vmatprep.subr.bf16.mxu0 0
  %1322 = vmatpush1.bf16.msra.mxu0 0
  %1323 = vmatprep.subr.bf16.mxu0 0
  %1324 = vmatpush1.bf16.msra.mxu0 0
  %1325 = vmatprep.subr.bf16.mxu0 0
  %1326 = vmatpush1.bf16.msra.mxu0 0
  %1327 = vmatprep.subr.bf16.mxu0 0
  %1328 = vmatpush1.bf16.msra.mxu0 0
  %1329 = vmatprep.subr.bf16.mxu0 0
  %1330 = vmatpush1.bf16.msra.mxu0 0
  %1331 = vmatprep.subr.bf16.mxu0 0
  %1332 = vmatpush1.bf16.msra.mxu0 0
  %1333 = vmatprep.subr.bf16.mxu0 0
  %1334 = vmatpush1.bf16.msra.mxu0 0
  %1335 = vmatprep.subr.bf16.mxu0 0
  %1336 = vmatpush1.bf16.msra.mxu0 0
  %1337 = vmatprep.mubr.bf16.mxu0 0
  %1338 = vmatmul.mubr.bf16.gmra.mrb[0].mxu0 %v1233
  %v1339 = vpop.f32.mrb[0].mxu0
  %v1340 = vadd.f32 %v1255, %v1339
  %v1341 = vpop.f32.mrb[0].mxu0
  %v1342 = vpop.f32.mrb[0].mxu0
  %v1343 = vpop.f32.mrb[0].mxu0
  %1344 = vdwg.mxu0
  %v1345 = vadd.f32 %v1203, %v1340
  %1346 = vst.msk [vmem:[%s15] sm:$0xff] %vm93, %v1345
  %v1347 = vpack.c.bf16 %v139, %v139
  %v1348 = vld [vmem:[%s13] sm:$0xf]
  %v1349 = vld [vmem:[%s13 + $0x4] sm:$0xf]
  %v1350 = vld [vmem:[%s13 + $0x8] sm:$0xf]
  %v1351 = vld [vmem:[%s13 + $0xc] sm:$0xf]
  %v1352 = vld [vmem:[%s13 + $0x10] sm:$0xf]
  %v1353 = vld [vmem:[%s13 + $0x14] sm:$0xf]
  %v1354 = vld [vmem:[%s13 + $0x18] sm:$0xf]
  %v1355 = vld [vmem:[%s13 + $0x1c] sm:$0xf]
  %v1356 = vld [vmem:[%s13 + $0x20] sm:$0xf]
  %v1357 = vld [vmem:[%s13 + $0x24] sm:$0xf]
  %v1358 = vld [vmem:[%s13 + $0x28] sm:$0xf]
  %v1359 = vld [vmem:[%s13 + $0x2c] sm:$0xf]
  %v1360 = vld [vmem:[%s13 + $0x30] sm:$0xf]
  %v1361 = vld [vmem:[%s13 + $0x34] sm:$0xf]
  %v1362 = vld [vmem:[%s13 + $0x38] sm:$0xf]
  %v1363 = vld [vmem:[%s13 + $0x3c] sm:$0xf]
  %v1364 = vld [vmem:[%s14] sm:$0x1]
  %v1366 = vlaneseq
  %v1367 = vshrl.u32 %v1366, 7
  %v1368 = vsub.s32 0, %v1367
  %v1369 = vrot.slane %v1364, %v1368
  %v1387 = vunpack.c.l.b16 %v1348
  %v1388 = vunpack.c.l.b16 %v1349
  %v1389 = vunpack.c.l.b16 %v1350
  %v1390 = vunpack.c.l.b16 %v1351
  %v1391 = vunpack.c.l.b16 %v1352
  %v1392 = vunpack.c.l.b16 %v1353
  %v1393 = vunpack.c.l.b16 %v1354
  %v1394 = vunpack.c.l.b16 %v1355
  %v1395 = vunpack.c.l.b16 %v1356
  %v1396 = vunpack.c.l.b16 %v1357
  %v1397 = vunpack.c.l.b16 %v1358
  %v1398 = vunpack.c.l.b16 %v1359
  %v1399 = vunpack.c.l.b16 %v1360
  %v1400 = vunpack.c.l.b16 %v1361
  %v1401 = vunpack.c.l.b16 %v1362
  %v1402 = vunpack.c.l.b16 %v1363
  %v1403 = vpack.c.b16 %v1388, %v1387
  %v1404 = vpack.c.b16 %v1390, %v1389
  %v1405 = vpack.c.b16 %v1392, %v1391
  %v1406 = vpack.c.b16 %v1394, %v1393
  %v1407 = vpack.c.b16 %v1396, %v1395
  %v1408 = vpack.c.b16 %v1398, %v1397
  %v1409 = vpack.c.b16 %v1400, %v1399
  %v1410 = vpack.c.b16 %v1402, %v1401
  %1419 = vmatprep.subr.bf16.mxu0 0
  %1420 = vmatpush1.bf16.msra.mxu0 %v1403
  %1421 = vmatprep.subr.bf16.mxu0 0
  %1422 = vmatpush1.bf16.msra.mxu0 %v1404
  %1423 = vmatprep.subr.bf16.mxu0 0
  %1424 = vmatpush1.bf16.msra.mxu0 %v1405
  %1425 = vmatprep.subr.bf16.mxu0 0
  %1426 = vmatpush1.bf16.msra.mxu0 %v1406
  %1427 = vmatprep.subr.bf16.mxu0 0
  %1428 = vmatpush1.bf16.msra.mxu0 %v1407
  %1429 = vmatprep.subr.bf16.mxu0 0
  %1430 = vmatpush1.bf16.msra.mxu0 %v1408
  %1431 = vmatprep.subr.bf16.mxu0 0
  %1432 = vmatpush1.bf16.msra.mxu0 %v1409
  %1433 = vmatprep.subr.bf16.mxu0 0
  %1434 = vmatpush1.bf16.msra.mxu0 %v1410
  %1435 = vmatprep.subr.bf16.mxu0 0
  %1436 = vmatpush1.bf16.msra.mxu0 0
  %1437 = vmatprep.subr.bf16.mxu0 0
  %1438 = vmatpush1.bf16.msra.mxu0 0
  %1439 = vmatprep.subr.bf16.mxu0 0
  %1440 = vmatpush1.bf16.msra.mxu0 0
  %1441 = vmatprep.subr.bf16.mxu0 0
  %1442 = vmatpush1.bf16.msra.mxu0 0
  %1443 = vmatprep.subr.bf16.mxu0 0
  %1444 = vmatpush1.bf16.msra.mxu0 0
  %1445 = vmatprep.subr.bf16.mxu0 0
  %1446 = vmatpush1.bf16.msra.mxu0 0
  %1447 = vmatprep.subr.bf16.mxu0 0
  %1448 = vmatpush1.bf16.msra.mxu0 0
  %1449 = vmatprep.subr.bf16.mxu0 0
  %1450 = vmatpush1.bf16.msra.mxu0 0
  %1451 = vmatprep.mubr.bf16.mxu0 0
  %1452 = vmatmul.mubr.bf16.gmra.mrb[0].mxu0 %v1347
  %v1453 = vpop.f32.mrb[0].mxu0
  %v1454 = vadd.f32 %v1369, %v1453
  %v1455 = vpop.f32.mrb[0].mxu0
  %v1456 = vpop.f32.mrb[0].mxu0
  %v1457 = vpop.f32.mrb[0].mxu0
  %1458 = vdwg.mxu0
  %v1459 = vadd.f32 %v1232, %v1454
  %s1460 = scalar_lea.vmem %s15, 8
  %1461 = vst.msk [vmem:[%s1460] sm:$0xff] %vm93, %v1459
  // Predicated region
  $region62: #{concatenated_temporal_unet_fwd.20} parent=0 // pred_check
    _
  $region63: #{concatenated_temporal_unet_fwd.20} parent=0 // pred_check_branch
    %1463 = sbr.rel (0) target = $region65
  $region64: #{concatenated_temporal_unet_fwd.20} parent=0 // pred_region
    _
  $region65: #{concatenated_temporal_unet_fwd.20} parent=0 // pred_fallthru
    _
  // Predicated region
  $region66: #{concatenated_temporal_unet_fwd.20} parent=0 // pred_check
    _
  $region67: #{concatenated_temporal_unet_fwd.20} parent=0 // pred_check_branch
    %1465 = sbr.rel (0) target = $region69
  $region68: #{concatenated_temporal_unet_fwd.20} parent=0 // pred_region
    _
  $region69: #{concatenated_temporal_unet_fwd.20} parent=0 // pred_fallthru
    _

// kernel: concatenated_temporal_unet_fwd.23
$region0: #{concatenated_temporal_unet_fwd.23}
  #allocation0 [shape = 'u32[]', space=smem, size = 0x4, offset = 0x4, fixed_abs, tag = 'smem constant byte address 0x4 - core index']
  #allocation1 [shape = 'u32[144,128]{1,0:T(1,128)}', space=vmem, size = 0x12000, scoped, tag = 'internal scratch']
  %s0 = inlined_call_operand.vmem [shape: f32[2,16,32], index: 0, kind: input, shape index: {}]
  %s1 = inlined_call_operand.vmem [shape: bf16[160,32], index: 1, kind: input, shape index: {}]
  %s2 = inlined_call_operand.vmem [shape: f32[1,32], index: 2, kind: input, shape index: {}]
  %s3 = inlined_call_operand.vmem [shape: f32[1,32], index: 3, kind: input, shape index: {}]
  %s4 = inlined_call_operand.vmem [shape: f32[1,32], index: 4, kind: input, shape index: {}]
  %s5 = inlined_call_operand.vmem [shape: f32[32,32], index: 5, kind: input, shape index: {}]
  %s6 = inlined_call_operand.vmem [shape: bf16[32,8], index: 6, kind: input, shape index: {}]
  %s7 = inlined_call_operand.vmem [shape: f32[1,8], index: 7, kind: input, shape index: {}]
  %s8 = inlined_call_operand.vmem [shape: f32[2,16,8], index: 8, kind: output, shape index: {}]
  %s9 = sld [smem:[#allocation0]]
  $region42: #{concatenated_temporal_unet_fwd.23} parent=0
    _
  %s11 = ssub.s32 1, %s9
  %s12 = scalar_select 0, %s11, %s9
  // Predicated region
  $region2: #{concatenated_temporal_unet_fwd.23} parent=0 // pred_check
    _
  $region3: #{concatenated_temporal_unet_fwd.23} parent=0 // pred_check_branch
    %14 = sbr.rel (0) target = $region5
  $region4: #{concatenated_temporal_unet_fwd.23} parent=0 // pred_region
    _
  $region5: #{concatenated_temporal_unet_fwd.23} parent=0 // pred_fallthru
    _
  // Predicated region
  $region6: #{concatenated_temporal_unet_fwd.23} parent=0 // pred_check
    _
  $region7: #{concatenated_temporal_unet_fwd.23} parent=0 // pred_check_branch
    %16 = sbr.rel (0) target = $region9
  $region8: #{concatenated_temporal_unet_fwd.23} parent=0 // pred_region
    _
  $region9: #{concatenated_temporal_unet_fwd.23} parent=0 // pred_fallthru
    _
  // Predicated region
  $region10: #{concatenated_temporal_unet_fwd.23} parent=0 // pred_check
    _
  $region11: #{concatenated_temporal_unet_fwd.23} parent=0 // pred_check_branch
    %18 = sbr.rel (0) target = $region13
  $region12: #{concatenated_temporal_unet_fwd.23} parent=0 // pred_region
    _
  $region13: #{concatenated_temporal_unet_fwd.23} parent=0 // pred_fallthru
    _
  // Predicated region
  $region14: #{concatenated_temporal_unet_fwd.23} parent=0 // pred_check
    _
  $region15: #{concatenated_temporal_unet_fwd.23} parent=0 // pred_check_branch
    %20 = sbr.rel (0) target = $region17
  $region16: #{concatenated_temporal_unet_fwd.23} parent=0 // pred_region
    _
  $region17: #{concatenated_temporal_unet_fwd.23} parent=0 // pred_fallthru
    _
  // Predicated region
  $region18: #{concatenated_temporal_unet_fwd.23} parent=0 // pred_check
    _
  $region19: #{concatenated_temporal_unet_fwd.23} parent=0 // pred_check_branch
    %22 = sbr.rel (0) target = $region21
  $region20: #{concatenated_temporal_unet_fwd.23} parent=0 // pred_region
    _
  $region21: #{concatenated_temporal_unet_fwd.23} parent=0 // pred_fallthru
    _
  // Predicated region
  $region22: #{concatenated_temporal_unet_fwd.23} parent=0 // pred_check
    _
  $region23: #{concatenated_temporal_unet_fwd.23} parent=0 // pred_check_branch
    %24 = sbr.rel (0) target = $region25
  $region24: #{concatenated_temporal_unet_fwd.23} parent=0 // pred_region
    _
  $region25: #{concatenated_temporal_unet_fwd.23} parent=0 // pred_fallthru
    _
  // Predicated region
  $region26: #{concatenated_temporal_unet_fwd.23} parent=0 // pred_check
    _
  $region27: #{concatenated_temporal_unet_fwd.23} parent=0 // pred_check_branch
    %26 = sbr.rel (0) target = $region29
  $region28: #{concatenated_temporal_unet_fwd.23} parent=0 // pred_region
    _
  $region29: #{concatenated_temporal_unet_fwd.23} parent=0 // pred_fallthru
    _
  // Predicated region
  $region30: #{concatenated_temporal_unet_fwd.23} parent=0 // pred_check
    _
  $region31: #{concatenated_temporal_unet_fwd.23} parent=0 // pred_check_branch
    %28 = sbr.rel (0) target = $region33
  $region32: #{concatenated_temporal_unet_fwd.23} parent=0 // pred_region
    _
  $region33: #{concatenated_temporal_unet_fwd.23} parent=0 // pred_fallthru
    _
  %v30 = vld [vmem:[%s0] sm:$0xff]
  %v31 = vld [vmem:[%s0 + $0x8] sm:$0xff]
  %s32 = scalar_lea.vmem %s0, 16
  %v33 = vld [vmem:[%s32] sm:$0xff]
  %v34 = vld [vmem:[%s32 + $0x8] sm:$0xff]
  %vm37 = vcmask 1041408
  %v38 = vrot.slane %v30, 6
  %v39 = vrot.slane %v31, 6
  %v40 = vsel %vm37, %v38, %v39
  %v44 = vsel %vm37, 0.0, %v38
  %v45 = vsel %vm37, %v39, 0.0
  %vm48 = vcmask 1046528
  %v49 = vrot.slane %v44, 1
  %v50 = vrot.slane %v40, 1
  %v51 = vsel %vm48, %v49, %v50
  %v52 = vrot.slane %v45, 1
  %v53 = vsel %vm48, %v50, %v52
  %54 = vrot.lane.b32.xlu0 %v51, 32
  %v55 = vpop.permute.xlu0 %54
  %56 = vrot.lane.b32.xlu0 %v53, 32
  %v57 = vpop.permute.xlu0 %56
  %vm60 = vcmask 1045504
  %v61 = vrot.slane %v44, 2
  %v62 = vrot.slane %v40, 2
  %v63 = vsel %vm60, %v61, %v62
  %v64 = vrot.slane %v45, 2
  %v65 = vsel %vm60, %v62, %v64
  %66 = vrot.lane.b32.xlu0 %v63, 64
  %v67 = vpop.permute.xlu0 %66
  %68 = vrot.lane.b32.xlu0 %v65, 64
  %v69 = vpop.permute.xlu0 %68
  %vm72 = vcmask 1044480
  %v73 = vrot.slane %v44, 3
  %v74 = vrot.slane %v40, 3
  %v75 = vsel %vm72, %v73, %v74
  %v76 = vrot.slane %v45, 3
  %v77 = vsel %vm72, %v74, %v76
  %78 = vrot.lane.b32.xlu0 %v75, 96
  %v79 = vpop.permute.xlu0 %78
  %80 = vrot.lane.b32.xlu0 %v77, 96
  %v81 = vpop.permute.xlu0 %80
  %vm84 = vcmask 1043456
  %v85 = vrot.slane %v44, 4
  %v86 = vrot.slane %v40, 4
  %v87 = vsel %vm84, %v85, %v86
  %v88 = vrot.slane %v45, 4
  %v89 = vsel %vm84, %v86, %v88
  %vm92 = vcmask 261120
  %v93 = vsel %vm92, %v44, %v55
  %v94 = vsel %vm92, %v40, %v57
  %vm95 = vcmask 523264
  %v96 = vsel %vm95, %v93, %v67
  %v97 = vsel %vm95, %v94, %v69
  %vm98 = vcmask 785408
  %v99 = vsel %vm98, %v96, %v79
  %v100 = vsel %vm98, %v97, %v81
  %v103 = vrot.slane %v33, 6
  %v104 = vrot.slane %v34, 6
  %v105 = vsel %vm37, %v103, %v104
  %v109 = vsel %vm37, 0.0, %v103
  %v110 = vsel %vm37, %v104, 0.0
  %v113 = vrot.slane %v109, 1
  %v114 = vrot.slane %v105, 1
  %v115 = vsel %vm48, %v113, %v114
  %v116 = vrot.slane %v110, 1
  %v117 = vsel %vm48, %v114, %v116
  %118 = vrot.lane.b32.xlu0 %v115, 32
  %v119 = vpop.permute.xlu0 %118
  %120 = vrot.lane.b32.xlu0 %v117, 32
  %v121 = vpop.permute.xlu0 %120
  %v124 = vrot.slane %v109, 2
  %v125 = vrot.slane %v105, 2
  %v126 = vsel %vm60, %v124, %v125
  %v127 = vrot.slane %v110, 2
  %v128 = vsel %vm60, %v125, %v127
  %129 = vrot.lane.b32.xlu0 %v126, 64
  %v130 = vpop.permute.xlu0 %129
  %131 = vrot.lane.b32.xlu0 %v128, 64
  %v132 = vpop.permute.xlu0 %131
  %v135 = vrot.slane %v109, 3
  %v136 = vrot.slane %v105, 3
  %v137 = vsel %vm72, %v135, %v136
  %v138 = vrot.slane %v110, 3
  %v139 = vsel %vm72, %v136, %v138
  %140 = vrot.lane.b32.xlu0 %v137, 96
  %v141 = vpop.permute.xlu0 %140
  %142 = vrot.lane.b32.xlu0 %v139, 96
  %v143 = vpop.permute.xlu0 %142
  %v146 = vrot.slane %v109, 4
  %v147 = vrot.slane %v105, 4
  %v148 = vsel %vm84, %v146, %v147
  %v149 = vrot.slane %v110, 4
  %v150 = vsel %vm84, %v147, %v149
  %v153 = vsel %vm92, %v109, %v119
  %v154 = vsel %vm92, %v105, %v121
  %v155 = vsel %vm95, %v153, %v130
  %v156 = vsel %vm95, %v154, %v132
  %v157 = vsel %vm98, %v155, %v141
  %v158 = vsel %vm98, %v156, %v143
  %v159 = vpack.c.bf16 %v100, %v99
  %v160 = vpack.c.bf16 %v89, %v87
  %v161 = vpack.c.bf16 %v158, %v157
  %v162 = vpack.c.bf16 %v150, %v148
  %v163 = vld [vmem:[%s1] sm:$0xf]
  %v164 = vld [vmem:[%s1 + $0x4] sm:$0xf]
  %v165 = vld [vmem:[%s1 + $0x8] sm:$0xf]
  %v166 = vld [vmem:[%s1 + $0xc] sm:$0xf]
  %v167 = vld [vmem:[%s1 + $0x10] sm:$0xf]
  %v168 = vld [vmem:[%s1 + $0x14] sm:$0xf]
  %v169 = vld [vmem:[%s1 + $0x18] sm:$0xf]
  %v170 = vld [vmem:[%s1 + $0x1c] sm:$0xf]
  %v171 = vld [vmem:[%s1 + $0x20] sm:$0xf]
  %v172 = vld [vmem:[%s1 + $0x24] sm:$0xf]
  %v173 = vld [vmem:[%s1 + $0x28] sm:$0xf]
  %v174 = vld [vmem:[%s1 + $0x2c] sm:$0xf]
  %v175 = vld [vmem:[%s1 + $0x30] sm:$0xf]
  %v176 = vld [vmem:[%s1 + $0x34] sm:$0xf]
  %v177 = vld [vmem:[%s1 + $0x38] sm:$0xf]
  %v178 = vld [vmem:[%s1 + $0x3c] sm:$0xf]
  %v179 = vld [vmem:[%s1 + $0x40] sm:$0xf]
  %v180 = vld [vmem:[%s1 + $0x44] sm:$0xf]
  %v181 = vld [vmem:[%s1 + $0x48] sm:$0xf]
  %v182 = vld [vmem:[%s1 + $0x4c] sm:$0xf]
  %v183 = vld [vmem:[%s2] sm:$0x1]
  %v185 = vlaneseq
  %v186 = vshrl.u32 %v185, 7
  %v187 = vsub.s32 0, %v186
  %v188 = vrot.slane %v183, %v187
  %v210 = vunpack.c.l.b16 %v163
  %v211 = vunpack.c.l.b16 %v164
  %v212 = vunpack.c.l.b16 %v165
  %v213 = vunpack.c.l.b16 %v166
  %v214 = vunpack.c.l.b16 %v167
  %v215 = vunpack.c.l.b16 %v168
  %v216 = vunpack.c.l.b16 %v169
  %v217 = vunpack.c.l.b16 %v170
  %v218 = vunpack.c.l.b16 %v171
  %v219 = vunpack.c.l.b16 %v172
  %v220 = vunpack.c.l.b16 %v173
  %v221 = vunpack.c.l.b16 %v174
  %v222 = vunpack.c.l.b16 %v175
  %v223 = vunpack.c.l.b16 %v176
  %v224 = vunpack.c.l.b16 %v177
  %v225 = vunpack.c.l.b16 %v178
  %v226 = vunpack.c.l.b16 %v179
  %v227 = vunpack.c.l.b16 %v180
  %v228 = vunpack.c.l.b16 %v181
  %v229 = vunpack.c.l.b16 %v182
  %v230 = vpack.c.b16 %v211, %v210
  %v231 = vpack.c.b16 %v213, %v212
  %v232 = vpack.c.b16 %v215, %v214
  %v233 = vpack.c.b16 %v217, %v216
  %v234 = vpack.c.b16 %v219, %v218
  %v235 = vpack.c.b16 %v221, %v220
  %v236 = vpack.c.b16 %v223, %v222
  %v237 = vpack.c.b16 %v225, %v224
  %v238 = vpack.c.b16 %v227, %v226
  %v239 = vpack.c.b16 %v229, %v228
  %v251 = vsel %vm92, %v160, 0
  %v254 = vsel %vm92, %v162, 0
  %256 = vmatprep.subr.bf16.mxu0 0
  %257 = vmatpush1.bf16.msra.mxu0 %v230
  %258 = vmatprep.subr.bf16.mxu0 0
  %259 = vmatpush1.bf16.msra.mxu0 %v231
  %260 = vmatprep.subr.bf16.mxu0 0
  %261 = vmatpush1.bf16.msra.mxu0 %v232
  %262 = vmatprep.subr.bf16.mxu0 0
  %263 = vmatpush1.bf16.msra.mxu0 %v233
  %264 = vmatprep.subr.bf16.mxu0 0
  %265 = vmatpush1.bf16.msra.mxu0 %v234
  %266 = vmatprep.subr.bf16.mxu0 0
  %267 = vmatpush1.bf16.msra.mxu0 %v235
  %268 = vmatprep.subr.bf16.mxu0 0
  %269 = vmatpush1.bf16.msra.mxu0 %v236
  %270 = vmatprep.subr.bf16.mxu0 0
  %271 = vmatpush1.bf16.msra.mxu0 %v237
  %272 = vmatprep.subr.bf16.mxu0 0
  %273 = vmatpush1.bf16.msra.mxu0 %v238
  %274 = vmatprep.subr.bf16.mxu0 0
  %275 = vmatpush1.bf16.msra.mxu0 %v239
  %276 = vmatprep.subr.bf16.mxu0 0
  %277 = vmatpush1.bf16.msra.mxu0 0
  %278 = vmatprep.subr.bf16.mxu0 0
  %279 = vmatpush1.bf16.msra.mxu0 0
  %280 = vmatprep.subr.bf16.mxu0 0
  %281 = vmatpush1.bf16.msra.mxu0 0
  %282 = vmatprep.subr.bf16.mxu0 0
  %283 = vmatpush1.bf16.msra.mxu0 0
  %284 = vmatprep.subr.bf16.mxu0 0
  %285 = vmatpush1.bf16.msra.mxu0 0
  %286 = vmatprep.subr.bf16.mxu0 0
  %287 = vmatpush1.bf16.msra.mxu0 0
  %288 = vmatprep.mubr.bf16.mxu0 %v251
  %289 = vmatmul.mubr.bf16.gmra.mrb[0].mxu0 %v159
  %v290 = vpop.f32.mrb[0].mxu0
  %v291 = vadd.f32 %v188, %v290
  %v292 = vpop.f32.mrb[0].mxu0
  %v293 = vpop.f32.mrb[0].mxu0
  %v294 = vadd.f32 %v188, %v293
  %v295 = vpop.f32.mrb[0].mxu0
  %296 = vmatprep.mubr.bf16.mxu0 %v254
  %297 = vmatmul.mubr.bf16.gmra.mrb[0].mxu0 %v161
  %v298 = vpop.f32.mrb[0].mxu0
  %v299 = vadd.f32 %v188, %v298
  %v300 = vpop.f32.mrb[0].mxu0
  %v301 = vpop.f32.mrb[0].mxu0
  %v302 = vadd.f32 %v188, %v301
  %v303 = vpop.f32.mrb[0].mxu0
  %304 = vdwg.mxu0
  %v305 = vld [vmem:[%s3] sm:$0x1]
  %v306 = vld [vmem:[%s4] sm:$0x1]
  %v307 = vld [vmem:[%s5] sm:$0xff]
  %v308 = vld [vmem:[%s5 + $0x8] sm:$0xff]
  %v309 = vld [vmem:[%s5 + $0x10] sm:$0xff]
  %v310 = vld [vmem:[%s5 + $0x18] sm:$0xff]
  %v311 = vsel %vm92, %v291, 0.0
  %v312 = vsel %vm92, %v294, 0.0
  %v313 = vadd.f32 %v311, %v312
  %v314 = vrot.slane %v313, 4
  %v315 = vadd.f32 %v313, %v314
  %v316 = vrot.slane %v315, 2
  %v317 = vadd.f32 %v315, %v316
  %v318 = vrot.slane %v317, 1
  %v319 = vadd.f32 %v317, %v318
  %v320 = vmul.f32 %v291, %v291
  %v321 = vmul.f32 %v294, %v294
  %v322 = vsel %vm92, %v320, 0.0
  %v323 = vsel %vm92, %v321, 0.0
  %v324 = vadd.f32 %v322, %v323
  %v325 = vrot.slane %v324, 4
  %v326 = vadd.f32 %v324, %v325
  %v327 = vrot.slane %v326, 2
  %v328 = vadd.f32 %v326, %v327
  %v329 = vrot.slane %v328, 1
  %v330 = vadd.f32 %v328, %v329
  %v331 = vsel %vm92, %v299, 0.0
  %v332 = vsel %vm92, %v302, 0.0
  %v333 = vadd.f32 %v331, %v332
  %v334 = vrot.slane %v333, 4
  %v335 = vadd.f32 %v333, %v334
  %v336 = vrot.slane %v335, 2
  %v337 = vadd.f32 %v335, %v336
  %v338 = vrot.slane %v337, 1
  %v339 = vadd.f32 %v337, %v338
  %v340 = vmul.f32 %v299, %v299
  %v341 = vmul.f32 %v302, %v302
  %v342 = vsel %vm92, %v340, 0.0
  %v343 = vsel %vm92, %v341, 0.0
  %v344 = vadd.f32 %v342, %v343
  %v345 = vrot.slane %v344, 4
  %v346 = vadd.f32 %v344, %v345
  %v347 = vrot.slane %v346, 2
  %v348 = vadd.f32 %v346, %v347
  %v349 = vrot.slane %v348, 1
  %v350 = vadd.f32 %v348, %v349
  %vm351 = vcmask 1040384
  %v352 = vsel %vm351, %v319, %v330
  %v353 = vsel %vm37, %v352, %v339
  %vm354 = vcmask 1042432
  %v355 = vsel %vm354, %v353, %v350
  %v357 = vsel %vm92, %v355, 0
  %359 = vmatprep.subr.mxu0 0.0
  %360 = vmatpush1.msra.mxu0 %v307
  %361 = vmatprep.subr.mxu0 0.0
  %362 = vmatpush1.msra.mxu0 %v308
  %363 = vmatprep.subr.mxu0 0.0
  %364 = vmatpush1.msra.mxu0 %v309
  %365 = vmatprep.subr.mxu0 0.0
  %366 = vmatpush1.msra.mxu0 %v310
  %367 = vmatprep.subr.mxu0 0.0
  %368 = vmatpush1.msra.mxu0 0.0
  %369 = vmatprep.subr.mxu0 0.0
  %370 = vmatpush1.msra.mxu0 0.0
  %371 = vmatprep.subr.mxu0 0.0
  %372 = vmatpush1.msra.mxu0 0.0
  %373 = vmatprep.subr.mxu0 0.0
  %374 = vmatpush1.msra.mxu0 0.0
  %375 = vmatprep.subr.mxu0 0.0
  %376 = vmatpush1.msra.mxu0 0.0
  %377 = vmatprep.subr.mxu0 0.0
  %378 = vmatpush1.msra.mxu0 0.0
  %379 = vmatprep.subr.mxu0 0.0
  %380 = vmatpush1.msra.mxu0 0.0
  %381 = vmatprep.subr.mxu0 0.0
  %382 = vmatpush1.msra.mxu0 0.0
  %383 = vmatprep.subr.mxu0 0.0
  %384 = vmatpush1.msra.mxu0 0.0
  %385 = vmatprep.subr.mxu0 0.0
  %386 = vmatpush1.msra.mxu0 0.0
  %387 = vmatprep.subr.mxu0 0.0
  %388 = vmatpush1.msra.mxu0 0.0
  %389 = vmatprep.subr.mxu0 0.0
  %390 = vmatpush1.msra.mxu0 0.0
  %391 = vmatprep.subr.mxu0 0.0
  %392 = vmatpush1.msra.mxu0 0.0
  %393 = vmatprep.subr.mxu0 0.0
  %394 = vmatpush1.msra.mxu0 0.0
  %395 = vmatprep.subr.mxu0 0.0
  %396 = vmatpush1.msra.mxu0 0.0
  %397 = vmatprep.subr.mxu0 0.0
  %398 = vmatpush1.msra.mxu0 0.0
  %399 = vmatprep.subr.mxu0 0.0
  %400 = vmatpush1.msra.mxu0 0.0
  %401 = vmatprep.subr.mxu0 0.0
  %402 = vmatpush1.msra.mxu0 0.0
  %403 = vmatprep.subr.mxu0 0.0
  %404 = vmatpush1.msra.mxu0 0.0
  %405 = vmatprep.subr.mxu0 0.0
  %406 = vmatpush1.msra.mxu0 0.0
  %407 = vmatprep.subr.mxu0 0.0
  %408 = vmatpush1.msra.mxu0 0.0
  %409 = vmatprep.subr.mxu0 0.0
  %410 = vmatpush1.msra.mxu0 0.0
  %411 = vmatprep.subr.mxu0 0.0
  %412 = vmatpush1.msra.mxu0 0.0
  %413 = vmatprep.subr.mxu0 0.0
  %414 = vmatpush1.msra.mxu0 0.0
  %415 = vmatprep.subr.mxu0 0.0
  %416 = vmatpush1.msra.mxu0 0.0
  %417 = vmatprep.subr.mxu0 0.0
  %418 = vmatpush1.msra.mxu0 0.0
  %419 = vmatprep.subr.mxu0 0.0
  %420 = vmatpush1.msra.mxu0 0.0
  %421 = vmatprep.subr.mxu0 0.0
  %422 = vmatpush1.msra.mxu0 0.0
  %423 = vmatprep.mubr.f32.mxu0 0.0
  %424 = vmatmul.mubr.f32.gmra.mrb[0].mxu0 %v357
  %v425 = vpop.f32.mrb[0].mxu0
  %v426 = vadd.f32 0.0, %v425
  %v427 = vpop.f32.mrb[0].mxu0
  %428 = vdwg.mxu0
  %v429 = vmul.f32 %v426, %v426
  %v431 = vrot.slane %v429, 7
  %v433 = vsub.f32 %v426, %v431
  %v434 = vmax.f32 %v433, 0.0
  %v435 = vlaneseq
  %v436 = vshrl.u32 %v435, 7
  %v437 = vsub.s32 0, %v436
  %v438 = vrot.slane %v426, %v437
  %v439 = vsub.f32 %v291, %v438
  %v440 = vsub.f32 %v294, %v438
  %v441 = vadd.f32 %v434, 1e-05
  %v442 = vrsqrt.pop %v441
  %v443 = vlaneseq
  %v444 = vshrl.u32 %v443, 7
  %v445 = vsub.s32 1, %v444
  %v446 = vrot.slane %v442, %v445
  %v447 = vmul.f32 %v439, %v446
  %v448 = vmul.f32 %v440, %v446
  %v450 = vlaneseq
  %v451 = vshrl.u32 %v450, 7
  %v452 = vsub.s32 0, %v451
  %v453 = vrot.slane %v305, %v452
  %v455 = vmul.f32 %v447, %v453
  %v456 = vmul.f32 %v448, %v453
  %v458 = vlaneseq
  %v459 = vshrl.u32 %v458, 7
  %v460 = vsub.s32 0, %v459
  %v461 = vrot.slane %v306, %v460
  %v463 = vadd.f32 %v455, %v461
  %v464 = vadd.f32 %v456, %v461
  %v465 = vand.u32 2147483647, %v463
  %v466 = vand.u32 2147483647, %v464
  %v467 = vsub.f32 0.0, %v465
  %v468 = vsub.f32 0.0, %v466
  %v469 = vmul.f32 %v467, 1.442695
  %v470 = vpow.pop %v469
  %v471 = vmul.f32 %v468, 1.442695
  %v472 = vpow.pop %v471
  %v473 = vadd.f32 %v470, 1.0
  %v474 = vlog2.pop %v473
  %v475 = vmul.f32 %v474, 0.6931472
  %v476 = vmul.f32 -0.5, %v470
  %v477 = vadd.f32 %v476, 1.0
  %v478 = vmul.f32 %v477, %v470
  %v479 = vand.u32 2147483647, %v470
  %vm480 = vcmp.lt.f32.partialorder %v479, 0.0004427343
  %v481 = vsel %vm480, %v478, %v475
  %v482 = vadd.f32 %v472, 1.0
  %v483 = vlog2.pop %v482
  %v484 = vmul.f32 %v483, 0.6931472
  %v485 = vmul.f32 -0.5, %v472
  %v486 = vadd.f32 %v485, 1.0
  %v487 = vmul.f32 %v486, %v472
  %v488 = vand.u32 2147483647, %v472
  %vm489 = vcmp.lt.f32.partialorder %v488, 0.0004427343
  %v490 = vsel %vm489, %v487, %v484
  %v491 = vmax.f32 %v463, 0.0
  %v492 = vmax.f32 %v464, 0.0
  %v493 = vadd.f32 %v481, %v491
  %v494 = vadd.f32 %v490, %v492
  %v495 = vtanh.pop %v493
  %v496 = vtanh.pop %v494
  %v497 = vmul.f32 %v463, %v495
  %v498 = vmul.f32 %v464, %v496
  %v499 = vlaneseq
  %v500 = vshrl.u32 %v499, 7
  %v501 = vsub.s32 2, %v500
  %v502 = vrot.slane %v426, %v501
  %v503 = vsub.f32 %v299, %v502
  %v504 = vsub.f32 %v302, %v502
  %v505 = vlaneseq
  %v506 = vshrl.u32 %v505, 7
  %v507 = vsub.s32 3, %v506
  %v508 = vrot.slane %v442, %v507
  %v509 = vmul.f32 %v503, %v508
  %v510 = vmul.f32 %v504, %v508
  %v511 = vmul.f32 %v509, %v453
  %v512 = vmul.f32 %v510, %v453
  %v513 = vadd.f32 %v511, %v461
  %v514 = vadd.f32 %v512, %v461
  %v515 = vand.u32 2147483647, %v513
  %v516 = vand.u32 2147483647, %v514
  %v517 = vsub.f32 0.0, %v515
  %v518 = vsub.f32 0.0, %v516
  %v519 = vmul.f32 %v517, 1.442695
  %v520 = vpow.pop %v519
  %v521 = vmul.f32 %v518, 1.442695
  %v522 = vpow.pop %v521
  %v523 = vadd.f32 %v520, 1.0
  %v524 = vlog2.pop %v523
  %v525 = vmul.f32 %v524, 0.6931472
  %v526 = vmul.f32 -0.5, %v520
  %v527 = vadd.f32 %v526, 1.0
  %v528 = vmul.f32 %v527, %v520
  %v529 = vand.u32 2147483647, %v520
  %vm530 = vcmp.lt.f32.partialorder %v529, 0.0004427343
  %v531 = vsel %vm530, %v528, %v525
  %v532 = vadd.f32 %v522, 1.0
  %v533 = vlog2.pop %v532
  %v534 = vmul.f32 %v533, 0.6931472
  %v535 = vmul.f32 -0.5, %v522
  %v536 = vadd.f32 %v535, 1.0
  %v537 = vmul.f32 %v536, %v522
  %v538 = vand.u32 2147483647, %v522
  %vm539 = vcmp.lt.f32.partialorder %v538, 0.0004427343
  %v540 = vsel %vm539, %v537, %v534
  %v541 = vmax.f32 %v513, 0.0
  %v542 = vmax.f32 %v514, 0.0
  %v543 = vadd.f32 %v531, %v541
  %v544 = vadd.f32 %v540, %v542
  %v545 = vtanh.pop %v543
  %v546 = vtanh.pop %v544
  %v547 = vmul.f32 %v513, %v545
  %v548 = vmul.f32 %v514, %v546
  %v549 = vpack.c.bf16 %v498, %v497
  %v550 = vpack.c.bf16 %v548, %v547
  %v551 = vld [vmem:[%s6] sm:$0xf]
  %v552 = vld [vmem:[%s6 + $0x4] sm:$0xf]
  %v553 = vld [vmem:[%s6 + $0x8] sm:$0xf]
  %v554 = vld [vmem:[%s6 + $0xc] sm:$0xf]
  %v555 = vld [vmem:[%s7] sm:$0x1]
  %v557 = vlaneseq
  %v558 = vshrl.u32 %v557, 7
  %v559 = vsub.s32 0, %v558
  %v560 = vrot.slane %v555, %v559
  %v566 = vunpack.c.l.b16 %v551
  %v567 = vunpack.c.l.b16 %v552
  %v568 = vunpack.c.l.b16 %v553
  %v569 = vunpack.c.l.b16 %v554
  %v570 = vpack.c.b16 %v567, %v566
  %v571 = vpack.c.b16 %v569, %v568
  %v575 = vsel %vm92, %v549, 0
  %v578 = vsel %vm92, %v550, 0
  %580 = vmatprep.subr.bf16.mxu0 0
  %581 = vmatpush1.bf16.msra.mxu0 %v570
  %582 = vmatprep.subr.bf16.mxu0 0
  %583 = vmatpush1.bf16.msra.mxu0 %v571
  %584 = vmatprep.subr.bf16.mxu0 0
  %585 = vmatpush1.bf16.msra.mxu0 0
  %586 = vmatprep.subr.bf16.mxu0 0
  %587 = vmatpush1.bf16.msra.mxu0 0
  %588 = vmatprep.subr.bf16.mxu0 0
  %589 = vmatpush1.bf16.msra.mxu0 0
  %590 = vmatprep.subr.bf16.mxu0 0
  %591 = vmatpush1.bf16.msra.mxu0 0
  %592 = vmatprep.subr.bf16.mxu0 0
  %593 = vmatpush1.bf16.msra.mxu0 0
  %594 = vmatprep.subr.bf16.mxu0 0
  %595 = vmatpush1.bf16.msra.mxu0 0
  %596 = vmatprep.subr.bf16.mxu0 0
  %597 = vmatpush1.bf16.msra.mxu0 0
  %598 = vmatprep.subr.bf16.mxu0 0
  %599 = vmatpush1.bf16.msra.mxu0 0
  %600 = vmatprep.subr.bf16.mxu0 0
  %601 = vmatpush1.bf16.msra.mxu0 0
  %602 = vmatprep.subr.bf16.mxu0 0
  %603 = vmatpush1.bf16.msra.mxu0 0
  %604 = vmatprep.subr.bf16.mxu0 0
  %605 = vmatpush1.bf16.msra.mxu0 0
  %606 = vmatprep.subr.bf16.mxu0 0
  %607 = vmatpush1.bf16.msra.mxu0 0
  %608 = vmatprep.subr.bf16.mxu0 0
  %609 = vmatpush1.bf16.msra.mxu0 0
  %610 = vmatprep.subr.bf16.mxu0 0
  %611 = vmatpush1.bf16.msra.mxu0 0
  %612 = vmatprep.mubr.bf16.mxu0 0
  %613 = vmatmul.mubr.bf16.gmra.mrb[0].mxu0 %v575
  %v614 = vpop.f32.mrb[0].mxu0
  %v615 = vadd.f32 %v560, %v614
  %v616 = vpop.f32.mrb[0].mxu0
  %v617 = vpop.f32.mrb[0].mxu0
  %v618 = vadd.f32 %v560, %v617
  %v619 = vpop.f32.mrb[0].mxu0
  %620 = vmatprep.mubr.bf16.mxu0 0
  %621 = vmatmul.mubr.bf16.gmra.mrb[0].mxu0 %v578
  %v622 = vpop.f32.mrb[0].mxu0
  %v623 = vadd.f32 %v560, %v622
  %v624 = vpop.f32.mrb[0].mxu0
  %v625 = vpop.f32.mrb[0].mxu0
  %v626 = vadd.f32 %v560, %v625
  %v627 = vpop.f32.mrb[0].mxu0
  %628 = vdwg.mxu0
  %vm629 = vcmask 64512
  %630 = vst.msk [vmem:[%s8] sm:$0xff] %vm629, %v615
  %631 = vst.msk [vmem:[%s8 + $0x8] sm:$0xff] %vm629, %v618
  %s632 = scalar_lea.vmem %s8, 16
  %633 = vst.msk [vmem:[%s632] sm:$0xff] %vm629, %v623
  %634 = vst.msk [vmem:[%s632 + $0x8] sm:$0xff] %vm629, %v626
  // Predicated region
  $region34: #{concatenated_temporal_unet_fwd.23} parent=0 // pred_check
    _
  $region35: #{concatenated_temporal_unet_fwd.23} parent=0 // pred_check_branch
    %636 = sbr.rel (0) target = $region37
  $region36: #{concatenated_temporal_unet_fwd.23} parent=0 // pred_region
    _
  $region37: #{concatenated_temporal_unet_fwd.23} parent=0 // pred_fallthru
    _
  // Predicated region
  $region38: #{concatenated_temporal_unet_fwd.23} parent=0 // pred_check
    _
  $region39: #{concatenated_temporal_unet_fwd.23} parent=0 // pred_check_branch
    %638 = sbr.rel (0) target = $region41
  $region40: #{concatenated_temporal_unet_fwd.23} parent=0 // pred_region
    _
  $region41: #{concatenated_temporal_unet_fwd.23} parent=0 // pred_fallthru
    _

</llo_original>
